<compile_context>
chip_gen: v7x
topology: tpu7x:2x2x1
jax: 0.10.0
libtpu: 0.0.40
codegen_flags: <defaults>
</compile_context>

<pallas_src>
import math
import functools

import jax
import jax.numpy as jnp
from jax.experimental import pallas as pl
from jax.experimental.pallas import tpu as pltpu


# -----------------------------------------------------------------------------
# Fused kernel: one (batch-block, layer) grid step of the decoder stack.
# -----------------------------------------------------------------------------
def _decoder_stack_kernel(n_heads, n_blk, S, M, dk, dv, vdim, ffdim, causal,
                          tgt_ref, mem_ref, pad_ref,
                          wq0, wk0, wv0, wo0, wq1, wk1, wv1, wo1, w1, w2,
                          small_ref, out_ref):
    l = pl.program_id(1)
    b0 = pl.program_id(0) * n_blk          # first batch element of this block
    kdim = n_heads * dk

    # Packed per-layer small parameters (biases + LayerNorm affine), f32.
    small = small_ref[0]                   # (16, Pmax)
    bq0 = small[0:1, :kdim]                # pre-scaled by 1/sqrt(dk)
    bk0 = small[1:2, :kdim]
    bv0 = small[2:3, :vdim]
    bo0 = small[3:4, :vdim]
    bq1 = small[4:5, :kdim]                # pre-scaled by 1/sqrt(dk)
    bk1 = small[5:6, :kdim]
    bv1 = small[6:7, :vdim]
    bo1 = small[7:8, :vdim]
    b1 = small[8:9, :ffdim]
    b2 = small[9:10, :vdim]
    g0 = small[10:11, :vdim]
    be0 = small[11:12, :vdim]
    g1 = small[12:13, :vdim]
    be1 = small[13:14, :vdim]
    g2 = small[14:15, :vdim]
    be2 = small[15:16, :vdim]

    # The activation is carried across layers in the resident output block
    # (out index map constant along the layer axis) -> no scratch, no copy-out.
    @pl.when(l == 0)
    def _init():
        out_ref[...] = tgt_ref[...]

    x = out_ref[...].astype(jnp.float32)   # (n_blk*S, V) residual stream, f32

    # Additive causal mask generated in-kernel (no (S, S) HBM DMA / VMEM copy).
    if causal:
        r = jax.lax.broadcasted_iota(jnp.int32, (S, S), 0)
        c = jax.lax.broadcasted_iota(jnp.int32, (S, S), 1)
        causal_add = jnp.where(r >= c, 0.0, -1e9).astype(jnp.float32)
    else:
        causal_add = jnp.zeros((S, S), jnp.float32)

    def layer_norm(h, g, b):
        # Fused statistics: mean and E[x^2] from one pass (var = E[x^2]-mu^2),
        # halving the dependent XLU lane reductions per LN.
        mu = jnp.mean(h, axis=-1, keepdims=True)
        ms = jnp.mean(h * h, axis=-1, keepdims=True)
        return (h - mu) * jax.lax.rsqrt(ms - mu * mu + 1e-5) * g + b

    def mha(q_rows, kv_rows, s_q, s_kv, wq, wk, wv, wo, bq, bk, bv, bo, masked):
        """Multi-head attention with the head split folded into the weights.

        q_rows: (n_blk*s_q, V); kv_rows: (n_blk*s_kv, V).  Projections run on
        the flattened rows (fills the MXU M dim); softmax is per batch element
        using 8-aligned row slices; the head merge is H accumulating
        (dv x V) MXU passes against wo[h] -- no lane relayouts anywhere.
        """
        xq = q_rows.astype(jnp.bfloat16)
        if kv_rows is q_rows:              # self-attention: reuse the one cast
            xkv = xq
        elif kv_rows.dtype == jnp.bfloat16:
            xkv = kv_rows
        else:
            xkv = kv_rows.astype(jnp.bfloat16)

        qs, ks, vs = [], [], []
        for h in range(n_heads):
            qs.append((jnp.dot(xq, wq[0, h], preferred_element_type=jnp.float32)
                       + bq[:, h * dk:(h + 1) * dk]).astype(jnp.bfloat16))
            ks.append((jnp.dot(xkv, wk[0, h], preferred_element_type=jnp.float32)
                       + bk[:, h * dk:(h + 1) * dk]).astype(jnp.bfloat16))
            vs.append((jnp.dot(xkv, wv[0, h], preferred_element_type=jnp.float32)
                       + bv[:, h * dv:(h + 1) * dv]).astype(jnp.bfloat16))

        outs = []
        for i in range(n_blk):                       # static, small unroll
            rq = slice(i * s_q, (i + 1) * s_q)       # 8-aligned row slices
            rk = slice(i * s_kv, (i + 1) * s_kv)
            amask = None
            if masked:
                pad_row = pad_ref[pl.ds(b0 + i, 1), :]        # (1, s_kv)
                amask = causal_add + pad_row
            acc = jnp.zeros((s_q, vdim), jnp.float32)
            for h in range(n_heads):
                s = jax.lax.dot_general(                      # 'qd,kd->qk'
                    qs[h][rq], ks[h][rk], (((1,), (1,)), ((), ())),
                    preferred_element_type=jnp.float32)
                if amask is not None:
                    s = s + amask
                s = s - jnp.max(s, axis=-1, keepdims=True)
                p = jnp.exp(s)
                p = p * pl.reciprocal(jnp.sum(p, axis=-1, keepdims=True),
                                      approx=True)
                o = jnp.dot(p.astype(jnp.bfloat16), vs[h][rk],
                            preferred_element_type=jnp.float32)   # (s_q, dv)
                acc = acc + jnp.dot(o.astype(jnp.bfloat16), wo[0, h],
                                    preferred_element_type=jnp.float32)
            outs.append(acc)
        return jnp.concatenate(outs, axis=0) + bo    # (n_blk*s_q, V)

    # --- self attention (scale folded into wq0/bq0) + skip & LN ---
    a0 = mha(x, x, S, S, wq0, wk0, wv0, wo0, bq0, bk0, bv0, bo0, masked=True)
    x = layer_norm(a0 + x, g0, be0)

    # --- cross attention over encoder memory + skip & LN ---
    # (per-layer weights -> memory K/V are projected per layer; the memory
    #  block itself is fetched once per batch block since its index map does
    #  not change along the layer axis.)
    a1 = mha(x, mem_ref[...], S, M, wq1, wk1, wv1, wo1, bq1, bk1, bv1, bo1,
             masked=False)
    x = layer_norm(a1 + x, g1, be1)

    # --- FFN (Linear -> ReLU -> Linear) + skip & LN ---
    xb = x.astype(jnp.bfloat16)
    hdn = jnp.maximum(
        jnp.dot(xb, w1[0], preferred_element_type=jnp.float32) + b1, 0.0)
    f = jnp.dot(hdn.astype(jnp.bfloat16), w2[0],
                preferred_element_type=jnp.float32) + b2
    x = layer_norm(f + x, g2, be2)

    out_ref[...] = x.astype(out_ref.dtype)   # carry to the next layer


# -----------------------------------------------------------------------------
# Generation-aware VMEM budget.
# -----------------------------------------------------------------------------
def _pick_vmem_limit_bytes():
    try:
        cap = int(getattr(pltpu.get_tpu_info(), "vmem_capacity_bytes", 0))
    except Exception:
        cap = 0
    if cap >= 100 * 1024 * 1024:
        return 100 * 1024 * 1024          # v5e/v6e: allow big resident tiles
    return 48 * 1024 * 1024               # v7x-class (64 MiB) or unknown


# -----------------------------------------------------------------------------
# Wrapper: TransformerDecoder.forward as ONE fused pallas_call.
#   params_list: list of per-layer parameter dicts (len == num_layers).
# -----------------------------------------------------------------------------
def transformer_decoder_forward(tgt, memory, params_list, n_heads,
                                causal=False, tgt_key_padding_mask=None,
                                batch_block=None):
    B, S, V = tgt.shape
    _, M, _ = memory.shape
    L = len(params_list)
    kdim = params_list[0]["wq0"].shape[1]
    ff = params_list[0]["w1"].shape[1]
    dk, dv = kdim // n_heads, V // n_heads
    scale = 1.0 / math.sqrt(dk)

    if batch_block is None:
        # fill MXU rows (aim ~>=128) without huge blocks; must divide B.
        batch_block = 1
        for cand in range(1, B + 1):
            if B % cand == 0 and cand * S <= 1024:
                batch_block = cand
    assert B % batch_block == 0
    nb = batch_block

    # ---- stack weights per layer (leading L axis) and fold the head split ----
    def stack(name, s=1.0):
        return jnp.stack([p[name] for p in params_list], axis=0) * s

    def per_head_in(name, d_out, s=1.0):      # (L, V, H*d) -> (L, H, V, d)
        w = stack(name, s).reshape(L, V, n_heads, d_out)
        return jnp.transpose(w, (0, 2, 1, 3)).astype(jnp.bfloat16)

    def per_head_out(name):                   # (L, H*dv, V) -> (L, H, dv, V)
        return stack(name).reshape(L, n_heads, dv, V).astype(jnp.bfloat16)

    weights = [
        per_head_in("wq0", dk, scale), per_head_in("wk0", dk),
        per_head_in("wv0", dv), per_head_out("wo0"),
        per_head_in("wq1", dk, scale), per_head_in("wk1", dk),
        per_head_in("wv1", dv), per_head_out("wo1"),
        stack("w1").astype(jnp.bfloat16), stack("w2").astype(jnp.bfloat16),
    ]

    # ---- pack all small vectors into one (L, 16, Pmax) f32 array ----
    pmax = ((max(kdim, V, ff) + 127) // 128) * 128

    def row(p, name, s=1.0):
        v = (p[name].reshape(-1) * s).astype(jnp.float32)
        return jnp.pad(v, (0, pmax - v.shape[0]))

    small = jnp.stack([
        jnp.stack([row(p, "bq0", scale), row(p, "bk0"), row(p, "bv0"),
                   row(p, "bo0"), row(p, "bq1", scale), row(p, "bk1"),
                   row(p, "bv1"), row(p, "bo1"), row(p, "b1"), row(p, "b2"),
                   row(p, "g0"), row(p, "be0"), row(p, "g1"), row(p, "be1"),
                   row(p, "g2"), row(p, "be2")])
        for p in params_list])                                   # (L, 16, Pmax)

    # ---- additive key-padding rows (the only self-mask data that is DMA'd) ----
    if tgt_key_padding_mask is not None:
        pad = jnp.where(tgt_key_padding_mask, -1e9, 0.0).astype(jnp.float32)
    else:
        pad = jnp.zeros((B, S), jnp.float32)

    # Flatten batch/seq so projections & FFN see lane-dense (rows, V) slabs.
    tgt2d = tgt.reshape(B * S, V)
    mem2d = memory.reshape(B * M, V).astype(jnp.bfloat16)   # read-only -> bf16

    kernel = functools.partial(_decoder_stack_kernel, n_heads, nb, S, M,
                               dk, dv, V, ff, causal)

    def wspec(arr):
        nd = arr.ndim
        return pl.BlockSpec((1,) + arr.shape[1:],
                            lambda b, l, _nd=nd: (l,) + (0,) * (_nd - 1))

    in_specs = [
        pl.BlockSpec((nb * S, V), lambda b, l: (b, 0)),   # tgt rows (layer-0)
        pl.BlockSpec((nb * M, V), lambda b, l: (b, 0)),   # encoder memory rows
        pl.BlockSpec((B, S), lambda b, l: (0, 0)),        # additive pad rows
    ] + [wspec(w) for w in weights] + [wspec(small)]

    out2d = pl.pallas_call(
        kernel,
        out_shape=jax.ShapeDtypeStruct((B * S, V), tgt.dtype),
        grid=(B // nb, L),
        in_specs=in_specs,
        out_specs=pl.BlockSpec((nb * S, V), lambda b, l: (b, 0)),
        compiler_params=pltpu.CompilerParams(
            # batch-block axis "parallel" (v7x megacore; keep its extent even),
            # layer axis "arbitrary" (output block resident across layers).
            dimension_semantics=("parallel", "arbitrary"),
            vmem_limit_bytes=_pick_vmem_limit_bytes()),
    )(tgt2d, mem2d, pad, *weights, small)
    return out2d.reshape(B, S, V)


# -----------------------------------------------------------------------------
# Deterministic parameter init for ONE layer
# (shapes from TransformerDecoderLayer.__init__).
# -----------------------------------------------------------------------------
def init_layer_params(key, kdim, vdim, n_heads, forward_expansion):
    ff = forward_expansion * vdim
    w_shapes = {
        "wq0": (vdim, kdim), "wk0": (vdim, kdim), "wv0": (vdim, vdim),
        "wo0": (vdim, vdim),
        "wq1": (vdim, kdim), "wk1": (vdim, kdim), "wv1": (vdim, vdim),
        "wo1": (vdim, vdim),
        "w1": (vdim, ff), "w2": (ff, vdim),
    }
    b_shapes = {
        "bq0": kdim, "bk0": kdim, "bv0": vdim, "bo0": vdim,
        "bq1": kdim, "bk1": kdim, "bv1": vdim, "bo1": vdim,
        "b1": ff, "b2": vdim,
    }
    keys = iter(jax.random.split(key, len(w_shapes) + len(b_shapes)))
    p = {}
    for name, shp in w_shapes.items():
        p[name] = jax.random.normal(next(keys), shp, jnp.float32) / math.sqrt(shp[0])
    for name, n in b_shapes.items():
        p[name] = 0.02 * jax.random.normal(next(keys), (1, n), jnp.float32)
    for name in ("g0", "g1", "g2"):
        p[name] = jnp.ones((1, vdim), jnp.float32)
    for name in ("be0", "be1", "be2"):
        p[name] = jnp.zeros((1, vdim), jnp.float32)
    return p


# -----------------------------------------------------------------------------
# Pure-JAX (f32) reference for the correctness check.
# -----------------------------------------------------------------------------
def _ref_layer(tgt, memory, mask, p, n_heads):
    def mha(qx, kvx, wq, bq, wk, bk, wv, bv, wo, bo, m):
        q = qx @ wq + bq
        k = kvx @ wk + bk
        v = kvx @ wv + bv
        B, Sq, K = q.shape
        Sk = k.shape[1]
        dk, dv = K // n_heads, v.shape[2] // n_heads
        qh = q.reshape(B, Sq, n_heads, dk)
        kh = k.reshape(B, Sk, n_heads, dk)
        vh = v.reshape(B, Sk, n_heads, dv)
        s = jnp.einsum("bqhd,bkhd->bhqk", qh, kh) / math.sqrt(dk)
        if m is not None:
            s = s + m[:, None, :, :]
        a = jax.nn.softmax(s, axis=-1)
        o = jnp.einsum("bhqk,bkhd->bqhd", a, vh).reshape(B, Sq, n_heads * dv)
        return o @ wo + bo

    def ln(x, g, b):
        mu = x.mean(-1, keepdims=True)
        var = ((x - mu) ** 2).mean(-1, keepdims=True)
        return (x - mu) / jnp.sqrt(var + 1e-5) * g + b

    x = tgt
    a0 = mha(x, x, p["wq0"], p["bq0"], p["wk0"], p["bk0"], p["wv0"], p["bv0"],
             p["wo0"], p["bo0"], mask)
    x = ln(a0 + x, p["g0"], p["be0"])
    a1 = mha(x, memory, p["wq1"], p["bq1"], p["wk1"], p["bk1"], p["wv1"],
             p["bv1"], p["wo1"], p["bo1"], None)
    x = ln(a1 + x, p["g1"], p["be1"])
    h = jnp.maximum(x @ p["w1"] + p["b1"], 0.0)
    f = h @ p["w2"] + p["b2"]
    return ln(f + x, p["g2"], p["be2"])


if __name__ == "__main__":
    # Small, lane-dense shapes (vdim/kdim multiple of 128, S multiple of 8).
    B, S, M = 4, 8, 16
    kdim, vdim, n_heads, fe, num_layers = 128, 128, 4, 2, 2

    key = jax.random.PRNGKey(0)
    k_tgt, k_mem, k_par = jax.random.split(key, 3)
    tgt = jax.random.normal(k_tgt, (B, S, vdim), jnp.float32)
    memory = jax.random.normal(k_mem, (B, M, vdim), jnp.float32)

    # Distinct per-layer parameters (exercises the per-layer weight indexing;
    # deepcopy'd clones are the special case where all layers are identical).
    layer_keys = jax.random.split(k_par, num_layers)
    params_list = [init_layer_params(k, kdim, vdim, n_heads, fe)
                   for k in layer_keys]

    # causal self-attention mask (generated in-kernel) + boolean key padding
    # (last 2 positions of batch element 1 padded).
    key_pad = jnp.zeros((B, S), bool).at[1, S - 2:].set(True)

    out = transformer_decoder_forward(tgt, memory, params_list, n_heads,
                                      causal=True,
                                      tgt_key_padding_mask=key_pad,
                                      batch_block=2)
    out = jax.block_until_ready(out)

    # f32 reference (kernel uses bf16 MXU operands + approx reciprocal, so the
    # bound reflects ~0.4% relative error per matmul; 2x tighter than before).
    causal_add = jnp.where(jnp.tril(jnp.ones((S, S), bool)), 0.0, -1e9
                           ).astype(jnp.float32)
    mask_b = causal_add[None, :, :] + jnp.where(key_pad, -1e9, 0.0)[:, None, :]
    ref = tgt
    for p in params_list:
        ref = _ref_layer(ref, memory, mask_b, p, n_heads)
    err = float(jnp.max(jnp.abs(out - ref)))
    assert err < 5e-2, f"max abs err {err}"

    print("KERNEL_OK")
</pallas_src>

<mosaic_0001>
module attributes {stable_mosaic.version = 11 : i64} {
  func.func @_decoder_stack_kernel(%arg0: i32, %arg1: i32, %arg2: memref<16x128xf32, #tpu.memory_space<vmem>>, %arg3: memref<32x128xbf16, #tpu.memory_space<vmem>>, %arg4: memref<4x8xf32, #tpu.memory_space<vmem>>, %arg5: memref<1x4x128x32xbf16, #tpu.memory_space<vmem>>, %arg6: memref<1x4x128x32xbf16, #tpu.memory_space<vmem>>, %arg7: memref<1x4x128x32xbf16, #tpu.memory_space<vmem>>, %arg8: memref<1x4x32x128xbf16, #tpu.memory_space<vmem>>, %arg9: memref<1x4x128x32xbf16, #tpu.memory_space<vmem>>, %arg10: memref<1x4x128x32xbf16, #tpu.memory_space<vmem>>, %arg11: memref<1x4x128x32xbf16, #tpu.memory_space<vmem>>, %arg12: memref<1x4x32x128xbf16, #tpu.memory_space<vmem>>, %arg13: memref<1x128x256xbf16, #tpu.memory_space<vmem>>, %arg14: memref<1x256x128xbf16, #tpu.memory_space<vmem>>, %arg15: memref<1x16x256xf32, #tpu.memory_space<vmem>>, %arg16: memref<16x128xf32, #tpu.memory_space<vmem>>) attributes {dimension_semantics = [#tpu.dimension_semantics<parallel>, #tpu.dimension_semantics<arbitrary>], iteration_bounds = array<i64: 2, 2>, scalar_prefetch = 0 : i64, scratch_operands = 0 : i64, tpu.core_type = #tpu.core_type<tc>, window_params = [{transform_indices = @transform_0, window_bounds = array<i64: 16, 128>}, {transform_indices = @transform_1, window_bounds = array<i64: 32, 128>}, {pipeline_mode = #tpu.pipeline_mode<synchronous>, transform_indices = @transform_2, window_bounds = array<i64: 4, 8>}, {transform_indices = @transform_3, window_bounds = array<i64: 1, 4, 128, 32>}, {transform_indices = @transform_4, window_bounds = array<i64: 1, 4, 128, 32>}, {transform_indices = @transform_5, window_bounds = array<i64: 1, 4, 128, 32>}, {transform_indices = @transform_6, window_bounds = array<i64: 1, 4, 32, 128>}, {transform_indices = @transform_7, window_bounds = array<i64: 1, 4, 128, 32>}, {transform_indices = @transform_8, window_bounds = array<i64: 1, 4, 128, 32>}, {transform_indices = @transform_9, window_bounds = array<i64: 1, 4, 128, 32>}, {transform_indices = @transform_10, window_bounds = array<i64: 1, 4, 32, 128>}, {transform_indices = @transform_11, window_bounds = array<i64: 1, 128, 256>}, {transform_indices = @transform_12, window_bounds = array<i64: 1, 256, 128>}, {transform_indices = @transform_13, window_bounds = array<i64: 1, 16, 256>}, {transform_indices = @transform_14, window_bounds = array<i64: 16, 128>}]} {
    %c2_i32 = arith.constant 2 : i32
    %0 = arith.muli %arg0, %c2_i32 : i32
    %c0 = arith.constant 0 : index
    %c0_0 = arith.constant 0 : index
    %c0_1 = arith.constant 0 : index
    %1 = vector.load %arg15[%c0, %c0_0, %c0_1] : memref<1x16x256xf32, #tpu.memory_space<vmem>>, vector<1x16x256xf32>
    %2 = vector.shape_cast %1 : vector<1x16x256xf32> to vector<16x256xf32>
    %3 = vector.extract_strided_slice %2 {offsets = [0, 0], sizes = [1, 128], strides = [1, 1]} : vector<16x256xf32> to vector<1x128xf32>
    %4 = vector.extract_strided_slice %2 {offsets = [1, 0], sizes = [1, 128], strides = [1, 1]} : vector<16x256xf32> to vector<1x128xf32>
    %5 = vector.extract_strided_slice %2 {offsets = [2, 0], sizes = [1, 128], strides = [1, 1]} : vector<16x256xf32> to vector<1x128xf32>
    %6 = vector.extract_strided_slice %2 {offsets = [3, 0], sizes = [1, 128], strides = [1, 1]} : vector<16x256xf32> to vector<1x128xf32>
    %7 = vector.extract_strided_slice %2 {offsets = [4, 0], sizes = [1, 128], strides = [1, 1]} : vector<16x256xf32> to vector<1x128xf32>
    %8 = vector.extract_strided_slice %2 {offsets = [5, 0], sizes = [1, 128], strides = [1, 1]} : vector<16x256xf32> to vector<1x128xf32>
    %9 = vector.extract_strided_slice %2 {offsets = [6, 0], sizes = [1, 128], strides = [1, 1]} : vector<16x256xf32> to vector<1x128xf32>
    %10 = vector.extract_strided_slice %2 {offsets = [7, 0], sizes = [1, 128], strides = [1, 1]} : vector<16x256xf32> to vector<1x128xf32>
    %11 = vector.extract_strided_slice %2 {offsets = [8, 0], sizes = [1, 256], strides = [1, 1]} : vector<16x256xf32> to vector<1x256xf32>
    %12 = vector.extract_strided_slice %2 {offsets = [9, 0], sizes = [1, 128], strides = [1, 1]} : vector<16x256xf32> to vector<1x128xf32>
    %13 = vector.extract_strided_slice %2 {offsets = [10, 0], sizes = [1, 128], strides = [1, 1]} : vector<16x256xf32> to vector<1x128xf32>
    %14 = vector.extract_strided_slice %2 {offsets = [11, 0], sizes = [1, 128], strides = [1, 1]} : vector<16x256xf32> to vector<1x128xf32>
    %15 = vector.extract_strided_slice %2 {offsets = [12, 0], sizes = [1, 128], strides = [1, 1]} : vector<16x256xf32> to vector<1x128xf32>
    %16 = vector.extract_strided_slice %2 {offsets = [13, 0], sizes = [1, 128], strides = [1, 1]} : vector<16x256xf32> to vector<1x128xf32>
    %17 = vector.extract_strided_slice %2 {offsets = [14, 0], sizes = [1, 128], strides = [1, 1]} : vector<16x256xf32> to vector<1x128xf32>
    %18 = vector.extract_strided_slice %2 {offsets = [15, 0], sizes = [1, 128], strides = [1, 1]} : vector<16x256xf32> to vector<1x128xf32>
    %c0_i32 = arith.constant 0 : i32
    %19 = arith.cmpi eq, %arg1, %c0_i32 : i32
    %20 = arith.extui %19 : i1 to i32
    %c0_i32_2 = arith.constant 0 : i32
    %21 = arith.cmpi ne, %20, %c0_i32_2 : i32
    scf.if %21 {
      %c0_302 = arith.constant 0 : index
      %c0_303 = arith.constant 0 : index
      %648 = vector.load %arg2[%c0_302, %c0_303] : memref<16x128xf32, #tpu.memory_space<vmem>>, vector<16x128xf32>
      %c0_304 = arith.constant 0 : index
      %c0_305 = arith.constant 0 : index
      %649 = vector.load %arg16[%c0_304, %c0_305] : memref<16x128xf32, #tpu.memory_space<vmem>>, vector<16x128xf32>
      tpu.vector_store %arg16[%c0_304, %c0_305], %648 {strides = array<i32>} : memref<16x128xf32, #tpu.memory_space<vmem>>, vector<16x128xf32>,
    } else {
    }
    %c0_3 = arith.constant 0 : index
    %c0_4 = arith.constant 0 : index
    %22 = vector.load %arg16[%c0_3, %c0_4] : memref<16x128xf32, #tpu.memory_space<vmem>>, vector<16x128xf32>
    %23 = tpu.iota {dimensions = array<i32: 0>} : vector<8x8xi32>
    %24 = tpu.iota {dimensions = array<i32: 1>} : vector<8x8xi32>
    %25 = arith.cmpi sge, %23, %24 : vector<8x8xi32>
    %cst = arith.constant 0.000000e+00 : f32
    %cst_5 = arith.constant -1.000000e+09 : f32
    %26 = vector.broadcast %cst : f32 to vector<8x8xf32>
    %27 = vector.broadcast %cst_5 : f32 to vector<8x8xf32>
    %28 = arith.select %25, %26, %27 : vector<8x8xi1>, vector<8x8xf32>
    %29 = arith.truncf %22 : vector<16x128xf32> to vector<16x128xbf16>
    %c0_6 = arith.constant 0 : index
    %c0_7 = arith.constant 0 : index
    %c0_8 = arith.constant 0 : index
    %c0_9 = arith.constant 0 : index
    %30 = vector.load %arg5[%c0_6, %c0_7, %c0_8, %c0_9] : memref<1x4x128x32xbf16, #tpu.memory_space<vmem>>, vector<1x1x128x32xbf16>
    %31 = vector.shape_cast %30 : vector<1x1x128x32xbf16> to vector<128x32xbf16>
    %cst_10 = arith.constant dense<0.000000e+00> : vector<16x32xf32>
    %32 = tpu.matmul %29, %31, %cst_10 {dimension_numbers = #tpu.dot_dimension_numbers<[1], [0], [0], [1], [0, 0, 1, 1], [], []>} : vector<16x128xbf16>, vector<128x32xbf16>, vector<16x32xf32> -> vector<16x32xf32>
    %33 = vector.extract_strided_slice %3 {offsets = [0, 0], sizes = [1, 32], strides = [1, 1]} : vector<1x128xf32> to vector<1x32xf32>
    %34 = vector.broadcast %33 : vector<1x32xf32> to vector<16x32xf32>
    %35 = arith.addf %32, %34 : vector<16x32xf32>
    %36 = arith.truncf %35 : vector<16x32xf32> to vector<16x32xbf16>
    %c0_11 = arith.constant 0 : index
    %c0_12 = arith.constant 0 : index
    %c0_13 = arith.constant 0 : index
    %c0_14 = arith.constant 0 : index
    %37 = vector.load %arg6[%c0_11, %c0_12, %c0_13, %c0_14] : memref<1x4x128x32xbf16, #tpu.memory_space<vmem>>, vector<1x1x128x32xbf16>
    %38 = vector.shape_cast %37 : vector<1x1x128x32xbf16> to vector<128x32xbf16>
    %cst_15 = arith.constant dense<0.000000e+00> : vector<16x32xf32>
    %39 = tpu.matmul %29, %38, %cst_15 {dimension_numbers = #tpu.dot_dimension_numbers<[1], [0], [0], [1], [0, 0, 1, 1], [], []>} : vector<16x128xbf16>, vector<128x32xbf16>, vector<16x32xf32> -> vector<16x32xf32>
    %40 = vector.extract_strided_slice %4 {offsets = [0, 0], sizes = [1, 32], strides = [1, 1]} : vector<1x128xf32> to vector<1x32xf32>
    %41 = vector.broadcast %40 : vector<1x32xf32> to vector<16x32xf32>
    %42 = arith.addf %39, %41 : vector<16x32xf32>
    %43 = arith.truncf %42 : vector<16x32xf32> to vector<16x32xbf16>
    %c0_16 = arith.constant 0 : index
    %c0_17 = arith.constant 0 : index
    %c0_18 = arith.constant 0 : index
    %c0_19 = arith.constant 0 : index
    %44 = vector.load %arg7[%c0_16, %c0_17, %c0_18, %c0_19] : memref<1x4x128x32xbf16, #tpu.memory_space<vmem>>, vector<1x1x128x32xbf16>
    %45 = vector.shape_cast %44 : vector<1x1x128x32xbf16> to vector<128x32xbf16>
    %cst_20 = arith.constant dense<0.000000e+00> : vector<16x32xf32>
    %46 = tpu.matmul %29, %45, %cst_20 {dimension_numbers = #tpu.dot_dimension_numbers<[1], [0], [0], [1], [0, 0, 1, 1], [], []>} : vector<16x128xbf16>, vector<128x32xbf16>, vector<16x32xf32> -> vector<16x32xf32>
    %47 = vector.extract_strided_slice %5 {offsets = [0, 0], sizes = [1, 32], strides = [1, 1]} : vector<1x128xf32> to vector<1x32xf32>
    %48 = vector.broadcast %47 : vector<1x32xf32> to vector<16x32xf32>
    %49 = arith.addf %46, %48 : vector<16x32xf32>
    %50 = arith.truncf %49 : vector<16x32xf32> to vector<16x32xbf16>
    %c0_21 = arith.constant 0 : index
    %c1 = arith.constant 1 : index
    %c0_22 = arith.constant 0 : index
    %c0_23 = arith.constant 0 : index
    %51 = vector.load %arg5[%c0_21, %c1, %c0_22, %c0_23] : memref<1x4x128x32xbf16, #tpu.memory_space<vmem>>, vector<1x1x128x32xbf16>
    %52 = vector.shape_cast %51 : vector<1x1x128x32xbf16> to vector<128x32xbf16>
    %cst_24 = arith.constant dense<0.000000e+00> : vector<16x32xf32>
    %53 = tpu.matmul %29, %52, %cst_24 {dimension_numbers = #tpu.dot_dimension_numbers<[1], [0], [0], [1], [0, 0, 1, 1], [], []>} : vector<16x128xbf16>, vector<128x32xbf16>, vector<16x32xf32> -> vector<16x32xf32>
    %54 = vector.extract_strided_slice %3 {offsets = [0, 32], sizes = [1, 32], strides = [1, 1]} : vector<1x128xf32> to vector<1x32xf32>
    %55 = vector.broadcast %54 : vector<1x32xf32> to vector<16x32xf32>
    %56 = arith.addf %53, %55 : vector<16x32xf32>
    %57 = arith.truncf %56 : vector<16x32xf32> to vector<16x32xbf16>
    %c0_25 = arith.constant 0 : index
    %c1_26 = arith.constant 1 : index
    %c0_27 = arith.constant 0 : index
    %c0_28 = arith.constant 0 : index
    %58 = vector.load %arg6[%c0_25, %c1_26, %c0_27, %c0_28] : memref<1x4x128x32xbf16, #tpu.memory_space<vmem>>, vector<1x1x128x32xbf16>
    %59 = vector.shape_cast %58 : vector<1x1x128x32xbf16> to vector<128x32xbf16>
    %cst_29 = arith.constant dense<0.000000e+00> : vector<16x32xf32>
    %60 = tpu.matmul %29, %59, %cst_29 {dimension_numbers = #tpu.dot_dimension_numbers<[1], [0], [0], [1], [0, 0, 1, 1], [], []>} : vector<16x128xbf16>, vector<128x32xbf16>, vector<16x32xf32> -> vector<16x32xf32>
    %61 = vector.extract_strided_slice %4 {offsets = [0, 32], sizes = [1, 32], strides = [1, 1]} : vector<1x128xf32> to vector<1x32xf32>
    %62 = vector.broadcast %61 : vector<1x32xf32> to vector<16x32xf32>
    %63 = arith.addf %60, %62 : vector<16x32xf32>
    %64 = arith.truncf %63 : vector<16x32xf32> to vector<16x32xbf16>
    %c0_30 = arith.constant 0 : index
    %c1_31 = arith.constant 1 : index
    %c0_32 = arith.constant 0 : index
    %c0_33 = arith.constant 0 : index
    %65 = vector.load %arg7[%c0_30, %c1_31, %c0_32, %c0_33] : memref<1x4x128x32xbf16, #tpu.memory_space<vmem>>, vector<1x1x128x32xbf16>
    %66 = vector.shape_cast %65 : vector<1x1x128x32xbf16> to vector<128x32xbf16>
    %cst_34 = arith.constant dense<0.000000e+00> : vector<16x32xf32>
    %67 = tpu.matmul %29, %66, %cst_34 {dimension_numbers = #tpu.dot_dimension_numbers<[1], [0], [0], [1], [0, 0, 1, 1], [], []>} : vector<16x128xbf16>, vector<128x32xbf16>, vector<16x32xf32> -> vector<16x32xf32>
    %68 = vector.extract_strided_slice %5 {offsets = [0, 32], sizes = [1, 32], strides = [1, 1]} : vector<1x128xf32> to vector<1x32xf32>
    %69 = vector.broadcast %68 : vector<1x32xf32> to vector<16x32xf32>
    %70 = arith.addf %67, %69 : vector<16x32xf32>
    %71 = arith.truncf %70 : vector<16x32xf32> to vector<16x32xbf16>
    %c0_35 = arith.constant 0 : index
    %c2 = arith.constant 2 : index
    %c0_36 = arith.constant 0 : index
    %c0_37 = arith.constant 0 : index
    %72 = vector.load %arg5[%c0_35, %c2, %c0_36, %c0_37] : memref<1x4x128x32xbf16, #tpu.memory_space<vmem>>, vector<1x1x128x32xbf16>
    %73 = vector.shape_cast %72 : vector<1x1x128x32xbf16> to vector<128x32xbf16>
    %cst_38 = arith.constant dense<0.000000e+00> : vector<16x32xf32>
    %74 = tpu.matmul %29, %73, %cst_38 {dimension_numbers = #tpu.dot_dimension_numbers<[1], [0], [0], [1], [0, 0, 1, 1], [], []>} : vector<16x128xbf16>, vector<128x32xbf16>, vector<16x32xf32> -> vector<16x32xf32>
    %75 = vector.extract_strided_slice %3 {offsets = [0, 64], sizes = [1, 32], strides = [1, 1]} : vector<1x128xf32> to vector<1x32xf32>
    %76 = vector.broadcast %75 : vector<1x32xf32> to vector<16x32xf32>
    %77 = arith.addf %74, %76 : vector<16x32xf32>
    %78 = arith.truncf %77 : vector<16x32xf32> to vector<16x32xbf16>
    %c0_39 = arith.constant 0 : index
    %c2_40 = arith.constant 2 : index
    %c0_41 = arith.constant 0 : index
    %c0_42 = arith.constant 0 : index
    %79 = vector.load %arg6[%c0_39, %c2_40, %c0_41, %c0_42] : memref<1x4x128x32xbf16, #tpu.memory_space<vmem>>, vector<1x1x128x32xbf16>
    %80 = vector.shape_cast %79 : vector<1x1x128x32xbf16> to vector<128x32xbf16>
    %cst_43 = arith.constant dense<0.000000e+00> : vector<16x32xf32>
    %81 = tpu.matmul %29, %80, %cst_43 {dimension_numbers = #tpu.dot_dimension_numbers<[1], [0], [0], [1], [0, 0, 1, 1], [], []>} : vector<16x128xbf16>, vector<128x32xbf16>, vector<16x32xf32> -> vector<16x32xf32>
    %82 = vector.extract_strided_slice %4 {offsets = [0, 64], sizes = [1, 32], strides = [1, 1]} : vector<1x128xf32> to vector<1x32xf32>
    %83 = vector.broadcast %82 : vector<1x32xf32> to vector<16x32xf32>
    %84 = arith.addf %81, %83 : vector<16x32xf32>
    %85 = arith.truncf %84 : vector<16x32xf32> to vector<16x32xbf16>
    %c0_44 = arith.constant 0 : index
    %c2_45 = arith.constant 2 : index
    %c0_46 = arith.constant 0 : index
    %c0_47 = arith.constant 0 : index
    %86 = vector.load %arg7[%c0_44, %c2_45, %c0_46, %c0_47] : memref<1x4x128x32xbf16, #tpu.memory_space<vmem>>, vector<1x1x128x32xbf16>
    %87 = vector.shape_cast %86 : vector<1x1x128x32xbf16> to vector<128x32xbf16>
    %cst_48 = arith.constant dense<0.000000e+00> : vector<16x32xf32>
    %88 = tpu.matmul %29, %87, %cst_48 {dimension_numbers = #tpu.dot_dimension_numbers<[1], [0], [0], [1], [0, 0, 1, 1], [], []>} : vector<16x128xbf16>, vector<128x32xbf16>, vector<16x32xf32> -> vector<16x32xf32>
    %89 = vector.extract_strided_slice %5 {offsets = [0, 64], sizes = [1, 32], strides = [1, 1]} : vector<1x128xf32> to vector<1x32xf32>
    %90 = vector.broadcast %89 : vector<1x32xf32> to vector<16x32xf32>
    %91 = arith.addf %88, %90 : vector<16x32xf32>
    %92 = arith.truncf %91 : vector<16x32xf32> to vector<16x32xbf16>
    %c0_49 = arith.constant 0 : index
    %c3 = arith.constant 3 : index
    %c0_50 = arith.constant 0 : index
    %c0_51 = arith.constant 0 : index
    %93 = vector.load %arg5[%c0_49, %c3, %c0_50, %c0_51] : memref<1x4x128x32xbf16, #tpu.memory_space<vmem>>, vector<1x1x128x32xbf16>
    %94 = vector.shape_cast %93 : vector<1x1x128x32xbf16> to vector<128x32xbf16>
    %cst_52 = arith.constant dense<0.000000e+00> : vector<16x32xf32>
    %95 = tpu.matmul %29, %94, %cst_52 {dimension_numbers = #tpu.dot_dimension_numbers<[1], [0], [0], [1], [0, 0, 1, 1], [], []>} : vector<16x128xbf16>, vector<128x32xbf16>, vector<16x32xf32> -> vector<16x32xf32>
    %96 = vector.extract_strided_slice %3 {offsets = [0, 96], sizes = [1, 32], strides = [1, 1]} : vector<1x128xf32> to vector<1x32xf32>
    %97 = vector.broadcast %96 : vector<1x32xf32> to vector<16x32xf32>
    %98 = arith.addf %95, %97 : vector<16x32xf32>
    %99 = arith.truncf %98 : vector<16x32xf32> to vector<16x32xbf16>
    %c0_53 = arith.constant 0 : index
    %c3_54 = arith.constant 3 : index
    %c0_55 = arith.constant 0 : index
    %c0_56 = arith.constant 0 : index
    %100 = vector.load %arg6[%c0_53, %c3_54, %c0_55, %c0_56] : memref<1x4x128x32xbf16, #tpu.memory_space<vmem>>, vector<1x1x128x32xbf16>
    %101 = vector.shape_cast %100 : vector<1x1x128x32xbf16> to vector<128x32xbf16>
    %cst_57 = arith.constant dense<0.000000e+00> : vector<16x32xf32>
    %102 = tpu.matmul %29, %101, %cst_57 {dimension_numbers = #tpu.dot_dimension_numbers<[1], [0], [0], [1], [0, 0, 1, 1], [], []>} : vector<16x128xbf16>, vector<128x32xbf16>, vector<16x32xf32> -> vector<16x32xf32>
    %103 = vector.extract_strided_slice %4 {offsets = [0, 96], sizes = [1, 32], strides = [1, 1]} : vector<1x128xf32> to vector<1x32xf32>
    %104 = vector.broadcast %103 : vector<1x32xf32> to vector<16x32xf32>
    %105 = arith.addf %102, %104 : vector<16x32xf32>
    %106 = arith.truncf %105 : vector<16x32xf32> to vector<16x32xbf16>
    %c0_58 = arith.constant 0 : index
    %c3_59 = arith.constant 3 : index
    %c0_60 = arith.constant 0 : index
    %c0_61 = arith.constant 0 : index
    %107 = vector.load %arg7[%c0_58, %c3_59, %c0_60, %c0_61] : memref<1x4x128x32xbf16, #tpu.memory_space<vmem>>, vector<1x1x128x32xbf16>
    %108 = vector.shape_cast %107 : vector<1x1x128x32xbf16> to vector<128x32xbf16>
    %cst_62 = arith.constant dense<0.000000e+00> : vector<16x32xf32>
    %109 = tpu.matmul %29, %108, %cst_62 {dimension_numbers = #tpu.dot_dimension_numbers<[1], [0], [0], [1], [0, 0, 1, 1], [], []>} : vector<16x128xbf16>, vector<128x32xbf16>, vector<16x32xf32> -> vector<16x32xf32>
    %110 = vector.extract_strided_slice %5 {offsets = [0, 96], sizes = [1, 32], strides = [1, 1]} : vector<1x128xf32> to vector<1x32xf32>
    %111 = vector.broadcast %110 : vector<1x32xf32> to vector<16x32xf32>
    %112 = arith.addf %109, %111 : vector<16x32xf32>
    %113 = arith.truncf %112 : vector<16x32xf32> to vector<16x32xbf16>
    %c0_i32_63 = arith.constant 0 : i32
    %114 = arith.addi %0, %c0_i32_63 : i32
    %115 = arith.index_cast %114 : i32 to index
    %c0_64 = arith.constant 0 : index
    %116 = vector.load %arg4[%115, %c0_64] : memref<4x8xf32, #tpu.memory_space<vmem>>, vector<1x8xf32>
    %117 = vector.broadcast %116 : vector<1x8xf32> to vector<8x8xf32>
    %118 = arith.addf %28, %117 : vector<8x8xf32>
    %cst_65 = arith.constant 0.000000e+00 : f32
    %119 = vector.broadcast %cst_65 : f32 to vector<8x128xf32>
    %120 = vector.extract_strided_slice %36 {offsets = [0, 0], sizes = [8, 32], strides = [1, 1]} : vector<16x32xbf16> to vector<8x32xbf16>
    %121 = vector.extract_strided_slice %43 {offsets = [0, 0], sizes = [8, 32], strides = [1, 1]} : vector<16x32xbf16> to vector<8x32xbf16>
    %cst_66 = arith.constant dense<0.000000e+00> : vector<8x8xf32>
    %122 = tpu.matmul %120, %121, %cst_66 {dimension_numbers = #tpu.dot_dimension_numbers<[1], [1], [0], [0], [0, 0, 1, 0], [], []>} : vector<8x32xbf16>, vector<8x32xbf16>, vector<8x8xf32> -> vector<8x8xf32>
    %123 = arith.addf %122, %118 : vector<8x8xf32>
    %cst_67 = arith.constant dense<0xFF800000> : vector<8xf32>
    %124 = vector.multi_reduction <maximumf>, %123, %cst_67 [1] : vector<8x8xf32> to vector<8xf32>
    %125 = vector.shape_cast %124 : vector<8xf32> to vector<8x1xf32>
    %126 = vector.broadcast %125 : vector<8x1xf32> to vector<8x8xf32>
    %127 = arith.subf %123, %126 : vector<8x8xf32>
    %128 = math.exp %127 : vector<8x8xf32>
    %cst_68 = arith.constant dense<0.000000e+00> : vector<8xf32>
    %129 = vector.multi_reduction <add>, %128, %cst_68 [1] : vector<8x8xf32> to vector<8xf32>
    %130 = vector.shape_cast %129 : vector<8xf32> to vector<8x1xf32>
    %131 = tpu.reciprocal %130 {approx = true} : vector<8x1xf32> -> vector<8x1xf32>
    %132 = vector.broadcast %131 : vector<8x1xf32> to vector<8x8xf32>
    %133 = arith.mulf %128, %132 : vector<8x8xf32>
    %134 = arith.truncf %133 : vector<8x8xf32> to vector<8x8xbf16>
    %135 = vector.extract_strided_slice %50 {offsets = [0, 0], sizes = [8, 32], strides = [1, 1]} : vector<16x32xbf16> to vector<8x32xbf16>
    %cst_69 = arith.constant dense<0.000000e+00> : vector<8x32xf32>
    %136 = tpu.matmul %134, %135, %cst_69 {dimension_numbers = #tpu.dot_dimension_numbers<[1], [0], [0], [1], [0, 0, 1, 1], [], []>} : vector<8x8xbf16>, vector<8x32xbf16>, vector<8x32xf32> -> vector<8x32xf32>
    %137 = arith.truncf %136 : vector<8x32xf32> to vector<8x32xbf16>
    %c0_70 = arith.constant 0 : index
    %c0_71 = arith.constant 0 : index
    %c0_72 = arith.constant 0 : index
    %c0_73 = arith.constant 0 : index
    %138 = vector.load %arg8[%c0_70, %c0_71, %c0_72, %c0_73] : memref<1x4x32x128xbf16, #tpu.memory_space<vmem>>, vector<1x1x32x128xbf16>
    %139 = vector.shape_cast %138 : vector<1x1x32x128xbf16> to vector<32x128xbf16>
    %cst_74 = arith.constant dense<0.000000e+00> : vector<8x128xf32>
    %140 = tpu.matmul %137, %139, %cst_74 {dimension_numbers = #tpu.dot_dimension_numbers<[1], [0], [0], [1], [0, 0, 1, 1], [], []>} : vector<8x32xbf16>, vector<32x128xbf16>, vector<8x128xf32> -> vector<8x128xf32>
    %141 = arith.addf %119, %140 : vector<8x128xf32>
    %142 = vector.extract_strided_slice %57 {offsets = [0, 0], sizes = [8, 32], strides = [1, 1]} : vector<16x32xbf16> to vector<8x32xbf16>
    %143 = vector.extract_strided_slice %64 {offsets = [0, 0], sizes = [8, 32], strides = [1, 1]} : vector<16x32xbf16> to vector<8x32xbf16>
    %cst_75 = arith.constant dense<0.000000e+00> : vector<8x8xf32>
    %144 = tpu.matmul %142, %143, %cst_75 {dimension_numbers = #tpu.dot_dimension_numbers<[1], [1], [0], [0], [0, 0, 1, 0], [], []>} : vector<8x32xbf16>, vector<8x32xbf16>, vector<8x8xf32> -> vector<8x8xf32>
    %145 = arith.addf %144, %118 : vector<8x8xf32>
    %cst_76 = arith.constant dense<0xFF800000> : vector<8xf32>
    %146 = vector.multi_reduction <maximumf>, %145, %cst_76 [1] : vector<8x8xf32> to vector<8xf32>
    %147 = vector.shape_cast %146 : vector<8xf32> to vector<8x1xf32>
    %148 = vector.broadcast %147 : vector<8x1xf32> to vector<8x8xf32>
    %149 = arith.subf %145, %148 : vector<8x8xf32>
    %150 = math.exp %149 : vector<8x8xf32>
    %cst_77 = arith.constant dense<0.000000e+00> : vector<8xf32>
    %151 = vector.multi_reduction <add>, %150, %cst_77 [1] : vector<8x8xf32> to vector<8xf32>
    %152 = vector.shape_cast %151 : vector<8xf32> to vector<8x1xf32>
    %153 = tpu.reciprocal %152 {approx = true} : vector<8x1xf32> -> vector<8x1xf32>
    %154 = vector.broadcast %153 : vector<8x1xf32> to vector<8x8xf32>
    %155 = arith.mulf %150, %154 : vector<8x8xf32>
    %156 = arith.truncf %155 : vector<8x8xf32> to vector<8x8xbf16>
    %157 = vector.extract_strided_slice %71 {offsets = [0, 0], sizes = [8, 32], strides = [1, 1]} : vector<16x32xbf16> to vector<8x32xbf16>
    %cst_78 = arith.constant dense<0.000000e+00> : vector<8x32xf32>
    %158 = tpu.matmul %156, %157, %cst_78 {dimension_numbers = #tpu.dot_dimension_numbers<[1], [0], [0], [1], [0, 0, 1, 1], [], []>} : vector<8x8xbf16>, vector<8x32xbf16>, vector<8x32xf32> -> vector<8x32xf32>
    %159 = arith.truncf %158 : vector<8x32xf32> to vector<8x32xbf16>
    %c0_79 = arith.constant 0 : index
    %c1_80 = arith.constant 1 : index
    %c0_81 = arith.constant 0 : index
    %c0_82 = arith.constant 0 : index
    %160 = vector.load %arg8[%c0_79, %c1_80, %c0_81, %c0_82] : memref<1x4x32x128xbf16, #tpu.memory_space<vmem>>, vector<1x1x32x128xbf16>
    %161 = vector.shape_cast %160 : vector<1x1x32x128xbf16> to vector<32x128xbf16>
    %cst_83 = arith.constant dense<0.000000e+00> : vector<8x128xf32>
    %162 = tpu.matmul %159, %161, %cst_83 {dimension_numbers = #tpu.dot_dimension_numbers<[1], [0], [0], [1], [0, 0, 1, 1], [], []>} : vector<8x32xbf16>, vector<32x128xbf16>, vector<8x128xf32> -> vector<8x128xf32>
    %163 = arith.addf %141, %162 : vector<8x128xf32>
    %164 = vector.extract_strided_slice %78 {offsets = [0, 0], sizes = [8, 32], strides = [1, 1]} : vector<16x32xbf16> to vector<8x32xbf16>
    %165 = vector.extract_strided_slice %85 {offsets = [0, 0], sizes = [8, 32], strides = [1, 1]} : vector<16x32xbf16> to vector<8x32xbf16>
    %cst_84 = arith.constant dense<0.000000e+00> : vector<8x8xf32>
    %166 = tpu.matmul %164, %165, %cst_84 {dimension_numbers = #tpu.dot_dimension_numbers<[1], [1], [0], [0], [0, 0, 1, 0], [], []>} : vector<8x32xbf16>, vector<8x32xbf16>, vector<8x8xf32> -> vector<8x8xf32>
    %167 = arith.addf %166, %118 : vector<8x8xf32>
    %cst_85 = arith.constant dense<0xFF800000> : vector<8xf32>
    %168 = vector.multi_reduction <maximumf>, %167, %cst_85 [1] : vector<8x8xf32> to vector<8xf32>
    %169 = vector.shape_cast %168 : vector<8xf32> to vector<8x1xf32>
    %170 = vector.broadcast %169 : vector<8x1xf32> to vector<8x8xf32>
    %171 = arith.subf %167, %170 : vector<8x8xf32>
    %172 = math.exp %171 : vector<8x8xf32>
    %cst_86 = arith.constant dense<0.000000e+00> : vector<8xf32>
    %173 = vector.multi_reduction <add>, %172, %cst_86 [1] : vector<8x8xf32> to vector<8xf32>
    %174 = vector.shape_cast %173 : vector<8xf32> to vector<8x1xf32>
    %175 = tpu.reciprocal %174 {approx = true} : vector<8x1xf32> -> vector<8x1xf32>
    %176 = vector.broadcast %175 : vector<8x1xf32> to vector<8x8xf32>
    %177 = arith.mulf %172, %176 : vector<8x8xf32>
    %178 = arith.truncf %177 : vector<8x8xf32> to vector<8x8xbf16>
    %179 = vector.extract_strided_slice %92 {offsets = [0, 0], sizes = [8, 32], strides = [1, 1]} : vector<16x32xbf16> to vector<8x32xbf16>
    %cst_87 = arith.constant dense<0.000000e+00> : vector<8x32xf32>
    %180 = tpu.matmul %178, %179, %cst_87 {dimension_numbers = #tpu.dot_dimension_numbers<[1], [0], [0], [1], [0, 0, 1, 1], [], []>} : vector<8x8xbf16>, vector<8x32xbf16>, vector<8x32xf32> -> vector<8x32xf32>
    %181 = arith.truncf %180 : vector<8x32xf32> to vector<8x32xbf16>
    %c0_88 = arith.constant 0 : index
    %c2_89 = arith.constant 2 : index
    %c0_90 = arith.constant 0 : index
    %c0_91 = arith.constant 0 : index
    %182 = vector.load %arg8[%c0_88, %c2_89, %c0_90, %c0_91] : memref<1x4x32x128xbf16, #tpu.memory_space<vmem>>, vector<1x1x32x128xbf16>
    %183 = vector.shape_cast %182 : vector<1x1x32x128xbf16> to vector<32x128xbf16>
    %cst_92 = arith.constant dense<0.000000e+00> : vector<8x128xf32>
    %184 = tpu.matmul %181, %183, %cst_92 {dimension_numbers = #tpu.dot_dimension_numbers<[1], [0], [0], [1], [0, 0, 1, 1], [], []>} : vector<8x32xbf16>, vector<32x128xbf16>, vector<8x128xf32> -> vector<8x128xf32>
    %185 = arith.addf %163, %184 : vector<8x128xf32>
    %186 = vector.extract_strided_slice %99 {offsets = [0, 0], sizes = [8, 32], strides = [1, 1]} : vector<16x32xbf16> to vector<8x32xbf16>
    %187 = vector.extract_strided_slice %106 {offsets = [0, 0], sizes = [8, 32], strides = [1, 1]} : vector<16x32xbf16> to vector<8x32xbf16>
    %cst_93 = arith.constant dense<0.000000e+00> : vector<8x8xf32>
    %188 = tpu.matmul %186, %187, %cst_93 {dimension_numbers = #tpu.dot_dimension_numbers<[1], [1], [0], [0], [0, 0, 1, 0], [], []>} : vector<8x32xbf16>, vector<8x32xbf16>, vector<8x8xf32> -> vector<8x8xf32>
    %189 = arith.addf %188, %118 : vector<8x8xf32>
    %cst_94 = arith.constant dense<0xFF800000> : vector<8xf32>
    %190 = vector.multi_reduction <maximumf>, %189, %cst_94 [1] : vector<8x8xf32> to vector<8xf32>
    %191 = vector.shape_cast %190 : vector<8xf32> to vector<8x1xf32>
    %192 = vector.broadcast %191 : vector<8x1xf32> to vector<8x8xf32>
    %193 = arith.subf %189, %192 : vector<8x8xf32>
    %194 = math.exp %193 : vector<8x8xf32>
    %cst_95 = arith.constant dense<0.000000e+00> : vector<8xf32>
    %195 = vector.multi_reduction <add>, %194, %cst_95 [1] : vector<8x8xf32> to vector<8xf32>
    %196 = vector.shape_cast %195 : vector<8xf32> to vector<8x1xf32>
    %197 = tpu.reciprocal %196 {approx = true} : vector<8x1xf32> -> vector<8x1xf32>
    %198 = vector.broadcast %197 : vector<8x1xf32> to vector<8x8xf32>
    %199 = arith.mulf %194, %198 : vector<8x8xf32>
    %200 = arith.truncf %199 : vector<8x8xf32> to vector<8x8xbf16>
    %201 = vector.extract_strided_slice %113 {offsets = [0, 0], sizes = [8, 32], strides = [1, 1]} : vector<16x32xbf16> to vector<8x32xbf16>
    %cst_96 = arith.constant dense<0.000000e+00> : vector<8x32xf32>
    %202 = tpu.matmul %200, %201, %cst_96 {dimension_numbers = #tpu.dot_dimension_numbers<[1], [0], [0], [1], [0, 0, 1, 1], [], []>} : vector<8x8xbf16>, vector<8x32xbf16>, vector<8x32xf32> -> vector<8x32xf32>
    %203 = arith.truncf %202 : vector<8x32xf32> to vector<8x32xbf16>
    %c0_97 = arith.constant 0 : index
    %c3_98 = arith.constant 3 : index
    %c0_99 = arith.constant 0 : index
    %c0_100 = arith.constant 0 : index
    %204 = vector.load %arg8[%c0_97, %c3_98, %c0_99, %c0_100] : memref<1x4x32x128xbf16, #tpu.memory_space<vmem>>, vector<1x1x32x128xbf16>
    %205 = vector.shape_cast %204 : vector<1x1x32x128xbf16> to vector<32x128xbf16>
    %cst_101 = arith.constant dense<0.000000e+00> : vector<8x128xf32>
    %206 = tpu.matmul %203, %205, %cst_101 {dimension_numbers = #tpu.dot_dimension_numbers<[1], [0], [0], [1], [0, 0, 1, 1], [], []>} : vector<8x32xbf16>, vector<32x128xbf16>, vector<8x128xf32> -> vector<8x128xf32>
    %207 = arith.addf %185, %206 : vector<8x128xf32>
    %c1_i32 = arith.constant 1 : i32
    %208 = arith.addi %0, %c1_i32 : i32
    %209 = arith.index_cast %208 : i32 to index
    %c0_102 = arith.constant 0 : index
    %210 = vector.load %arg4[%209, %c0_102] : memref<4x8xf32, #tpu.memory_space<vmem>>, vector<1x8xf32>
    %211 = vector.broadcast %210 : vector<1x8xf32> to vector<8x8xf32>
    %212 = arith.addf %28, %211 : vector<8x8xf32>
    %cst_103 = arith.constant 0.000000e+00 : f32
    %213 = vector.broadcast %cst_103 : f32 to vector<8x128xf32>
    %214 = vector.extract_strided_slice %36 {offsets = [8, 0], sizes = [8, 32], strides = [1, 1]} : vector<16x32xbf16> to vector<8x32xbf16>
    %215 = vector.extract_strided_slice %43 {offsets = [8, 0], sizes = [8, 32], strides = [1, 1]} : vector<16x32xbf16> to vector<8x32xbf16>
    %cst_104 = arith.constant dense<0.000000e+00> : vector<8x8xf32>
    %216 = tpu.matmul %214, %215, %cst_104 {dimension_numbers = #tpu.dot_dimension_numbers<[1], [1], [0], [0], [0, 0, 1, 0], [], []>} : vector<8x32xbf16>, vector<8x32xbf16>, vector<8x8xf32> -> vector<8x8xf32>
    %217 = arith.addf %216, %212 : vector<8x8xf32>
    %cst_105 = arith.constant dense<0xFF800000> : vector<8xf32>
    %218 = vector.multi_reduction <maximumf>, %217, %cst_105 [1] : vector<8x8xf32> to vector<8xf32>
    %219 = vector.shape_cast %218 : vector<8xf32> to vector<8x1xf32>
    %220 = vector.broadcast %219 : vector<8x1xf32> to vector<8x8xf32>
    %221 = arith.subf %217, %220 : vector<8x8xf32>
    %222 = math.exp %221 : vector<8x8xf32>
    %cst_106 = arith.constant dense<0.000000e+00> : vector<8xf32>
    %223 = vector.multi_reduction <add>, %222, %cst_106 [1] : vector<8x8xf32> to vector<8xf32>
    %224 = vector.shape_cast %223 : vector<8xf32> to vector<8x1xf32>
    %225 = tpu.reciprocal %224 {approx = true} : vector<8x1xf32> -> vector<8x1xf32>
    %226 = vector.broadcast %225 : vector<8x1xf32> to vector<8x8xf32>
    %227 = arith.mulf %222, %226 : vector<8x8xf32>
    %228 = arith.truncf %227 : vector<8x8xf32> to vector<8x8xbf16>
    %229 = vector.extract_strided_slice %50 {offsets = [8, 0], sizes = [8, 32], strides = [1, 1]} : vector<16x32xbf16> to vector<8x32xbf16>
    %cst_107 = arith.constant dense<0.000000e+00> : vector<8x32xf32>
    %230 = tpu.matmul %228, %229, %cst_107 {dimension_numbers = #tpu.dot_dimension_numbers<[1], [0], [0], [1], [0, 0, 1, 1], [], []>} : vector<8x8xbf16>, vector<8x32xbf16>, vector<8x32xf32> -> vector<8x32xf32>
    %231 = arith.truncf %230 : vector<8x32xf32> to vector<8x32xbf16>
    %c0_108 = arith.constant 0 : index
    %c0_109 = arith.constant 0 : index
    %c0_110 = arith.constant 0 : index
    %c0_111 = arith.constant 0 : index
    %232 = vector.load %arg8[%c0_108, %c0_109, %c0_110, %c0_111] : memref<1x4x32x128xbf16, #tpu.memory_space<vmem>>, vector<1x1x32x128xbf16>
    %233 = vector.shape_cast %232 : vector<1x1x32x128xbf16> to vector<32x128xbf16>
    %cst_112 = arith.constant dense<0.000000e+00> : vector<8x128xf32>
    %234 = tpu.matmul %231, %233, %cst_112 {dimension_numbers = #tpu.dot_dimension_numbers<[1], [0], [0], [1], [0, 0, 1, 1], [], []>} : vector<8x32xbf16>, vector<32x128xbf16>, vector<8x128xf32> -> vector<8x128xf32>
    %235 = arith.addf %213, %234 : vector<8x128xf32>
    %236 = vector.extract_strided_slice %57 {offsets = [8, 0], sizes = [8, 32], strides = [1, 1]} : vector<16x32xbf16> to vector<8x32xbf16>
    %237 = vector.extract_strided_slice %64 {offsets = [8, 0], sizes = [8, 32], strides = [1, 1]} : vector<16x32xbf16> to vector<8x32xbf16>
    %cst_113 = arith.constant dense<0.000000e+00> : vector<8x8xf32>
    %238 = tpu.matmul %236, %237, %cst_113 {dimension_numbers = #tpu.dot_dimension_numbers<[1], [1], [0], [0], [0, 0, 1, 0], [], []>} : vector<8x32xbf16>, vector<8x32xbf16>, vector<8x8xf32> -> vector<8x8xf32>
    %239 = arith.addf %238, %212 : vector<8x8xf32>
    %cst_114 = arith.constant dense<0xFF800000> : vector<8xf32>
    %240 = vector.multi_reduction <maximumf>, %239, %cst_114 [1] : vector<8x8xf32> to vector<8xf32>
    %241 = vector.shape_cast %240 : vector<8xf32> to vector<8x1xf32>
    %242 = vector.broadcast %241 : vector<8x1xf32> to vector<8x8xf32>
    %243 = arith.subf %239, %242 : vector<8x8xf32>
    %244 = math.exp %243 : vector<8x8xf32>
    %cst_115 = arith.constant dense<0.000000e+00> : vector<8xf32>
    %245 = vector.multi_reduction <add>, %244, %cst_115 [1] : vector<8x8xf32> to vector<8xf32>
    %246 = vector.shape_cast %245 : vector<8xf32> to vector<8x1xf32>
    %247 = tpu.reciprocal %246 {approx = true} : vector<8x1xf32> -> vector<8x1xf32>
    %248 = vector.broadcast %247 : vector<8x1xf32> to vector<8x8xf32>
    %249 = arith.mulf %244, %248 : vector<8x8xf32>
    %250 = arith.truncf %249 : vector<8x8xf32> to vector<8x8xbf16>
    %251 = vector.extract_strided_slice %71 {offsets = [8, 0], sizes = [8, 32], strides = [1, 1]} : vector<16x32xbf16> to vector<8x32xbf16>
    %cst_116 = arith.constant dense<0.000000e+00> : vector<8x32xf32>
    %252 = tpu.matmul %250, %251, %cst_116 {dimension_numbers = #tpu.dot_dimension_numbers<[1], [0], [0], [1], [0, 0, 1, 1], [], []>} : vector<8x8xbf16>, vector<8x32xbf16>, vector<8x32xf32> -> vector<8x32xf32>
    %253 = arith.truncf %252 : vector<8x32xf32> to vector<8x32xbf16>
    %c0_117 = arith.constant 0 : index
    %c1_118 = arith.constant 1 : index
    %c0_119 = arith.constant 0 : index
    %c0_120 = arith.constant 0 : index
    %254 = vector.load %arg8[%c0_117, %c1_118, %c0_119, %c0_120] : memref<1x4x32x128xbf16, #tpu.memory_space<vmem>>, vector<1x1x32x128xbf16>
    %255 = vector.shape_cast %254 : vector<1x1x32x128xbf16> to vector<32x128xbf16>
    %cst_121 = arith.constant dense<0.000000e+00> : vector<8x128xf32>
    %256 = tpu.matmul %253, %255, %cst_121 {dimension_numbers = #tpu.dot_dimension_numbers<[1], [0], [0], [1], [0, 0, 1, 1], [], []>} : vector<8x32xbf16>, vector<32x128xbf16>, vector<8x128xf32> -> vector<8x128xf32>
    %257 = arith.addf %235, %256 : vector<8x128xf32>
    %258 = vector.extract_strided_slice %78 {offsets = [8, 0], sizes = [8, 32], strides = [1, 1]} : vector<16x32xbf16> to vector<8x32xbf16>
    %259 = vector.extract_strided_slice %85 {offsets = [8, 0], sizes = [8, 32], strides = [1, 1]} : vector<16x32xbf16> to vector<8x32xbf16>
    %cst_122 = arith.constant dense<0.000000e+00> : vector<8x8xf32>
    %260 = tpu.matmul %258, %259, %cst_122 {dimension_numbers = #tpu.dot_dimension_numbers<[1], [1], [0], [0], [0, 0, 1, 0], [], []>} : vector<8x32xbf16>, vector<8x32xbf16>, vector<8x8xf32> -> vector<8x8xf32>
    %261 = arith.addf %260, %212 : vector<8x8xf32>
    %cst_123 = arith.constant dense<0xFF800000> : vector<8xf32>
    %262 = vector.multi_reduction <maximumf>, %261, %cst_123 [1] : vector<8x8xf32> to vector<8xf32>
    %263 = vector.shape_cast %262 : vector<8xf32> to vector<8x1xf32>
    %264 = vector.broadcast %263 : vector<8x1xf32> to vector<8x8xf32>
    %265 = arith.subf %261, %264 : vector<8x8xf32>
    %266 = math.exp %265 : vector<8x8xf32>
    %cst_124 = arith.constant dense<0.000000e+00> : vector<8xf32>
    %267 = vector.multi_reduction <add>, %266, %cst_124 [1] : vector<8x8xf32> to vector<8xf32>
    %268 = vector.shape_cast %267 : vector<8xf32> to vector<8x1xf32>
    %269 = tpu.reciprocal %268 {approx = true} : vector<8x1xf32> -> vector<8x1xf32>
    %270 = vector.broadcast %269 : vector<8x1xf32> to vector<8x8xf32>
    %271 = arith.mulf %266, %270 : vector<8x8xf32>
    %272 = arith.truncf %271 : vector<8x8xf32> to vector<8x8xbf16>
    %273 = vector.extract_strided_slice %92 {offsets = [8, 0], sizes = [8, 32], strides = [1, 1]} : vector<16x32xbf16> to vector<8x32xbf16>
    %cst_125 = arith.constant dense<0.000000e+00> : vector<8x32xf32>
    %274 = tpu.matmul %272, %273, %cst_125 {dimension_numbers = #tpu.dot_dimension_numbers<[1], [0], [0], [1], [0, 0, 1, 1], [], []>} : vector<8x8xbf16>, vector<8x32xbf16>, vector<8x32xf32> -> vector<8x32xf32>
    %275 = arith.truncf %274 : vector<8x32xf32> to vector<8x32xbf16>
    %c0_126 = arith.constant 0 : index
    %c2_127 = arith.constant 2 : index
    %c0_128 = arith.constant 0 : index
    %c0_129 = arith.constant 0 : index
    %276 = vector.load %arg8[%c0_126, %c2_127, %c0_128, %c0_129] : memref<1x4x32x128xbf16, #tpu.memory_space<vmem>>, vector<1x1x32x128xbf16>
    %277 = vector.shape_cast %276 : vector<1x1x32x128xbf16> to vector<32x128xbf16>
    %cst_130 = arith.constant dense<0.000000e+00> : vector<8x128xf32>
    %278 = tpu.matmul %275, %277, %cst_130 {dimension_numbers = #tpu.dot_dimension_numbers<[1], [0], [0], [1], [0, 0, 1, 1], [], []>} : vector<8x32xbf16>, vector<32x128xbf16>, vector<8x128xf32> -> vector<8x128xf32>
    %279 = arith.addf %257, %278 : vector<8x128xf32>
    %280 = vector.extract_strided_slice %99 {offsets = [8, 0], sizes = [8, 32], strides = [1, 1]} : vector<16x32xbf16> to vector<8x32xbf16>
    %281 = vector.extract_strided_slice %106 {offsets = [8, 0], sizes = [8, 32], strides = [1, 1]} : vector<16x32xbf16> to vector<8x32xbf16>
    %cst_131 = arith.constant dense<0.000000e+00> : vector<8x8xf32>
    %282 = tpu.matmul %280, %281, %cst_131 {dimension_numbers = #tpu.dot_dimension_numbers<[1], [1], [0], [0], [0, 0, 1, 0], [], []>} : vector<8x32xbf16>, vector<8x32xbf16>, vector<8x8xf32> -> vector<8x8xf32>
    %283 = arith.addf %282, %212 : vector<8x8xf32>
    %cst_132 = arith.constant dense<0xFF800000> : vector<8xf32>
    %284 = vector.multi_reduction <maximumf>, %283, %cst_132 [1] : vector<8x8xf32> to vector<8xf32>
    %285 = vector.shape_cast %284 : vector<8xf32> to vector<8x1xf32>
    %286 = vector.broadcast %285 : vector<8x1xf32> to vector<8x8xf32>
    %287 = arith.subf %283, %286 : vector<8x8xf32>
    %288 = math.exp %287 : vector<8x8xf32>
    %cst_133 = arith.constant dense<0.000000e+00> : vector<8xf32>
    %289 = vector.multi_reduction <add>, %288, %cst_133 [1] : vector<8x8xf32> to vector<8xf32>
    %290 = vector.shape_cast %289 : vector<8xf32> to vector<8x1xf32>
    %291 = tpu.reciprocal %290 {approx = true} : vector<8x1xf32> -> vector<8x1xf32>
    %292 = vector.broadcast %291 : vector<8x1xf32> to vector<8x8xf32>
    %293 = arith.mulf %288, %292 : vector<8x8xf32>
    %294 = arith.truncf %293 : vector<8x8xf32> to vector<8x8xbf16>
    %295 = vector.extract_strided_slice %113 {offsets = [8, 0], sizes = [8, 32], strides = [1, 1]} : vector<16x32xbf16> to vector<8x32xbf16>
    %cst_134 = arith.constant dense<0.000000e+00> : vector<8x32xf32>
    %296 = tpu.matmul %294, %295, %cst_134 {dimension_numbers = #tpu.dot_dimension_numbers<[1], [0], [0], [1], [0, 0, 1, 1], [], []>} : vector<8x8xbf16>, vector<8x32xbf16>, vector<8x32xf32> -> vector<8x32xf32>
    %297 = arith.truncf %296 : vector<8x32xf32> to vector<8x32xbf16>
    %c0_135 = arith.constant 0 : index
    %c3_136 = arith.constant 3 : index
    %c0_137 = arith.constant 0 : index
    %c0_138 = arith.constant 0 : index
    %298 = vector.load %arg8[%c0_135, %c3_136, %c0_137, %c0_138] : memref<1x4x32x128xbf16, #tpu.memory_space<vmem>>, vector<1x1x32x128xbf16>
    %299 = vector.shape_cast %298 : vector<1x1x32x128xbf16> to vector<32x128xbf16>
    %cst_139 = arith.constant dense<0.000000e+00> : vector<8x128xf32>
    %300 = tpu.matmul %297, %299, %cst_139 {dimension_numbers = #tpu.dot_dimension_numbers<[1], [0], [0], [1], [0, 0, 1, 1], [], []>} : vector<8x32xbf16>, vector<32x128xbf16>, vector<8x128xf32> -> vector<8x128xf32>
    %301 = arith.addf %279, %300 : vector<8x128xf32>
    %302 = tpu.concatenate %207, %301 in 0 : vector<8x128xf32>, vector<8x128xf32> -> vector<16x128xf32>
    %303 = vector.broadcast %6 : vector<1x128xf32> to vector<16x128xf32>
    %304 = arith.addf %302, %303 : vector<16x128xf32>
    %305 = arith.addf %304, %22 : vector<16x128xf32>
    %cst_140 = arith.constant dense<0.000000e+00> : vector<16xf32>
    %306 = vector.multi_reduction <add>, %305, %cst_140 [1] : vector<16x128xf32> to vector<16xf32>
    %307 = vector.shape_cast %306 : vector<16xf32> to vector<16x1xf32>
    %cst_141 = arith.constant 1.280000e+02 : f32
    %308 = vector.broadcast %cst_141 : f32 to vector<16x1xf32>
    %309 = arith.divf %307, %308 : vector<16x1xf32>
    %310 = arith.mulf %305, %305 : vector<16x128xf32>
    %cst_142 = arith.constant dense<0.000000e+00> : vector<16xf32>
    %311 = vector.multi_reduction <add>, %310, %cst_142 [1] : vector<16x128xf32> to vector<16xf32>
    %312 = vector.shape_cast %311 : vector<16xf32> to vector<16x1xf32>
    %cst_143 = arith.constant 1.280000e+02 : f32
    %313 = vector.broadcast %cst_143 : f32 to vector<16x1xf32>
    %314 = arith.divf %312, %313 : vector<16x1xf32>
    %315 = vector.broadcast %309 : vector<16x1xf32> to vector<16x128xf32>
    %316 = arith.subf %305, %315 : vector<16x128xf32>
    %317 = arith.mulf %309, %309 : vector<16x1xf32>
    %318 = arith.subf %314, %317 : vector<16x1xf32>
    %cst_144 = arith.constant 9.99999974E-6 : f32
    %319 = vector.broadcast %cst_144 : f32 to vector<16x1xf32>
    %320 = arith.addf %318, %319 : vector<16x1xf32>
    %321 = math.rsqrt %320 : vector<16x1xf32>
    %322 = vector.broadcast %321 : vector<16x1xf32> to vector<16x128xf32>
    %323 = arith.mulf %316, %322 : vector<16x128xf32>
    %324 = vector.broadcast %13 : vector<1x128xf32> to vector<16x128xf32>
    %325 = arith.mulf %323, %324 : vector<16x128xf32>
    %326 = vector.broadcast %14 : vector<1x128xf32> to vector<16x128xf32>
    %327 = arith.addf %325, %326 : vector<16x128xf32>
    %c0_145 = arith.constant 0 : index
    %c0_146 = arith.constant 0 : index
    %328 = vector.load %arg3[%c0_145, %c0_146] : memref<32x128xbf16, #tpu.memory_space<vmem>>, vector<32x128xbf16>
    %329 = arith.truncf %327 : vector<16x128xf32> to vector<16x128xbf16>
    %c0_147 = arith.constant 0 : index
    %c0_148 = arith.constant 0 : index
    %c0_149 = arith.constant 0 : index
    %c0_150 = arith.constant 0 : index
    %330 = vector.load %arg9[%c0_147, %c0_148, %c0_149, %c0_150] : memref<1x4x128x32xbf16, #tpu.memory_space<vmem>>, vector<1x1x128x32xbf16>
    %331 = vector.shape_cast %330 : vector<1x1x128x32xbf16> to vector<128x32xbf16>
    %cst_151 = arith.constant dense<0.000000e+00> : vector<16x32xf32>
    %332 = tpu.matmul %329, %331, %cst_151 {dimension_numbers = #tpu.dot_dimension_numbers<[1], [0], [0], [1], [0, 0, 1, 1], [], []>} : vector<16x128xbf16>, vector<128x32xbf16>, vector<16x32xf32> -> vector<16x32xf32>
    %333 = vector.extract_strided_slice %7 {offsets = [0, 0], sizes = [1, 32], strides = [1, 1]} : vector<1x128xf32> to vector<1x32xf32>
    %334 = vector.broadcast %333 : vector<1x32xf32> to vector<16x32xf32>
    %335 = arith.addf %332, %334 : vector<16x32xf32>
    %336 = arith.truncf %335 : vector<16x32xf32> to vector<16x32xbf16>
    %c0_152 = arith.constant 0 : index
    %c0_153 = arith.constant 0 : index
    %c0_154 = arith.constant 0 : index
    %c0_155 = arith.constant 0 : index
    %337 = vector.load %arg10[%c0_152, %c0_153, %c0_154, %c0_155] : memref<1x4x128x32xbf16, #tpu.memory_space<vmem>>, vector<1x1x128x32xbf16>
    %338 = vector.shape_cast %337 : vector<1x1x128x32xbf16> to vector<128x32xbf16>
    %cst_156 = arith.constant dense<0.000000e+00> : vector<32x32xf32>
    %339 = tpu.matmul %328, %338, %cst_156 {dimension_numbers = #tpu.dot_dimension_numbers<[1], [0], [0], [1], [0, 0, 1, 1], [], []>} : vector<32x128xbf16>, vector<128x32xbf16>, vector<32x32xf32> -> vector<32x32xf32>
    %340 = vector.extract_strided_slice %8 {offsets = [0, 0], sizes = [1, 32], strides = [1, 1]} : vector<1x128xf32> to vector<1x32xf32>
    %341 = vector.broadcast %340 : vector<1x32xf32> to vector<32x32xf32>
    %342 = arith.addf %339, %341 : vector<32x32xf32>
    %343 = arith.truncf %342 : vector<32x32xf32> to vector<32x32xbf16>
    %c0_157 = arith.constant 0 : index
    %c0_158 = arith.constant 0 : index
    %c0_159 = arith.constant 0 : index
    %c0_160 = arith.constant 0 : index
    %344 = vector.load %arg11[%c0_157, %c0_158, %c0_159, %c0_160] : memref<1x4x128x32xbf16, #tpu.memory_space<vmem>>, vector<1x1x128x32xbf16>
    %345 = vector.shape_cast %344 : vector<1x1x128x32xbf16> to vector<128x32xbf16>
    %cst_161 = arith.constant dense<0.000000e+00> : vector<32x32xf32>
    %346 = tpu.matmul %328, %345, %cst_161 {dimension_numbers = #tpu.dot_dimension_numbers<[1], [0], [0], [1], [0, 0, 1, 1], [], []>} : vector<32x128xbf16>, vector<128x32xbf16>, vector<32x32xf32> -> vector<32x32xf32>
    %347 = vector.extract_strided_slice %9 {offsets = [0, 0], sizes = [1, 32], strides = [1, 1]} : vector<1x128xf32> to vector<1x32xf32>
    %348 = vector.broadcast %347 : vector<1x32xf32> to vector<32x32xf32>
    %349 = arith.addf %346, %348 : vector<32x32xf32>
    %350 = arith.truncf %349 : vector<32x32xf32> to vector<32x32xbf16>
    %c0_162 = arith.constant 0 : index
    %c1_163 = arith.constant 1 : index
    %c0_164 = arith.constant 0 : index
    %c0_165 = arith.constant 0 : index
    %351 = vector.load %arg9[%c0_162, %c1_163, %c0_164, %c0_165] : memref<1x4x128x32xbf16, #tpu.memory_space<vmem>>, vector<1x1x128x32xbf16>
    %352 = vector.shape_cast %351 : vector<1x1x128x32xbf16> to vector<128x32xbf16>
    %cst_166 = arith.constant dense<0.000000e+00> : vector<16x32xf32>
    %353 = tpu.matmul %329, %352, %cst_166 {dimension_numbers = #tpu.dot_dimension_numbers<[1], [0], [0], [1], [0, 0, 1, 1], [], []>} : vector<16x128xbf16>, vector<128x32xbf16>, vector<16x32xf32> -> vector<16x32xf32>
    %354 = vector.extract_strided_slice %7 {offsets = [0, 32], sizes = [1, 32], strides = [1, 1]} : vector<1x128xf32> to vector<1x32xf32>
    %355 = vector.broadcast %354 : vector<1x32xf32> to vector<16x32xf32>
    %356 = arith.addf %353, %355 : vector<16x32xf32>
    %357 = arith.truncf %356 : vector<16x32xf32> to vector<16x32xbf16>
    %c0_167 = arith.constant 0 : index
    %c1_168 = arith.constant 1 : index
    %c0_169 = arith.constant 0 : index
    %c0_170 = arith.constant 0 : index
    %358 = vector.load %arg10[%c0_167, %c1_168, %c0_169, %c0_170] : memref<1x4x128x32xbf16, #tpu.memory_space<vmem>>, vector<1x1x128x32xbf16>
    %359 = vector.shape_cast %358 : vector<1x1x128x32xbf16> to vector<128x32xbf16>
    %cst_171 = arith.constant dense<0.000000e+00> : vector<32x32xf32>
    %360 = tpu.matmul %328, %359, %cst_171 {dimension_numbers = #tpu.dot_dimension_numbers<[1], [0], [0], [1], [0, 0, 1, 1], [], []>} : vector<32x128xbf16>, vector<128x32xbf16>, vector<32x32xf32> -> vector<32x32xf32>
    %361 = vector.extract_strided_slice %8 {offsets = [0, 32], sizes = [1, 32], strides = [1, 1]} : vector<1x128xf32> to vector<1x32xf32>
    %362 = vector.broadcast %361 : vector<1x32xf32> to vector<32x32xf32>
    %363 = arith.addf %360, %362 : vector<32x32xf32>
    %364 = arith.truncf %363 : vector<32x32xf32> to vector<32x32xbf16>
    %c0_172 = arith.constant 0 : index
    %c1_173 = arith.constant 1 : index
    %c0_174 = arith.constant 0 : index
    %c0_175 = arith.constant 0 : index
    %365 = vector.load %arg11[%c0_172, %c1_173, %c0_174, %c0_175] : memref<1x4x128x32xbf16, #tpu.memory_space<vmem>>, vector<1x1x128x32xbf16>
    %366 = vector.shape_cast %365 : vector<1x1x128x32xbf16> to vector<128x32xbf16>
    %cst_176 = arith.constant dense<0.000000e+00> : vector<32x32xf32>
    %367 = tpu.matmul %328, %366, %cst_176 {dimension_numbers = #tpu.dot_dimension_numbers<[1], [0], [0], [1], [0, 0, 1, 1], [], []>} : vector<32x128xbf16>, vector<128x32xbf16>, vector<32x32xf32> -> vector<32x32xf32>
    %368 = vector.extract_strided_slice %9 {offsets = [0, 32], sizes = [1, 32], strides = [1, 1]} : vector<1x128xf32> to vector<1x32xf32>
    %369 = vector.broadcast %368 : vector<1x32xf32> to vector<32x32xf32>
    %370 = arith.addf %367, %369 : vector<32x32xf32>
    %371 = arith.truncf %370 : vector<32x32xf32> to vector<32x32xbf16>
    %c0_177 = arith.constant 0 : index
    %c2_178 = arith.constant 2 : index
    %c0_179 = arith.constant 0 : index
    %c0_180 = arith.constant 0 : index
    %372 = vector.load %arg9[%c0_177, %c2_178, %c0_179, %c0_180] : memref<1x4x128x32xbf16, #tpu.memory_space<vmem>>, vector<1x1x128x32xbf16>
    %373 = vector.shape_cast %372 : vector<1x1x128x32xbf16> to vector<128x32xbf16>
    %cst_181 = arith.constant dense<0.000000e+00> : vector<16x32xf32>
    %374 = tpu.matmul %329, %373, %cst_181 {dimension_numbers = #tpu.dot_dimension_numbers<[1], [0], [0], [1], [0, 0, 1, 1], [], []>} : vector<16x128xbf16>, vector<128x32xbf16>, vector<16x32xf32> -> vector<16x32xf32>
    %375 = vector.extract_strided_slice %7 {offsets = [0, 64], sizes = [1, 32], strides = [1, 1]} : vector<1x128xf32> to vector<1x32xf32>
    %376 = vector.broadcast %375 : vector<1x32xf32> to vector<16x32xf32>
    %377 = arith.addf %374, %376 : vector<16x32xf32>
    %378 = arith.truncf %377 : vector<16x32xf32> to vector<16x32xbf16>
    %c0_182 = arith.constant 0 : index
    %c2_183 = arith.constant 2 : index
    %c0_184 = arith.constant 0 : index
    %c0_185 = arith.constant 0 : index
    %379 = vector.load %arg10[%c0_182, %c2_183, %c0_184, %c0_185] : memref<1x4x128x32xbf16, #tpu.memory_space<vmem>>, vector<1x1x128x32xbf16>
    %380 = vector.shape_cast %379 : vector<1x1x128x32xbf16> to vector<128x32xbf16>
    %cst_186 = arith.constant dense<0.000000e+00> : vector<32x32xf32>
    %381 = tpu.matmul %328, %380, %cst_186 {dimension_numbers = #tpu.dot_dimension_numbers<[1], [0], [0], [1], [0, 0, 1, 1], [], []>} : vector<32x128xbf16>, vector<128x32xbf16>, vector<32x32xf32> -> vector<32x32xf32>
    %382 = vector.extract_strided_slice %8 {offsets = [0, 64], sizes = [1, 32], strides = [1, 1]} : vector<1x128xf32> to vector<1x32xf32>
    %383 = vector.broadcast %382 : vector<1x32xf32> to vector<32x32xf32>
    %384 = arith.addf %381, %383 : vector<32x32xf32>
    %385 = arith.truncf %384 : vector<32x32xf32> to vector<32x32xbf16>
    %c0_187 = arith.constant 0 : index
    %c2_188 = arith.constant 2 : index
    %c0_189 = arith.constant 0 : index
    %c0_190 = arith.constant 0 : index
    %386 = vector.load %arg11[%c0_187, %c2_188, %c0_189, %c0_190] : memref<1x4x128x32xbf16, #tpu.memory_space<vmem>>, vector<1x1x128x32xbf16>
    %387 = vector.shape_cast %386 : vector<1x1x128x32xbf16> to vector<128x32xbf16>
    %cst_191 = arith.constant dense<0.000000e+00> : vector<32x32xf32>
    %388 = tpu.matmul %328, %387, %cst_191 {dimension_numbers = #tpu.dot_dimension_numbers<[1], [0], [0], [1], [0, 0, 1, 1], [], []>} : vector<32x128xbf16>, vector<128x32xbf16>, vector<32x32xf32> -> vector<32x32xf32>
    %389 = vector.extract_strided_slice %9 {offsets = [0, 64], sizes = [1, 32], strides = [1, 1]} : vector<1x128xf32> to vector<1x32xf32>
    %390 = vector.broadcast %389 : vector<1x32xf32> to vector<32x32xf32>
    %391 = arith.addf %388, %390 : vector<32x32xf32>
    %392 = arith.truncf %391 : vector<32x32xf32> to vector<32x32xbf16>
    %c0_192 = arith.constant 0 : index
    %c3_193 = arith.constant 3 : index
    %c0_194 = arith.constant 0 : index
    %c0_195 = arith.constant 0 : index
    %393 = vector.load %arg9[%c0_192, %c3_193, %c0_194, %c0_195] : memref<1x4x128x32xbf16, #tpu.memory_space<vmem>>, vector<1x1x128x32xbf16>
    %394 = vector.shape_cast %393 : vector<1x1x128x32xbf16> to vector<128x32xbf16>
    %cst_196 = arith.constant dense<0.000000e+00> : vector<16x32xf32>
    %395 = tpu.matmul %329, %394, %cst_196 {dimension_numbers = #tpu.dot_dimension_numbers<[1], [0], [0], [1], [0, 0, 1, 1], [], []>} : vector<16x128xbf16>, vector<128x32xbf16>, vector<16x32xf32> -> vector<16x32xf32>
    %396 = vector.extract_strided_slice %7 {offsets = [0, 96], sizes = [1, 32], strides = [1, 1]} : vector<1x128xf32> to vector<1x32xf32>
    %397 = vector.broadcast %396 : vector<1x32xf32> to vector<16x32xf32>
    %398 = arith.addf %395, %397 : vector<16x32xf32>
    %399 = arith.truncf %398 : vector<16x32xf32> to vector<16x32xbf16>
    %c0_197 = arith.constant 0 : index
    %c3_198 = arith.constant 3 : index
    %c0_199 = arith.constant 0 : index
    %c0_200 = arith.constant 0 : index
    %400 = vector.load %arg10[%c0_197, %c3_198, %c0_199, %c0_200] : memref<1x4x128x32xbf16, #tpu.memory_space<vmem>>, vector<1x1x128x32xbf16>
    %401 = vector.shape_cast %400 : vector<1x1x128x32xbf16> to vector<128x32xbf16>
    %cst_201 = arith.constant dense<0.000000e+00> : vector<32x32xf32>
    %402 = tpu.matmul %328, %401, %cst_201 {dimension_numbers = #tpu.dot_dimension_numbers<[1], [0], [0], [1], [0, 0, 1, 1], [], []>} : vector<32x128xbf16>, vector<128x32xbf16>, vector<32x32xf32> -> vector<32x32xf32>
    %403 = vector.extract_strided_slice %8 {offsets = [0, 96], sizes = [1, 32], strides = [1, 1]} : vector<1x128xf32> to vector<1x32xf32>
    %404 = vector.broadcast %403 : vector<1x32xf32> to vector<32x32xf32>
    %405 = arith.addf %402, %404 : vector<32x32xf32>
    %406 = arith.truncf %405 : vector<32x32xf32> to vector<32x32xbf16>
    %c0_202 = arith.constant 0 : index
    %c3_203 = arith.constant 3 : index
    %c0_204 = arith.constant 0 : index
    %c0_205 = arith.constant 0 : index
    %407 = vector.load %arg11[%c0_202, %c3_203, %c0_204, %c0_205] : memref<1x4x128x32xbf16, #tpu.memory_space<vmem>>, vector<1x1x128x32xbf16>
    %408 = vector.shape_cast %407 : vector<1x1x128x32xbf16> to vector<128x32xbf16>
    %cst_206 = arith.constant dense<0.000000e+00> : vector<32x32xf32>
    %409 = tpu.matmul %328, %408, %cst_206 {dimension_numbers = #tpu.dot_dimension_numbers<[1], [0], [0], [1], [0, 0, 1, 1], [], []>} : vector<32x128xbf16>, vector<128x32xbf16>, vector<32x32xf32> -> vector<32x32xf32>
    %410 = vector.extract_strided_slice %9 {offsets = [0, 96], sizes = [1, 32], strides = [1, 1]} : vector<1x128xf32> to vector<1x32xf32>
    %411 = vector.broadcast %410 : vector<1x32xf32> to vector<32x32xf32>
    %412 = arith.addf %409, %411 : vector<32x32xf32>
    %413 = arith.truncf %412 : vector<32x32xf32> to vector<32x32xbf16>
    %cst_207 = arith.constant 0.000000e+00 : f32
    %414 = vector.broadcast %cst_207 : f32 to vector<8x128xf32>
    %415 = vector.extract_strided_slice %336 {offsets = [0, 0], sizes = [8, 32], strides = [1, 1]} : vector<16x32xbf16> to vector<8x32xbf16>
    %416 = vector.extract_strided_slice %343 {offsets = [0, 0], sizes = [16, 32], strides = [1, 1]} : vector<32x32xbf16> to vector<16x32xbf16>
    %cst_208 = arith.constant dense<0.000000e+00> : vector<8x16xf32>
    %417 = tpu.matmul %415, %416, %cst_208 {dimension_numbers = #tpu.dot_dimension_numbers<[1], [1], [0], [0], [0, 0, 1, 0], [], []>} : vector<8x32xbf16>, vector<16x32xbf16>, vector<8x16xf32> -> vector<8x16xf32>
    %cst_209 = arith.constant dense<0xFF800000> : vector<8xf32>
    %418 = vector.multi_reduction <maximumf>, %417, %cst_209 [1] : vector<8x16xf32> to vector<8xf32>
    %419 = vector.shape_cast %418 : vector<8xf32> to vector<8x1xf32>
    %420 = vector.broadcast %419 : vector<8x1xf32> to vector<8x16xf32>
    %421 = arith.subf %417, %420 : vector<8x16xf32>
    %422 = math.exp %421 : vector<8x16xf32>
    %cst_210 = arith.constant dense<0.000000e+00> : vector<8xf32>
    %423 = vector.multi_reduction <add>, %422, %cst_210 [1] : vector<8x16xf32> to vector<8xf32>
    %424 = vector.shape_cast %423 : vector<8xf32> to vector<8x1xf32>
    %425 = tpu.reciprocal %424 {approx = true} : vector<8x1xf32> -> vector<8x1xf32>
    %426 = vector.broadcast %425 : vector<8x1xf32> to vector<8x16xf32>
    %427 = arith.mulf %422, %426 : vector<8x16xf32>
    %428 = arith.truncf %427 : vector<8x16xf32> to vector<8x16xbf16>
    %429 = vector.extract_strided_slice %350 {offsets = [0, 0], sizes = [16, 32], strides = [1, 1]} : vector<32x32xbf16> to vector<16x32xbf16>
    %cst_211 = arith.constant dense<0.000000e+00> : vector<8x32xf32>
    %430 = tpu.matmul %428, %429, %cst_211 {dimension_numbers = #tpu.dot_dimension_numbers<[1], [0], [0], [1], [0, 0, 1, 1], [], []>} : vector<8x16xbf16>, vector<16x32xbf16>, vector<8x32xf32> -> vector<8x32xf32>
    %431 = arith.truncf %430 : vector<8x32xf32> to vector<8x32xbf16>
    %c0_212 = arith.constant 0 : index
    %c0_213 = arith.constant 0 : index
    %c0_214 = arith.constant 0 : index
    %c0_215 = arith.constant 0 : index
    %432 = vector.load %arg12[%c0_212, %c0_213, %c0_214, %c0_215] : memref<1x4x32x128xbf16, #tpu.memory_space<vmem>>, vector<1x1x32x128xbf16>
    %433 = vector.shape_cast %432 : vector<1x1x32x128xbf16> to vector<32x128xbf16>
    %cst_216 = arith.constant dense<0.000000e+00> : vector<8x128xf32>
    %434 = tpu.matmul %431, %433, %cst_216 {dimension_numbers = #tpu.dot_dimension_numbers<[1], [0], [0], [1], [0, 0, 1, 1], [], []>} : vector<8x32xbf16>, vector<32x128xbf16>, vector<8x128xf32> -> vector<8x128xf32>
    %435 = arith.addf %414, %434 : vector<8x128xf32>
    %436 = vector.extract_strided_slice %357 {offsets = [0, 0], sizes = [8, 32], strides = [1, 1]} : vector<16x32xbf16> to vector<8x32xbf16>
    %437 = vector.extract_strided_slice %364 {offsets = [0, 0], sizes = [16, 32], strides = [1, 1]} : vector<32x32xbf16> to vector<16x32xbf16>
    %cst_217 = arith.constant dense<0.000000e+00> : vector<8x16xf32>
    %438 = tpu.matmul %436, %437, %cst_217 {dimension_numbers = #tpu.dot_dimension_numbers<[1], [1], [0], [0], [0, 0, 1, 0], [], []>} : vector<8x32xbf16>, vector<16x32xbf16>, vector<8x16xf32> -> vector<8x16xf32>
    %cst_218 = arith.constant dense<0xFF800000> : vector<8xf32>
    %439 = vector.multi_reduction <maximumf>, %438, %cst_218 [1] : vector<8x16xf32> to vector<8xf32>
    %440 = vector.shape_cast %439 : vector<8xf32> to vector<8x1xf32>
    %441 = vector.broadcast %440 : vector<8x1xf32> to vector<8x16xf32>
    %442 = arith.subf %438, %441 : vector<8x16xf32>
    %443 = math.exp %442 : vector<8x16xf32>
    %cst_219 = arith.constant dense<0.000000e+00> : vector<8xf32>
    %444 = vector.multi_reduction <add>, %443, %cst_219 [1] : vector<8x16xf32> to vector<8xf32>
    %445 = vector.shape_cast %444 : vector<8xf32> to vector<8x1xf32>
    %446 = tpu.reciprocal %445 {approx = true} : vector<8x1xf32> -> vector<8x1xf32>
    %447 = vector.broadcast %446 : vector<8x1xf32> to vector<8x16xf32>
    %448 = arith.mulf %443, %447 : vector<8x16xf32>
    %449 = arith.truncf %448 : vector<8x16xf32> to vector<8x16xbf16>
    %450 = vector.extract_strided_slice %371 {offsets = [0, 0], sizes = [16, 32], strides = [1, 1]} : vector<32x32xbf16> to vector<16x32xbf16>
    %cst_220 = arith.constant dense<0.000000e+00> : vector<8x32xf32>
    %451 = tpu.matmul %449, %450, %cst_220 {dimension_numbers = #tpu.dot_dimension_numbers<[1], [0], [0], [1], [0, 0, 1, 1], [], []>} : vector<8x16xbf16>, vector<16x32xbf16>, vector<8x32xf32> -> vector<8x32xf32>
    %452 = arith.truncf %451 : vector<8x32xf32> to vector<8x32xbf16>
    %c0_221 = arith.constant 0 : index
    %c1_222 = arith.constant 1 : index
    %c0_223 = arith.constant 0 : index
    %c0_224 = arith.constant 0 : index
    %453 = vector.load %arg12[%c0_221, %c1_222, %c0_223, %c0_224] : memref<1x4x32x128xbf16, #tpu.memory_space<vmem>>, vector<1x1x32x128xbf16>
    %454 = vector.shape_cast %453 : vector<1x1x32x128xbf16> to vector<32x128xbf16>
    %cst_225 = arith.constant dense<0.000000e+00> : vector<8x128xf32>
    %455 = tpu.matmul %452, %454, %cst_225 {dimension_numbers = #tpu.dot_dimension_numbers<[1], [0], [0], [1], [0, 0, 1, 1], [], []>} : vector<8x32xbf16>, vector<32x128xbf16>, vector<8x128xf32> -> vector<8x128xf32>
    %456 = arith.addf %435, %455 : vector<8x128xf32>
    %457 = vector.extract_strided_slice %378 {offsets = [0, 0], sizes = [8, 32], strides = [1, 1]} : vector<16x32xbf16> to vector<8x32xbf16>
    %458 = vector.extract_strided_slice %385 {offsets = [0, 0], sizes = [16, 32], strides = [1, 1]} : vector<32x32xbf16> to vector<16x32xbf16>
    %cst_226 = arith.constant dense<0.000000e+00> : vector<8x16xf32>
    %459 = tpu.matmul %457, %458, %cst_226 {dimension_numbers = #tpu.dot_dimension_numbers<[1], [1], [0], [0], [0, 0, 1, 0], [], []>} : vector<8x32xbf16>, vector<16x32xbf16>, vector<8x16xf32> -> vector<8x16xf32>
    %cst_227 = arith.constant dense<0xFF800000> : vector<8xf32>
    %460 = vector.multi_reduction <maximumf>, %459, %cst_227 [1] : vector<8x16xf32> to vector<8xf32>
    %461 = vector.shape_cast %460 : vector<8xf32> to vector<8x1xf32>
    %462 = vector.broadcast %461 : vector<8x1xf32> to vector<8x16xf32>
    %463 = arith.subf %459, %462 : vector<8x16xf32>
    %464 = math.exp %463 : vector<8x16xf32>
    %cst_228 = arith.constant dense<0.000000e+00> : vector<8xf32>
    %465 = vector.multi_reduction <add>, %464, %cst_228 [1] : vector<8x16xf32> to vector<8xf32>
    %466 = vector.shape_cast %465 : vector<8xf32> to vector<8x1xf32>
    %467 = tpu.reciprocal %466 {approx = true} : vector<8x1xf32> -> vector<8x1xf32>
    %468 = vector.broadcast %467 : vector<8x1xf32> to vector<8x16xf32>
    %469 = arith.mulf %464, %468 : vector<8x16xf32>
    %470 = arith.truncf %469 : vector<8x16xf32> to vector<8x16xbf16>
    %471 = vector.extract_strided_slice %392 {offsets = [0, 0], sizes = [16, 32], strides = [1, 1]} : vector<32x32xbf16> to vector<16x32xbf16>
    %cst_229 = arith.constant dense<0.000000e+00> : vector<8x32xf32>
    %472 = tpu.matmul %470, %471, %cst_229 {dimension_numbers = #tpu.dot_dimension_numbers<[1], [0], [0], [1], [0, 0, 1, 1], [], []>} : vector<8x16xbf16>, vector<16x32xbf16>, vector<8x32xf32> -> vector<8x32xf32>
    %473 = arith.truncf %472 : vector<8x32xf32> to vector<8x32xbf16>
    %c0_230 = arith.constant 0 : index
    %c2_231 = arith.constant 2 : index
    %c0_232 = arith.constant 0 : index
    %c0_233 = arith.constant 0 : index
    %474 = vector.load %arg12[%c0_230, %c2_231, %c0_232, %c0_233] : memref<1x4x32x128xbf16, #tpu.memory_space<vmem>>, vector<1x1x32x128xbf16>
    %475 = vector.shape_cast %474 : vector<1x1x32x128xbf16> to vector<32x128xbf16>
    %cst_234 = arith.constant dense<0.000000e+00> : vector<8x128xf32>
    %476 = tpu.matmul %473, %475, %cst_234 {dimension_numbers = #tpu.dot_dimension_numbers<[1], [0], [0], [1], [0, 0, 1, 1], [], []>} : vector<8x32xbf16>, vector<32x128xbf16>, vector<8x128xf32> -> vector<8x128xf32>
    %477 = arith.addf %456, %476 : vector<8x128xf32>
    %478 = vector.extract_strided_slice %399 {offsets = [0, 0], sizes = [8, 32], strides = [1, 1]} : vector<16x32xbf16> to vector<8x32xbf16>
    %479 = vector.extract_strided_slice %406 {offsets = [0, 0], sizes = [16, 32], strides = [1, 1]} : vector<32x32xbf16> to vector<16x32xbf16>
    %cst_235 = arith.constant dense<0.000000e+00> : vector<8x16xf32>
    %480 = tpu.matmul %478, %479, %cst_235 {dimension_numbers = #tpu.dot_dimension_numbers<[1], [1], [0], [0], [0, 0, 1, 0], [], []>} : vector<8x32xbf16>, vector<16x32xbf16>, vector<8x16xf32> -> vector<8x16xf32>
    %cst_236 = arith.constant dense<0xFF800000> : vector<8xf32>
    %481 = vector.multi_reduction <maximumf>, %480, %cst_236 [1] : vector<8x16xf32> to vector<8xf32>
    %482 = vector.shape_cast %481 : vector<8xf32> to vector<8x1xf32>
    %483 = vector.broadcast %482 : vector<8x1xf32> to vector<8x16xf32>
    %484 = arith.subf %480, %483 : vector<8x16xf32>
    %485 = math.exp %484 : vector<8x16xf32>
    %cst_237 = arith.constant dense<0.000000e+00> : vector<8xf32>
    %486 = vector.multi_reduction <add>, %485, %cst_237 [1] : vector<8x16xf32> to vector<8xf32>
    %487 = vector.shape_cast %486 : vector<8xf32> to vector<8x1xf32>
    %488 = tpu.reciprocal %487 {approx = true} : vector<8x1xf32> -> vector<8x1xf32>
    %489 = vector.broadcast %488 : vector<8x1xf32> to vector<8x16xf32>
    %490 = arith.mulf %485, %489 : vector<8x16xf32>
    %491 = arith.truncf %490 : vector<8x16xf32> to vector<8x16xbf16>
    %492 = vector.extract_strided_slice %413 {offsets = [0, 0], sizes = [16, 32], strides = [1, 1]} : vector<32x32xbf16> to vector<16x32xbf16>
    %cst_238 = arith.constant dense<0.000000e+00> : vector<8x32xf32>
    %493 = tpu.matmul %491, %492, %cst_238 {dimension_numbers = #tpu.dot_dimension_numbers<[1], [0], [0], [1], [0, 0, 1, 1], [], []>} : vector<8x16xbf16>, vector<16x32xbf16>, vector<8x32xf32> -> vector<8x32xf32>
    %494 = arith.truncf %493 : vector<8x32xf32> to vector<8x32xbf16>
    %c0_239 = arith.constant 0 : index
    %c3_240 = arith.constant 3 : index
    %c0_241 = arith.constant 0 : index
    %c0_242 = arith.constant 0 : index
    %495 = vector.load %arg12[%c0_239, %c3_240, %c0_241, %c0_242] : memref<1x4x32x128xbf16, #tpu.memory_space<vmem>>, vector<1x1x32x128xbf16>
    %496 = vector.shape_cast %495 : vector<1x1x32x128xbf16> to vector<32x128xbf16>
    %cst_243 = arith.constant dense<0.000000e+00> : vector<8x128xf32>
    %497 = tpu.matmul %494, %496, %cst_243 {dimension_numbers = #tpu.dot_dimension_numbers<[1], [0], [0], [1], [0, 0, 1, 1], [], []>} : vector<8x32xbf16>, vector<32x128xbf16>, vector<8x128xf32> -> vector<8x128xf32>
    %498 = arith.addf %477, %497 : vector<8x128xf32>
    %cst_244 = arith.constant 0.000000e+00 : f32
    %499 = vector.broadcast %cst_244 : f32 to vector<8x128xf32>
    %500 = vector.extract_strided_slice %336 {offsets = [8, 0], sizes = [8, 32], strides = [1, 1]} : vector<16x32xbf16> to vector<8x32xbf16>
    %501 = vector.extract_strided_slice %343 {offsets = [16, 0], sizes = [16, 32], strides = [1, 1]} : vector<32x32xbf16> to vector<16x32xbf16>
    %cst_245 = arith.constant dense<0.000000e+00> : vector<8x16xf32>
    %502 = tpu.matmul %500, %501, %cst_245 {dimension_numbers = #tpu.dot_dimension_numbers<[1], [1], [0], [0], [0, 0, 1, 0], [], []>} : vector<8x32xbf16>, vector<16x32xbf16>, vector<8x16xf32> -> vector<8x16xf32>
    %cst_246 = arith.constant dense<0xFF800000> : vector<8xf32>
    %503 = vector.multi_reduction <maximumf>, %502, %cst_246 [1] : vector<8x16xf32> to vector<8xf32>
    %504 = vector.shape_cast %503 : vector<8xf32> to vector<8x1xf32>
    %505 = vector.broadcast %504 : vector<8x1xf32> to vector<8x16xf32>
    %506 = arith.subf %502, %505 : vector<8x16xf32>
    %507 = math.exp %506 : vector<8x16xf32>
    %cst_247 = arith.constant dense<0.000000e+00> : vector<8xf32>
    %508 = vector.multi_reduction <add>, %507, %cst_247 [1] : vector<8x16xf32> to vector<8xf32>
    %509 = vector.shape_cast %508 : vector<8xf32> to vector<8x1xf32>
    %510 = tpu.reciprocal %509 {approx = true} : vector<8x1xf32> -> vector<8x1xf32>
    %511 = vector.broadcast %510 : vector<8x1xf32> to vector<8x16xf32>
    %512 = arith.mulf %507, %511 : vector<8x16xf32>
    %513 = arith.truncf %512 : vector<8x16xf32> to vector<8x16xbf16>
    %514 = vector.extract_strided_slice %350 {offsets = [16, 0], sizes = [16, 32], strides = [1, 1]} : vector<32x32xbf16> to vector<16x32xbf16>
    %cst_248 = arith.constant dense<0.000000e+00> : vector<8x32xf32>
    %515 = tpu.matmul %513, %514, %cst_248 {dimension_numbers = #tpu.dot_dimension_numbers<[1], [0], [0], [1], [0, 0, 1, 1], [], []>} : vector<8x16xbf16>, vector<16x32xbf16>, vector<8x32xf32> -> vector<8x32xf32>
    %516 = arith.truncf %515 : vector<8x32xf32> to vector<8x32xbf16>
    %c0_249 = arith.constant 0 : index
    %c0_250 = arith.constant 0 : index
    %c0_251 = arith.constant 0 : index
    %c0_252 = arith.constant 0 : index
    %517 = vector.load %arg12[%c0_249, %c0_250, %c0_251, %c0_252] : memref<1x4x32x128xbf16, #tpu.memory_space<vmem>>, vector<1x1x32x128xbf16>
    %518 = vector.shape_cast %517 : vector<1x1x32x128xbf16> to vector<32x128xbf16>
    %cst_253 = arith.constant dense<0.000000e+00> : vector<8x128xf32>
    %519 = tpu.matmul %516, %518, %cst_253 {dimension_numbers = #tpu.dot_dimension_numbers<[1], [0], [0], [1], [0, 0, 1, 1], [], []>} : vector<8x32xbf16>, vector<32x128xbf16>, vector<8x128xf32> -> vector<8x128xf32>
    %520 = arith.addf %499, %519 : vector<8x128xf32>
    %521 = vector.extract_strided_slice %357 {offsets = [8, 0], sizes = [8, 32], strides = [1, 1]} : vector<16x32xbf16> to vector<8x32xbf16>
    %522 = vector.extract_strided_slice %364 {offsets = [16, 0], sizes = [16, 32], strides = [1, 1]} : vector<32x32xbf16> to vector<16x32xbf16>
    %cst_254 = arith.constant dense<0.000000e+00> : vector<8x16xf32>
    %523 = tpu.matmul %521, %522, %cst_254 {dimension_numbers = #tpu.dot_dimension_numbers<[1], [1], [0], [0], [0, 0, 1, 0], [], []>} : vector<8x32xbf16>, vector<16x32xbf16>, vector<8x16xf32> -> vector<8x16xf32>
    %cst_255 = arith.constant dense<0xFF800000> : vector<8xf32>
    %524 = vector.multi_reduction <maximumf>, %523, %cst_255 [1] : vector<8x16xf32> to vector<8xf32>
    %525 = vector.shape_cast %524 : vector<8xf32> to vector<8x1xf32>
    %526 = vector.broadcast %525 : vector<8x1xf32> to vector<8x16xf32>
    %527 = arith.subf %523, %526 : vector<8x16xf32>
    %528 = math.exp %527 : vector<8x16xf32>
    %cst_256 = arith.constant dense<0.000000e+00> : vector<8xf32>
    %529 = vector.multi_reduction <add>, %528, %cst_256 [1] : vector<8x16xf32> to vector<8xf32>
    %530 = vector.shape_cast %529 : vector<8xf32> to vector<8x1xf32>
    %531 = tpu.reciprocal %530 {approx = true} : vector<8x1xf32> -> vector<8x1xf32>
    %532 = vector.broadcast %531 : vector<8x1xf32> to vector<8x16xf32>
    %533 = arith.mulf %528, %532 : vector<8x16xf32>
    %534 = arith.truncf %533 : vector<8x16xf32> to vector<8x16xbf16>
    %535 = vector.extract_strided_slice %371 {offsets = [16, 0], sizes = [16, 32], strides = [1, 1]} : vector<32x32xbf16> to vector<16x32xbf16>
    %cst_257 = arith.constant dense<0.000000e+00> : vector<8x32xf32>
    %536 = tpu.matmul %534, %535, %cst_257 {dimension_numbers = #tpu.dot_dimension_numbers<[1], [0], [0], [1], [0, 0, 1, 1], [], []>} : vector<8x16xbf16>, vector<16x32xbf16>, vector<8x32xf32> -> vector<8x32xf32>
    %537 = arith.truncf %536 : vector<8x32xf32> to vector<8x32xbf16>
    %c0_258 = arith.constant 0 : index
    %c1_259 = arith.constant 1 : index
    %c0_260 = arith.constant 0 : index
    %c0_261 = arith.constant 0 : index
    %538 = vector.load %arg12[%c0_258, %c1_259, %c0_260, %c0_261] : memref<1x4x32x128xbf16, #tpu.memory_space<vmem>>, vector<1x1x32x128xbf16>
    %539 = vector.shape_cast %538 : vector<1x1x32x128xbf16> to vector<32x128xbf16>
    %cst_262 = arith.constant dense<0.000000e+00> : vector<8x128xf32>
    %540 = tpu.matmul %537, %539, %cst_262 {dimension_numbers = #tpu.dot_dimension_numbers<[1], [0], [0], [1], [0, 0, 1, 1], [], []>} : vector<8x32xbf16>, vector<32x128xbf16>, vector<8x128xf32> -> vector<8x128xf32>
    %541 = arith.addf %520, %540 : vector<8x128xf32>
    %542 = vector.extract_strided_slice %378 {offsets = [8, 0], sizes = [8, 32], strides = [1, 1]} : vector<16x32xbf16> to vector<8x32xbf16>
    %543 = vector.extract_strided_slice %385 {offsets = [16, 0], sizes = [16, 32], strides = [1, 1]} : vector<32x32xbf16> to vector<16x32xbf16>
    %cst_263 = arith.constant dense<0.000000e+00> : vector<8x16xf32>
    %544 = tpu.matmul %542, %543, %cst_263 {dimension_numbers = #tpu.dot_dimension_numbers<[1], [1], [0], [0], [0, 0, 1, 0], [], []>} : vector<8x32xbf16>, vector<16x32xbf16>, vector<8x16xf32> -> vector<8x16xf32>
    %cst_264 = arith.constant dense<0xFF800000> : vector<8xf32>
    %545 = vector.multi_reduction <maximumf>, %544, %cst_264 [1] : vector<8x16xf32> to vector<8xf32>
    %546 = vector.shape_cast %545 : vector<8xf32> to vector<8x1xf32>
    %547 = vector.broadcast %546 : vector<8x1xf32> to vector<8x16xf32>
    %548 = arith.subf %544, %547 : vector<8x16xf32>
    %549 = math.exp %548 : vector<8x16xf32>
    %cst_265 = arith.constant dense<0.000000e+00> : vector<8xf32>
    %550 = vector.multi_reduction <add>, %549, %cst_265 [1] : vector<8x16xf32> to vector<8xf32>
    %551 = vector.shape_cast %550 : vector<8xf32> to vector<8x1xf32>
    %552 = tpu.reciprocal %551 {approx = true} : vector<8x1xf32> -> vector<8x1xf32>
    %553 = vector.broadcast %552 : vector<8x1xf32> to vector<8x16xf32>
    %554 = arith.mulf %549, %553 : vector<8x16xf32>
    %555 = arith.truncf %554 : vector<8x16xf32> to vector<8x16xbf16>
    %556 = vector.extract_strided_slice %392 {offsets = [16, 0], sizes = [16, 32], strides = [1, 1]} : vector<32x32xbf16> to vector<16x32xbf16>
    %cst_266 = arith.constant dense<0.000000e+00> : vector<8x32xf32>
    %557 = tpu.matmul %555, %556, %cst_266 {dimension_numbers = #tpu.dot_dimension_numbers<[1], [0], [0], [1], [0, 0, 1, 1], [], []>} : vector<8x16xbf16>, vector<16x32xbf16>, vector<8x32xf32> -> vector<8x32xf32>
    %558 = arith.truncf %557 : vector<8x32xf32> to vector<8x32xbf16>
    %c0_267 = arith.constant 0 : index
    %c2_268 = arith.constant 2 : index
    %c0_269 = arith.constant 0 : index
    %c0_270 = arith.constant 0 : index
    %559 = vector.load %arg12[%c0_267, %c2_268, %c0_269, %c0_270] : memref<1x4x32x128xbf16, #tpu.memory_space<vmem>>, vector<1x1x32x128xbf16>
    %560 = vector.shape_cast %559 : vector<1x1x32x128xbf16> to vector<32x128xbf16>
    %cst_271 = arith.constant dense<0.000000e+00> : vector<8x128xf32>
    %561 = tpu.matmul %558, %560, %cst_271 {dimension_numbers = #tpu.dot_dimension_numbers<[1], [0], [0], [1], [0, 0, 1, 1], [], []>} : vector<8x32xbf16>, vector<32x128xbf16>, vector<8x128xf32> -> vector<8x128xf32>
    %562 = arith.addf %541, %561 : vector<8x128xf32>
    %563 = vector.extract_strided_slice %399 {offsets = [8, 0], sizes = [8, 32], strides = [1, 1]} : vector<16x32xbf16> to vector<8x32xbf16>
    %564 = vector.extract_strided_slice %406 {offsets = [16, 0], sizes = [16, 32], strides = [1, 1]} : vector<32x32xbf16> to vector<16x32xbf16>
    %cst_272 = arith.constant dense<0.000000e+00> : vector<8x16xf32>
    %565 = tpu.matmul %563, %564, %cst_272 {dimension_numbers = #tpu.dot_dimension_numbers<[1], [1], [0], [0], [0, 0, 1, 0], [], []>} : vector<8x32xbf16>, vector<16x32xbf16>, vector<8x16xf32> -> vector<8x16xf32>
    %cst_273 = arith.constant dense<0xFF800000> : vector<8xf32>
    %566 = vector.multi_reduction <maximumf>, %565, %cst_273 [1] : vector<8x16xf32> to vector<8xf32>
    %567 = vector.shape_cast %566 : vector<8xf32> to vector<8x1xf32>
    %568 = vector.broadcast %567 : vector<8x1xf32> to vector<8x16xf32>
    %569 = arith.subf %565, %568 : vector<8x16xf32>
    %570 = math.exp %569 : vector<8x16xf32>
    %cst_274 = arith.constant dense<0.000000e+00> : vector<8xf32>
    %571 = vector.multi_reduction <add>, %570, %cst_274 [1] : vector<8x16xf32> to vector<8xf32>
    %572 = vector.shape_cast %571 : vector<8xf32> to vector<8x1xf32>
    %573 = tpu.reciprocal %572 {approx = true} : vector<8x1xf32> -> vector<8x1xf32>
    %574 = vector.broadcast %573 : vector<8x1xf32> to vector<8x16xf32>
    %575 = arith.mulf %570, %574 : vector<8x16xf32>
    %576 = arith.truncf %575 : vector<8x16xf32> to vector<8x16xbf16>
    %577 = vector.extract_strided_slice %413 {offsets = [16, 0], sizes = [16, 32], strides = [1, 1]} : vector<32x32xbf16> to vector<16x32xbf16>
    %cst_275 = arith.constant dense<0.000000e+00> : vector<8x32xf32>
    %578 = tpu.matmul %576, %577, %cst_275 {dimension_numbers = #tpu.dot_dimension_numbers<[1], [0], [0], [1], [0, 0, 1, 1], [], []>} : vector<8x16xbf16>, vector<16x32xbf16>, vector<8x32xf32> -> vector<8x32xf32>
    %579 = arith.truncf %578 : vector<8x32xf32> to vector<8x32xbf16>
    %c0_276 = arith.constant 0 : index
    %c3_277 = arith.constant 3 : index
    %c0_278 = arith.constant 0 : index
    %c0_279 = arith.constant 0 : index
    %580 = vector.load %arg12[%c0_276, %c3_277, %c0_278, %c0_279] : memref<1x4x32x128xbf16, #tpu.memory_space<vmem>>, vector<1x1x32x128xbf16>
    %581 = vector.shape_cast %580 : vector<1x1x32x128xbf16> to vector<32x128xbf16>
    %cst_280 = arith.constant dense<0.000000e+00> : vector<8x128xf32>
    %582 = tpu.matmul %579, %581, %cst_280 {dimension_numbers = #tpu.dot_dimension_numbers<[1], [0], [0], [1], [0, 0, 1, 1], [], []>} : vector<8x32xbf16>, vector<32x128xbf16>, vector<8x128xf32> -> vector<8x128xf32>
    %583 = arith.addf %562, %582 : vector<8x128xf32>
    %584 = tpu.concatenate %498, %583 in 0 : vector<8x128xf32>, vector<8x128xf32> -> vector<16x128xf32>
    %585 = vector.broadcast %10 : vector<1x128xf32> to vector<16x128xf32>
    %586 = arith.addf %584, %585 : vector<16x128xf32>
    %587 = arith.addf %586, %327 : vector<16x128xf32>
    %cst_281 = arith.constant dense<0.000000e+00> : vector<16xf32>
    %588 = vector.multi_reduction <add>, %587, %cst_281 [1] : vector<16x128xf32> to vector<16xf32>
    %589 = vector.shape_cast %588 : vector<16xf32> to vector<16x1xf32>
    %cst_282 = arith.constant 1.280000e+02 : f32
    %590 = vector.broadcast %cst_282 : f32 to vector<16x1xf32>
    %591 = arith.divf %589, %590 : vector<16x1xf32>
    %592 = arith.mulf %587, %587 : vector<16x128xf32>
    %cst_283 = arith.constant dense<0.000000e+00> : vector<16xf32>
    %593 = vector.multi_reduction <add>, %592, %cst_283 [1] : vector<16x128xf32> to vector<16xf32>
    %594 = vector.shape_cast %593 : vector<16xf32> to vector<16x1xf32>
    %cst_284 = arith.constant 1.280000e+02 : f32
    %595 = vector.broadcast %cst_284 : f32 to vector<16x1xf32>
    %596 = arith.divf %594, %595 : vector<16x1xf32>
    %597 = vector.broadcast %591 : vector<16x1xf32> to vector<16x128xf32>
    %598 = arith.subf %587, %597 : vector<16x128xf32>
    %599 = arith.mulf %591, %591 : vector<16x1xf32>
    %600 = arith.subf %596, %599 : vector<16x1xf32>
    %cst_285 = arith.constant 9.99999974E-6 : f32
    %601 = vector.broadcast %cst_285 : f32 to vector<16x1xf32>
    %602 = arith.addf %600, %601 : vector<16x1xf32>
    %603 = math.rsqrt %602 : vector<16x1xf32>
    %604 = vector.broadcast %603 : vector<16x1xf32> to vector<16x128xf32>
    %605 = arith.mulf %598, %604 : vector<16x128xf32>
    %606 = vector.broadcast %15 : vector<1x128xf32> to vector<16x128xf32>
    %607 = arith.mulf %605, %606 : vector<16x128xf32>
    %608 = vector.broadcast %16 : vector<1x128xf32> to vector<16x128xf32>
    %609 = arith.addf %607, %608 : vector<16x128xf32>
    %610 = arith.truncf %609 : vector<16x128xf32> to vector<16x128xbf16>
    %c0_286 = arith.constant 0 : index
    %c0_287 = arith.constant 0 : index
    %c0_288 = arith.constant 0 : index
    %611 = vector.load %arg13[%c0_286, %c0_287, %c0_288] : memref<1x128x256xbf16, #tpu.memory_space<vmem>>, vector<1x128x256xbf16>
    %612 = vector.shape_cast %611 : vector<1x128x256xbf16> to vector<128x256xbf16>
    %cst_289 = arith.constant dense<0.000000e+00> : vector<16x256xf32>
    %613 = tpu.matmul %610, %612, %cst_289 {dimension_numbers = #tpu.dot_dimension_numbers<[1], [0], [0], [1], [0, 0, 1, 1], [], []>} : vector<16x128xbf16>, vector<128x256xbf16>, vector<16x256xf32> -> vector<16x256xf32>
    %614 = vector.broadcast %11 : vector<1x256xf32> to vector<16x256xf32>
    %615 = arith.addf %613, %614 : vector<16x256xf32>
    %cst_290 = arith.constant 0.000000e+00 : f32
    %616 = vector.broadcast %cst_290 : f32 to vector<16x256xf32>
    %617 = arith.maximumf %615, %616 : vector<16x256xf32>
    %618 = arith.truncf %617 : vector<16x256xf32> to vector<16x256xbf16>
    %c0_291 = arith.constant 0 : index
    %c0_292 = arith.constant 0 : index
    %c0_293 = arith.constant 0 : index
    %619 = vector.load %arg14[%c0_291, %c0_292, %c0_293] : memref<1x256x128xbf16, #tpu.memory_space<vmem>>, vector<1x256x128xbf16>
    %620 = vector.shape_cast %619 : vector<1x256x128xbf16> to vector<256x128xbf16>
    %cst_294 = arith.constant dense<0.000000e+00> : vector<16x128xf32>
    %621 = tpu.matmul %618, %620, %cst_294 {dimension_numbers = #tpu.dot_dimension_numbers<[1], [0], [0], [1], [0, 0, 1, 1], [], []>} : vector<16x256xbf16>, vector<256x128xbf16>, vector<16x128xf32> -> vector<16x128xf32>
    %622 = vector.broadcast %12 : vector<1x128xf32> to vector<16x128xf32>
    %623 = arith.addf %621, %622 : vector<16x128xf32>
    %624 = arith.addf %623, %609 : vector<16x128xf32>
    %cst_295 = arith.constant dense<0.000000e+00> : vector<16xf32>
    %625 = vector.multi_reduction <add>, %624, %cst_295 [1] : vector<16x128xf32> to vector<16xf32>
    %626 = vector.shape_cast %625 : vector<16xf32> to vector<16x1xf32>
    %cst_296 = arith.constant 1.280000e+02 : f32
    %627 = vector.broadcast %cst_296 : f32 to vector<16x1xf32>
    %628 = arith.divf %626, %627 : vector<16x1xf32>
    %629 = arith.mulf %624, %624 : vector<16x128xf32>
    %cst_297 = arith.constant dense<0.000000e+00> : vector<16xf32>
    %630 = vector.multi_reduction <add>, %629, %cst_297 [1] : vector<16x128xf32> to vector<16xf32>
    %631 = vector.shape_cast %630 : vector<16xf32> to vector<16x1xf32>
    %cst_298 = arith.constant 1.280000e+02 : f32
    %632 = vector.broadcast %cst_298 : f32 to vector<16x1xf32>
    %633 = arith.divf %631, %632 : vector<16x1xf32>
    %634 = vector.broadcast %628 : vector<16x1xf32> to vector<16x128xf32>
    %635 = arith.subf %624, %634 : vector<16x128xf32>
    %636 = arith.mulf %628, %628 : vector<16x1xf32>
    %637 = arith.subf %633, %636 : vector<16x1xf32>
    %cst_299 = arith.constant 9.99999974E-6 : f32
    %638 = vector.broadcast %cst_299 : f32 to vector<16x1xf32>
    %639 = arith.addf %637, %638 : vector<16x1xf32>
    %640 = math.rsqrt %639 : vector<16x1xf32>
    %641 = vector.broadcast %640 : vector<16x1xf32> to vector<16x128xf32>
    %642 = arith.mulf %635, %641 : vector<16x128xf32>
    %643 = vector.broadcast %17 : vector<1x128xf32> to vector<16x128xf32>
    %644 = arith.mulf %642, %643 : vector<16x128xf32>
    %645 = vector.broadcast %18 : vector<1x128xf32> to vector<16x128xf32>
    %646 = arith.addf %644, %645 : vector<16x128xf32>
    %c0_300 = arith.constant 0 : index
    %c0_301 = arith.constant 0 : index
    %647 = vector.load %arg16[%c0_300, %c0_301] : memref<16x128xf32, #tpu.memory_space<vmem>>, vector<16x128xf32>
    tpu.vector_store %arg16[%c0_300, %c0_301], %646 {strides = array<i32>} : memref<16x128xf32, #tpu.memory_space<vmem>>, vector<16x128xf32>,
    return
  }
  func.func @transform_0(%arg0: i32, %arg1: i32) -> (i32, i32) {
    %c0_i32 = arith.constant 0 : i32
    %c0_i32_0 = arith.constant 0 : i32
    return %arg0, %c0_i32 : i32, i32
  }
  func.func @transform_1(%arg0: i32, %arg1: i32) -> (i32, i32) {
    %c0_i32 = arith.constant 0 : i32
    %c0_i32_0 = arith.constant 0 : i32
    return %arg0, %c0_i32 : i32, i32
  }
  func.func @transform_2(%arg0: i32, %arg1: i32) -> (i32, i32) {
    %c0_i32 = arith.constant 0 : i32
    %c0_i32_0 = arith.constant 0 : i32
    %c0_i32_1 = arith.constant 0 : i32
    return %c0_i32, %c0_i32_0 : i32, i32
  }
  func.func @transform_3(%arg0: i32, %arg1: i32) -> (i32, i32, i32, i32) {
    %c0_i32 = arith.constant 0 : i32
    %c0_i32_0 = arith.constant 0 : i32
    %c0_i32_1 = arith.constant 0 : i32
    %c0_i32_2 = arith.constant 0 : i32
    return %arg1, %c0_i32, %c0_i32_0, %c0_i32_1 : i32, i32, i32, i32
  }
  func.func @transform_4(%arg0: i32, %arg1: i32) -> (i32, i32, i32, i32) {
    %c0_i32 = arith.constant 0 : i32
    %c0_i32_0 = arith.constant 0 : i32
    %c0_i32_1 = arith.constant 0 : i32
    %c0_i32_2 = arith.constant 0 : i32
    return %arg1, %c0_i32, %c0_i32_0, %c0_i32_1 : i32, i32, i32, i32
  }
  func.func @transform_5(%arg0: i32, %arg1: i32) -> (i32, i32, i32, i32) {
    %c0_i32 = arith.constant 0 : i32
    %c0_i32_0 = arith.constant 0 : i32
    %c0_i32_1 = arith.constant 0 : i32
    %c0_i32_2 = arith.constant 0 : i32
    return %arg1, %c0_i32, %c0_i32_0, %c0_i32_1 : i32, i32, i32, i32
  }
  func.func @transform_6(%arg0: i32, %arg1: i32) -> (i32, i32, i32, i32) {
    %c0_i32 = arith.constant 0 : i32
    %c0_i32_0 = arith.constant 0 : i32
    %c0_i32_1 = arith.constant 0 : i32
    %c0_i32_2 = arith.constant 0 : i32
    return %arg1, %c0_i32, %c0_i32_0, %c0_i32_1 : i32, i32, i32, i32
  }
  func.func @transform_7(%arg0: i32, %arg1: i32) -> (i32, i32, i32, i32) {
    %c0_i32 = arith.constant 0 : i32
    %c0_i32_0 = arith.constant 0 : i32
    %c0_i32_1 = arith.constant 0 : i32
    %c0_i32_2 = arith.constant 0 : i32
    return %arg1, %c0_i32, %c0_i32_0, %c0_i32_1 : i32, i32, i32, i32
  }
  func.func @transform_8(%arg0: i32, %arg1: i32) -> (i32, i32, i32, i32) {
    %c0_i32 = arith.constant 0 : i32
    %c0_i32_0 = arith.constant 0 : i32
    %c0_i32_1 = arith.constant 0 : i32
    %c0_i32_2 = arith.constant 0 : i32
    return %arg1, %c0_i32, %c0_i32_0, %c0_i32_1 : i32, i32, i32, i32
  }
  func.func @transform_9(%arg0: i32, %arg1: i32) -> (i32, i32, i32, i32) {
    %c0_i32 = arith.constant 0 : i32
    %c0_i32_0 = arith.constant 0 : i32
    %c0_i32_1 = arith.constant 0 : i32
    %c0_i32_2 = arith.constant 0 : i32
    return %arg1, %c0_i32, %c0_i32_0, %c0_i32_1 : i32, i32, i32, i32
  }
  func.func @transform_10(%arg0: i32, %arg1: i32) -> (i32, i32, i32, i32) {
    %c0_i32 = arith.constant 0 : i32
    %c0_i32_0 = arith.constant 0 : i32
    %c0_i32_1 = arith.constant 0 : i32
    %c0_i32_2 = arith.constant 0 : i32
    return %arg1, %c0_i32, %c0_i32_0, %c0_i32_1 : i32, i32, i32, i32
  }
  func.func @transform_11(%arg0: i32, %arg1: i32) -> (i32, i32, i32) {
    %c0_i32 = arith.constant 0 : i32
    %c0_i32_0 = arith.constant 0 : i32
    %c0_i32_1 = arith.constant 0 : i32
    return %arg1, %c0_i32, %c0_i32_0 : i32, i32, i32
  }
  func.func @transform_12(%arg0: i32, %arg1: i32) -> (i32, i32, i32) {
    %c0_i32 = arith.constant 0 : i32
    %c0_i32_0 = arith.constant 0 : i32
    %c0_i32_1 = arith.constant 0 : i32
    return %arg1, %c0_i32, %c0_i32_0 : i32, i32, i32
  }
  func.func @transform_13(%arg0: i32, %arg1: i32) -> (i32, i32, i32) {
    %c0_i32 = arith.constant 0 : i32
    %c0_i32_0 = arith.constant 0 : i32
    %c0_i32_1 = arith.constant 0 : i32
    return %arg1, %c0_i32, %c0_i32_0 : i32, i32, i32
  }
  func.func @transform_14(%arg0: i32, %arg1: i32) -> (i32, i32) {
    %c0_i32 = arith.constant 0 : i32
    %c0_i32_0 = arith.constant 0 : i32
    return %arg0, %c0_i32 : i32, i32
  }
}

</mosaic_0001>

<llo_original>
// kernel: tpu_custom_call.1
$region0: #{tpu_custom_call.1}
  #allocation0 [shape = 'u32[]', space=smem, size = 0x4, offset = 0x4, fixed_abs, tag = 'smem constant byte address 0x4 - core index']
  #allocation1 [shape = 'u32[144,128]{1,0:T(1,128)}', space=vmem, size = 0x12000, scoped, tag = 'internal scratch']
  %s0 = inlined_call_operand.vmem [shape: f32[32,128], index: 0, kind: input, shape index: {}]
  %s1 = inlined_call_operand.vmem [shape: bf16[64,128], index: 1, kind: input, shape index: {}]
  %s2 = inlined_call_operand.vmem [shape: f32[4,8], index: 2, kind: input, shape index: {}]
  %s3 = inlined_call_operand.vmem [shape: bf16[2,4,128,32], index: 3, kind: input, shape index: {}]
  %s4 = inlined_call_operand.vmem [shape: bf16[2,4,128,32], index: 4, kind: input, shape index: {}]
  %s5 = inlined_call_operand.vmem [shape: bf16[2,4,128,32], index: 5, kind: input, shape index: {}]
  %s6 = inlined_call_operand.vmem [shape: bf16[2,4,32,128], index: 6, kind: input, shape index: {}]
  %s7 = inlined_call_operand.vmem [shape: bf16[2,4,128,32], index: 7, kind: input, shape index: {}]
  %s8 = inlined_call_operand.vmem [shape: bf16[2,4,128,32], index: 8, kind: input, shape index: {}]
  %s9 = inlined_call_operand.vmem [shape: bf16[2,4,128,32], index: 9, kind: input, shape index: {}]
  %s10 = inlined_call_operand.vmem [shape: bf16[2,4,32,128], index: 10, kind: input, shape index: {}]
  %s11 = inlined_call_operand.vmem [shape: bf16[2,128,256], index: 11, kind: input, shape index: {}]
  %s12 = inlined_call_operand.vmem [shape: bf16[2,256,128], index: 12, kind: input, shape index: {}]
  %s13 = inlined_call_operand.vmem [shape: f32[2,16,256], index: 13, kind: input, shape index: {}]
  %s14 = inlined_call_operand.hbm [shape: f32[32,128], index: 14, kind: output, shape index: {}]
  %s15 = sld [smem:[#allocation0]]
  $region93: #{tpu_custom_call.1} parent=0
    _
  %s17 = ssub.s32 1, %s15
  %s18 = scalar_select 0, %s17, %s15
  $region1: #{tpu_custom_call.1} parent=0
    #allocation2 [shape = 'u8[16384]{0}', space=vmem, size = 0x4000, scoped, tag = 'output window, operand 0']
    #allocation3 [shape = 's32[2]{0}', space=sflag, size = 0x8, scoped, tag = 'scoped memory for tpu_custom_call.1']
    %19 = vsyncpa [#allocation3], 0
    %s20 = scalar_lea.sflag [#allocation3], 1
    %21 = vsyncpa %s20, 0
    loop: start=0, step=1, limit=6
    $region2: #{tpu_custom_call.1} parent=1 // loop_pre_header
      _
    $region3: #{tpu_custom_call.1} parent=1 // loop_header
      %s23 = sphi 0, %s27
      %p24 = scmp.ge.s32.totalorder %s23, 6
      %s30 = sphi 0, %s42
      %s31 = sphi 0, %s38
      %s32 = sphi 0, %s30
      %s33 = sphi 0, %s31
      %s34 = sphi 0, %s32
      %s35 = sphi 0, %s33
      %s45 = sphi 0, %s47
      %s48 = sphi 0, %s45
      %s49 = sphi 0, %s48
      %s65 = sphi 0, %s49
      %s71 = sphi 0, %s73
      %s74 = sphi 0, %s71
      %s75 = sphi 0, %s74
      %s91 = sphi 0, %s75
      %s95 = sphi 0, %s95
      %s97 = sphi 0, %s95
      %s98 = sphi 0, %s97
      %s112 = sphi 0, %s98
      %s118 = sphi 0, %s120
      %s121 = sphi 0, %s118
      %s122 = sphi 0, %s121
      %s138 = sphi 0, %s122
      %s144 = sphi 0, %s146
      %s147 = sphi 0, %s144
      %s148 = sphi 0, %s147
      %s164 = sphi 0, %s148
      %s170 = sphi 0, %s172
      %s173 = sphi 0, %s170
      %s174 = sphi 0, %s173
      %s190 = sphi 0, %s174
      %s196 = sphi 0, %s198
      %s199 = sphi 0, %s196
      %s200 = sphi 0, %s199
      %s216 = sphi 0, %s200
      %s222 = sphi 0, %s224
      %s225 = sphi 0, %s222
      %s226 = sphi 0, %s225
      %s242 = sphi 0, %s226
      %s248 = sphi 0, %s250
      %s251 = sphi 0, %s248
      %s252 = sphi 0, %s251
      %s268 = sphi 0, %s252
      %s274 = sphi 0, %s276
      %s277 = sphi 0, %s274
      %s278 = sphi 0, %s277
      %s294 = sphi 0, %s278
      %s300 = sphi 0, %s302
      %s303 = sphi 0, %s300
      %s304 = sphi 0, %s303
      %s320 = sphi 0, %s304
      %s326 = sphi 0, %s328
      %s329 = sphi 0, %s326
      %s330 = sphi 0, %s329
      %s346 = sphi 0, %s330
      %s352 = sphi 0, %s354
      %s355 = sphi 0, %s352
      %s356 = sphi 0, %s355
      %s372 = sphi 0, %s356
      %s378 = sphi 0, %s380
      %s381 = sphi 0, %s378
      %s382 = sphi 0, %s381
      %s398 = sphi 0, %s382
      %s404 = sphi 0, %s406
      %s407 = sphi 0, %s404
      %s408 = sphi 0, %s407
      %s424 = sphi 0, %s408
    $region4: #{tpu_custom_call.1} parent=1 // loop_header_branch
      %26 = sbr.rel (%p24) target = $region8
    $region5: #{tpu_custom_call.1} parent=1 // loop_body
      %s28 = ssub.s32 %s23, 1
      %s29 = ssub.s32 %s23, 2
      %s36 = sadd.s32 1, %s31
      %p37 = scmp.ge.s32.totalorder %s36, 2
      %s38 = scalar_select %p37, 0, %s36
      %s39 = sadd.s32 1, %s30
      %s40 = scalar_select %p37, %s39, %s30
      %p41 = scmp.ge.s32.totalorder %s40, 2
      %s42 = scalar_select %p41, 0, %s40
      %s43 = ssub.s32 %s30, %s42
      %p44 = scmp.eq.s32.totalorder %s43, 0
      %s46 = sadd.s32 %s45, 1
      %s47 = scalar_select %p44, %s45, %s46
      %p50 = pneg %p44
      %p51 = scmp.eq.s32.totalorder %s23, 3
      %p52 = por %p50, %p51
      %p53 = scmp.ne.s32.totalorder %s45, %s48
      %p54 = scmp.eq.s32.totalorder %s23, 0
      %p55 = por %p53, %p54
      %p56 = scmp.ne.s32.totalorder %s45, %s48
      %p57 = scmp.eq.s32.totalorder %s28, 3
      %p58 = por %p56, %p57
      %p59 = scmp.ne.s32.totalorder %s48, %s49
      %p60 = scmp.eq.s32.totalorder %s28, 0
      %p61 = por %p59, %p60
      %p62 = scmp.ne.s32.totalorder %s48, %s49
      %p63 = scmp.eq.s32.totalorder %s29, 3
      %p64 = por %p62, %p63
      %p66 = scmp.ne.s32.totalorder %s49, %s65
      %p67 = scmp.eq.s32.totalorder %s29, 0
      %p68 = por %p66, %p67
      %s69 = ssub.s32 %s30, %s42
      %p70 = scmp.eq.s32.totalorder %s69, 0
      %s72 = sadd.s32 %s71, 1
      %s73 = scalar_select %p70, %s71, %s72
      %p76 = pneg %p70
      %p77 = scmp.eq.s32.totalorder %s23, 3
      %p78 = por %p76, %p77
      %p79 = scmp.ne.s32.totalorder %s71, %s74
      %p80 = scmp.eq.s32.totalorder %s23, 0
      %p81 = por %p79, %p80
      %p82 = scmp.ne.s32.totalorder %s71, %s74
      %p83 = scmp.eq.s32.totalorder %s28, 3
      %p84 = por %p82, %p83
      %p85 = scmp.ne.s32.totalorder %s74, %s75
      %p86 = scmp.eq.s32.totalorder %s28, 0
      %p87 = por %p85, %p86
      %p88 = scmp.ne.s32.totalorder %s74, %s75
      %p89 = scmp.eq.s32.totalorder %s29, 3
      %p90 = por %p88, %p89
      %p92 = scmp.ne.s32.totalorder %s75, %s91
      %p93 = scmp.eq.s32.totalorder %s29, 0
      %p94 = por %p92, %p93
      %s96 = sadd.s32 %s95, 1
      %p99 = scmp.eq.s32.totalorder %s23, 3
      %p100 = scmp.ne.s32.totalorder %s95, %s97
      %p101 = scmp.eq.s32.totalorder %s23, 0
      %p102 = por %p100, %p101
      %p103 = scmp.ne.s32.totalorder %s95, %s97
      %p104 = scmp.eq.s32.totalorder %s28, 3
      %p105 = por %p103, %p104
      %p106 = scmp.ne.s32.totalorder %s97, %s98
      %p107 = scmp.eq.s32.totalorder %s28, 0
      %p108 = por %p106, %p107
      %p109 = scmp.ne.s32.totalorder %s97, %s98
      %p110 = scmp.eq.s32.totalorder %s29, 3
      %p111 = por %p109, %p110
      %p113 = scmp.ne.s32.totalorder %s98, %s112
      %p114 = scmp.eq.s32.totalorder %s29, 0
      %p115 = por %p113, %p114
      %s116 = ssub.s32 %s31, %s38
      %p117 = scmp.eq.s32.totalorder %s116, 0
      %s119 = sadd.s32 %s118, 1
      %s120 = scalar_select %p117, %s118, %s119
      %p123 = pneg %p117
      %p124 = scmp.eq.s32.totalorder %s23, 3
      %p125 = por %p123, %p124
      %p126 = scmp.ne.s32.totalorder %s118, %s121
      %p127 = scmp.eq.s32.totalorder %s23, 0
      %p128 = por %p126, %p127
      %p129 = scmp.ne.s32.totalorder %s118, %s121
      %p130 = scmp.eq.s32.totalorder %s28, 3
      %p131 = por %p129, %p130
      %p132 = scmp.ne.s32.totalorder %s121, %s122
      %p133 = scmp.eq.s32.totalorder %s28, 0
      %p134 = por %p132, %p133
      %p135 = scmp.ne.s32.totalorder %s121, %s122
      %p136 = scmp.eq.s32.totalorder %s29, 3
      %p137 = por %p135, %p136
      %p139 = scmp.ne.s32.totalorder %s122, %s138
      %p140 = scmp.eq.s32.totalorder %s29, 0
      %p141 = por %p139, %p140
      %s142 = ssub.s32 %s31, %s38
      %p143 = scmp.eq.s32.totalorder %s142, 0
      %s145 = sadd.s32 %s144, 1
      %s146 = scalar_select %p143, %s144, %s145
      %p149 = pneg %p143
      %p150 = scmp.eq.s32.totalorder %s23, 3
      %p151 = por %p149, %p150
      %p152 = scmp.ne.s32.totalorder %s144, %s147
      %p153 = scmp.eq.s32.totalorder %s23, 0
      %p154 = por %p152, %p153
      %p155 = scmp.ne.s32.totalorder %s144, %s147
      %p156 = scmp.eq.s32.totalorder %s28, 3
      %p157 = por %p155, %p156
      %p158 = scmp.ne.s32.totalorder %s147, %s148
      %p159 = scmp.eq.s32.totalorder %s28, 0
      %p160 = por %p158, %p159
      %p161 = scmp.ne.s32.totalorder %s147, %s148
      %p162 = scmp.eq.s32.totalorder %s29, 3
      %p163 = por %p161, %p162
      %p165 = scmp.ne.s32.totalorder %s148, %s164
      %p166 = scmp.eq.s32.totalorder %s29, 0
      %p167 = por %p165, %p166
      %s168 = ssub.s32 %s31, %s38
      %p169 = scmp.eq.s32.totalorder %s168, 0
      %s171 = sadd.s32 %s170, 1
      %s172 = scalar_select %p169, %s170, %s171
      %p175 = pneg %p169
      %p176 = scmp.eq.s32.totalorder %s23, 3
      %p177 = por %p175, %p176
      %p178 = scmp.ne.s32.totalorder %s170, %s173
      %p179 = scmp.eq.s32.totalorder %s23, 0
      %p180 = por %p178, %p179
      %p181 = scmp.ne.s32.totalorder %s170, %s173
      %p182 = scmp.eq.s32.totalorder %s28, 3
      %p183 = por %p181, %p182
      %p184 = scmp.ne.s32.totalorder %s173, %s174
      %p185 = scmp.eq.s32.totalorder %s28, 0
      %p186 = por %p184, %p185
      %p187 = scmp.ne.s32.totalorder %s173, %s174
      %p188 = scmp.eq.s32.totalorder %s29, 3
      %p189 = por %p187, %p188
      %p191 = scmp.ne.s32.totalorder %s174, %s190
      %p192 = scmp.eq.s32.totalorder %s29, 0
      %p193 = por %p191, %p192
      %s194 = ssub.s32 %s31, %s38
      %p195 = scmp.eq.s32.totalorder %s194, 0
      %s197 = sadd.s32 %s196, 1
      %s198 = scalar_select %p195, %s196, %s197
      %p201 = pneg %p195
      %p202 = scmp.eq.s32.totalorder %s23, 3
      %p203 = por %p201, %p202
      %p204 = scmp.ne.s32.totalorder %s196, %s199
      %p205 = scmp.eq.s32.totalorder %s23, 0
      %p206 = por %p204, %p205
      %p207 = scmp.ne.s32.totalorder %s196, %s199
      %p208 = scmp.eq.s32.totalorder %s28, 3
      %p209 = por %p207, %p208
      %p210 = scmp.ne.s32.totalorder %s199, %s200
      %p211 = scmp.eq.s32.totalorder %s28, 0
      %p212 = por %p210, %p211
      %p213 = scmp.ne.s32.totalorder %s199, %s200
      %p214 = scmp.eq.s32.totalorder %s29, 3
      %p215 = por %p213, %p214
      %p217 = scmp.ne.s32.totalorder %s200, %s216
      %p218 = scmp.eq.s32.totalorder %s29, 0
      %p219 = por %p217, %p218
      %s220 = ssub.s32 %s31, %s38
      %p221 = scmp.eq.s32.totalorder %s220, 0
      %s223 = sadd.s32 %s222, 1
      %s224 = scalar_select %p221, %s222, %s223
      %p227 = pneg %p221
      %p228 = scmp.eq.s32.totalorder %s23, 3
      %p229 = por %p227, %p228
      %p230 = scmp.ne.s32.totalorder %s222, %s225
      %p231 = scmp.eq.s32.totalorder %s23, 0
      %p232 = por %p230, %p231
      %p233 = scmp.ne.s32.totalorder %s222, %s225
      %p234 = scmp.eq.s32.totalorder %s28, 3
      %p235 = por %p233, %p234
      %p236 = scmp.ne.s32.totalorder %s225, %s226
      %p237 = scmp.eq.s32.totalorder %s28, 0
      %p238 = por %p236, %p237
      %p239 = scmp.ne.s32.totalorder %s225, %s226
      %p240 = scmp.eq.s32.totalorder %s29, 3
      %p241 = por %p239, %p240
      %p243 = scmp.ne.s32.totalorder %s226, %s242
      %p244 = scmp.eq.s32.totalorder %s29, 0
      %p245 = por %p243, %p244
      %s246 = ssub.s32 %s31, %s38
      %p247 = scmp.eq.s32.totalorder %s246, 0
      %s249 = sadd.s32 %s248, 1
      %s250 = scalar_select %p247, %s248, %s249
      %p253 = pneg %p247
      %p254 = scmp.eq.s32.totalorder %s23, 3
      %p255 = por %p253, %p254
      %p256 = scmp.ne.s32.totalorder %s248, %s251
      %p257 = scmp.eq.s32.totalorder %s23, 0
      %p258 = por %p256, %p257
      %p259 = scmp.ne.s32.totalorder %s248, %s251
      %p260 = scmp.eq.s32.totalorder %s28, 3
      %p261 = por %p259, %p260
      %p262 = scmp.ne.s32.totalorder %s251, %s252
      %p263 = scmp.eq.s32.totalorder %s28, 0
      %p264 = por %p262, %p263
      %p265 = scmp.ne.s32.totalorder %s251, %s252
      %p266 = scmp.eq.s32.totalorder %s29, 3
      %p267 = por %p265, %p266
      %p269 = scmp.ne.s32.totalorder %s252, %s268
      %p270 = scmp.eq.s32.totalorder %s29, 0
      %p271 = por %p269, %p270
      %s272 = ssub.s32 %s31, %s38
      %p273 = scmp.eq.s32.totalorder %s272, 0
      %s275 = sadd.s32 %s274, 1
      %s276 = scalar_select %p273, %s274, %s275
      %p279 = pneg %p273
      %p280 = scmp.eq.s32.totalorder %s23, 3
      %p281 = por %p279, %p280
      %p282 = scmp.ne.s32.totalorder %s274, %s277
      %p283 = scmp.eq.s32.totalorder %s23, 0
      %p284 = por %p282, %p283
      %p285 = scmp.ne.s32.totalorder %s274, %s277
      %p286 = scmp.eq.s32.totalorder %s28, 3
      %p287 = por %p285, %p286
      %p288 = scmp.ne.s32.totalorder %s277, %s278
      %p289 = scmp.eq.s32.totalorder %s28, 0
      %p290 = por %p288, %p289
      %p291 = scmp.ne.s32.totalorder %s277, %s278
      %p292 = scmp.eq.s32.totalorder %s29, 3
      %p293 = por %p291, %p292
      %p295 = scmp.ne.s32.totalorder %s278, %s294
      %p296 = scmp.eq.s32.totalorder %s29, 0
      %p297 = por %p295, %p296
      %s298 = ssub.s32 %s31, %s38
      %p299 = scmp.eq.s32.totalorder %s298, 0
      %s301 = sadd.s32 %s300, 1
      %s302 = scalar_select %p299, %s300, %s301
      %p305 = pneg %p299
      %p306 = scmp.eq.s32.totalorder %s23, 3
      %p307 = por %p305, %p306
      %p308 = scmp.ne.s32.totalorder %s300, %s303
      %p309 = scmp.eq.s32.totalorder %s23, 0
      %p310 = por %p308, %p309
      %p311 = scmp.ne.s32.totalorder %s300, %s303
      %p312 = scmp.eq.s32.totalorder %s28, 3
      %p313 = por %p311, %p312
      %p314 = scmp.ne.s32.totalorder %s303, %s304
      %p315 = scmp.eq.s32.totalorder %s28, 0
      %p316 = por %p314, %p315
      %p317 = scmp.ne.s32.totalorder %s303, %s304
      %p318 = scmp.eq.s32.totalorder %s29, 3
      %p319 = por %p317, %p318
      %p321 = scmp.ne.s32.totalorder %s304, %s320
      %p322 = scmp.eq.s32.totalorder %s29, 0
      %p323 = por %p321, %p322
      %s324 = ssub.s32 %s31, %s38
      %p325 = scmp.eq.s32.totalorder %s324, 0
      %s327 = sadd.s32 %s326, 1
      %s328 = scalar_select %p325, %s326, %s327
      %p331 = pneg %p325
      %p332 = scmp.eq.s32.totalorder %s23, 3
      %p333 = por %p331, %p332
      %p334 = scmp.ne.s32.totalorder %s326, %s329
      %p335 = scmp.eq.s32.totalorder %s23, 0
      %p336 = por %p334, %p335
      %p337 = scmp.ne.s32.totalorder %s326, %s329
      %p338 = scmp.eq.s32.totalorder %s28, 3
      %p339 = por %p337, %p338
      %p340 = scmp.ne.s32.totalorder %s329, %s330
      %p341 = scmp.eq.s32.totalorder %s28, 0
      %p342 = por %p340, %p341
      %p343 = scmp.ne.s32.totalorder %s329, %s330
      %p344 = scmp.eq.s32.totalorder %s29, 3
      %p345 = por %p343, %p344
      %p347 = scmp.ne.s32.totalorder %s330, %s346
      %p348 = scmp.eq.s32.totalorder %s29, 0
      %p349 = por %p347, %p348
      %s350 = ssub.s32 %s31, %s38
      %p351 = scmp.eq.s32.totalorder %s350, 0
      %s353 = sadd.s32 %s352, 1
      %s354 = scalar_select %p351, %s352, %s353
      %p357 = pneg %p351
      %p358 = scmp.eq.s32.totalorder %s23, 3
      %p359 = por %p357, %p358
      %p360 = scmp.ne.s32.totalorder %s352, %s355
      %p361 = scmp.eq.s32.totalorder %s23, 0
      %p362 = por %p360, %p361
      %p363 = scmp.ne.s32.totalorder %s352, %s355
      %p364 = scmp.eq.s32.totalorder %s28, 3
      %p365 = por %p363, %p364
      %p366 = scmp.ne.s32.totalorder %s355, %s356
      %p367 = scmp.eq.s32.totalorder %s28, 0
      %p368 = por %p366, %p367
      %p369 = scmp.ne.s32.totalorder %s355, %s356
      %p370 = scmp.eq.s32.totalorder %s29, 3
      %p371 = por %p369, %p370
      %p373 = scmp.ne.s32.totalorder %s356, %s372
      %p374 = scmp.eq.s32.totalorder %s29, 0
      %p375 = por %p373, %p374
      %s376 = ssub.s32 %s31, %s38
      %p377 = scmp.eq.s32.totalorder %s376, 0
      %s379 = sadd.s32 %s378, 1
      %s380 = scalar_select %p377, %s378, %s379
      %p383 = pneg %p377
      %p384 = scmp.eq.s32.totalorder %s23, 3
      %p385 = por %p383, %p384
      %p386 = scmp.ne.s32.totalorder %s378, %s381
      %p387 = scmp.eq.s32.totalorder %s23, 0
      %p388 = por %p386, %p387
      %p389 = scmp.ne.s32.totalorder %s378, %s381
      %p390 = scmp.eq.s32.totalorder %s28, 3
      %p391 = por %p389, %p390
      %p392 = scmp.ne.s32.totalorder %s381, %s382
      %p393 = scmp.eq.s32.totalorder %s28, 0
      %p394 = por %p392, %p393
      %p395 = scmp.ne.s32.totalorder %s381, %s382
      %p396 = scmp.eq.s32.totalorder %s29, 3
      %p397 = por %p395, %p396
      %p399 = scmp.ne.s32.totalorder %s382, %s398
      %p400 = scmp.eq.s32.totalorder %s29, 0
      %p401 = por %p399, %p400
      %s402 = ssub.s32 %s30, %s42
      %p403 = scmp.eq.s32.totalorder %s402, 0
      %s405 = sadd.s32 %s404, 1
      %s406 = scalar_select %p403, %s404, %s405
      %p409 = pneg %p403
      %p410 = scmp.eq.s32.totalorder %s23, 3
      %p411 = por %p409, %p410
      %p412 = scmp.ne.s32.totalorder %s404, %s407
      %p413 = scmp.eq.s32.totalorder %s23, 0
      %p414 = por %p412, %p413
      %p415 = scmp.ne.s32.totalorder %s404, %s407
      %p416 = scmp.eq.s32.totalorder %s28, 3
      %p417 = por %p415, %p416
      %p418 = scmp.ne.s32.totalorder %s407, %s408
      %p419 = scmp.eq.s32.totalorder %s28, 0
      %p420 = por %p418, %p419
      %p421 = scmp.ne.s32.totalorder %s407, %s408
      %p422 = scmp.eq.s32.totalorder %s29, 3
      %p423 = por %p421, %p422
      %p425 = scmp.ne.s32.totalorder %s408, %s424
      %p426 = scmp.eq.s32.totalorder %s29, 0
      %p427 = por %p425, %p426
      %p428 = scmp.le.s32.totalorder 1, %s23
      %p429 = scmp.lt.s32.totalorder %s23, 5
      %p430 = pnand %p428, %p429
      %p431 = pneg %p430
      // Predicated region
      $region9: #{tpu_custom_call.1} parent=5 // pred_check
        _
      $region10: #{tpu_custom_call.1} parent=5 // pred_check_branch
        %433 = sbr.rel (%p430) target = $region12
      $region11: #{tpu_custom_call.1} parent=5 // pred_region
        %s434 = ssub.s32 %s23, 1
        // Predicated region
        $region13: #{tpu_custom_call.1} parent=11 // pred_check
          %p435 = pneg %p108
        $region14: #{tpu_custom_call.1} parent=11 // pred_check_branch
          %437 = sbr.rel (%p435) target = $region16
        $region15: #{tpu_custom_call.1} parent=11 // pred_region
          _
        $region16: #{tpu_custom_call.1} parent=11 // pred_fallthru
          _
      $region12: #{tpu_custom_call.1} parent=5 // pred_fallthru
        _
      %p438 = scmp.lt.s32.totalorder %s23, 4
      // Predicated region
      $region17: #{tpu_custom_call.1} parent=5 // pred_check
        %p439 = pneg %p438
      $region18: #{tpu_custom_call.1} parent=5 // pred_check_branch
        %441 = sbr.rel (%p439) target = $region20
      $region19: #{tpu_custom_call.1} parent=5 // pred_region
        // Predicated region
        $region21: #{tpu_custom_call.1} parent=19 // pred_check
          %p442 = pneg %p55
        $region22: #{tpu_custom_call.1} parent=19 // pred_check_branch
          %444 = sbr.rel (%p442) target = $region24
        $region23: #{tpu_custom_call.1} parent=19 // pred_region
          %s445 = smul.u32 2, %s30
          %p446 = scmp.lt.s32.totalorder %s445, 3
          %s447 = scalar_select %p446, %s445, 3
          %s448 = smul.addr %s447, 8
          %s449 = scalar_lea.vmem %s0, %s448
          %s450 = smul.u32 2, %s30
        $region24: #{tpu_custom_call.1} parent=19 // pred_fallthru
          _
        // Predicated region
        $region25: #{tpu_custom_call.1} parent=19 // pred_check
          %p451 = pneg %p81
        $region26: #{tpu_custom_call.1} parent=19 // pred_check_branch
          %453 = sbr.rel (%p451) target = $region28
        $region27: #{tpu_custom_call.1} parent=19 // pred_region
          %s454 = smul.u32 4, %s30
          %p455 = scmp.lt.s32.totalorder %s454, 7
          %s456 = scalar_select %p455, %s454, 7
          %s457 = smul.addr %s456, 4
          %s458 = scalar_lea.vmem %s1, %s457
          %s459 = smul.u32 4, %s30
        $region28: #{tpu_custom_call.1} parent=19 // pred_fallthru
          _
        // Predicated region
        $region29: #{tpu_custom_call.1} parent=19 // pred_check
          %p460 = pneg %p128
        $region30: #{tpu_custom_call.1} parent=19 // pred_check_branch
          %462 = sbr.rel (%p460) target = $region32
        $region31: #{tpu_custom_call.1} parent=19 // pred_region
          %p463 = scmp.lt.s32.totalorder %s31, 1
          %s464 = scalar_select %p463, %s31, 1
          %s465 = smul.addr %s464, 64
          %s466 = smul.addr %s465, 4
          %s467 = scalar_lea.vmem %s3, %s466
        $region32: #{tpu_custom_call.1} parent=19 // pred_fallthru
          _
        // Predicated region
        $region33: #{tpu_custom_call.1} parent=19 // pred_check
          %p468 = pneg %p154
        $region34: #{tpu_custom_call.1} parent=19 // pred_check_branch
          %470 = sbr.rel (%p468) target = $region36
        $region35: #{tpu_custom_call.1} parent=19 // pred_region
          %p471 = scmp.lt.s32.totalorder %s31, 1
          %s472 = scalar_select %p471, %s31, 1
          %s473 = smul.addr %s472, 64
          %s474 = smul.addr %s473, 4
          %s475 = scalar_lea.vmem %s4, %s474
        $region36: #{tpu_custom_call.1} parent=19 // pred_fallthru
          _
        // Predicated region
        $region37: #{tpu_custom_call.1} parent=19 // pred_check
          %p476 = pneg %p180
        $region38: #{tpu_custom_call.1} parent=19 // pred_check_branch
          %478 = sbr.rel (%p476) target = $region40
        $region39: #{tpu_custom_call.1} parent=19 // pred_region
          %p479 = scmp.lt.s32.totalorder %s31, 1
          %s480 = scalar_select %p479, %s31, 1
          %s481 = smul.addr %s480, 64
          %s482 = smul.addr %s481, 4
          %s483 = scalar_lea.vmem %s5, %s482
        $region40: #{tpu_custom_call.1} parent=19 // pred_fallthru
          _
        // Predicated region
        $region41: #{tpu_custom_call.1} parent=19 // pred_check
          %p484 = pneg %p206
        $region42: #{tpu_custom_call.1} parent=19 // pred_check_branch
          %486 = sbr.rel (%p484) target = $region44
        $region43: #{tpu_custom_call.1} parent=19 // pred_region
          %p487 = scmp.lt.s32.totalorder %s31, 1
          %s488 = scalar_select %p487, %s31, 1
          %s489 = smul.addr %s488, 16
          %s490 = smul.addr %s489, 4
          %s491 = scalar_lea.vmem %s6, %s490
        $region44: #{tpu_custom_call.1} parent=19 // pred_fallthru
          _
        // Predicated region
        $region45: #{tpu_custom_call.1} parent=19 // pred_check
          %p492 = pneg %p232
        $region46: #{tpu_custom_call.1} parent=19 // pred_check_branch
          %494 = sbr.rel (%p492) target = $region48
        $region47: #{tpu_custom_call.1} parent=19 // pred_region
          %p495 = scmp.lt.s32.totalorder %s31, 1
          %s496 = scalar_select %p495, %s31, 1
          %s497 = smul.addr %s496, 64
          %s498 = smul.addr %s497, 4
          %s499 = scalar_lea.vmem %s7, %s498
        $region48: #{tpu_custom_call.1} parent=19 // pred_fallthru
          _
        // Predicated region
        $region49: #{tpu_custom_call.1} parent=19 // pred_check
          %p500 = pneg %p258
        $region50: #{tpu_custom_call.1} parent=19 // pred_check_branch
          %502 = sbr.rel (%p500) target = $region52
        $region51: #{tpu_custom_call.1} parent=19 // pred_region
          %p503 = scmp.lt.s32.totalorder %s31, 1
          %s504 = scalar_select %p503, %s31, 1
          %s505 = smul.addr %s504, 64
          %s506 = smul.addr %s505, 4
          %s507 = scalar_lea.vmem %s8, %s506
        $region52: #{tpu_custom_call.1} parent=19 // pred_fallthru
          _
        // Predicated region
        $region53: #{tpu_custom_call.1} parent=19 // pred_check
          %p508 = pneg %p284
        $region54: #{tpu_custom_call.1} parent=19 // pred_check_branch
          %510 = sbr.rel (%p508) target = $region56
        $region55: #{tpu_custom_call.1} parent=19 // pred_region
          %p511 = scmp.lt.s32.totalorder %s31, 1
          %s512 = scalar_select %p511, %s31, 1
          %s513 = smul.addr %s512, 64
          %s514 = smul.addr %s513, 4
          %s515 = scalar_lea.vmem %s9, %s514
        $region56: #{tpu_custom_call.1} parent=19 // pred_fallthru
          _
        // Predicated region
        $region57: #{tpu_custom_call.1} parent=19 // pred_check
          %p516 = pneg %p310
        $region58: #{tpu_custom_call.1} parent=19 // pred_check_branch
          %518 = sbr.rel (%p516) target = $region60
        $region59: #{tpu_custom_call.1} parent=19 // pred_region
          %p519 = scmp.lt.s32.totalorder %s31, 1
          %s520 = scalar_select %p519, %s31, 1
          %s521 = smul.addr %s520, 16
          %s522 = smul.addr %s521, 4
          %s523 = scalar_lea.vmem %s10, %s522
        $region60: #{tpu_custom_call.1} parent=19 // pred_fallthru
          _
        // Predicated region
        $region61: #{tpu_custom_call.1} parent=19 // pred_check
          %p524 = pneg %p336
        $region62: #{tpu_custom_call.1} parent=19 // pred_check_branch
          %526 = sbr.rel (%p524) target = $region64
        $region63: #{tpu_custom_call.1} parent=19 // pred_region
          %p527 = scmp.lt.s32.totalorder %s31, 1
          %s528 = scalar_select %p527, %s31, 1
          %s529 = smul.addr %s528, 32
          %s530 = smul.addr %s529, 4
          %s531 = scalar_lea.vmem %s11, %s530
        $region64: #{tpu_custom_call.1} parent=19 // pred_fallthru
          _
        // Predicated region
        $region65: #{tpu_custom_call.1} parent=19 // pred_check
          %p532 = pneg %p362
        $region66: #{tpu_custom_call.1} parent=19 // pred_check_branch
          %534 = sbr.rel (%p532) target = $region68
        $region67: #{tpu_custom_call.1} parent=19 // pred_region
          %p535 = scmp.lt.s32.totalorder %s31, 1
          %s536 = scalar_select %p535, %s31, 1
          %s537 = smul.addr %s536, 32
          %s538 = smul.addr %s537, 4
          %s539 = scalar_lea.vmem %s12, %s538
        $region68: #{tpu_custom_call.1} parent=19 // pred_fallthru
          _
        // Predicated region
        $region69: #{tpu_custom_call.1} parent=19 // pred_check
          %p540 = pneg %p388
        $region70: #{tpu_custom_call.1} parent=19 // pred_check_branch
          %542 = sbr.rel (%p540) target = $region72
        $region71: #{tpu_custom_call.1} parent=19 // pred_region
          %p543 = scmp.lt.s32.totalorder %s31, 1
          %s544 = scalar_select %p543, %s31, 1
          %s545 = smul.addr %s544, 4
          %s546 = smul.addr %s545, 8
          %s547 = scalar_lea.vmem %s13, %s546
        $region72: #{tpu_custom_call.1} parent=19 // pred_fallthru
          _
      $region20: #{tpu_custom_call.1} parent=5 // pred_fallthru
        _
      %p548 = scmp.le.s32.totalorder 1, %s23
      %p549 = scmp.lt.s32.totalorder %s23, 5
      %p550 = pnand %p548, %p549
      %p551 = pneg %p550
      // Predicated region
      $region73: #{tpu_custom_call.1} parent=5 // pred_check
        _
      $region74: #{tpu_custom_call.1} parent=5 // pred_check_branch
        %553 = sbr.rel (%p550) target = $region76
      $region75: #{tpu_custom_call.1} parent=5 // pred_region
        %s554 = ssub.s32 %s23, 1
        %s555 = smul.u32 2, %s32
        %p556 = scmp.lt.s32.totalorder %s555, 3
        %s557 = scalar_select %p556, %s555, 3
        %s558 = smul.addr %s557, 8
        %s559 = scalar_lea.vmem %s0, %s558
        %p560 = pneg %p61
        %p561 = pneg %p58
        %s562 = smul.u32 4, %s32
        %p563 = scmp.lt.s32.totalorder %s562, 7
        %s564 = scalar_select %p563, %s562, 7
        %s565 = smul.addr %s564, 4
        %s566 = scalar_lea.vmem %s1, %s565
        %p567 = pneg %p87
        %p568 = pneg %p84
        %p569 = pneg %p108
        %p570 = pneg %p105
        %p571 = scmp.lt.s32.totalorder %s33, 1
        %s572 = scalar_select %p571, %s33, 1
        %s573 = smul.addr %s572, 64
        %s574 = smul.addr %s573, 4
        %s575 = scalar_lea.vmem %s3, %s574
        %p576 = pneg %p134
        %p577 = pneg %p131
        %p578 = scmp.lt.s32.totalorder %s33, 1
        %s579 = scalar_select %p578, %s33, 1
        %s580 = smul.addr %s579, 64
        %s581 = smul.addr %s580, 4
        %s582 = scalar_lea.vmem %s4, %s581
        %p583 = pneg %p160
        %p584 = pneg %p157
        %p585 = scmp.lt.s32.totalorder %s33, 1
        %s586 = scalar_select %p585, %s33, 1
        %s587 = smul.addr %s586, 64
        %s588 = smul.addr %s587, 4
        %s589 = scalar_lea.vmem %s5, %s588
        %p590 = pneg %p186
        %p591 = pneg %p183
        %p592 = scmp.lt.s32.totalorder %s33, 1
        %s593 = scalar_select %p592, %s33, 1
        %s594 = smul.addr %s593, 16
        %s595 = smul.addr %s594, 4
        %s596 = scalar_lea.vmem %s6, %s595
        %p597 = pneg %p212
        %p598 = pneg %p209
        %p599 = scmp.lt.s32.totalorder %s33, 1
        %s600 = scalar_select %p599, %s33, 1
        %s601 = smul.addr %s600, 64
        %s602 = smul.addr %s601, 4
        %s603 = scalar_lea.vmem %s7, %s602
        %p604 = pneg %p238
        %p605 = pneg %p235
        %p606 = scmp.lt.s32.totalorder %s33, 1
        %s607 = scalar_select %p606, %s33, 1
        %s608 = smul.addr %s607, 64
        %s609 = smul.addr %s608, 4
        %s610 = scalar_lea.vmem %s8, %s609
        %p611 = pneg %p264
        %p612 = pneg %p261
        %p613 = scmp.lt.s32.totalorder %s33, 1
        %s614 = scalar_select %p613, %s33, 1
        %s615 = smul.addr %s614, 64
        %s616 = smul.addr %s615, 4
        %s617 = scalar_lea.vmem %s9, %s616
        %p618 = pneg %p290
        %p619 = pneg %p287
        %p620 = scmp.lt.s32.totalorder %s33, 1
        %s621 = scalar_select %p620, %s33, 1
        %s622 = smul.addr %s621, 16
        %s623 = smul.addr %s622, 4
        %s624 = scalar_lea.vmem %s10, %s623
        %p625 = pneg %p316
        %p626 = pneg %p313
        %p627 = scmp.lt.s32.totalorder %s33, 1
        %s628 = scalar_select %p627, %s33, 1
        %s629 = smul.addr %s628, 32
        %s630 = smul.addr %s629, 4
        %s631 = scalar_lea.vmem %s11, %s630
        %p632 = pneg %p342
        %p633 = pneg %p339
        %p634 = scmp.lt.s32.totalorder %s33, 1
        %s635 = scalar_select %p634, %s33, 1
        %s636 = smul.addr %s635, 32
        %s637 = smul.addr %s636, 4
        %s638 = scalar_lea.vmem %s12, %s637
        %p639 = pneg %p368
        %p640 = pneg %p365
        %p641 = scmp.lt.s32.totalorder %s33, 1
        %s642 = scalar_select %p641, %s33, 1
        %s643 = smul.addr %s642, 4
        %s644 = smul.addr %s643, 8
        %s645 = scalar_lea.vmem %s13, %s644
        %p646 = pneg %p394
        %p647 = pneg %p391
        %p648 = pneg %p420
        %p649 = pneg %p417
        %s650 = sand.u32 %s407, 1
        %s651 = scalar_lea.sflag [#allocation3], %s650
        %s652 = sand.u32 %s407, 1
        %s653 = smul.addr %s652, 16
        %s654 = scalar_lea.vmem [#allocation2], %s653
        %s655 = smul.u32 2, %s32
        %p656 = scmp.lt.s32.totalorder %s655, 3
        %s657 = scalar_select %p656, %s655, 3
        %s658 = smul.addr %s657, 8
        %s659 = scalar_lea.vmem %s0, %s658
        %s660 = smul.u32 2, %s32
        %s661 = smul.u32 4, %s32
        %p662 = scmp.lt.s32.totalorder %s661, 7
        %s663 = scalar_select %p662, %s661, 7
        %s664 = smul.addr %s663, 4
        %s665 = scalar_lea.vmem %s1, %s664
        %s666 = smul.u32 4, %s32
        %p667 = scmp.lt.s32.totalorder %s33, 1
        %s668 = scalar_select %p667, %s33, 1
        %s669 = smul.addr %s668, 64
        %s670 = smul.addr %s669, 4
        %s671 = scalar_lea.vmem %s3, %s670
        %p672 = scmp.lt.s32.totalorder %s33, 1
        %s673 = scalar_select %p672, %s33, 1
        %s674 = smul.addr %s673, 64
        %s675 = smul.addr %s674, 4
        %s676 = scalar_lea.vmem %s4, %s675
        %p677 = scmp.lt.s32.totalorder %s33, 1
        %s678 = scalar_select %p677, %s33, 1
        %s679 = smul.addr %s678, 64
        %s680 = smul.addr %s679, 4
        %s681 = scalar_lea.vmem %s5, %s680
        %p682 = scmp.lt.s32.totalorder %s33, 1
        %s683 = scalar_select %p682, %s33, 1
        %s684 = smul.addr %s683, 16
        %s685 = smul.addr %s684, 4
        %s686 = scalar_lea.vmem %s6, %s685
        %p687 = scmp.lt.s32.totalorder %s33, 1
        %s688 = scalar_select %p687, %s33, 1
        %s689 = smul.addr %s688, 64
        %s690 = smul.addr %s689, 4
        %s691 = scalar_lea.vmem %s7, %s690
        %p692 = scmp.lt.s32.totalorder %s33, 1
        %s693 = scalar_select %p692, %s33, 1
        %s694 = smul.addr %s693, 64
        %s695 = smul.addr %s694, 4
        %s696 = scalar_lea.vmem %s8, %s695
        %p697 = scmp.lt.s32.totalorder %s33, 1
        %s698 = scalar_select %p697, %s33, 1
        %s699 = smul.addr %s698, 64
        %s700 = smul.addr %s699, 4
        %s701 = scalar_lea.vmem %s9, %s700
        %p702 = scmp.lt.s32.totalorder %s33, 1
        %s703 = scalar_select %p702, %s33, 1
        %s704 = smul.addr %s703, 16
        %s705 = smul.addr %s704, 4
        %s706 = scalar_lea.vmem %s10, %s705
        %p707 = scmp.lt.s32.totalorder %s33, 1
        %s708 = scalar_select %p707, %s33, 1
        %s709 = smul.addr %s708, 32
        %s710 = smul.addr %s709, 4
        %s711 = scalar_lea.vmem %s11, %s710
        %p712 = scmp.lt.s32.totalorder %s33, 1
        %s713 = scalar_select %p712, %s33, 1
        %s714 = smul.addr %s713, 32
        %s715 = smul.addr %s714, 4
        %s716 = scalar_lea.vmem %s12, %s715
        %p717 = scmp.lt.s32.totalorder %s33, 1
        %s718 = scalar_select %p717, %s33, 1
        %s719 = smul.addr %s718, 4
        %s720 = smul.addr %s719, 8
        %s721 = scalar_lea.vmem %s13, %s720
        %s722 = smul.u32 2, %s32
        %s724 = smul.u32 %s32, 2
        %v725 = vld [vmem:[%s721] sm:$0xff]
        %v726 = vld [vmem:[%s721 + $0x10] sm:$0xff]
        %v727 = vld [vmem:[%s721 + $0x18] sm:$0xff]
        %p728 = scmp.eq.s32.totalorder %s33, 0
        // Predicated region
        $region77: #{tpu_custom_call.1} parent=75 // pred_check
          %p729 = pneg %p728
        $region78: #{tpu_custom_call.1} parent=75 // pred_check_branch
          %731 = sbr.rel (%p729) target = $region80
        $region79: #{tpu_custom_call.1} parent=75 // pred_region
          %v732 = vld [vmem:[%s659] sm:$0xff]
          %v733 = vld [vmem:[%s659 + $0x8] sm:$0xff]
          %734 = vst [vmem:[%s654] sm:$0xff] %v732
          %735 = vst [vmem:[%s654 + $0x8] sm:$0xff] %v733
        $region80: #{tpu_custom_call.1} parent=75 // pred_fallthru
          _
        %v736 = vld [vmem:[%s654] sm:$0xff]
        %v737 = vld [vmem:[%s654 + $0x8] sm:$0xff]
        %v738 = vlaneseq
        %v739 = vshrl.u32 %v738, 7
        %v740 = vlaneseq
        %v741 = vand.u32 %v740, 127
        %vm742 = vcmp.ge.s32.totalorder %v739, %v741
        %v743 = vsel %vm742, 0.0, -1e+09
        %v744 = vpack.c.bf16 %v737, %v736
        %v745 = vld [vmem:[%s671] sm:$0xf]
        %v746 = vld [vmem:[%s671 + $0x4] sm:$0xf]
        %v747 = vld [vmem:[%s671 + $0x8] sm:$0xf]
        %v748 = vld [vmem:[%s671 + $0xc] sm:$0xf]
        %v749 = vld [vmem:[%s671 + $0x10] sm:$0xf]
        %v750 = vld [vmem:[%s671 + $0x14] sm:$0xf]
        %v751 = vld [vmem:[%s671 + $0x18] sm:$0xf]
        %v752 = vld [vmem:[%s671 + $0x1c] sm:$0xf]
        %v753 = vld [vmem:[%s671 + $0x20] sm:$0xf]
        %v754 = vld [vmem:[%s671 + $0x24] sm:$0xf]
        %v755 = vld [vmem:[%s671 + $0x28] sm:$0xf]
        %v756 = vld [vmem:[%s671 + $0x2c] sm:$0xf]
        %v757 = vld [vmem:[%s671 + $0x30] sm:$0xf]
        %v758 = vld [vmem:[%s671 + $0x34] sm:$0xf]
        %v759 = vld [vmem:[%s671 + $0x38] sm:$0xf]
        %v760 = vld [vmem:[%s671 + $0x3c] sm:$0xf]
        %v761 = vlaneseq
        %v762 = vshrl.u32 %v761, 7
        %v763 = vsub.s32 0, %v762
        %v764 = vrot.slane %v725, %v763
        %v781 = vunpack.c.l.b16 %v745
        %v782 = vunpack.c.l.b16 %v746
        %v783 = vunpack.c.l.b16 %v747
        %v784 = vunpack.c.l.b16 %v748
        %v785 = vunpack.c.l.b16 %v749
        %v786 = vunpack.c.l.b16 %v750
        %v787 = vunpack.c.l.b16 %v751
        %v788 = vunpack.c.l.b16 %v752
        %v789 = vunpack.c.l.b16 %v753
        %v790 = vunpack.c.l.b16 %v754
        %v791 = vunpack.c.l.b16 %v755
        %v792 = vunpack.c.l.b16 %v756
        %v793 = vunpack.c.l.b16 %v757
        %v794 = vunpack.c.l.b16 %v758
        %v795 = vunpack.c.l.b16 %v759
        %v796 = vunpack.c.l.b16 %v760
        %v797 = vpack.c.b16 %v782, %v781
        %v798 = vpack.c.b16 %v784, %v783
        %v799 = vpack.c.b16 %v786, %v785
        %v800 = vpack.c.b16 %v788, %v787
        %v801 = vpack.c.b16 %v790, %v789
        %v802 = vpack.c.b16 %v792, %v791
        %v803 = vpack.c.b16 %v794, %v793
        %v804 = vpack.c.b16 %v796, %v795
        %813 = vmatprep.subr.bf16.mxu0 0
        %814 = vmatpush1.bf16.msra.mxu0 %v797
        %815 = vmatprep.subr.bf16.mxu0 0
        %816 = vmatpush1.bf16.msra.mxu0 %v798
        %817 = vmatprep.subr.bf16.mxu0 0
        %818 = vmatpush1.bf16.msra.mxu0 %v799
        %819 = vmatprep.subr.bf16.mxu0 0
        %820 = vmatpush1.bf16.msra.mxu0 %v800
        %821 = vmatprep.subr.bf16.mxu0 0
        %822 = vmatpush1.bf16.msra.mxu0 %v801
        %823 = vmatprep.subr.bf16.mxu0 0
        %824 = vmatpush1.bf16.msra.mxu0 %v802
        %825 = vmatprep.subr.bf16.mxu0 0
        %826 = vmatpush1.bf16.msra.mxu0 %v803
        %827 = vmatprep.subr.bf16.mxu0 0
        %828 = vmatpush1.bf16.msra.mxu0 %v804
        %829 = vmatprep.subr.bf16.mxu0 0
        %830 = vmatpush1.bf16.msra.mxu0 0
        %831 = vmatprep.subr.bf16.mxu0 0
        %832 = vmatpush1.bf16.msra.mxu0 0
        %833 = vmatprep.subr.bf16.mxu0 0
        %834 = vmatpush1.bf16.msra.mxu0 0
        %835 = vmatprep.subr.bf16.mxu0 0
        %836 = vmatpush1.bf16.msra.mxu0 0
        %837 = vmatprep.subr.bf16.mxu0 0
        %838 = vmatpush1.bf16.msra.mxu0 0
        %839 = vmatprep.subr.bf16.mxu0 0
        %840 = vmatpush1.bf16.msra.mxu0 0
        %841 = vmatprep.subr.bf16.mxu0 0
        %842 = vmatpush1.bf16.msra.mxu0 0
        %843 = vmatprep.subr.bf16.mxu0 0
        %844 = vmatpush1.bf16.msra.mxu0 0
        %845 = vmatprep.mubr.bf16.mxu0 0
        %846 = vmatmul.mubr.bf16.gmra.mrb[0].mxu0 %v744
        %v847 = vpop.f32.mrb[0].mxu0
        %v848 = vadd.f32 %v764, %v847
        %v849 = vpop.f32.mrb[0].mxu0
        %v850 = vpop.f32.mrb[0].mxu0
        %v851 = vadd.f32 %v764, %v850
        %v852 = vpop.f32.mrb[0].mxu0
        %853 = vdwg.mxu0
        %v854 = vpack.c.bf16 %v851, %v848
        %v855 = vld [vmem:[%s676] sm:$0xf]
        %v856 = vld [vmem:[%s676 + $0x4] sm:$0xf]
        %v857 = vld [vmem:[%s676 + $0x8] sm:$0xf]
        %v858 = vld [vmem:[%s676 + $0xc] sm:$0xf]
        %v859 = vld [vmem:[%s676 + $0x10] sm:$0xf]
        %v860 = vld [vmem:[%s676 + $0x14] sm:$0xf]
        %v861 = vld [vmem:[%s676 + $0x18] sm:$0xf]
        %v862 = vld [vmem:[%s676 + $0x1c] sm:$0xf]
        %v863 = vld [vmem:[%s676 + $0x20] sm:$0xf]
        %v864 = vld [vmem:[%s676 + $0x24] sm:$0xf]
        %v865 = vld [vmem:[%s676 + $0x28] sm:$0xf]
        %v866 = vld [vmem:[%s676 + $0x2c] sm:$0xf]
        %v867 = vld [vmem:[%s676 + $0x30] sm:$0xf]
        %v868 = vld [vmem:[%s676 + $0x34] sm:$0xf]
        %v869 = vld [vmem:[%s676 + $0x38] sm:$0xf]
        %v870 = vld [vmem:[%s676 + $0x3c] sm:$0xf]
        %v871 = vlaneseq
        %v872 = vshrl.u32 %v871, 7
        %v873 = vsub.s32 1, %v872
        %v874 = vrot.slane %v725, %v873
        %v891 = vunpack.c.l.b16 %v855
        %v892 = vunpack.c.l.b16 %v856
        %v893 = vunpack.c.l.b16 %v857
        %v894 = vunpack.c.l.b16 %v858
        %v895 = vunpack.c.l.b16 %v859
        %v896 = vunpack.c.l.b16 %v860
        %v897 = vunpack.c.l.b16 %v861
        %v898 = vunpack.c.l.b16 %v862
        %v899 = vunpack.c.l.b16 %v863
        %v900 = vunpack.c.l.b16 %v864
        %v901 = vunpack.c.l.b16 %v865
        %v902 = vunpack.c.l.b16 %v866
        %v903 = vunpack.c.l.b16 %v867
        %v904 = vunpack.c.l.b16 %v868
        %v905 = vunpack.c.l.b16 %v869
        %v906 = vunpack.c.l.b16 %v870
        %v907 = vpack.c.b16 %v892, %v891
        %v908 = vpack.c.b16 %v894, %v893
        %v909 = vpack.c.b16 %v896, %v895
        %v910 = vpack.c.b16 %v898, %v897
        %v911 = vpack.c.b16 %v900, %v899
        %v912 = vpack.c.b16 %v902, %v901
        %v913 = vpack.c.b16 %v904, %v903
        %v914 = vpack.c.b16 %v906, %v905
        %923 = vmatprep.subr.bf16.mxu0 0
        %924 = vmatpush1.bf16.msra.mxu0 %v907
        %925 = vmatprep.subr.bf16.mxu0 0
        %926 = vmatpush1.bf16.msra.mxu0 %v908
        %927 = vmatprep.subr.bf16.mxu0 0
        %928 = vmatpush1.bf16.msra.mxu0 %v909
        %929 = vmatprep.subr.bf16.mxu0 0
        %930 = vmatpush1.bf16.msra.mxu0 %v910
        %931 = vmatprep.subr.bf16.mxu0 0
        %932 = vmatpush1.bf16.msra.mxu0 %v911
        %933 = vmatprep.subr.bf16.mxu0 0
        %934 = vmatpush1.bf16.msra.mxu0 %v912
        %935 = vmatprep.subr.bf16.mxu0 0
        %936 = vmatpush1.bf16.msra.mxu0 %v913
        %937 = vmatprep.subr.bf16.mxu0 0
        %938 = vmatpush1.bf16.msra.mxu0 %v914
        %939 = vmatprep.subr.bf16.mxu0 0
        %940 = vmatpush1.bf16.msra.mxu0 0
        %941 = vmatprep.subr.bf16.mxu0 0
        %942 = vmatpush1.bf16.msra.mxu0 0
        %943 = vmatprep.subr.bf16.mxu0 0
        %944 = vmatpush1.bf16.msra.mxu0 0
        %945 = vmatprep.subr.bf16.mxu0 0
        %946 = vmatpush1.bf16.msra.mxu0 0
        %947 = vmatprep.subr.bf16.mxu0 0
        %948 = vmatpush1.bf16.msra.mxu0 0
        %949 = vmatprep.subr.bf16.mxu0 0
        %950 = vmatpush1.bf16.msra.mxu0 0
        %951 = vmatprep.subr.bf16.mxu0 0
        %952 = vmatpush1.bf16.msra.mxu0 0
        %953 = vmatprep.subr.bf16.mxu0 0
        %954 = vmatpush1.bf16.msra.mxu0 0
        %955 = vmatprep.mubr.bf16.mxu0 0
        %956 = vmatmul.mubr.bf16.gmra.mrb[0].mxu0 %v744
        %v957 = vpop.f32.mrb[0].mxu0
        %v958 = vadd.f32 %v874, %v957
        %v959 = vpop.f32.mrb[0].mxu0
        %v960 = vpop.f32.mrb[0].mxu0
        %v961 = vadd.f32 %v874, %v960
        %v962 = vpop.f32.mrb[0].mxu0
        %963 = vdwg.mxu0
        %v964 = vpack.c.bf16 %v961, %v958
        %v965 = vld [vmem:[%s681] sm:$0xf]
        %v966 = vld [vmem:[%s681 + $0x4] sm:$0xf]
        %v967 = vld [vmem:[%s681 + $0x8] sm:$0xf]
        %v968 = vld [vmem:[%s681 + $0xc] sm:$0xf]
        %v969 = vld [vmem:[%s681 + $0x10] sm:$0xf]
        %v970 = vld [vmem:[%s681 + $0x14] sm:$0xf]
        %v971 = vld [vmem:[%s681 + $0x18] sm:$0xf]
        %v972 = vld [vmem:[%s681 + $0x1c] sm:$0xf]
        %v973 = vld [vmem:[%s681 + $0x20] sm:$0xf]
        %v974 = vld [vmem:[%s681 + $0x24] sm:$0xf]
        %v975 = vld [vmem:[%s681 + $0x28] sm:$0xf]
        %v976 = vld [vmem:[%s681 + $0x2c] sm:$0xf]
        %v977 = vld [vmem:[%s681 + $0x30] sm:$0xf]
        %v978 = vld [vmem:[%s681 + $0x34] sm:$0xf]
        %v979 = vld [vmem:[%s681 + $0x38] sm:$0xf]
        %v980 = vld [vmem:[%s681 + $0x3c] sm:$0xf]
        %v981 = vlaneseq
        %v982 = vshrl.u32 %v981, 7
        %v983 = vsub.s32 2, %v982
        %v984 = vrot.slane %v725, %v983
        %v1001 = vunpack.c.l.b16 %v965
        %v1002 = vunpack.c.l.b16 %v966
        %v1003 = vunpack.c.l.b16 %v967
        %v1004 = vunpack.c.l.b16 %v968
        %v1005 = vunpack.c.l.b16 %v969
        %v1006 = vunpack.c.l.b16 %v970
        %v1007 = vunpack.c.l.b16 %v971
        %v1008 = vunpack.c.l.b16 %v972
        %v1009 = vunpack.c.l.b16 %v973
        %v1010 = vunpack.c.l.b16 %v974
        %v1011 = vunpack.c.l.b16 %v975
        %v1012 = vunpack.c.l.b16 %v976
        %v1013 = vunpack.c.l.b16 %v977
        %v1014 = vunpack.c.l.b16 %v978
        %v1015 = vunpack.c.l.b16 %v979
        %v1016 = vunpack.c.l.b16 %v980
        %v1017 = vpack.c.b16 %v1002, %v1001
        %v1018 = vpack.c.b16 %v1004, %v1003
        %v1019 = vpack.c.b16 %v1006, %v1005
        %v1020 = vpack.c.b16 %v1008, %v1007
        %v1021 = vpack.c.b16 %v1010, %v1009
        %v1022 = vpack.c.b16 %v1012, %v1011
        %v1023 = vpack.c.b16 %v1014, %v1013
        %v1024 = vpack.c.b16 %v1016, %v1015
        %1033 = vmatprep.subr.bf16.mxu0 0
        %1034 = vmatpush1.bf16.msra.mxu0 %v1017
        %1035 = vmatprep.subr.bf16.mxu0 0
        %1036 = vmatpush1.bf16.msra.mxu0 %v1018
        %1037 = vmatprep.subr.bf16.mxu0 0
        %1038 = vmatpush1.bf16.msra.mxu0 %v1019
        %1039 = vmatprep.subr.bf16.mxu0 0
        %1040 = vmatpush1.bf16.msra.mxu0 %v1020
        %1041 = vmatprep.subr.bf16.mxu0 0
        %1042 = vmatpush1.bf16.msra.mxu0 %v1021
        %1043 = vmatprep.subr.bf16.mxu0 0
        %1044 = vmatpush1.bf16.msra.mxu0 %v1022
        %1045 = vmatprep.subr.bf16.mxu0 0
        %1046 = vmatpush1.bf16.msra.mxu0 %v1023
        %1047 = vmatprep.subr.bf16.mxu0 0
        %1048 = vmatpush1.bf16.msra.mxu0 %v1024
        %1049 = vmatprep.subr.bf16.mxu0 0
        %1050 = vmatpush1.bf16.msra.mxu0 0
        %1051 = vmatprep.subr.bf16.mxu0 0
        %1052 = vmatpush1.bf16.msra.mxu0 0
        %1053 = vmatprep.subr.bf16.mxu0 0
        %1054 = vmatpush1.bf16.msra.mxu0 0
        %1055 = vmatprep.subr.bf16.mxu0 0
        %1056 = vmatpush1.bf16.msra.mxu0 0
        %1057 = vmatprep.subr.bf16.mxu0 0
        %1058 = vmatpush1.bf16.msra.mxu0 0
        %1059 = vmatprep.subr.bf16.mxu0 0
        %1060 = vmatpush1.bf16.msra.mxu0 0
        %1061 = vmatprep.subr.bf16.mxu0 0
        %1062 = vmatpush1.bf16.msra.mxu0 0
        %1063 = vmatprep.subr.bf16.mxu0 0
        %1064 = vmatpush1.bf16.msra.mxu0 0
        %1065 = vmatprep.mubr.bf16.mxu0 0
        %1066 = vmatmul.mubr.bf16.gmra.mrb[0].mxu0 %v744
        %v1067 = vpop.f32.mrb[0].mxu0
        %v1068 = vadd.f32 %v984, %v1067
        %v1069 = vpop.f32.mrb[0].mxu0
        %v1070 = vpop.f32.mrb[0].mxu0
        %v1071 = vadd.f32 %v984, %v1070
        %v1072 = vpop.f32.mrb[0].mxu0
        %1073 = vdwg.mxu0
        %v1074 = vpack.c.bf16 %v1071, %v1068
        %s1075 = scalar_lea.vmem %s671, 64
        %v1076 = vld [vmem:[%s1075] sm:$0xf]
        %v1077 = vld [vmem:[%s1075 + $0x4] sm:$0xf]
        %v1078 = vld [vmem:[%s1075 + $0x8] sm:$0xf]
        %v1079 = vld [vmem:[%s1075 + $0xc] sm:$0xf]
        %v1080 = vld [vmem:[%s1075 + $0x10] sm:$0xf]
        %v1081 = vld [vmem:[%s1075 + $0x14] sm:$0xf]
        %v1082 = vld [vmem:[%s1075 + $0x18] sm:$0xf]
        %v1083 = vld [vmem:[%s1075 + $0x1c] sm:$0xf]
        %v1084 = vld [vmem:[%s1075 + $0x20] sm:$0xf]
        %v1085 = vld [vmem:[%s1075 + $0x24] sm:$0xf]
        %v1086 = vld [vmem:[%s1075 + $0x28] sm:$0xf]
        %v1087 = vld [vmem:[%s1075 + $0x2c] sm:$0xf]
        %v1088 = vld [vmem:[%s1075 + $0x30] sm:$0xf]
        %v1089 = vld [vmem:[%s1075 + $0x34] sm:$0xf]
        %v1090 = vld [vmem:[%s1075 + $0x38] sm:$0xf]
        %v1091 = vld [vmem:[%s1075 + $0x3c] sm:$0xf]
        %v1108 = vunpack.c.l.b16 %v1076
        %v1109 = vunpack.c.l.b16 %v1077
        %v1110 = vunpack.c.l.b16 %v1078
        %v1111 = vunpack.c.l.b16 %v1079
        %v1112 = vunpack.c.l.b16 %v1080
        %v1113 = vunpack.c.l.b16 %v1081
        %v1114 = vunpack.c.l.b16 %v1082
        %v1115 = vunpack.c.l.b16 %v1083
        %v1116 = vunpack.c.l.b16 %v1084
        %v1117 = vunpack.c.l.b16 %v1085
        %v1118 = vunpack.c.l.b16 %v1086
        %v1119 = vunpack.c.l.b16 %v1087
        %v1120 = vunpack.c.l.b16 %v1088
        %v1121 = vunpack.c.l.b16 %v1089
        %v1122 = vunpack.c.l.b16 %v1090
        %v1123 = vunpack.c.l.b16 %v1091
        %v1124 = vpack.c.b16 %v1109, %v1108
        %v1125 = vpack.c.b16 %v1111, %v1110
        %v1126 = vpack.c.b16 %v1113, %v1112
        %v1127 = vpack.c.b16 %v1115, %v1114
        %v1128 = vpack.c.b16 %v1117, %v1116
        %v1129 = vpack.c.b16 %v1119, %v1118
        %v1130 = vpack.c.b16 %v1121, %v1120
        %v1131 = vpack.c.b16 %v1123, %v1122
        %1141 = vrot.lane.b32.xlu0 %v764, 96
        %v1142 = vpop.permute.xlu0 %1141
        %1144 = vmatprep.subr.bf16.mxu0 0
        %1145 = vmatpush1.bf16.msra.mxu0 %v1124
        %1146 = vmatprep.subr.bf16.mxu0 0
        %1147 = vmatpush1.bf16.msra.mxu0 %v1125
        %1148 = vmatprep.subr.bf16.mxu0 0
        %1149 = vmatpush1.bf16.msra.mxu0 %v1126
        %1150 = vmatprep.subr.bf16.mxu0 0
        %1151 = vmatpush1.bf16.msra.mxu0 %v1127
        %1152 = vmatprep.subr.bf16.mxu0 0
        %1153 = vmatpush1.bf16.msra.mxu0 %v1128
        %1154 = vmatprep.subr.bf16.mxu0 0
        %1155 = vmatpush1.bf16.msra.mxu0 %v1129
        %1156 = vmatprep.subr.bf16.mxu0 0
        %1157 = vmatpush1.bf16.msra.mxu0 %v1130
        %1158 = vmatprep.subr.bf16.mxu0 0
        %1159 = vmatpush1.bf16.msra.mxu0 %v1131
        %1160 = vmatprep.subr.bf16.mxu0 0
        %1161 = vmatpush1.bf16.msra.mxu0 0
        %1162 = vmatprep.subr.bf16.mxu0 0
        %1163 = vmatpush1.bf16.msra.mxu0 0
        %1164 = vmatprep.subr.bf16.mxu0 0
        %1165 = vmatpush1.bf16.msra.mxu0 0
        %1166 = vmatprep.subr.bf16.mxu0 0
        %1167 = vmatpush1.bf16.msra.mxu0 0
        %1168 = vmatprep.subr.bf16.mxu0 0
        %1169 = vmatpush1.bf16.msra.mxu0 0
        %1170 = vmatprep.subr.bf16.mxu0 0
        %1171 = vmatpush1.bf16.msra.mxu0 0
        %1172 = vmatprep.subr.bf16.mxu0 0
        %1173 = vmatpush1.bf16.msra.mxu0 0
        %1174 = vmatprep.subr.bf16.mxu0 0
        %1175 = vmatpush1.bf16.msra.mxu0 0
        %1176 = vmatprep.mubr.bf16.mxu0 0
        %1177 = vmatmul.mubr.bf16.gmra.mrb[0].mxu0 %v744
        %v1178 = vpop.f32.mrb[0].mxu0
        %v1179 = vadd.f32 %v1142, %v1178
        %v1180 = vpop.f32.mrb[0].mxu0
        %v1181 = vpop.f32.mrb[0].mxu0
        %v1182 = vadd.f32 %v1142, %v1181
        %v1183 = vpop.f32.mrb[0].mxu0
        %1184 = vdwg.mxu0
        %v1185 = vpack.c.bf16 %v1182, %v1179
        %s1186 = scalar_lea.vmem %s676, 64
        %v1187 = vld [vmem:[%s1186] sm:$0xf]
        %v1188 = vld [vmem:[%s1186 + $0x4] sm:$0xf]
        %v1189 = vld [vmem:[%s1186 + $0x8] sm:$0xf]
        %v1190 = vld [vmem:[%s1186 + $0xc] sm:$0xf]
        %v1191 = vld [vmem:[%s1186 + $0x10] sm:$0xf]
        %v1192 = vld [vmem:[%s1186 + $0x14] sm:$0xf]
        %v1193 = vld [vmem:[%s1186 + $0x18] sm:$0xf]
        %v1194 = vld [vmem:[%s1186 + $0x1c] sm:$0xf]
        %v1195 = vld [vmem:[%s1186 + $0x20] sm:$0xf]
        %v1196 = vld [vmem:[%s1186 + $0x24] sm:$0xf]
        %v1197 = vld [vmem:[%s1186 + $0x28] sm:$0xf]
        %v1198 = vld [vmem:[%s1186 + $0x2c] sm:$0xf]
        %v1199 = vld [vmem:[%s1186 + $0x30] sm:$0xf]
        %v1200 = vld [vmem:[%s1186 + $0x34] sm:$0xf]
        %v1201 = vld [vmem:[%s1186 + $0x38] sm:$0xf]
        %v1202 = vld [vmem:[%s1186 + $0x3c] sm:$0xf]
        %v1219 = vunpack.c.l.b16 %v1187
        %v1220 = vunpack.c.l.b16 %v1188
        %v1221 = vunpack.c.l.b16 %v1189
        %v1222 = vunpack.c.l.b16 %v1190
        %v1223 = vunpack.c.l.b16 %v1191
        %v1224 = vunpack.c.l.b16 %v1192
        %v1225 = vunpack.c.l.b16 %v1193
        %v1226 = vunpack.c.l.b16 %v1194
        %v1227 = vunpack.c.l.b16 %v1195
        %v1228 = vunpack.c.l.b16 %v1196
        %v1229 = vunpack.c.l.b16 %v1197
        %v1230 = vunpack.c.l.b16 %v1198
        %v1231 = vunpack.c.l.b16 %v1199
        %v1232 = vunpack.c.l.b16 %v1200
        %v1233 = vunpack.c.l.b16 %v1201
        %v1234 = vunpack.c.l.b16 %v1202
        %v1235 = vpack.c.b16 %v1220, %v1219
        %v1236 = vpack.c.b16 %v1222, %v1221
        %v1237 = vpack.c.b16 %v1224, %v1223
        %v1238 = vpack.c.b16 %v1226, %v1225
        %v1239 = vpack.c.b16 %v1228, %v1227
        %v1240 = vpack.c.b16 %v1230, %v1229
        %v1241 = vpack.c.b16 %v1232, %v1231
        %v1242 = vpack.c.b16 %v1234, %v1233
        %1252 = vrot.lane.b32.xlu0 %v874, 96
        %v1253 = vpop.permute.xlu0 %1252
        %1255 = vmatprep.subr.bf16.mxu0 0
        %1256 = vmatpush1.bf16.msra.mxu0 %v1235
        %1257 = vmatprep.subr.bf16.mxu0 0
        %1258 = vmatpush1.bf16.msra.mxu0 %v1236
        %1259 = vmatprep.subr.bf16.mxu0 0
        %1260 = vmatpush1.bf16.msra.mxu0 %v1237
        %1261 = vmatprep.subr.bf16.mxu0 0
        %1262 = vmatpush1.bf16.msra.mxu0 %v1238
        %1263 = vmatprep.subr.bf16.mxu0 0
        %1264 = vmatpush1.bf16.msra.mxu0 %v1239
        %1265 = vmatprep.subr.bf16.mxu0 0
        %1266 = vmatpush1.bf16.msra.mxu0 %v1240
        %1267 = vmatprep.subr.bf16.mxu0 0
        %1268 = vmatpush1.bf16.msra.mxu0 %v1241
        %1269 = vmatprep.subr.bf16.mxu0 0
        %1270 = vmatpush1.bf16.msra.mxu0 %v1242
        %1271 = vmatprep.subr.bf16.mxu0 0
        %1272 = vmatpush1.bf16.msra.mxu0 0
        %1273 = vmatprep.subr.bf16.mxu0 0
        %1274 = vmatpush1.bf16.msra.mxu0 0
        %1275 = vmatprep.subr.bf16.mxu0 0
        %1276 = vmatpush1.bf16.msra.mxu0 0
        %1277 = vmatprep.subr.bf16.mxu0 0
        %1278 = vmatpush1.bf16.msra.mxu0 0
        %1279 = vmatprep.subr.bf16.mxu0 0
        %1280 = vmatpush1.bf16.msra.mxu0 0
        %1281 = vmatprep.subr.bf16.mxu0 0
        %1282 = vmatpush1.bf16.msra.mxu0 0
        %1283 = vmatprep.subr.bf16.mxu0 0
        %1284 = vmatpush1.bf16.msra.mxu0 0
        %1285 = vmatprep.subr.bf16.mxu0 0
        %1286 = vmatpush1.bf16.msra.mxu0 0
        %1287 = vmatprep.mubr.bf16.mxu0 0
        %1288 = vmatmul.mubr.bf16.gmra.mrb[0].mxu0 %v744
        %v1289 = vpop.f32.mrb[0].mxu0
        %v1290 = vadd.f32 %v1253, %v1289
        %v1291 = vpop.f32.mrb[0].mxu0
        %v1292 = vpop.f32.mrb[0].mxu0
        %v1293 = vadd.f32 %v1253, %v1292
        %v1294 = vpop.f32.mrb[0].mxu0
        %1295 = vdwg.mxu0
        %v1296 = vpack.c.bf16 %v1293, %v1290
        %s1297 = scalar_lea.vmem %s681, 64
        %v1298 = vld [vmem:[%s1297] sm:$0xf]
        %v1299 = vld [vmem:[%s1297 + $0x4] sm:$0xf]
        %v1300 = vld [vmem:[%s1297 + $0x8] sm:$0xf]
        %v1301 = vld [vmem:[%s1297 + $0xc] sm:$0xf]
        %v1302 = vld [vmem:[%s1297 + $0x10] sm:$0xf]
        %v1303 = vld [vmem:[%s1297 + $0x14] sm:$0xf]
        %v1304 = vld [vmem:[%s1297 + $0x18] sm:$0xf]
        %v1305 = vld [vmem:[%s1297 + $0x1c] sm:$0xf]
        %v1306 = vld [vmem:[%s1297 + $0x20] sm:$0xf]
        %v1307 = vld [vmem:[%s1297 + $0x24] sm:$0xf]
        %v1308 = vld [vmem:[%s1297 + $0x28] sm:$0xf]
        %v1309 = vld [vmem:[%s1297 + $0x2c] sm:$0xf]
        %v1310 = vld [vmem:[%s1297 + $0x30] sm:$0xf]
        %v1311 = vld [vmem:[%s1297 + $0x34] sm:$0xf]
        %v1312 = vld [vmem:[%s1297 + $0x38] sm:$0xf]
        %v1313 = vld [vmem:[%s1297 + $0x3c] sm:$0xf]
        %v1330 = vunpack.c.l.b16 %v1298
        %v1331 = vunpack.c.l.b16 %v1299
        %v1332 = vunpack.c.l.b16 %v1300
        %v1333 = vunpack.c.l.b16 %v1301
        %v1334 = vunpack.c.l.b16 %v1302
        %v1335 = vunpack.c.l.b16 %v1303
        %v1336 = vunpack.c.l.b16 %v1304
        %v1337 = vunpack.c.l.b16 %v1305
        %v1338 = vunpack.c.l.b16 %v1306
        %v1339 = vunpack.c.l.b16 %v1307
        %v1340 = vunpack.c.l.b16 %v1308
        %v1341 = vunpack.c.l.b16 %v1309
        %v1342 = vunpack.c.l.b16 %v1310
        %v1343 = vunpack.c.l.b16 %v1311
        %v1344 = vunpack.c.l.b16 %v1312
        %v1345 = vunpack.c.l.b16 %v1313
        %v1346 = vpack.c.b16 %v1331, %v1330
        %v1347 = vpack.c.b16 %v1333, %v1332
        %v1348 = vpack.c.b16 %v1335, %v1334
        %v1349 = vpack.c.b16 %v1337, %v1336
        %v1350 = vpack.c.b16 %v1339, %v1338
        %v1351 = vpack.c.b16 %v1341, %v1340
        %v1352 = vpack.c.b16 %v1343, %v1342
        %v1353 = vpack.c.b16 %v1345, %v1344
        %1363 = vrot.lane.b32.xlu0 %v984, 96
        %v1364 = vpop.permute.xlu0 %1363
        %1366 = vmatprep.subr.bf16.mxu0 0
        %1367 = vmatpush1.bf16.msra.mxu0 %v1346
        %1368 = vmatprep.subr.bf16.mxu0 0
        %1369 = vmatpush1.bf16.msra.mxu0 %v1347
        %1370 = vmatprep.subr.bf16.mxu0 0
        %1371 = vmatpush1.bf16.msra.mxu0 %v1348
        %1372 = vmatprep.subr.bf16.mxu0 0
        %1373 = vmatpush1.bf16.msra.mxu0 %v1349
        %1374 = vmatprep.subr.bf16.mxu0 0
        %1375 = vmatpush1.bf16.msra.mxu0 %v1350
        %1376 = vmatprep.subr.bf16.mxu0 0
        %1377 = vmatpush1.bf16.msra.mxu0 %v1351
        %1378 = vmatprep.subr.bf16.mxu0 0
        %1379 = vmatpush1.bf16.msra.mxu0 %v1352
        %1380 = vmatprep.subr.bf16.mxu0 0
        %1381 = vmatpush1.bf16.msra.mxu0 %v1353
        %1382 = vmatprep.subr.bf16.mxu0 0
        %1383 = vmatpush1.bf16.msra.mxu0 0
        %1384 = vmatprep.subr.bf16.mxu0 0
        %1385 = vmatpush1.bf16.msra.mxu0 0
        %1386 = vmatprep.subr.bf16.mxu0 0
        %1387 = vmatpush1.bf16.msra.mxu0 0
        %1388 = vmatprep.subr.bf16.mxu0 0
        %1389 = vmatpush1.bf16.msra.mxu0 0
        %1390 = vmatprep.subr.bf16.mxu0 0
        %1391 = vmatpush1.bf16.msra.mxu0 0
        %1392 = vmatprep.subr.bf16.mxu0 0
        %1393 = vmatpush1.bf16.msra.mxu0 0
        %1394 = vmatprep.subr.bf16.mxu0 0
        %1395 = vmatpush1.bf16.msra.mxu0 0
        %1396 = vmatprep.subr.bf16.mxu0 0
        %1397 = vmatpush1.bf16.msra.mxu0 0
        %1398 = vmatprep.mubr.bf16.mxu0 0
        %1399 = vmatmul.mubr.bf16.gmra.mrb[0].mxu0 %v744
        %v1400 = vpop.f32.mrb[0].mxu0
        %v1401 = vadd.f32 %v1364, %v1400
        %v1402 = vpop.f32.mrb[0].mxu0
        %v1403 = vpop.f32.mrb[0].mxu0
        %v1404 = vadd.f32 %v1364, %v1403
        %v1405 = vpop.f32.mrb[0].mxu0
        %1406 = vdwg.mxu0
        %v1407 = vpack.c.bf16 %v1404, %v1401
        %s1408 = scalar_lea.vmem %s671, 128
        %v1409 = vld [vmem:[%s1408] sm:$0xf]
        %v1410 = vld [vmem:[%s1408 + $0x4] sm:$0xf]
        %v1411 = vld [vmem:[%s1408 + $0x8] sm:$0xf]
        %v1412 = vld [vmem:[%s1408 + $0xc] sm:$0xf]
        %v1413 = vld [vmem:[%s1408 + $0x10] sm:$0xf]
        %v1414 = vld [vmem:[%s1408 + $0x14] sm:$0xf]
        %v1415 = vld [vmem:[%s1408 + $0x18] sm:$0xf]
        %v1416 = vld [vmem:[%s1408 + $0x1c] sm:$0xf]
        %v1417 = vld [vmem:[%s1408 + $0x20] sm:$0xf]
        %v1418 = vld [vmem:[%s1408 + $0x24] sm:$0xf]
        %v1419 = vld [vmem:[%s1408 + $0x28] sm:$0xf]
        %v1420 = vld [vmem:[%s1408 + $0x2c] sm:$0xf]
        %v1421 = vld [vmem:[%s1408 + $0x30] sm:$0xf]
        %v1422 = vld [vmem:[%s1408 + $0x34] sm:$0xf]
        %v1423 = vld [vmem:[%s1408 + $0x38] sm:$0xf]
        %v1424 = vld [vmem:[%s1408 + $0x3c] sm:$0xf]
        %v1441 = vunpack.c.l.b16 %v1409
        %v1442 = vunpack.c.l.b16 %v1410
        %v1443 = vunpack.c.l.b16 %v1411
        %v1444 = vunpack.c.l.b16 %v1412
        %v1445 = vunpack.c.l.b16 %v1413
        %v1446 = vunpack.c.l.b16 %v1414
        %v1447 = vunpack.c.l.b16 %v1415
        %v1448 = vunpack.c.l.b16 %v1416
        %v1449 = vunpack.c.l.b16 %v1417
        %v1450 = vunpack.c.l.b16 %v1418
        %v1451 = vunpack.c.l.b16 %v1419
        %v1452 = vunpack.c.l.b16 %v1420
        %v1453 = vunpack.c.l.b16 %v1421
        %v1454 = vunpack.c.l.b16 %v1422
        %v1455 = vunpack.c.l.b16 %v1423
        %v1456 = vunpack.c.l.b16 %v1424
        %v1457 = vpack.c.b16 %v1442, %v1441
        %v1458 = vpack.c.b16 %v1444, %v1443
        %v1459 = vpack.c.b16 %v1446, %v1445
        %v1460 = vpack.c.b16 %v1448, %v1447
        %v1461 = vpack.c.b16 %v1450, %v1449
        %v1462 = vpack.c.b16 %v1452, %v1451
        %v1463 = vpack.c.b16 %v1454, %v1453
        %v1464 = vpack.c.b16 %v1456, %v1455
        %1473 = vrot.lane.b32.xlu0 %v764, 64
        %v1474 = vpop.permute.xlu0 %1473
        %1476 = vmatprep.subr.bf16.mxu0 0
        %1477 = vmatpush1.bf16.msra.mxu0 %v1457
        %1478 = vmatprep.subr.bf16.mxu0 0
        %1479 = vmatpush1.bf16.msra.mxu0 %v1458
        %1480 = vmatprep.subr.bf16.mxu0 0
        %1481 = vmatpush1.bf16.msra.mxu0 %v1459
        %1482 = vmatprep.subr.bf16.mxu0 0
        %1483 = vmatpush1.bf16.msra.mxu0 %v1460
        %1484 = vmatprep.subr.bf16.mxu0 0
        %1485 = vmatpush1.bf16.msra.mxu0 %v1461
        %1486 = vmatprep.subr.bf16.mxu0 0
        %1487 = vmatpush1.bf16.msra.mxu0 %v1462
        %1488 = vmatprep.subr.bf16.mxu0 0
        %1489 = vmatpush1.bf16.msra.mxu0 %v1463
        %1490 = vmatprep.subr.bf16.mxu0 0
        %1491 = vmatpush1.bf16.msra.mxu0 %v1464
        %1492 = vmatprep.subr.bf16.mxu0 0
        %1493 = vmatpush1.bf16.msra.mxu0 0
        %1494 = vmatprep.subr.bf16.mxu0 0
        %1495 = vmatpush1.bf16.msra.mxu0 0
        %1496 = vmatprep.subr.bf16.mxu0 0
        %1497 = vmatpush1.bf16.msra.mxu0 0
        %1498 = vmatprep.subr.bf16.mxu0 0
        %1499 = vmatpush1.bf16.msra.mxu0 0
        %1500 = vmatprep.subr.bf16.mxu0 0
        %1501 = vmatpush1.bf16.msra.mxu0 0
        %1502 = vmatprep.subr.bf16.mxu0 0
        %1503 = vmatpush1.bf16.msra.mxu0 0
        %1504 = vmatprep.subr.bf16.mxu0 0
        %1505 = vmatpush1.bf16.msra.mxu0 0
        %1506 = vmatprep.subr.bf16.mxu0 0
        %1507 = vmatpush1.bf16.msra.mxu0 0
        %1508 = vmatprep.mubr.bf16.mxu0 0
        %1509 = vmatmul.mubr.bf16.gmra.mrb[0].mxu0 %v744
        %v1510 = vpop.f32.mrb[0].mxu0
        %v1511 = vadd.f32 %v1474, %v1510
        %v1512 = vpop.f32.mrb[0].mxu0
        %v1513 = vpop.f32.mrb[0].mxu0
        %v1514 = vadd.f32 %v1474, %v1513
        %v1515 = vpop.f32.mrb[0].mxu0
        %1516 = vdwg.mxu0
        %v1517 = vpack.c.bf16 %v1514, %v1511
        %s1518 = scalar_lea.vmem %s676, 128
        %v1519 = vld [vmem:[%s1518] sm:$0xf]
        %v1520 = vld [vmem:[%s1518 + $0x4] sm:$0xf]
        %v1521 = vld [vmem:[%s1518 + $0x8] sm:$0xf]
        %v1522 = vld [vmem:[%s1518 + $0xc] sm:$0xf]
        %v1523 = vld [vmem:[%s1518 + $0x10] sm:$0xf]
        %v1524 = vld [vmem:[%s1518 + $0x14] sm:$0xf]
        %v1525 = vld [vmem:[%s1518 + $0x18] sm:$0xf]
        %v1526 = vld [vmem:[%s1518 + $0x1c] sm:$0xf]
        %v1527 = vld [vmem:[%s1518 + $0x20] sm:$0xf]
        %v1528 = vld [vmem:[%s1518 + $0x24] sm:$0xf]
        %v1529 = vld [vmem:[%s1518 + $0x28] sm:$0xf]
        %v1530 = vld [vmem:[%s1518 + $0x2c] sm:$0xf]
        %v1531 = vld [vmem:[%s1518 + $0x30] sm:$0xf]
        %v1532 = vld [vmem:[%s1518 + $0x34] sm:$0xf]
        %v1533 = vld [vmem:[%s1518 + $0x38] sm:$0xf]
        %v1534 = vld [vmem:[%s1518 + $0x3c] sm:$0xf]
        %v1551 = vunpack.c.l.b16 %v1519
        %v1552 = vunpack.c.l.b16 %v1520
        %v1553 = vunpack.c.l.b16 %v1521
        %v1554 = vunpack.c.l.b16 %v1522
        %v1555 = vunpack.c.l.b16 %v1523
        %v1556 = vunpack.c.l.b16 %v1524
        %v1557 = vunpack.c.l.b16 %v1525
        %v1558 = vunpack.c.l.b16 %v1526
        %v1559 = vunpack.c.l.b16 %v1527
        %v1560 = vunpack.c.l.b16 %v1528
        %v1561 = vunpack.c.l.b16 %v1529
        %v1562 = vunpack.c.l.b16 %v1530
        %v1563 = vunpack.c.l.b16 %v1531
        %v1564 = vunpack.c.l.b16 %v1532
        %v1565 = vunpack.c.l.b16 %v1533
        %v1566 = vunpack.c.l.b16 %v1534
        %v1567 = vpack.c.b16 %v1552, %v1551
        %v1568 = vpack.c.b16 %v1554, %v1553
        %v1569 = vpack.c.b16 %v1556, %v1555
        %v1570 = vpack.c.b16 %v1558, %v1557
        %v1571 = vpack.c.b16 %v1560, %v1559
        %v1572 = vpack.c.b16 %v1562, %v1561
        %v1573 = vpack.c.b16 %v1564, %v1563
        %v1574 = vpack.c.b16 %v1566, %v1565
        %1583 = vrot.lane.b32.xlu0 %v874, 64
        %v1584 = vpop.permute.xlu0 %1583
        %1586 = vmatprep.subr.bf16.mxu0 0
        %1587 = vmatpush1.bf16.msra.mxu0 %v1567
        %1588 = vmatprep.subr.bf16.mxu0 0
        %1589 = vmatpush1.bf16.msra.mxu0 %v1568
        %1590 = vmatprep.subr.bf16.mxu0 0
        %1591 = vmatpush1.bf16.msra.mxu0 %v1569
        %1592 = vmatprep.subr.bf16.mxu0 0
        %1593 = vmatpush1.bf16.msra.mxu0 %v1570
        %1594 = vmatprep.subr.bf16.mxu0 0
        %1595 = vmatpush1.bf16.msra.mxu0 %v1571
        %1596 = vmatprep.subr.bf16.mxu0 0
        %1597 = vmatpush1.bf16.msra.mxu0 %v1572
        %1598 = vmatprep.subr.bf16.mxu0 0
        %1599 = vmatpush1.bf16.msra.mxu0 %v1573
        %1600 = vmatprep.subr.bf16.mxu0 0
        %1601 = vmatpush1.bf16.msra.mxu0 %v1574
        %1602 = vmatprep.subr.bf16.mxu0 0
        %1603 = vmatpush1.bf16.msra.mxu0 0
        %1604 = vmatprep.subr.bf16.mxu0 0
        %1605 = vmatpush1.bf16.msra.mxu0 0
        %1606 = vmatprep.subr.bf16.mxu0 0
        %1607 = vmatpush1.bf16.msra.mxu0 0
        %1608 = vmatprep.subr.bf16.mxu0 0
        %1609 = vmatpush1.bf16.msra.mxu0 0
        %1610 = vmatprep.subr.bf16.mxu0 0
        %1611 = vmatpush1.bf16.msra.mxu0 0
        %1612 = vmatprep.subr.bf16.mxu0 0
        %1613 = vmatpush1.bf16.msra.mxu0 0
        %1614 = vmatprep.subr.bf16.mxu0 0
        %1615 = vmatpush1.bf16.msra.mxu0 0
        %1616 = vmatprep.subr.bf16.mxu0 0
        %1617 = vmatpush1.bf16.msra.mxu0 0
        %1618 = vmatprep.mubr.bf16.mxu0 0
        %1619 = vmatmul.mubr.bf16.gmra.mrb[0].mxu0 %v744
        %v1620 = vpop.f32.mrb[0].mxu0
        %v1621 = vadd.f32 %v1584, %v1620
        %v1622 = vpop.f32.mrb[0].mxu0
        %v1623 = vpop.f32.mrb[0].mxu0
        %v1624 = vadd.f32 %v1584, %v1623
        %v1625 = vpop.f32.mrb[0].mxu0
        %1626 = vdwg.mxu0
        %v1627 = vpack.c.bf16 %v1624, %v1621
        %s1628 = scalar_lea.vmem %s681, 128
        %v1629 = vld [vmem:[%s1628] sm:$0xf]
        %v1630 = vld [vmem:[%s1628 + $0x4] sm:$0xf]
        %v1631 = vld [vmem:[%s1628 + $0x8] sm:$0xf]
        %v1632 = vld [vmem:[%s1628 + $0xc] sm:$0xf]
        %v1633 = vld [vmem:[%s1628 + $0x10] sm:$0xf]
        %v1634 = vld [vmem:[%s1628 + $0x14] sm:$0xf]
        %v1635 = vld [vmem:[%s1628 + $0x18] sm:$0xf]
        %v1636 = vld [vmem:[%s1628 + $0x1c] sm:$0xf]
        %v1637 = vld [vmem:[%s1628 + $0x20] sm:$0xf]
        %v1638 = vld [vmem:[%s1628 + $0x24] sm:$0xf]
        %v1639 = vld [vmem:[%s1628 + $0x28] sm:$0xf]
        %v1640 = vld [vmem:[%s1628 + $0x2c] sm:$0xf]
        %v1641 = vld [vmem:[%s1628 + $0x30] sm:$0xf]
        %v1642 = vld [vmem:[%s1628 + $0x34] sm:$0xf]
        %v1643 = vld [vmem:[%s1628 + $0x38] sm:$0xf]
        %v1644 = vld [vmem:[%s1628 + $0x3c] sm:$0xf]
        %v1661 = vunpack.c.l.b16 %v1629
        %v1662 = vunpack.c.l.b16 %v1630
        %v1663 = vunpack.c.l.b16 %v1631
        %v1664 = vunpack.c.l.b16 %v1632
        %v1665 = vunpack.c.l.b16 %v1633
        %v1666 = vunpack.c.l.b16 %v1634
        %v1667 = vunpack.c.l.b16 %v1635
        %v1668 = vunpack.c.l.b16 %v1636
        %v1669 = vunpack.c.l.b16 %v1637
        %v1670 = vunpack.c.l.b16 %v1638
        %v1671 = vunpack.c.l.b16 %v1639
        %v1672 = vunpack.c.l.b16 %v1640
        %v1673 = vunpack.c.l.b16 %v1641
        %v1674 = vunpack.c.l.b16 %v1642
        %v1675 = vunpack.c.l.b16 %v1643
        %v1676 = vunpack.c.l.b16 %v1644
        %v1677 = vpack.c.b16 %v1662, %v1661
        %v1678 = vpack.c.b16 %v1664, %v1663
        %v1679 = vpack.c.b16 %v1666, %v1665
        %v1680 = vpack.c.b16 %v1668, %v1667
        %v1681 = vpack.c.b16 %v1670, %v1669
        %v1682 = vpack.c.b16 %v1672, %v1671
        %v1683 = vpack.c.b16 %v1674, %v1673
        %v1684 = vpack.c.b16 %v1676, %v1675
        %1693 = vrot.lane.b32.xlu0 %v984, 64
        %v1694 = vpop.permute.xlu0 %1693
        %1696 = vmatprep.subr.bf16.mxu0 0
        %1697 = vmatpush1.bf16.msra.mxu0 %v1677
        %1698 = vmatprep.subr.bf16.mxu0 0
        %1699 = vmatpush1.bf16.msra.mxu0 %v1678
        %1700 = vmatprep.subr.bf16.mxu0 0
        %1701 = vmatpush1.bf16.msra.mxu0 %v1679
        %1702 = vmatprep.subr.bf16.mxu0 0
        %1703 = vmatpush1.bf16.msra.mxu0 %v1680
        %1704 = vmatprep.subr.bf16.mxu0 0
        %1705 = vmatpush1.bf16.msra.mxu0 %v1681
        %1706 = vmatprep.subr.bf16.mxu0 0
        %1707 = vmatpush1.bf16.msra.mxu0 %v1682
        %1708 = vmatprep.subr.bf16.mxu0 0
        %1709 = vmatpush1.bf16.msra.mxu0 %v1683
        %1710 = vmatprep.subr.bf16.mxu0 0
        %1711 = vmatpush1.bf16.msra.mxu0 %v1684
        %1712 = vmatprep.subr.bf16.mxu0 0
        %1713 = vmatpush1.bf16.msra.mxu0 0
        %1714 = vmatprep.subr.bf16.mxu0 0
        %1715 = vmatpush1.bf16.msra.mxu0 0
        %1716 = vmatprep.subr.bf16.mxu0 0
        %1717 = vmatpush1.bf16.msra.mxu0 0
        %1718 = vmatprep.subr.bf16.mxu0 0
        %1719 = vmatpush1.bf16.msra.mxu0 0
        %1720 = vmatprep.subr.bf16.mxu0 0
        %1721 = vmatpush1.bf16.msra.mxu0 0
        %1722 = vmatprep.subr.bf16.mxu0 0
        %1723 = vmatpush1.bf16.msra.mxu0 0
        %1724 = vmatprep.subr.bf16.mxu0 0
        %1725 = vmatpush1.bf16.msra.mxu0 0
        %1726 = vmatprep.subr.bf16.mxu0 0
        %1727 = vmatpush1.bf16.msra.mxu0 0
        %1728 = vmatprep.mubr.bf16.mxu0 0
        %1729 = vmatmul.mubr.bf16.gmra.mrb[0].mxu0 %v744
        %v1730 = vpop.f32.mrb[0].mxu0
        %v1731 = vadd.f32 %v1694, %v1730
        %v1732 = vpop.f32.mrb[0].mxu0
        %v1733 = vpop.f32.mrb[0].mxu0
        %v1734 = vadd.f32 %v1694, %v1733
        %v1735 = vpop.f32.mrb[0].mxu0
        %1736 = vdwg.mxu0
        %v1737 = vpack.c.bf16 %v1734, %v1731
        %s1738 = scalar_lea.vmem %s671, 192
        %v1739 = vld [vmem:[%s1738] sm:$0xf]
        %v1740 = vld [vmem:[%s1738 + $0x4] sm:$0xf]
        %v1741 = vld [vmem:[%s1738 + $0x8] sm:$0xf]
        %v1742 = vld [vmem:[%s1738 + $0xc] sm:$0xf]
        %v1743 = vld [vmem:[%s1738 + $0x10] sm:$0xf]
        %v1744 = vld [vmem:[%s1738 + $0x14] sm:$0xf]
        %v1745 = vld [vmem:[%s1738 + $0x18] sm:$0xf]
        %v1746 = vld [vmem:[%s1738 + $0x1c] sm:$0xf]
        %v1747 = vld [vmem:[%s1738 + $0x20] sm:$0xf]
        %v1748 = vld [vmem:[%s1738 + $0x24] sm:$0xf]
        %v1749 = vld [vmem:[%s1738 + $0x28] sm:$0xf]
        %v1750 = vld [vmem:[%s1738 + $0x2c] sm:$0xf]
        %v1751 = vld [vmem:[%s1738 + $0x30] sm:$0xf]
        %v1752 = vld [vmem:[%s1738 + $0x34] sm:$0xf]
        %v1753 = vld [vmem:[%s1738 + $0x38] sm:$0xf]
        %v1754 = vld [vmem:[%s1738 + $0x3c] sm:$0xf]
        %v1771 = vunpack.c.l.b16 %v1739
        %v1772 = vunpack.c.l.b16 %v1740
        %v1773 = vunpack.c.l.b16 %v1741
        %v1774 = vunpack.c.l.b16 %v1742
        %v1775 = vunpack.c.l.b16 %v1743
        %v1776 = vunpack.c.l.b16 %v1744
        %v1777 = vunpack.c.l.b16 %v1745
        %v1778 = vunpack.c.l.b16 %v1746
        %v1779 = vunpack.c.l.b16 %v1747
        %v1780 = vunpack.c.l.b16 %v1748
        %v1781 = vunpack.c.l.b16 %v1749
        %v1782 = vunpack.c.l.b16 %v1750
        %v1783 = vunpack.c.l.b16 %v1751
        %v1784 = vunpack.c.l.b16 %v1752
        %v1785 = vunpack.c.l.b16 %v1753
        %v1786 = vunpack.c.l.b16 %v1754
        %v1787 = vpack.c.b16 %v1772, %v1771
        %v1788 = vpack.c.b16 %v1774, %v1773
        %v1789 = vpack.c.b16 %v1776, %v1775
        %v1790 = vpack.c.b16 %v1778, %v1777
        %v1791 = vpack.c.b16 %v1780, %v1779
        %v1792 = vpack.c.b16 %v1782, %v1781
        %v1793 = vpack.c.b16 %v1784, %v1783
        %v1794 = vpack.c.b16 %v1786, %v1785
        %1803 = vrot.lane.b32.xlu0 %v764, 32
        %v1804 = vpop.permute.xlu0 %1803
        %1806 = vmatprep.subr.bf16.mxu0 0
        %1807 = vmatpush1.bf16.msra.mxu0 %v1787
        %1808 = vmatprep.subr.bf16.mxu0 0
        %1809 = vmatpush1.bf16.msra.mxu0 %v1788
        %1810 = vmatprep.subr.bf16.mxu0 0
        %1811 = vmatpush1.bf16.msra.mxu0 %v1789
        %1812 = vmatprep.subr.bf16.mxu0 0
        %1813 = vmatpush1.bf16.msra.mxu0 %v1790
        %1814 = vmatprep.subr.bf16.mxu0 0
        %1815 = vmatpush1.bf16.msra.mxu0 %v1791
        %1816 = vmatprep.subr.bf16.mxu0 0
        %1817 = vmatpush1.bf16.msra.mxu0 %v1792
        %1818 = vmatprep.subr.bf16.mxu0 0
        %1819 = vmatpush1.bf16.msra.mxu0 %v1793
        %1820 = vmatprep.subr.bf16.mxu0 0
        %1821 = vmatpush1.bf16.msra.mxu0 %v1794
        %1822 = vmatprep.subr.bf16.mxu0 0
        %1823 = vmatpush1.bf16.msra.mxu0 0
        %1824 = vmatprep.subr.bf16.mxu0 0
        %1825 = vmatpush1.bf16.msra.mxu0 0
        %1826 = vmatprep.subr.bf16.mxu0 0
        %1827 = vmatpush1.bf16.msra.mxu0 0
        %1828 = vmatprep.subr.bf16.mxu0 0
        %1829 = vmatpush1.bf16.msra.mxu0 0
        %1830 = vmatprep.subr.bf16.mxu0 0
        %1831 = vmatpush1.bf16.msra.mxu0 0
        %1832 = vmatprep.subr.bf16.mxu0 0
        %1833 = vmatpush1.bf16.msra.mxu0 0
        %1834 = vmatprep.subr.bf16.mxu0 0
        %1835 = vmatpush1.bf16.msra.mxu0 0
        %1836 = vmatprep.subr.bf16.mxu0 0
        %1837 = vmatpush1.bf16.msra.mxu0 0
        %1838 = vmatprep.mubr.bf16.mxu0 0
        %1839 = vmatmul.mubr.bf16.gmra.mrb[0].mxu0 %v744
        %v1840 = vpop.f32.mrb[0].mxu0
        %v1841 = vadd.f32 %v1804, %v1840
        %v1842 = vpop.f32.mrb[0].mxu0
        %v1843 = vpop.f32.mrb[0].mxu0
        %v1844 = vadd.f32 %v1804, %v1843
        %v1845 = vpop.f32.mrb[0].mxu0
        %1846 = vdwg.mxu0
        %v1847 = vpack.c.bf16 %v1844, %v1841
        %s1848 = scalar_lea.vmem %s676, 192
        %v1849 = vld [vmem:[%s1848] sm:$0xf]
        %v1850 = vld [vmem:[%s1848 + $0x4] sm:$0xf]
        %v1851 = vld [vmem:[%s1848 + $0x8] sm:$0xf]
        %v1852 = vld [vmem:[%s1848 + $0xc] sm:$0xf]
        %v1853 = vld [vmem:[%s1848 + $0x10] sm:$0xf]
        %v1854 = vld [vmem:[%s1848 + $0x14] sm:$0xf]
        %v1855 = vld [vmem:[%s1848 + $0x18] sm:$0xf]
        %v1856 = vld [vmem:[%s1848 + $0x1c] sm:$0xf]
        %v1857 = vld [vmem:[%s1848 + $0x20] sm:$0xf]
        %v1858 = vld [vmem:[%s1848 + $0x24] sm:$0xf]
        %v1859 = vld [vmem:[%s1848 + $0x28] sm:$0xf]
        %v1860 = vld [vmem:[%s1848 + $0x2c] sm:$0xf]
        %v1861 = vld [vmem:[%s1848 + $0x30] sm:$0xf]
        %v1862 = vld [vmem:[%s1848 + $0x34] sm:$0xf]
        %v1863 = vld [vmem:[%s1848 + $0x38] sm:$0xf]
        %v1864 = vld [vmem:[%s1848 + $0x3c] sm:$0xf]
        %v1881 = vunpack.c.l.b16 %v1849
        %v1882 = vunpack.c.l.b16 %v1850
        %v1883 = vunpack.c.l.b16 %v1851
        %v1884 = vunpack.c.l.b16 %v1852
        %v1885 = vunpack.c.l.b16 %v1853
        %v1886 = vunpack.c.l.b16 %v1854
        %v1887 = vunpack.c.l.b16 %v1855
        %v1888 = vunpack.c.l.b16 %v1856
        %v1889 = vunpack.c.l.b16 %v1857
        %v1890 = vunpack.c.l.b16 %v1858
        %v1891 = vunpack.c.l.b16 %v1859
        %v1892 = vunpack.c.l.b16 %v1860
        %v1893 = vunpack.c.l.b16 %v1861
        %v1894 = vunpack.c.l.b16 %v1862
        %v1895 = vunpack.c.l.b16 %v1863
        %v1896 = vunpack.c.l.b16 %v1864
        %v1897 = vpack.c.b16 %v1882, %v1881
        %v1898 = vpack.c.b16 %v1884, %v1883
        %v1899 = vpack.c.b16 %v1886, %v1885
        %v1900 = vpack.c.b16 %v1888, %v1887
        %v1901 = vpack.c.b16 %v1890, %v1889
        %v1902 = vpack.c.b16 %v1892, %v1891
        %v1903 = vpack.c.b16 %v1894, %v1893
        %v1904 = vpack.c.b16 %v1896, %v1895
        %1913 = vrot.lane.b32.xlu0 %v874, 32
        %v1914 = vpop.permute.xlu0 %1913
        %1916 = vmatprep.subr.bf16.mxu0 0
        %1917 = vmatpush1.bf16.msra.mxu0 %v1897
        %1918 = vmatprep.subr.bf16.mxu0 0
        %1919 = vmatpush1.bf16.msra.mxu0 %v1898
        %1920 = vmatprep.subr.bf16.mxu0 0
        %1921 = vmatpush1.bf16.msra.mxu0 %v1899
        %1922 = vmatprep.subr.bf16.mxu0 0
        %1923 = vmatpush1.bf16.msra.mxu0 %v1900
        %1924 = vmatprep.subr.bf16.mxu0 0
        %1925 = vmatpush1.bf16.msra.mxu0 %v1901
        %1926 = vmatprep.subr.bf16.mxu0 0
        %1927 = vmatpush1.bf16.msra.mxu0 %v1902
        %1928 = vmatprep.subr.bf16.mxu0 0
        %1929 = vmatpush1.bf16.msra.mxu0 %v1903
        %1930 = vmatprep.subr.bf16.mxu0 0
        %1931 = vmatpush1.bf16.msra.mxu0 %v1904
        %1932 = vmatprep.subr.bf16.mxu0 0
        %1933 = vmatpush1.bf16.msra.mxu0 0
        %1934 = vmatprep.subr.bf16.mxu0 0
        %1935 = vmatpush1.bf16.msra.mxu0 0
        %1936 = vmatprep.subr.bf16.mxu0 0
        %1937 = vmatpush1.bf16.msra.mxu0 0
        %1938 = vmatprep.subr.bf16.mxu0 0
        %1939 = vmatpush1.bf16.msra.mxu0 0
        %1940 = vmatprep.subr.bf16.mxu0 0
        %1941 = vmatpush1.bf16.msra.mxu0 0
        %1942 = vmatprep.subr.bf16.mxu0 0
        %1943 = vmatpush1.bf16.msra.mxu0 0
        %1944 = vmatprep.subr.bf16.mxu0 0
        %1945 = vmatpush1.bf16.msra.mxu0 0
        %1946 = vmatprep.subr.bf16.mxu0 0
        %1947 = vmatpush1.bf16.msra.mxu0 0
        %1948 = vmatprep.mubr.bf16.mxu0 0
        %1949 = vmatmul.mubr.bf16.gmra.mrb[0].mxu0 %v744
        %v1950 = vpop.f32.mrb[0].mxu0
        %v1951 = vadd.f32 %v1914, %v1950
        %v1952 = vpop.f32.mrb[0].mxu0
        %v1953 = vpop.f32.mrb[0].mxu0
        %v1954 = vadd.f32 %v1914, %v1953
        %v1955 = vpop.f32.mrb[0].mxu0
        %1956 = vdwg.mxu0
        %v1957 = vpack.c.bf16 %v1954, %v1951
        %s1958 = scalar_lea.vmem %s681, 192
        %v1959 = vld [vmem:[%s1958] sm:$0xf]
        %v1960 = vld [vmem:[%s1958 + $0x4] sm:$0xf]
        %v1961 = vld [vmem:[%s1958 + $0x8] sm:$0xf]
        %v1962 = vld [vmem:[%s1958 + $0xc] sm:$0xf]
        %v1963 = vld [vmem:[%s1958 + $0x10] sm:$0xf]
        %v1964 = vld [vmem:[%s1958 + $0x14] sm:$0xf]
        %v1965 = vld [vmem:[%s1958 + $0x18] sm:$0xf]
        %v1966 = vld [vmem:[%s1958 + $0x1c] sm:$0xf]
        %v1967 = vld [vmem:[%s1958 + $0x20] sm:$0xf]
        %v1968 = vld [vmem:[%s1958 + $0x24] sm:$0xf]
        %v1969 = vld [vmem:[%s1958 + $0x28] sm:$0xf]
        %v1970 = vld [vmem:[%s1958 + $0x2c] sm:$0xf]
        %v1971 = vld [vmem:[%s1958 + $0x30] sm:$0xf]
        %v1972 = vld [vmem:[%s1958 + $0x34] sm:$0xf]
        %v1973 = vld [vmem:[%s1958 + $0x38] sm:$0xf]
        %v1974 = vld [vmem:[%s1958 + $0x3c] sm:$0xf]
        %v1991 = vunpack.c.l.b16 %v1959
        %v1992 = vunpack.c.l.b16 %v1960
        %v1993 = vunpack.c.l.b16 %v1961
        %v1994 = vunpack.c.l.b16 %v1962
        %v1995 = vunpack.c.l.b16 %v1963
        %v1996 = vunpack.c.l.b16 %v1964
        %v1997 = vunpack.c.l.b16 %v1965
        %v1998 = vunpack.c.l.b16 %v1966
        %v1999 = vunpack.c.l.b16 %v1967
        %v2000 = vunpack.c.l.b16 %v1968
        %v2001 = vunpack.c.l.b16 %v1969
        %v2002 = vunpack.c.l.b16 %v1970
        %v2003 = vunpack.c.l.b16 %v1971
        %v2004 = vunpack.c.l.b16 %v1972
        %v2005 = vunpack.c.l.b16 %v1973
        %v2006 = vunpack.c.l.b16 %v1974
        %v2007 = vpack.c.b16 %v1992, %v1991
        %v2008 = vpack.c.b16 %v1994, %v1993
        %v2009 = vpack.c.b16 %v1996, %v1995
        %v2010 = vpack.c.b16 %v1998, %v1997
        %v2011 = vpack.c.b16 %v2000, %v1999
        %v2012 = vpack.c.b16 %v2002, %v2001
        %v2013 = vpack.c.b16 %v2004, %v2003
        %v2014 = vpack.c.b16 %v2006, %v2005
        %2023 = vrot.lane.b32.xlu0 %v984, 32
        %v2024 = vpop.permute.xlu0 %2023
        %2026 = vmatprep.subr.bf16.mxu0 0
        %2027 = vmatpush1.bf16.msra.mxu0 %v2007
        %2028 = vmatprep.subr.bf16.mxu0 0
        %2029 = vmatpush1.bf16.msra.mxu0 %v2008
        %2030 = vmatprep.subr.bf16.mxu0 0
        %2031 = vmatpush1.bf16.msra.mxu0 %v2009
        %2032 = vmatprep.subr.bf16.mxu0 0
        %2033 = vmatpush1.bf16.msra.mxu0 %v2010
        %2034 = vmatprep.subr.bf16.mxu0 0
        %2035 = vmatpush1.bf16.msra.mxu0 %v2011
        %2036 = vmatprep.subr.bf16.mxu0 0
        %2037 = vmatpush1.bf16.msra.mxu0 %v2012
        %2038 = vmatprep.subr.bf16.mxu0 0
        %2039 = vmatpush1.bf16.msra.mxu0 %v2013
        %2040 = vmatprep.subr.bf16.mxu0 0
        %2041 = vmatpush1.bf16.msra.mxu0 %v2014
        %2042 = vmatprep.subr.bf16.mxu0 0
        %2043 = vmatpush1.bf16.msra.mxu0 0
        %2044 = vmatprep.subr.bf16.mxu0 0
        %2045 = vmatpush1.bf16.msra.mxu0 0
        %2046 = vmatprep.subr.bf16.mxu0 0
        %2047 = vmatpush1.bf16.msra.mxu0 0
        %2048 = vmatprep.subr.bf16.mxu0 0
        %2049 = vmatpush1.bf16.msra.mxu0 0
        %2050 = vmatprep.subr.bf16.mxu0 0
        %2051 = vmatpush1.bf16.msra.mxu0 0
        %2052 = vmatprep.subr.bf16.mxu0 0
        %2053 = vmatpush1.bf16.msra.mxu0 0
        %2054 = vmatprep.subr.bf16.mxu0 0
        %2055 = vmatpush1.bf16.msra.mxu0 0
        %2056 = vmatprep.subr.bf16.mxu0 0
        %2057 = vmatpush1.bf16.msra.mxu0 0
        %2058 = vmatprep.mubr.bf16.mxu0 0
        %2059 = vmatmul.mubr.bf16.gmra.mrb[0].mxu0 %v744
        %v2060 = vpop.f32.mrb[0].mxu0
        %v2061 = vadd.f32 %v2024, %v2060
        %v2062 = vpop.f32.mrb[0].mxu0
        %v2063 = vpop.f32.mrb[0].mxu0
        %v2064 = vadd.f32 %v2024, %v2063
        %v2065 = vpop.f32.mrb[0].mxu0
        %2066 = vdwg.mxu0
        %v2067 = vpack.c.bf16 %v2064, %v2061
        %s2068 = scalar_lea.vmem %s2, %s724
        %v2069 = vld [vmem:[%s2068] sm:$0x1]
        %v2070 = vlaneseq
        %v2071 = vshrl.u32 %v2070, 7
        %v2072 = vsub.s32 0, %v2071
        %v2073 = vrot.slane %v2069, %v2072
        %v2074 = vadd.f32 %v743, %v2073
        %vm2075 = vcmask 261120
        %v2077 = vsel %vm2075, %v854, 0
        %v2080 = vsel %vm2075, %v964, 0
        %2082 = vmatprep.subr.bf16.mxu0 0
        %2083 = vmatpush1.bf16.xpose.msra.mxu0 %v2080
        %2084 = vmatprep.subr.bf16.mxu0 0
        %2085 = vmatpush1.bf16.xpose.msra.mxu0 0
        %2086 = vmatprep.subr.bf16.mxu0 0
        %2087 = vmatpush1.bf16.xpose.msra.mxu0 0
        %2088 = vmatprep.subr.bf16.mxu0 0
        %2089 = vmatpush1.bf16.xpose.msra.mxu0 0
        %2090 = vmatprep.subr.bf16.mxu0 0
        %2091 = vmatpush1.bf16.xpose.msra.mxu0 0
        %2092 = vmatprep.subr.bf16.mxu0 0
        %2093 = vmatpush1.bf16.xpose.msra.mxu0 0
        %2094 = vmatprep.subr.bf16.mxu0 0
        %2095 = vmatpush1.bf16.xpose.msra.mxu0 0
        %2096 = vmatprep.subr.bf16.mxu0 0
        %2097 = vmatpush1.bf16.xpose.msra.mxu0 0
        %2098 = vmatprep.subr.bf16.mxu0 0
        %2099 = vmatpush1.bf16.xpose.msra.mxu0 0
        %2100 = vmatprep.subr.bf16.mxu0 0
        %2101 = vmatpush1.bf16.xpose.msra.mxu0 0
        %2102 = vmatprep.subr.bf16.mxu0 0
        %2103 = vmatpush1.bf16.xpose.msra.mxu0 0
        %2104 = vmatprep.subr.bf16.mxu0 0
        %2105 = vmatpush1.bf16.xpose.msra.mxu0 0
        %2106 = vmatprep.subr.bf16.mxu0 0
        %2107 = vmatpush1.bf16.xpose.msra.mxu0 0
        %2108 = vmatprep.subr.bf16.mxu0 0
        %2109 = vmatpush1.bf16.xpose.msra.mxu0 0
        %2110 = vmatprep.subr.bf16.mxu0 0
        %2111 = vmatpush1.bf16.xpose.msra.mxu0 0
        %2112 = vmatprep.subr.bf16.mxu0 0
        %2113 = vmatpush1.bf16.xpose.msra.mxu0 0
        %2114 = vmatprep.mubr.bf16.mxu0 0
        %2115 = vmatmul.mubr.bf16.gmra.mrb[0].mxu0 %v2077
        %v2116 = vpop.f32.mrb[0].mxu0
        %v2117 = vadd.f32 %v2074, %v2116
        %v2118 = vpop.f32.mrb[0].mxu0
        %v2119 = vpop.f32.mrb[0].mxu0
        %v2120 = vpop.f32.mrb[0].mxu0
        %2121 = vdwg.mxu0
        %vm2122 = vcmask 64512
        %v2123 = vsel %vm2122, %v2117, -inf
        %2124 = vmax.xlane.f32.xlu0 %v2123
        %v2125 = vpop.xlane.xlu0 %2124
        %v2126 = vsub.f32 %v2117, %v2125
        %v2127 = vmul.f32 %v2126, 1.442695
        %v2128 = vpow.pop %v2127
        %v2129 = vsel %vm2122, %v2128, 0.0
        %2130 = vadd.xlane.f32.xlu0 %v2129
        %v2131 = vpop.xlane.xlu0 %2130
        %v2132 = vrcp.pop %v2131
        %v2133 = vmul.f32 %v2128, %v2132
        %v2134 = vpack.c.bf16 %v2133, %v2133
        %v2136 = vsel %vm2122, %v2134, 0
        %vm2138 = vcmask 1043456
        %v2140 = vsel %vm2138, %v1074, 0
        %2142 = vmatprep.subr.bf16.mxu0 0
        %2143 = vmatpush1.bf16.msra.mxu0 %v2140
        %2144 = vmatprep.subr.bf16.mxu0 0
        %2145 = vmatpush1.bf16.msra.mxu0 0
        %2146 = vmatprep.subr.bf16.mxu0 0
        %2147 = vmatpush1.bf16.msra.mxu0 0
        %2148 = vmatprep.subr.bf16.mxu0 0
        %2149 = vmatpush1.bf16.msra.mxu0 0
        %2150 = vmatprep.subr.bf16.mxu0 0
        %2151 = vmatpush1.bf16.msra.mxu0 0
        %2152 = vmatprep.subr.bf16.mxu0 0
        %2153 = vmatpush1.bf16.msra.mxu0 0
        %2154 = vmatprep.subr.bf16.mxu0 0
        %2155 = vmatpush1.bf16.msra.mxu0 0
        %2156 = vmatprep.subr.bf16.mxu0 0
        %2157 = vmatpush1.bf16.msra.mxu0 0
        %2158 = vmatprep.subr.bf16.mxu0 0
        %2159 = vmatpush1.bf16.msra.mxu0 0
        %2160 = vmatprep.subr.bf16.mxu0 0
        %2161 = vmatpush1.bf16.msra.mxu0 0
        %2162 = vmatprep.subr.bf16.mxu0 0
        %2163 = vmatpush1.bf16.msra.mxu0 0
        %2164 = vmatprep.subr.bf16.mxu0 0
        %2165 = vmatpush1.bf16.msra.mxu0 0
        %2166 = vmatprep.subr.bf16.mxu0 0
        %2167 = vmatpush1.bf16.msra.mxu0 0
        %2168 = vmatprep.subr.bf16.mxu0 0
        %2169 = vmatpush1.bf16.msra.mxu0 0
        %2170 = vmatprep.subr.bf16.mxu0 0
        %2171 = vmatpush1.bf16.msra.mxu0 0
        %2172 = vmatprep.subr.bf16.mxu0 0
        %2173 = vmatpush1.bf16.msra.mxu0 0
        %2174 = vmatprep.mubr.bf16.mxu0 0
        %2175 = vmatmul.mubr.bf16.gmra.mrb[0].mxu0 %v2136
        %v2176 = vpop.f32.mrb[0].mxu0
        %v2177 = vadd.f32 0.0, %v2176
        %v2178 = vpop.f32.mrb[0].mxu0
        %v2179 = vpop.f32.mrb[0].mxu0
        %v2180 = vpop.f32.mrb[0].mxu0
        %2181 = vdwg.mxu0
        %v2182 = vpack.c.bf16 %v2177, %v2177
        %v2183 = vld [vmem:[%s686] sm:$0xf]
        %v2184 = vld [vmem:[%s686 + $0x4] sm:$0xf]
        %v2185 = vld [vmem:[%s686 + $0x8] sm:$0xf]
        %v2186 = vld [vmem:[%s686 + $0xc] sm:$0xf]
        %v2188 = vsel %vm2075, %v1185, 0
        %v2191 = vsel %vm2075, %v1296, 0
        %2193 = vmatprep.subr.bf16.mxu0 0
        %2194 = vmatpush1.bf16.xpose.msra.mxu0 %v2191
        %2195 = vmatprep.subr.bf16.mxu0 0
        %2196 = vmatpush1.bf16.xpose.msra.mxu0 0
        %2197 = vmatprep.subr.bf16.mxu0 0
        %2198 = vmatpush1.bf16.xpose.msra.mxu0 0
        %2199 = vmatprep.subr.bf16.mxu0 0
        %2200 = vmatpush1.bf16.xpose.msra.mxu0 0
        %2201 = vmatprep.subr.bf16.mxu0 0
        %2202 = vmatpush1.bf16.xpose.msra.mxu0 0
        %2203 = vmatprep.subr.bf16.mxu0 0
        %2204 = vmatpush1.bf16.xpose.msra.mxu0 0
        %2205 = vmatprep.subr.bf16.mxu0 0
        %2206 = vmatpush1.bf16.xpose.msra.mxu0 0
        %2207 = vmatprep.subr.bf16.mxu0 0
        %2208 = vmatpush1.bf16.xpose.msra.mxu0 0
        %2209 = vmatprep.subr.bf16.mxu0 0
        %2210 = vmatpush1.bf16.xpose.msra.mxu0 0
        %2211 = vmatprep.subr.bf16.mxu0 0
        %2212 = vmatpush1.bf16.xpose.msra.mxu0 0
        %2213 = vmatprep.subr.bf16.mxu0 0
        %2214 = vmatpush1.bf16.xpose.msra.mxu0 0
        %2215 = vmatprep.subr.bf16.mxu0 0
        %2216 = vmatpush1.bf16.xpose.msra.mxu0 0
        %2217 = vmatprep.subr.bf16.mxu0 0
        %2218 = vmatpush1.bf16.xpose.msra.mxu0 0
        %2219 = vmatprep.subr.bf16.mxu0 0
        %2220 = vmatpush1.bf16.xpose.msra.mxu0 0
        %2221 = vmatprep.subr.bf16.mxu0 0
        %2222 = vmatpush1.bf16.xpose.msra.mxu0 0
        %2223 = vmatprep.subr.bf16.mxu0 0
        %2224 = vmatpush1.bf16.xpose.msra.mxu0 0
        %2225 = vmatprep.mubr.bf16.mxu0 0
        %2226 = vmatmul.mubr.bf16.gmra.mrb[0].mxu0 %v2188
        %v2227 = vpop.f32.mrb[0].mxu0
        %v2228 = vadd.f32 %v2074, %v2227
        %v2229 = vpop.f32.mrb[0].mxu0
        %v2230 = vpop.f32.mrb[0].mxu0
        %v2231 = vpop.f32.mrb[0].mxu0
        %2232 = vdwg.mxu0
        %v2233 = vsel %vm2122, %v2228, -inf
        %2234 = vmax.xlane.f32.xlu0 %v2233
        %v2235 = vpop.xlane.xlu0 %2234
        %v2236 = vsub.f32 %v2228, %v2235
        %v2237 = vmul.f32 %v2236, 1.442695
        %v2238 = vpow.pop %v2237
        %v2239 = vsel %vm2122, %v2238, 0.0
        %2240 = vadd.xlane.f32.xlu0 %v2239
        %v2241 = vpop.xlane.xlu0 %2240
        %v2242 = vrcp.pop %v2241
        %v2243 = vmul.f32 %v2238, %v2242
        %v2244 = vpack.c.bf16 %v2243, %v2243
        %v2246 = vsel %vm2122, %v2244, 0
        %v2249 = vsel %vm2138, %v1407, 0
        %2251 = vmatprep.subr.bf16.mxu0 0
        %2252 = vmatpush1.bf16.msra.mxu0 %v2249
        %2253 = vmatprep.subr.bf16.mxu0 0
        %2254 = vmatpush1.bf16.msra.mxu0 0
        %2255 = vmatprep.subr.bf16.mxu0 0
        %2256 = vmatpush1.bf16.msra.mxu0 0
        %2257 = vmatprep.subr.bf16.mxu0 0
        %2258 = vmatpush1.bf16.msra.mxu0 0
        %2259 = vmatprep.subr.bf16.mxu0 0
        %2260 = vmatpush1.bf16.msra.mxu0 0
        %2261 = vmatprep.subr.bf16.mxu0 0
        %2262 = vmatpush1.bf16.msra.mxu0 0
        %2263 = vmatprep.subr.bf16.mxu0 0
        %2264 = vmatpush1.bf16.msra.mxu0 0
        %2265 = vmatprep.subr.bf16.mxu0 0
        %2266 = vmatpush1.bf16.msra.mxu0 0
        %2267 = vmatprep.subr.bf16.mxu0 0
        %2268 = vmatpush1.bf16.msra.mxu0 0
        %2269 = vmatprep.subr.bf16.mxu0 0
        %2270 = vmatpush1.bf16.msra.mxu0 0
        %2271 = vmatprep.subr.bf16.mxu0 0
        %2272 = vmatpush1.bf16.msra.mxu0 0
        %2273 = vmatprep.subr.bf16.mxu0 0
        %2274 = vmatpush1.bf16.msra.mxu0 0
        %2275 = vmatprep.subr.bf16.mxu0 0
        %2276 = vmatpush1.bf16.msra.mxu0 0
        %2277 = vmatprep.subr.bf16.mxu0 0
        %2278 = vmatpush1.bf16.msra.mxu0 0
        %2279 = vmatprep.subr.bf16.mxu0 0
        %2280 = vmatpush1.bf16.msra.mxu0 0
        %2281 = vmatprep.subr.bf16.mxu0 0
        %2282 = vmatpush1.bf16.msra.mxu0 0
        %2283 = vmatprep.mubr.bf16.mxu0 0
        %2284 = vmatmul.mubr.bf16.gmra.mrb[0].mxu0 %v2246
        %v2285 = vpop.f32.mrb[0].mxu0
        %v2286 = vadd.f32 0.0, %v2285
        %v2287 = vpop.f32.mrb[0].mxu0
        %v2288 = vpop.f32.mrb[0].mxu0
        %v2289 = vpop.f32.mrb[0].mxu0
        %2290 = vdwg.mxu0
        %v2291 = vpack.c.bf16 %v2286, %v2286
        %s2292 = scalar_lea.vmem %s686, 16
        %v2293 = vld [vmem:[%s2292] sm:$0xf]
        %v2294 = vld [vmem:[%s2292 + $0x4] sm:$0xf]
        %v2295 = vld [vmem:[%s2292 + $0x8] sm:$0xf]
        %v2296 = vld [vmem:[%s2292 + $0xc] sm:$0xf]
        %v2301 = vunpack.c.l.b16 %v2293
        %v2302 = vunpack.c.l.b16 %v2294
        %v2303 = vunpack.c.l.b16 %v2295
        %v2304 = vunpack.c.l.b16 %v2296
        %v2305 = vpack.c.b16 %v2302, %v2301
        %v2306 = vpack.c.b16 %v2304, %v2303
        %v2310 = vsel %vm2075, %v2291, 0
        %2312 = vmatprep.subr.bf16.mxu0 0
        %2313 = vmatpush1.bf16.msra.mxu0 %v2305
        %2314 = vmatprep.subr.bf16.mxu0 0
        %2315 = vmatpush1.bf16.msra.mxu0 %v2306
        %2316 = vmatprep.subr.bf16.mxu0 0
        %2317 = vmatpush1.bf16.msra.mxu0 0
        %2318 = vmatprep.subr.bf16.mxu0 0
        %2319 = vmatpush1.bf16.msra.mxu0 0
        %2320 = vmatprep.subr.bf16.mxu0 0
        %2321 = vmatpush1.bf16.msra.mxu0 0
        %2322 = vmatprep.subr.bf16.mxu0 0
        %2323 = vmatpush1.bf16.msra.mxu0 0
        %2324 = vmatprep.subr.bf16.mxu0 0
        %2325 = vmatpush1.bf16.msra.mxu0 0
        %2326 = vmatprep.subr.bf16.mxu0 0
        %2327 = vmatpush1.bf16.msra.mxu0 0
        %2328 = vmatprep.subr.bf16.mxu0 0
        %2329 = vmatpush1.bf16.msra.mxu0 0
        %2330 = vmatprep.subr.bf16.mxu0 0
        %2331 = vmatpush1.bf16.msra.mxu0 0
        %2332 = vmatprep.subr.bf16.mxu0 0
        %2333 = vmatpush1.bf16.msra.mxu0 0
        %2334 = vmatprep.subr.bf16.mxu0 0
        %2335 = vmatpush1.bf16.msra.mxu0 0
        %2336 = vmatprep.subr.bf16.mxu0 0
        %2337 = vmatpush1.bf16.msra.mxu0 0
        %2338 = vmatprep.subr.bf16.mxu0 0
        %2339 = vmatpush1.bf16.msra.mxu0 0
        %2340 = vmatprep.subr.bf16.mxu0 0
        %2341 = vmatpush1.bf16.msra.mxu0 0
        %2342 = vmatprep.subr.bf16.mxu0 0
        %2343 = vmatpush1.bf16.msra.mxu0 0
        %2344 = vmatprep.mubr.bf16.mxu0 0
        %2345 = vmatmul.mubr.bf16.gmra.mrb[0].mxu0 %v2310
        %v2346 = vpop.f32.mrb[0].mxu0
        %v2347 = vadd.f32 0.0, %v2346
        %v2348 = vpop.f32.mrb[0].mxu0
        %v2349 = vpop.f32.mrb[0].mxu0
        %v2350 = vpop.f32.mrb[0].mxu0
        %2351 = vdwg.mxu0
        %v2356 = vunpack.c.l.b16 %v2183
        %v2357 = vunpack.c.l.b16 %v2184
        %v2358 = vunpack.c.l.b16 %v2185
        %v2359 = vunpack.c.l.b16 %v2186
        %v2360 = vpack.c.b16 %v2357, %v2356
        %v2361 = vpack.c.b16 %v2359, %v2358
        %v2365 = vsel %vm2075, %v2182, 0
        %2367 = vmatprep.subr.bf16.mxu0 0
        %2368 = vmatpush1.bf16.msra.mxu0 %v2360
        %2369 = vmatprep.subr.bf16.mxu0 0
        %2370 = vmatpush1.bf16.msra.mxu0 %v2361
        %2371 = vmatprep.subr.bf16.mxu0 0
        %2372 = vmatpush1.bf16.msra.mxu0 0
        %2373 = vmatprep.subr.bf16.mxu0 0
        %2374 = vmatpush1.bf16.msra.mxu0 0
        %2375 = vmatprep.subr.bf16.mxu0 0
        %2376 = vmatpush1.bf16.msra.mxu0 0
        %2377 = vmatprep.subr.bf16.mxu0 0
        %2378 = vmatpush1.bf16.msra.mxu0 0
        %2379 = vmatprep.subr.bf16.mxu0 0
        %2380 = vmatpush1.bf16.msra.mxu0 0
        %2381 = vmatprep.subr.bf16.mxu0 0
        %2382 = vmatpush1.bf16.msra.mxu0 0
        %2383 = vmatprep.subr.bf16.mxu0 0
        %2384 = vmatpush1.bf16.msra.mxu0 0
        %2385 = vmatprep.subr.bf16.mxu0 0
        %2386 = vmatpush1.bf16.msra.mxu0 0
        %2387 = vmatprep.subr.bf16.mxu0 0
        %2388 = vmatpush1.bf16.msra.mxu0 0
        %2389 = vmatprep.subr.bf16.mxu0 0
        %2390 = vmatpush1.bf16.msra.mxu0 0
        %2391 = vmatprep.subr.bf16.mxu0 0
        %2392 = vmatpush1.bf16.msra.mxu0 0
        %2393 = vmatprep.subr.bf16.mxu0 0
        %2394 = vmatpush1.bf16.msra.mxu0 0
        %2395 = vmatprep.subr.bf16.mxu0 0
        %2396 = vmatpush1.bf16.msra.mxu0 0
        %2397 = vmatprep.subr.bf16.mxu0 0
        %2398 = vmatpush1.bf16.msra.mxu0 0
        %2399 = vmatprep.mubr.bf16.mxu0 0
        %2400 = vmatmul.mubr.bf16.gmra.mrb[0].mxu0 %v2365
        %v2401 = vpop.f32.mrb[0].mxu0
        %v2402 = vadd.f32 %v2347, %v2401
        %v2403 = vpop.f32.mrb[0].mxu0
        %v2404 = vpop.f32.mrb[0].mxu0
        %v2405 = vpop.f32.mrb[0].mxu0
        %2406 = vdwg.mxu0
        %v2408 = vsel %vm2075, %v1517, 0
        %v2411 = vsel %vm2075, %v1627, 0
        %2413 = vmatprep.subr.bf16.mxu0 0
        %2414 = vmatpush1.bf16.xpose.msra.mxu0 %v2411
        %2415 = vmatprep.subr.bf16.mxu0 0
        %2416 = vmatpush1.bf16.xpose.msra.mxu0 0
        %2417 = vmatprep.subr.bf16.mxu0 0
        %2418 = vmatpush1.bf16.xpose.msra.mxu0 0
        %2419 = vmatprep.subr.bf16.mxu0 0
        %2420 = vmatpush1.bf16.xpose.msra.mxu0 0
        %2421 = vmatprep.subr.bf16.mxu0 0
        %2422 = vmatpush1.bf16.xpose.msra.mxu0 0
        %2423 = vmatprep.subr.bf16.mxu0 0
        %2424 = vmatpush1.bf16.xpose.msra.mxu0 0
        %2425 = vmatprep.subr.bf16.mxu0 0
        %2426 = vmatpush1.bf16.xpose.msra.mxu0 0
        %2427 = vmatprep.subr.bf16.mxu0 0
        %2428 = vmatpush1.bf16.xpose.msra.mxu0 0
        %2429 = vmatprep.subr.bf16.mxu0 0
        %2430 = vmatpush1.bf16.xpose.msra.mxu0 0
        %2431 = vmatprep.subr.bf16.mxu0 0
        %2432 = vmatpush1.bf16.xpose.msra.mxu0 0
        %2433 = vmatprep.subr.bf16.mxu0 0
        %2434 = vmatpush1.bf16.xpose.msra.mxu0 0
        %2435 = vmatprep.subr.bf16.mxu0 0
        %2436 = vmatpush1.bf16.xpose.msra.mxu0 0
        %2437 = vmatprep.subr.bf16.mxu0 0
        %2438 = vmatpush1.bf16.xpose.msra.mxu0 0
        %2439 = vmatprep.subr.bf16.mxu0 0
        %2440 = vmatpush1.bf16.xpose.msra.mxu0 0
        %2441 = vmatprep.subr.bf16.mxu0 0
        %2442 = vmatpush1.bf16.xpose.msra.mxu0 0
        %2443 = vmatprep.subr.bf16.mxu0 0
        %2444 = vmatpush1.bf16.xpose.msra.mxu0 0
        %2445 = vmatprep.mubr.bf16.mxu0 0
        %2446 = vmatmul.mubr.bf16.gmra.mrb[0].mxu0 %v2408
        %v2447 = vpop.f32.mrb[0].mxu0
        %v2448 = vadd.f32 %v2074, %v2447
        %v2449 = vpop.f32.mrb[0].mxu0
        %v2450 = vpop.f32.mrb[0].mxu0
        %v2451 = vpop.f32.mrb[0].mxu0
        %2452 = vdwg.mxu0
        %v2453 = vsel %vm2122, %v2448, -inf
        %2454 = vmax.xlane.f32.xlu0 %v2453
        %v2455 = vpop.xlane.xlu0 %2454
        %v2456 = vsub.f32 %v2448, %v2455
        %v2457 = vmul.f32 %v2456, 1.442695
        %v2458 = vpow.pop %v2457
        %v2459 = vsel %vm2122, %v2458, 0.0
        %2460 = vadd.xlane.f32.xlu0 %v2459
        %v2461 = vpop.xlane.xlu0 %2460
        %v2462 = vrcp.pop %v2461
        %v2463 = vmul.f32 %v2458, %v2462
        %v2464 = vpack.c.bf16 %v2463, %v2463
        %v2466 = vsel %vm2122, %v2464, 0
        %v2469 = vsel %vm2138, %v1737, 0
        %2471 = vmatprep.subr.bf16.mxu0 0
        %2472 = vmatpush1.bf16.msra.mxu0 %v2469
        %2473 = vmatprep.subr.bf16.mxu0 0
        %2474 = vmatpush1.bf16.msra.mxu0 0
        %2475 = vmatprep.subr.bf16.mxu0 0
        %2476 = vmatpush1.bf16.msra.mxu0 0
        %2477 = vmatprep.subr.bf16.mxu0 0
        %2478 = vmatpush1.bf16.msra.mxu0 0
        %2479 = vmatprep.subr.bf16.mxu0 0
        %2480 = vmatpush1.bf16.msra.mxu0 0
        %2481 = vmatprep.subr.bf16.mxu0 0
        %2482 = vmatpush1.bf16.msra.mxu0 0
        %2483 = vmatprep.subr.bf16.mxu0 0
        %2484 = vmatpush1.bf16.msra.mxu0 0
        %2485 = vmatprep.subr.bf16.mxu0 0
        %2486 = vmatpush1.bf16.msra.mxu0 0
        %2487 = vmatprep.subr.bf16.mxu0 0
        %2488 = vmatpush1.bf16.msra.mxu0 0
        %2489 = vmatprep.subr.bf16.mxu0 0
        %2490 = vmatpush1.bf16.msra.mxu0 0
        %2491 = vmatprep.subr.bf16.mxu0 0
        %2492 = vmatpush1.bf16.msra.mxu0 0
        %2493 = vmatprep.subr.bf16.mxu0 0
        %2494 = vmatpush1.bf16.msra.mxu0 0
        %2495 = vmatprep.subr.bf16.mxu0 0
        %2496 = vmatpush1.bf16.msra.mxu0 0
        %2497 = vmatprep.subr.bf16.mxu0 0
        %2498 = vmatpush1.bf16.msra.mxu0 0
        %2499 = vmatprep.subr.bf16.mxu0 0
        %2500 = vmatpush1.bf16.msra.mxu0 0
        %2501 = vmatprep.subr.bf16.mxu0 0
        %2502 = vmatpush1.bf16.msra.mxu0 0
        %2503 = vmatprep.mubr.bf16.mxu0 0
        %2504 = vmatmul.mubr.bf16.gmra.mrb[0].mxu0 %v2466
        %v2505 = vpop.f32.mrb[0].mxu0
        %v2506 = vadd.f32 0.0, %v2505
        %v2507 = vpop.f32.mrb[0].mxu0
        %v2508 = vpop.f32.mrb[0].mxu0
        %v2509 = vpop.f32.mrb[0].mxu0
        %2510 = vdwg.mxu0
        %v2511 = vpack.c.bf16 %v2506, %v2506
        %s2512 = scalar_lea.vmem %s686, 32
        %v2513 = vld [vmem:[%s2512] sm:$0xf]
        %v2514 = vld [vmem:[%s2512 + $0x4] sm:$0xf]
        %v2515 = vld [vmem:[%s2512 + $0x8] sm:$0xf]
        %v2516 = vld [vmem:[%s2512 + $0xc] sm:$0xf]
        %v2521 = vunpack.c.l.b16 %v2513
        %v2522 = vunpack.c.l.b16 %v2514
        %v2523 = vunpack.c.l.b16 %v2515
        %v2524 = vunpack.c.l.b16 %v2516
        %v2525 = vpack.c.b16 %v2522, %v2521
        %v2526 = vpack.c.b16 %v2524, %v2523
        %v2530 = vsel %vm2075, %v2511, 0
        %2532 = vmatprep.subr.bf16.mxu0 0
        %2533 = vmatpush1.bf16.msra.mxu0 %v2525
        %2534 = vmatprep.subr.bf16.mxu0 0
        %2535 = vmatpush1.bf16.msra.mxu0 %v2526
        %2536 = vmatprep.subr.bf16.mxu0 0
        %2537 = vmatpush1.bf16.msra.mxu0 0
        %2538 = vmatprep.subr.bf16.mxu0 0
        %2539 = vmatpush1.bf16.msra.mxu0 0
        %2540 = vmatprep.subr.bf16.mxu0 0
        %2541 = vmatpush1.bf16.msra.mxu0 0
        %2542 = vmatprep.subr.bf16.mxu0 0
        %2543 = vmatpush1.bf16.msra.mxu0 0
        %2544 = vmatprep.subr.bf16.mxu0 0
        %2545 = vmatpush1.bf16.msra.mxu0 0
        %2546 = vmatprep.subr.bf16.mxu0 0
        %2547 = vmatpush1.bf16.msra.mxu0 0
        %2548 = vmatprep.subr.bf16.mxu0 0
        %2549 = vmatpush1.bf16.msra.mxu0 0
        %2550 = vmatprep.subr.bf16.mxu0 0
        %2551 = vmatpush1.bf16.msra.mxu0 0
        %2552 = vmatprep.subr.bf16.mxu0 0
        %2553 = vmatpush1.bf16.msra.mxu0 0
        %2554 = vmatprep.subr.bf16.mxu0 0
        %2555 = vmatpush1.bf16.msra.mxu0 0
        %2556 = vmatprep.subr.bf16.mxu0 0
        %2557 = vmatpush1.bf16.msra.mxu0 0
        %2558 = vmatprep.subr.bf16.mxu0 0
        %2559 = vmatpush1.bf16.msra.mxu0 0
        %2560 = vmatprep.subr.bf16.mxu0 0
        %2561 = vmatpush1.bf16.msra.mxu0 0
        %2562 = vmatprep.subr.bf16.mxu0 0
        %2563 = vmatpush1.bf16.msra.mxu0 0
        %2564 = vmatprep.mubr.bf16.mxu0 0
        %2565 = vmatmul.mubr.bf16.gmra.mrb[0].mxu0 %v2530
        %v2566 = vpop.f32.mrb[0].mxu0
        %v2567 = vadd.f32 0.0, %v2566
        %v2568 = vpop.f32.mrb[0].mxu0
        %v2569 = vpop.f32.mrb[0].mxu0
        %v2570 = vpop.f32.mrb[0].mxu0
        %2571 = vdwg.mxu0
        %v2572 = vadd.f32 %v2402, %v2567
        %v2574 = vsel %vm2075, %v1847, 0
        %v2577 = vsel %vm2075, %v1957, 0
        %2579 = vmatprep.subr.bf16.mxu0 0
        %2580 = vmatpush1.bf16.xpose.msra.mxu0 %v2577
        %2581 = vmatprep.subr.bf16.mxu0 0
        %2582 = vmatpush1.bf16.xpose.msra.mxu0 0
        %2583 = vmatprep.subr.bf16.mxu0 0
        %2584 = vmatpush1.bf16.xpose.msra.mxu0 0
        %2585 = vmatprep.subr.bf16.mxu0 0
        %2586 = vmatpush1.bf16.xpose.msra.mxu0 0
        %2587 = vmatprep.subr.bf16.mxu0 0
        %2588 = vmatpush1.bf16.xpose.msra.mxu0 0
        %2589 = vmatprep.subr.bf16.mxu0 0
        %2590 = vmatpush1.bf16.xpose.msra.mxu0 0
        %2591 = vmatprep.subr.bf16.mxu0 0
        %2592 = vmatpush1.bf16.xpose.msra.mxu0 0
        %2593 = vmatprep.subr.bf16.mxu0 0
        %2594 = vmatpush1.bf16.xpose.msra.mxu0 0
        %2595 = vmatprep.subr.bf16.mxu0 0
        %2596 = vmatpush1.bf16.xpose.msra.mxu0 0
        %2597 = vmatprep.subr.bf16.mxu0 0
        %2598 = vmatpush1.bf16.xpose.msra.mxu0 0
        %2599 = vmatprep.subr.bf16.mxu0 0
        %2600 = vmatpush1.bf16.xpose.msra.mxu0 0
        %2601 = vmatprep.subr.bf16.mxu0 0
        %2602 = vmatpush1.bf16.xpose.msra.mxu0 0
        %2603 = vmatprep.subr.bf16.mxu0 0
        %2604 = vmatpush1.bf16.xpose.msra.mxu0 0
        %2605 = vmatprep.subr.bf16.mxu0 0
        %2606 = vmatpush1.bf16.xpose.msra.mxu0 0
        %2607 = vmatprep.subr.bf16.mxu0 0
        %2608 = vmatpush1.bf16.xpose.msra.mxu0 0
        %2609 = vmatprep.subr.bf16.mxu0 0
        %2610 = vmatpush1.bf16.xpose.msra.mxu0 0
        %2611 = vmatprep.mubr.bf16.mxu0 0
        %2612 = vmatmul.mubr.bf16.gmra.mrb[0].mxu0 %v2574
        %v2613 = vpop.f32.mrb[0].mxu0
        %v2614 = vadd.f32 %v2074, %v2613
        %v2615 = vpop.f32.mrb[0].mxu0
        %v2616 = vpop.f32.mrb[0].mxu0
        %v2617 = vpop.f32.mrb[0].mxu0
        %2618 = vdwg.mxu0
        %v2619 = vsel %vm2122, %v2614, -inf
        %2620 = vmax.xlane.f32.xlu0 %v2619
        %v2621 = vpop.xlane.xlu0 %2620
        %v2622 = vsub.f32 %v2614, %v2621
        %v2623 = vmul.f32 %v2622, 1.442695
        %v2624 = vpow.pop %v2623
        %v2625 = vsel %vm2122, %v2624, 0.0
        %2626 = vadd.xlane.f32.xlu0 %v2625
        %v2627 = vpop.xlane.xlu0 %2626
        %v2628 = vrcp.pop %v2627
        %v2629 = vmul.f32 %v2624, %v2628
        %v2630 = vpack.c.bf16 %v2629, %v2629
        %v2632 = vsel %vm2122, %v2630, 0
        %v2635 = vsel %vm2138, %v2067, 0
        %2637 = vmatprep.subr.bf16.mxu0 0
        %2638 = vmatpush1.bf16.msra.mxu0 %v2635
        %2639 = vmatprep.subr.bf16.mxu0 0
        %2640 = vmatpush1.bf16.msra.mxu0 0
        %2641 = vmatprep.subr.bf16.mxu0 0
        %2642 = vmatpush1.bf16.msra.mxu0 0
        %2643 = vmatprep.subr.bf16.mxu0 0
        %2644 = vmatpush1.bf16.msra.mxu0 0
        %2645 = vmatprep.subr.bf16.mxu0 0
        %2646 = vmatpush1.bf16.msra.mxu0 0
        %2647 = vmatprep.subr.bf16.mxu0 0
        %2648 = vmatpush1.bf16.msra.mxu0 0
        %2649 = vmatprep.subr.bf16.mxu0 0
        %2650 = vmatpush1.bf16.msra.mxu0 0
        %2651 = vmatprep.subr.bf16.mxu0 0
        %2652 = vmatpush1.bf16.msra.mxu0 0
        %2653 = vmatprep.subr.bf16.mxu0 0
        %2654 = vmatpush1.bf16.msra.mxu0 0
        %2655 = vmatprep.subr.bf16.mxu0 0
        %2656 = vmatpush1.bf16.msra.mxu0 0
        %2657 = vmatprep.subr.bf16.mxu0 0
        %2658 = vmatpush1.bf16.msra.mxu0 0
        %2659 = vmatprep.subr.bf16.mxu0 0
        %2660 = vmatpush1.bf16.msra.mxu0 0
        %2661 = vmatprep.subr.bf16.mxu0 0
        %2662 = vmatpush1.bf16.msra.mxu0 0
        %2663 = vmatprep.subr.bf16.mxu0 0
        %2664 = vmatpush1.bf16.msra.mxu0 0
        %2665 = vmatprep.subr.bf16.mxu0 0
        %2666 = vmatpush1.bf16.msra.mxu0 0
        %2667 = vmatprep.subr.bf16.mxu0 0
        %2668 = vmatpush1.bf16.msra.mxu0 0
        %2669 = vmatprep.mubr.bf16.mxu0 0
        %2670 = vmatmul.mubr.bf16.gmra.mrb[0].mxu0 %v2632
        %v2671 = vpop.f32.mrb[0].mxu0
        %v2672 = vadd.f32 0.0, %v2671
        %v2673 = vpop.f32.mrb[0].mxu0
        %v2674 = vpop.f32.mrb[0].mxu0
        %v2675 = vpop.f32.mrb[0].mxu0
        %2676 = vdwg.mxu0
        %v2677 = vpack.c.bf16 %v2672, %v2672
        %s2678 = scalar_lea.vmem %s686, 48
        %v2679 = vld [vmem:[%s2678] sm:$0xf]
        %v2680 = vld [vmem:[%s2678 + $0x4] sm:$0xf]
        %v2681 = vld [vmem:[%s2678 + $0x8] sm:$0xf]
        %v2682 = vld [vmem:[%s2678 + $0xc] sm:$0xf]
        %v2687 = vunpack.c.l.b16 %v2679
        %v2688 = vunpack.c.l.b16 %v2680
        %v2689 = vunpack.c.l.b16 %v2681
        %v2690 = vunpack.c.l.b16 %v2682
        %v2691 = vpack.c.b16 %v2688, %v2687
        %v2692 = vpack.c.b16 %v2690, %v2689
        %v2696 = vsel %vm2075, %v2677, 0
        %2698 = vmatprep.subr.bf16.mxu0 0
        %2699 = vmatpush1.bf16.msra.mxu0 %v2691
        %2700 = vmatprep.subr.bf16.mxu0 0
        %2701 = vmatpush1.bf16.msra.mxu0 %v2692
        %2702 = vmatprep.subr.bf16.mxu0 0
        %2703 = vmatpush1.bf16.msra.mxu0 0
        %2704 = vmatprep.subr.bf16.mxu0 0
        %2705 = vmatpush1.bf16.msra.mxu0 0
        %2706 = vmatprep.subr.bf16.mxu0 0
        %2707 = vmatpush1.bf16.msra.mxu0 0
        %2708 = vmatprep.subr.bf16.mxu0 0
        %2709 = vmatpush1.bf16.msra.mxu0 0
        %2710 = vmatprep.subr.bf16.mxu0 0
        %2711 = vmatpush1.bf16.msra.mxu0 0
        %2712 = vmatprep.subr.bf16.mxu0 0
        %2713 = vmatpush1.bf16.msra.mxu0 0
        %2714 = vmatprep.subr.bf16.mxu0 0
        %2715 = vmatpush1.bf16.msra.mxu0 0
        %2716 = vmatprep.subr.bf16.mxu0 0
        %2717 = vmatpush1.bf16.msra.mxu0 0
        %2718 = vmatprep.subr.bf16.mxu0 0
        %2719 = vmatpush1.bf16.msra.mxu0 0
        %2720 = vmatprep.subr.bf16.mxu0 0
        %2721 = vmatpush1.bf16.msra.mxu0 0
        %2722 = vmatprep.subr.bf16.mxu0 0
        %2723 = vmatpush1.bf16.msra.mxu0 0
        %2724 = vmatprep.subr.bf16.mxu0 0
        %2725 = vmatpush1.bf16.msra.mxu0 0
        %2726 = vmatprep.subr.bf16.mxu0 0
        %2727 = vmatpush1.bf16.msra.mxu0 0
        %2728 = vmatprep.subr.bf16.mxu0 0
        %2729 = vmatpush1.bf16.msra.mxu0 0
        %2730 = vmatprep.mubr.bf16.mxu0 0
        %2731 = vmatmul.mubr.bf16.gmra.mrb[0].mxu0 %v2696
        %v2732 = vpop.f32.mrb[0].mxu0
        %v2733 = vadd.f32 0.0, %v2732
        %v2734 = vpop.f32.mrb[0].mxu0
        %v2735 = vpop.f32.mrb[0].mxu0
        %v2736 = vpop.f32.mrb[0].mxu0
        %2737 = vdwg.mxu0
        %v2738 = vadd.f32 %v2572, %v2733
        %s2739 = sadd.s32 %s724, 1
        %s2740 = scalar_lea.vmem %s2, %s2739
        %v2741 = vld [vmem:[%s2740] sm:$0x1]
        %v2742 = vlaneseq
        %v2743 = vshrl.u32 %v2742, 7
        %v2744 = vsub.s32 0, %v2743
        %v2745 = vrot.slane %v2741, %v2744
        %v2746 = vadd.f32 %v743, %v2745
        %v2748 = vrot.slane %v854, 4
        %v2750 = vrot.slane %v964, 4
        %v2752 = vsel %vm2075, %v2748, 0
        %v2755 = vsel %vm2075, %v2750, 0
        %2757 = vmatprep.subr.bf16.mxu0 0
        %2758 = vmatpush1.bf16.xpose.msra.mxu0 %v2755
        %2759 = vmatprep.subr.bf16.mxu0 0
        %2760 = vmatpush1.bf16.xpose.msra.mxu0 0
        %2761 = vmatprep.subr.bf16.mxu0 0
        %2762 = vmatpush1.bf16.xpose.msra.mxu0 0
        %2763 = vmatprep.subr.bf16.mxu0 0
        %2764 = vmatpush1.bf16.xpose.msra.mxu0 0
        %2765 = vmatprep.subr.bf16.mxu0 0
        %2766 = vmatpush1.bf16.xpose.msra.mxu0 0
        %2767 = vmatprep.subr.bf16.mxu0 0
        %2768 = vmatpush1.bf16.xpose.msra.mxu0 0
        %2769 = vmatprep.subr.bf16.mxu0 0
        %2770 = vmatpush1.bf16.xpose.msra.mxu0 0
        %2771 = vmatprep.subr.bf16.mxu0 0
        %2772 = vmatpush1.bf16.xpose.msra.mxu0 0
        %2773 = vmatprep.subr.bf16.mxu0 0
        %2774 = vmatpush1.bf16.xpose.msra.mxu0 0
        %2775 = vmatprep.subr.bf16.mxu0 0
        %2776 = vmatpush1.bf16.xpose.msra.mxu0 0
        %2777 = vmatprep.subr.bf16.mxu0 0
        %2778 = vmatpush1.bf16.xpose.msra.mxu0 0
        %2779 = vmatprep.subr.bf16.mxu0 0
        %2780 = vmatpush1.bf16.xpose.msra.mxu0 0
        %2781 = vmatprep.subr.bf16.mxu0 0
        %2782 = vmatpush1.bf16.xpose.msra.mxu0 0
        %2783 = vmatprep.subr.bf16.mxu0 0
        %2784 = vmatpush1.bf16.xpose.msra.mxu0 0
        %2785 = vmatprep.subr.bf16.mxu0 0
        %2786 = vmatpush1.bf16.xpose.msra.mxu0 0
        %2787 = vmatprep.subr.bf16.mxu0 0
        %2788 = vmatpush1.bf16.xpose.msra.mxu0 0
        %2789 = vmatprep.mubr.bf16.mxu0 0
        %2790 = vmatmul.mubr.bf16.gmra.mrb[0].mxu0 %v2752
        %v2791 = vpop.f32.mrb[0].mxu0
        %v2792 = vadd.f32 %v2746, %v2791
        %v2793 = vpop.f32.mrb[0].mxu0
        %v2794 = vpop.f32.mrb[0].mxu0
        %v2795 = vpop.f32.mrb[0].mxu0
        %2796 = vdwg.mxu0
        %v2797 = vsel %vm2122, %v2792, -inf
        %2798 = vmax.xlane.f32.xlu0 %v2797
        %v2799 = vpop.xlane.xlu0 %2798
        %v2800 = vsub.f32 %v2792, %v2799
        %v2801 = vmul.f32 %v2800, 1.442695
        %v2802 = vpow.pop %v2801
        %v2803 = vsel %vm2122, %v2802, 0.0
        %2804 = vadd.xlane.f32.xlu0 %v2803
        %v2805 = vpop.xlane.xlu0 %2804
        %v2806 = vrcp.pop %v2805
        %v2807 = vmul.f32 %v2802, %v2806
        %v2808 = vpack.c.bf16 %v2807, %v2807
        %v2810 = vrot.slane %v1074, 4
        %v2812 = vsel %vm2122, %v2808, 0
        %v2815 = vsel %vm2138, %v2810, 0
        %2817 = vmatprep.subr.bf16.mxu0 0
        %2818 = vmatpush1.bf16.msra.mxu0 %v2815
        %2819 = vmatprep.subr.bf16.mxu0 0
        %2820 = vmatpush1.bf16.msra.mxu0 0
        %2821 = vmatprep.subr.bf16.mxu0 0
        %2822 = vmatpush1.bf16.msra.mxu0 0
        %2823 = vmatprep.subr.bf16.mxu0 0
        %2824 = vmatpush1.bf16.msra.mxu0 0
        %2825 = vmatprep.subr.bf16.mxu0 0
        %2826 = vmatpush1.bf16.msra.mxu0 0
        %2827 = vmatprep.subr.bf16.mxu0 0
        %2828 = vmatpush1.bf16.msra.mxu0 0
        %2829 = vmatprep.subr.bf16.mxu0 0
        %2830 = vmatpush1.bf16.msra.mxu0 0
        %2831 = vmatprep.subr.bf16.mxu0 0
        %2832 = vmatpush1.bf16.msra.mxu0 0
        %2833 = vmatprep.subr.bf16.mxu0 0
        %2834 = vmatpush1.bf16.msra.mxu0 0
        %2835 = vmatprep.subr.bf16.mxu0 0
        %2836 = vmatpush1.bf16.msra.mxu0 0
        %2837 = vmatprep.subr.bf16.mxu0 0
        %2838 = vmatpush1.bf16.msra.mxu0 0
        %2839 = vmatprep.subr.bf16.mxu0 0
        %2840 = vmatpush1.bf16.msra.mxu0 0
        %2841 = vmatprep.subr.bf16.mxu0 0
        %2842 = vmatpush1.bf16.msra.mxu0 0
        %2843 = vmatprep.subr.bf16.mxu0 0
        %2844 = vmatpush1.bf16.msra.mxu0 0
        %2845 = vmatprep.subr.bf16.mxu0 0
        %2846 = vmatpush1.bf16.msra.mxu0 0
        %2847 = vmatprep.subr.bf16.mxu0 0
        %2848 = vmatpush1.bf16.msra.mxu0 0
        %2849 = vmatprep.mubr.bf16.mxu0 0
        %2850 = vmatmul.mubr.bf16.gmra.mrb[0].mxu0 %v2812
        %v2851 = vpop.f32.mrb[0].mxu0
        %v2852 = vadd.f32 0.0, %v2851
        %v2853 = vpop.f32.mrb[0].mxu0
        %v2854 = vpop.f32.mrb[0].mxu0
        %v2855 = vpop.f32.mrb[0].mxu0
        %2856 = vdwg.mxu0
        %v2857 = vpack.c.bf16 %v2852, %v2852
        %v2859 = vrot.slane %v1185, 4
        %v2861 = vrot.slane %v1296, 4
        %v2863 = vsel %vm2075, %v2859, 0
        %v2866 = vsel %vm2075, %v2861, 0
        %2868 = vmatprep.subr.bf16.mxu0 0
        %2869 = vmatpush1.bf16.xpose.msra.mxu0 %v2866
        %2870 = vmatprep.subr.bf16.mxu0 0
        %2871 = vmatpush1.bf16.xpose.msra.mxu0 0
        %2872 = vmatprep.subr.bf16.mxu0 0
        %2873 = vmatpush1.bf16.xpose.msra.mxu0 0
        %2874 = vmatprep.subr.bf16.mxu0 0
        %2875 = vmatpush1.bf16.xpose.msra.mxu0 0
        %2876 = vmatprep.subr.bf16.mxu0 0
        %2877 = vmatpush1.bf16.xpose.msra.mxu0 0
        %2878 = vmatprep.subr.bf16.mxu0 0
        %2879 = vmatpush1.bf16.xpose.msra.mxu0 0
        %2880 = vmatprep.subr.bf16.mxu0 0
        %2881 = vmatpush1.bf16.xpose.msra.mxu0 0
        %2882 = vmatprep.subr.bf16.mxu0 0
        %2883 = vmatpush1.bf16.xpose.msra.mxu0 0
        %2884 = vmatprep.subr.bf16.mxu0 0
        %2885 = vmatpush1.bf16.xpose.msra.mxu0 0
        %2886 = vmatprep.subr.bf16.mxu0 0
        %2887 = vmatpush1.bf16.xpose.msra.mxu0 0
        %2888 = vmatprep.subr.bf16.mxu0 0
        %2889 = vmatpush1.bf16.xpose.msra.mxu0 0
        %2890 = vmatprep.subr.bf16.mxu0 0
        %2891 = vmatpush1.bf16.xpose.msra.mxu0 0
        %2892 = vmatprep.subr.bf16.mxu0 0
        %2893 = vmatpush1.bf16.xpose.msra.mxu0 0
        %2894 = vmatprep.subr.bf16.mxu0 0
        %2895 = vmatpush1.bf16.xpose.msra.mxu0 0
        %2896 = vmatprep.subr.bf16.mxu0 0
        %2897 = vmatpush1.bf16.xpose.msra.mxu0 0
        %2898 = vmatprep.subr.bf16.mxu0 0
        %2899 = vmatpush1.bf16.xpose.msra.mxu0 0
        %2900 = vmatprep.mubr.bf16.mxu0 0
        %2901 = vmatmul.mubr.bf16.gmra.mrb[0].mxu0 %v2863
        %v2902 = vpop.f32.mrb[0].mxu0
        %v2903 = vadd.f32 %v2746, %v2902
        %v2904 = vpop.f32.mrb[0].mxu0
        %v2905 = vpop.f32.mrb[0].mxu0
        %v2906 = vpop.f32.mrb[0].mxu0
        %2907 = vdwg.mxu0
        %v2908 = vsel %vm2122, %v2903, -inf
        %2909 = vmax.xlane.f32.xlu0 %v2908
        %v2910 = vpop.xlane.xlu0 %2909
        %v2911 = vsub.f32 %v2903, %v2910
        %v2912 = vmul.f32 %v2911, 1.442695
        %v2913 = vpow.pop %v2912
        %v2914 = vsel %vm2122, %v2913, 0.0
        %2915 = vadd.xlane.f32.xlu0 %v2914
        %v2916 = vpop.xlane.xlu0 %2915
        %v2917 = vrcp.pop %v2916
        %v2918 = vmul.f32 %v2913, %v2917
        %v2919 = vpack.c.bf16 %v2918, %v2918
        %v2921 = vrot.slane %v1407, 4
        %v2923 = vsel %vm2122, %v2919, 0
        %v2926 = vsel %vm2138, %v2921, 0
        %2928 = vmatprep.subr.bf16.mxu0 0
        %2929 = vmatpush1.bf16.msra.mxu0 %v2926
        %2930 = vmatprep.subr.bf16.mxu0 0
        %2931 = vmatpush1.bf16.msra.mxu0 0
        %2932 = vmatprep.subr.bf16.mxu0 0
        %2933 = vmatpush1.bf16.msra.mxu0 0
        %2934 = vmatprep.subr.bf16.mxu0 0
        %2935 = vmatpush1.bf16.msra.mxu0 0
        %2936 = vmatprep.subr.bf16.mxu0 0
        %2937 = vmatpush1.bf16.msra.mxu0 0
        %2938 = vmatprep.subr.bf16.mxu0 0
        %2939 = vmatpush1.bf16.msra.mxu0 0
        %2940 = vmatprep.subr.bf16.mxu0 0
        %2941 = vmatpush1.bf16.msra.mxu0 0
        %2942 = vmatprep.subr.bf16.mxu0 0
        %2943 = vmatpush1.bf16.msra.mxu0 0
        %2944 = vmatprep.subr.bf16.mxu0 0
        %2945 = vmatpush1.bf16.msra.mxu0 0
        %2946 = vmatprep.subr.bf16.mxu0 0
        %2947 = vmatpush1.bf16.msra.mxu0 0
        %2948 = vmatprep.subr.bf16.mxu0 0
        %2949 = vmatpush1.bf16.msra.mxu0 0
        %2950 = vmatprep.subr.bf16.mxu0 0
        %2951 = vmatpush1.bf16.msra.mxu0 0
        %2952 = vmatprep.subr.bf16.mxu0 0
        %2953 = vmatpush1.bf16.msra.mxu0 0
        %2954 = vmatprep.subr.bf16.mxu0 0
        %2955 = vmatpush1.bf16.msra.mxu0 0
        %2956 = vmatprep.subr.bf16.mxu0 0
        %2957 = vmatpush1.bf16.msra.mxu0 0
        %2958 = vmatprep.subr.bf16.mxu0 0
        %2959 = vmatpush1.bf16.msra.mxu0 0
        %2960 = vmatprep.mubr.bf16.mxu0 0
        %2961 = vmatmul.mubr.bf16.gmra.mrb[0].mxu0 %v2923
        %v2962 = vpop.f32.mrb[0].mxu0
        %v2963 = vadd.f32 0.0, %v2962
        %v2964 = vpop.f32.mrb[0].mxu0
        %v2965 = vpop.f32.mrb[0].mxu0
        %v2966 = vpop.f32.mrb[0].mxu0
        %2967 = vdwg.mxu0
        %v2968 = vpack.c.bf16 %v2963, %v2963
        %v2970 = vsel %vm2075, %v2968, 0
        %2972 = vmatprep.subr.bf16.mxu0 0
        %2973 = vmatpush1.bf16.msra.mxu0 %v2305
        %2974 = vmatprep.subr.bf16.mxu0 0
        %2975 = vmatpush1.bf16.msra.mxu0 %v2306
        %2976 = vmatprep.subr.bf16.mxu0 0
        %2977 = vmatpush1.bf16.msra.mxu0 0
        %2978 = vmatprep.subr.bf16.mxu0 0
        %2979 = vmatpush1.bf16.msra.mxu0 0
        %2980 = vmatprep.subr.bf16.mxu0 0
        %2981 = vmatpush1.bf16.msra.mxu0 0
        %2982 = vmatprep.subr.bf16.mxu0 0
        %2983 = vmatpush1.bf16.msra.mxu0 0
        %2984 = vmatprep.subr.bf16.mxu0 0
        %2985 = vmatpush1.bf16.msra.mxu0 0
        %2986 = vmatprep.subr.bf16.mxu0 0
        %2987 = vmatpush1.bf16.msra.mxu0 0
        %2988 = vmatprep.subr.bf16.mxu0 0
        %2989 = vmatpush1.bf16.msra.mxu0 0
        %2990 = vmatprep.subr.bf16.mxu0 0
        %2991 = vmatpush1.bf16.msra.mxu0 0
        %2992 = vmatprep.subr.bf16.mxu0 0
        %2993 = vmatpush1.bf16.msra.mxu0 0
        %2994 = vmatprep.subr.bf16.mxu0 0
        %2995 = vmatpush1.bf16.msra.mxu0 0
        %2996 = vmatprep.subr.bf16.mxu0 0
        %2997 = vmatpush1.bf16.msra.mxu0 0
        %2998 = vmatprep.subr.bf16.mxu0 0
        %2999 = vmatpush1.bf16.msra.mxu0 0
        %3000 = vmatprep.subr.bf16.mxu0 0
        %3001 = vmatpush1.bf16.msra.mxu0 0
        %3002 = vmatprep.subr.bf16.mxu0 0
        %3003 = vmatpush1.bf16.msra.mxu0 0
        %3004 = vmatprep.mubr.bf16.mxu0 0
        %3005 = vmatmul.mubr.bf16.gmra.mrb[0].mxu0 %v2970
        %v3006 = vpop.f32.mrb[0].mxu0
        %v3007 = vadd.f32 0.0, %v3006
        %v3008 = vpop.f32.mrb[0].mxu0
        %v3009 = vpop.f32.mrb[0].mxu0
        %v3010 = vpop.f32.mrb[0].mxu0
        %3011 = vdwg.mxu0
        %v3013 = vsel %vm2075, %v2857, 0
        %3015 = vmatprep.subr.bf16.mxu0 0
        %3016 = vmatpush1.bf16.msra.mxu0 %v2360
        %3017 = vmatprep.subr.bf16.mxu0 0
        %3018 = vmatpush1.bf16.msra.mxu0 %v2361
        %3019 = vmatprep.subr.bf16.mxu0 0
        %3020 = vmatpush1.bf16.msra.mxu0 0
        %3021 = vmatprep.subr.bf16.mxu0 0
        %3022 = vmatpush1.bf16.msra.mxu0 0
        %3023 = vmatprep.subr.bf16.mxu0 0
        %3024 = vmatpush1.bf16.msra.mxu0 0
        %3025 = vmatprep.subr.bf16.mxu0 0
        %3026 = vmatpush1.bf16.msra.mxu0 0
        %3027 = vmatprep.subr.bf16.mxu0 0
        %3028 = vmatpush1.bf16.msra.mxu0 0
        %3029 = vmatprep.subr.bf16.mxu0 0
        %3030 = vmatpush1.bf16.msra.mxu0 0
        %3031 = vmatprep.subr.bf16.mxu0 0
        %3032 = vmatpush1.bf16.msra.mxu0 0
        %3033 = vmatprep.subr.bf16.mxu0 0
        %3034 = vmatpush1.bf16.msra.mxu0 0
        %3035 = vmatprep.subr.bf16.mxu0 0
        %3036 = vmatpush1.bf16.msra.mxu0 0
        %3037 = vmatprep.subr.bf16.mxu0 0
        %3038 = vmatpush1.bf16.msra.mxu0 0
        %3039 = vmatprep.subr.bf16.mxu0 0
        %3040 = vmatpush1.bf16.msra.mxu0 0
        %3041 = vmatprep.subr.bf16.mxu0 0
        %3042 = vmatpush1.bf16.msra.mxu0 0
        %3043 = vmatprep.subr.bf16.mxu0 0
        %3044 = vmatpush1.bf16.msra.mxu0 0
        %3045 = vmatprep.subr.bf16.mxu0 0
        %3046 = vmatpush1.bf16.msra.mxu0 0
        %3047 = vmatprep.mubr.bf16.mxu0 0
        %3048 = vmatmul.mubr.bf16.gmra.mrb[0].mxu0 %v3013
        %v3049 = vpop.f32.mrb[0].mxu0
        %v3050 = vadd.f32 %v3007, %v3049
        %v3051 = vpop.f32.mrb[0].mxu0
        %v3052 = vpop.f32.mrb[0].mxu0
        %v3053 = vpop.f32.mrb[0].mxu0
        %3054 = vdwg.mxu0
        %v3056 = vrot.slane %v1517, 4
        %v3058 = vrot.slane %v1627, 4
        %v3060 = vsel %vm2075, %v3056, 0
        %v3063 = vsel %vm2075, %v3058, 0
        %3065 = vmatprep.subr.bf16.mxu0 0
        %3066 = vmatpush1.bf16.xpose.msra.mxu0 %v3063
        %3067 = vmatprep.subr.bf16.mxu0 0
        %3068 = vmatpush1.bf16.xpose.msra.mxu0 0
        %3069 = vmatprep.subr.bf16.mxu0 0
        %3070 = vmatpush1.bf16.xpose.msra.mxu0 0
        %3071 = vmatprep.subr.bf16.mxu0 0
        %3072 = vmatpush1.bf16.xpose.msra.mxu0 0
        %3073 = vmatprep.subr.bf16.mxu0 0
        %3074 = vmatpush1.bf16.xpose.msra.mxu0 0
        %3075 = vmatprep.subr.bf16.mxu0 0
        %3076 = vmatpush1.bf16.xpose.msra.mxu0 0
        %3077 = vmatprep.subr.bf16.mxu0 0
        %3078 = vmatpush1.bf16.xpose.msra.mxu0 0
        %3079 = vmatprep.subr.bf16.mxu0 0
        %3080 = vmatpush1.bf16.xpose.msra.mxu0 0
        %3081 = vmatprep.subr.bf16.mxu0 0
        %3082 = vmatpush1.bf16.xpose.msra.mxu0 0
        %3083 = vmatprep.subr.bf16.mxu0 0
        %3084 = vmatpush1.bf16.xpose.msra.mxu0 0
        %3085 = vmatprep.subr.bf16.mxu0 0
        %3086 = vmatpush1.bf16.xpose.msra.mxu0 0
        %3087 = vmatprep.subr.bf16.mxu0 0
        %3088 = vmatpush1.bf16.xpose.msra.mxu0 0
        %3089 = vmatprep.subr.bf16.mxu0 0
        %3090 = vmatpush1.bf16.xpose.msra.mxu0 0
        %3091 = vmatprep.subr.bf16.mxu0 0
        %3092 = vmatpush1.bf16.xpose.msra.mxu0 0
        %3093 = vmatprep.subr.bf16.mxu0 0
        %3094 = vmatpush1.bf16.xpose.msra.mxu0 0
        %3095 = vmatprep.subr.bf16.mxu0 0
        %3096 = vmatpush1.bf16.xpose.msra.mxu0 0
        %3097 = vmatprep.mubr.bf16.mxu0 0
        %3098 = vmatmul.mubr.bf16.gmra.mrb[0].mxu0 %v3060
        %v3099 = vpop.f32.mrb[0].mxu0
        %v3100 = vadd.f32 %v2746, %v3099
        %v3101 = vpop.f32.mrb[0].mxu0
        %v3102 = vpop.f32.mrb[0].mxu0
        %v3103 = vpop.f32.mrb[0].mxu0
        %3104 = vdwg.mxu0
        %v3105 = vsel %vm2122, %v3100, -inf
        %3106 = vmax.xlane.f32.xlu0 %v3105
        %v3107 = vpop.xlane.xlu0 %3106
        %v3108 = vsub.f32 %v3100, %v3107
        %v3109 = vmul.f32 %v3108, 1.442695
        %v3110 = vpow.pop %v3109
        %v3111 = vsel %vm2122, %v3110, 0.0
        %3112 = vadd.xlane.f32.xlu0 %v3111
        %v3113 = vpop.xlane.xlu0 %3112
        %v3114 = vrcp.pop %v3113
        %v3115 = vmul.f32 %v3110, %v3114
        %v3116 = vpack.c.bf16 %v3115, %v3115
        %v3118 = vrot.slane %v1737, 4
        %v3120 = vsel %vm2122, %v3116, 0
        %v3123 = vsel %vm2138, %v3118, 0
        %3125 = vmatprep.subr.bf16.mxu0 0
        %3126 = vmatpush1.bf16.msra.mxu0 %v3123
        %3127 = vmatprep.subr.bf16.mxu0 0
        %3128 = vmatpush1.bf16.msra.mxu0 0
        %3129 = vmatprep.subr.bf16.mxu0 0
        %3130 = vmatpush1.bf16.msra.mxu0 0
        %3131 = vmatprep.subr.bf16.mxu0 0
        %3132 = vmatpush1.bf16.msra.mxu0 0
        %3133 = vmatprep.subr.bf16.mxu0 0
        %3134 = vmatpush1.bf16.msra.mxu0 0
        %3135 = vmatprep.subr.bf16.mxu0 0
        %3136 = vmatpush1.bf16.msra.mxu0 0
        %3137 = vmatprep.subr.bf16.mxu0 0
        %3138 = vmatpush1.bf16.msra.mxu0 0
        %3139 = vmatprep.subr.bf16.mxu0 0
        %3140 = vmatpush1.bf16.msra.mxu0 0
        %3141 = vmatprep.subr.bf16.mxu0 0
        %3142 = vmatpush1.bf16.msra.mxu0 0
        %3143 = vmatprep.subr.bf16.mxu0 0
        %3144 = vmatpush1.bf16.msra.mxu0 0
        %3145 = vmatprep.subr.bf16.mxu0 0
        %3146 = vmatpush1.bf16.msra.mxu0 0
        %3147 = vmatprep.subr.bf16.mxu0 0
        %3148 = vmatpush1.bf16.msra.mxu0 0
        %3149 = vmatprep.subr.bf16.mxu0 0
        %3150 = vmatpush1.bf16.msra.mxu0 0
        %3151 = vmatprep.subr.bf16.mxu0 0
        %3152 = vmatpush1.bf16.msra.mxu0 0
        %3153 = vmatprep.subr.bf16.mxu0 0
        %3154 = vmatpush1.bf16.msra.mxu0 0
        %3155 = vmatprep.subr.bf16.mxu0 0
        %3156 = vmatpush1.bf16.msra.mxu0 0
        %3157 = vmatprep.mubr.bf16.mxu0 0
        %3158 = vmatmul.mubr.bf16.gmra.mrb[0].mxu0 %v3120
        %v3159 = vpop.f32.mrb[0].mxu0
        %v3160 = vadd.f32 0.0, %v3159
        %v3161 = vpop.f32.mrb[0].mxu0
        %v3162 = vpop.f32.mrb[0].mxu0
        %v3163 = vpop.f32.mrb[0].mxu0
        %3164 = vdwg.mxu0
        %v3165 = vpack.c.bf16 %v3160, %v3160
        %v3167 = vsel %vm2075, %v3165, 0
        %3169 = vmatprep.subr.bf16.mxu0 0
        %3170 = vmatpush1.bf16.msra.mxu0 %v2525
        %3171 = vmatprep.subr.bf16.mxu0 0
        %3172 = vmatpush1.bf16.msra.mxu0 %v2526
        %3173 = vmatprep.subr.bf16.mxu0 0
        %3174 = vmatpush1.bf16.msra.mxu0 0
        %3175 = vmatprep.subr.bf16.mxu0 0
        %3176 = vmatpush1.bf16.msra.mxu0 0
        %3177 = vmatprep.subr.bf16.mxu0 0
        %3178 = vmatpush1.bf16.msra.mxu0 0
        %3179 = vmatprep.subr.bf16.mxu0 0
        %3180 = vmatpush1.bf16.msra.mxu0 0
        %3181 = vmatprep.subr.bf16.mxu0 0
        %3182 = vmatpush1.bf16.msra.mxu0 0
        %3183 = vmatprep.subr.bf16.mxu0 0
        %3184 = vmatpush1.bf16.msra.mxu0 0
        %3185 = vmatprep.subr.bf16.mxu0 0
        %3186 = vmatpush1.bf16.msra.mxu0 0
        %3187 = vmatprep.subr.bf16.mxu0 0
        %3188 = vmatpush1.bf16.msra.mxu0 0
        %3189 = vmatprep.subr.bf16.mxu0 0
        %3190 = vmatpush1.bf16.msra.mxu0 0
        %3191 = vmatprep.subr.bf16.mxu0 0
        %3192 = vmatpush1.bf16.msra.mxu0 0
        %3193 = vmatprep.subr.bf16.mxu0 0
        %3194 = vmatpush1.bf16.msra.mxu0 0
        %3195 = vmatprep.subr.bf16.mxu0 0
        %3196 = vmatpush1.bf16.msra.mxu0 0
        %3197 = vmatprep.subr.bf16.mxu0 0
        %3198 = vmatpush1.bf16.msra.mxu0 0
        %3199 = vmatprep.subr.bf16.mxu0 0
        %3200 = vmatpush1.bf16.msra.mxu0 0
        %3201 = vmatprep.mubr.bf16.mxu0 0
        %3202 = vmatmul.mubr.bf16.gmra.mrb[0].mxu0 %v3167
        %v3203 = vpop.f32.mrb[0].mxu0
        %v3204 = vadd.f32 0.0, %v3203
        %v3205 = vpop.f32.mrb[0].mxu0
        %v3206 = vpop.f32.mrb[0].mxu0
        %v3207 = vpop.f32.mrb[0].mxu0
        %3208 = vdwg.mxu0
        %v3209 = vadd.f32 %v3050, %v3204
        %v3211 = vrot.slane %v1847, 4
        %v3213 = vrot.slane %v1957, 4
        %v3215 = vsel %vm2075, %v3211, 0
        %v3218 = vsel %vm2075, %v3213, 0
        %3220 = vmatprep.subr.bf16.mxu0 0
        %3221 = vmatpush1.bf16.xpose.msra.mxu0 %v3218
        %3222 = vmatprep.subr.bf16.mxu0 0
        %3223 = vmatpush1.bf16.xpose.msra.mxu0 0
        %3224 = vmatprep.subr.bf16.mxu0 0
        %3225 = vmatpush1.bf16.xpose.msra.mxu0 0
        %3226 = vmatprep.subr.bf16.mxu0 0
        %3227 = vmatpush1.bf16.xpose.msra.mxu0 0
        %3228 = vmatprep.subr.bf16.mxu0 0
        %3229 = vmatpush1.bf16.xpose.msra.mxu0 0
        %3230 = vmatprep.subr.bf16.mxu0 0
        %3231 = vmatpush1.bf16.xpose.msra.mxu0 0
        %3232 = vmatprep.subr.bf16.mxu0 0
        %3233 = vmatpush1.bf16.xpose.msra.mxu0 0
        %3234 = vmatprep.subr.bf16.mxu0 0
        %3235 = vmatpush1.bf16.xpose.msra.mxu0 0
        %3236 = vmatprep.subr.bf16.mxu0 0
        %3237 = vmatpush1.bf16.xpose.msra.mxu0 0
        %3238 = vmatprep.subr.bf16.mxu0 0
        %3239 = vmatpush1.bf16.xpose.msra.mxu0 0
        %3240 = vmatprep.subr.bf16.mxu0 0
        %3241 = vmatpush1.bf16.xpose.msra.mxu0 0
        %3242 = vmatprep.subr.bf16.mxu0 0
        %3243 = vmatpush1.bf16.xpose.msra.mxu0 0
        %3244 = vmatprep.subr.bf16.mxu0 0
        %3245 = vmatpush1.bf16.xpose.msra.mxu0 0
        %3246 = vmatprep.subr.bf16.mxu0 0
        %3247 = vmatpush1.bf16.xpose.msra.mxu0 0
        %3248 = vmatprep.subr.bf16.mxu0 0
        %3249 = vmatpush1.bf16.xpose.msra.mxu0 0
        %3250 = vmatprep.subr.bf16.mxu0 0
        %3251 = vmatpush1.bf16.xpose.msra.mxu0 0
        %3252 = vmatprep.mubr.bf16.mxu0 0
        %3253 = vmatmul.mubr.bf16.gmra.mrb[0].mxu0 %v3215
        %v3254 = vpop.f32.mrb[0].mxu0
        %v3255 = vadd.f32 %v2746, %v3254
        %v3256 = vpop.f32.mrb[0].mxu0
        %v3257 = vpop.f32.mrb[0].mxu0
        %v3258 = vpop.f32.mrb[0].mxu0
        %3259 = vdwg.mxu0
        %v3260 = vsel %vm2122, %v3255, -inf
        %3261 = vmax.xlane.f32.xlu0 %v3260
        %v3262 = vpop.xlane.xlu0 %3261
        %v3263 = vsub.f32 %v3255, %v3262
        %v3264 = vmul.f32 %v3263, 1.442695
        %v3265 = vpow.pop %v3264
        %v3266 = vsel %vm2122, %v3265, 0.0
        %3267 = vadd.xlane.f32.xlu0 %v3266
        %v3268 = vpop.xlane.xlu0 %3267
        %v3269 = vrcp.pop %v3268
        %v3270 = vmul.f32 %v3265, %v3269
        %v3271 = vpack.c.bf16 %v3270, %v3270
        %v3273 = vrot.slane %v2067, 4
        %v3275 = vsel %vm2122, %v3271, 0
        %v3278 = vsel %vm2138, %v3273, 0
        %3280 = vmatprep.subr.bf16.mxu0 0
        %3281 = vmatpush1.bf16.msra.mxu0 %v3278
        %3282 = vmatprep.subr.bf16.mxu0 0
        %3283 = vmatpush1.bf16.msra.mxu0 0
        %3284 = vmatprep.subr.bf16.mxu0 0
        %3285 = vmatpush1.bf16.msra.mxu0 0
        %3286 = vmatprep.subr.bf16.mxu0 0
        %3287 = vmatpush1.bf16.msra.mxu0 0
        %3288 = vmatprep.subr.bf16.mxu0 0
        %3289 = vmatpush1.bf16.msra.mxu0 0
        %3290 = vmatprep.subr.bf16.mxu0 0
        %3291 = vmatpush1.bf16.msra.mxu0 0
        %3292 = vmatprep.subr.bf16.mxu0 0
        %3293 = vmatpush1.bf16.msra.mxu0 0
        %3294 = vmatprep.subr.bf16.mxu0 0
        %3295 = vmatpush1.bf16.msra.mxu0 0
        %3296 = vmatprep.subr.bf16.mxu0 0
        %3297 = vmatpush1.bf16.msra.mxu0 0
        %3298 = vmatprep.subr.bf16.mxu0 0
        %3299 = vmatpush1.bf16.msra.mxu0 0
        %3300 = vmatprep.subr.bf16.mxu0 0
        %3301 = vmatpush1.bf16.msra.mxu0 0
        %3302 = vmatprep.subr.bf16.mxu0 0
        %3303 = vmatpush1.bf16.msra.mxu0 0
        %3304 = vmatprep.subr.bf16.mxu0 0
        %3305 = vmatpush1.bf16.msra.mxu0 0
        %3306 = vmatprep.subr.bf16.mxu0 0
        %3307 = vmatpush1.bf16.msra.mxu0 0
        %3308 = vmatprep.subr.bf16.mxu0 0
        %3309 = vmatpush1.bf16.msra.mxu0 0
        %3310 = vmatprep.subr.bf16.mxu0 0
        %3311 = vmatpush1.bf16.msra.mxu0 0
        %3312 = vmatprep.mubr.bf16.mxu0 0
        %3313 = vmatmul.mubr.bf16.gmra.mrb[0].mxu0 %v3275
        %v3314 = vpop.f32.mrb[0].mxu0
        %v3315 = vadd.f32 0.0, %v3314
        %v3316 = vpop.f32.mrb[0].mxu0
        %v3317 = vpop.f32.mrb[0].mxu0
        %v3318 = vpop.f32.mrb[0].mxu0
        %3319 = vdwg.mxu0
        %v3320 = vpack.c.bf16 %v3315, %v3315
        %v3322 = vsel %vm2075, %v3320, 0
        %3324 = vmatprep.subr.bf16.mxu0 0
        %3325 = vmatpush1.bf16.msra.mxu0 %v2691
        %3326 = vmatprep.subr.bf16.mxu0 0
        %3327 = vmatpush1.bf16.msra.mxu0 %v2692
        %3328 = vmatprep.subr.bf16.mxu0 0
        %3329 = vmatpush1.bf16.msra.mxu0 0
        %3330 = vmatprep.subr.bf16.mxu0 0
        %3331 = vmatpush1.bf16.msra.mxu0 0
        %3332 = vmatprep.subr.bf16.mxu0 0
        %3333 = vmatpush1.bf16.msra.mxu0 0
        %3334 = vmatprep.subr.bf16.mxu0 0
        %3335 = vmatpush1.bf16.msra.mxu0 0
        %3336 = vmatprep.subr.bf16.mxu0 0
        %3337 = vmatpush1.bf16.msra.mxu0 0
        %3338 = vmatprep.subr.bf16.mxu0 0
        %3339 = vmatpush1.bf16.msra.mxu0 0
        %3340 = vmatprep.subr.bf16.mxu0 0
        %3341 = vmatpush1.bf16.msra.mxu0 0
        %3342 = vmatprep.subr.bf16.mxu0 0
        %3343 = vmatpush1.bf16.msra.mxu0 0
        %3344 = vmatprep.subr.bf16.mxu0 0
        %3345 = vmatpush1.bf16.msra.mxu0 0
        %3346 = vmatprep.subr.bf16.mxu0 0
        %3347 = vmatpush1.bf16.msra.mxu0 0
        %3348 = vmatprep.subr.bf16.mxu0 0
        %3349 = vmatpush1.bf16.msra.mxu0 0
        %3350 = vmatprep.subr.bf16.mxu0 0
        %3351 = vmatpush1.bf16.msra.mxu0 0
        %3352 = vmatprep.subr.bf16.mxu0 0
        %3353 = vmatpush1.bf16.msra.mxu0 0
        %3354 = vmatprep.subr.bf16.mxu0 0
        %3355 = vmatpush1.bf16.msra.mxu0 0
        %3356 = vmatprep.mubr.bf16.mxu0 0
        %3357 = vmatmul.mubr.bf16.gmra.mrb[0].mxu0 %v3322
        %v3358 = vpop.f32.mrb[0].mxu0
        %v3359 = vadd.f32 0.0, %v3358
        %v3360 = vpop.f32.mrb[0].mxu0
        %v3361 = vpop.f32.mrb[0].mxu0
        %v3362 = vpop.f32.mrb[0].mxu0
        %3363 = vdwg.mxu0
        %v3364 = vadd.f32 %v3209, %v3359
        %v3365 = vlaneseq
        %v3366 = vshrl.u32 %v3365, 7
        %v3367 = vsub.s32 3, %v3366
        %v3368 = vrot.slane %v725, %v3367
        %v3369 = vadd.f32 %v2738, %v3368
        %v3370 = vadd.f32 %v3364, %v3368
        %v3371 = vadd.f32 %v3369, %v736
        %v3372 = vadd.f32 %v3370, %v737
        %3373 = vadd.xlane.f32.xlu0 %v3371
        %v3374 = vpop.xlane.xlu0 %3373
        %3375 = vadd.xlane.f32.xlu0 %v3372
        %v3376 = vpop.xlane.xlu0 %3375
        %v3377 = vrcp.pop 128.0
        %v3378 = vmul.f32 %v3374, %v3377
        %v3379 = vmul.f32 %v3376, %v3377
        %v3380 = vmul.f32 %v3371, %v3371
        %v3381 = vmul.f32 %v3372, %v3372
        %3382 = vadd.xlane.f32.xlu0 %v3380
        %v3383 = vpop.xlane.xlu0 %3382
        %3384 = vadd.xlane.f32.xlu0 %v3381
        %v3385 = vpop.xlane.xlu0 %3384
        %v3386 = vmul.f32 %v3383, %v3377
        %v3387 = vmul.f32 %v3385, %v3377
        %v3388 = vsub.f32 %v3371, %v3378
        %v3389 = vsub.f32 %v3372, %v3379
        %v3390 = vmul.f32 %v3378, %v3378
        %v3391 = vmul.f32 %v3379, %v3379
        %v3392 = vsub.f32 %v3386, %v3390
        %v3393 = vsub.f32 %v3387, %v3391
        %v3394 = vadd.f32 %v3392, 1e-05
        %v3395 = vadd.f32 %v3393, 1e-05
        %v3396 = vrsqrt.pop %v3394
        %v3397 = vrsqrt.pop %v3395
        %v3398 = vmul.f32 %v3388, %v3396
        %v3399 = vmul.f32 %v3389, %v3397
        %v3400 = vlaneseq
        %v3401 = vshrl.u32 %v3400, 7
        %v3402 = vsub.s32 2, %v3401
        %v3403 = vrot.slane %v726, %v3402
        %v3404 = vmul.f32 %v3398, %v3403
        %v3405 = vmul.f32 %v3399, %v3403
        %v3406 = vlaneseq
        %v3407 = vshrl.u32 %v3406, 7
        %v3408 = vsub.s32 3, %v3407
        %v3409 = vrot.slane %v726, %v3408
        %v3410 = vadd.f32 %v3404, %v3409
        %v3411 = vadd.f32 %v3405, %v3409
        %v3412 = vld [vmem:[%s665] sm:$0xf]
        %v3413 = vld [vmem:[%s665 + $0x4] sm:$0xf]
        %v3414 = vld [vmem:[%s665 + $0x8] sm:$0xf]
        %v3415 = vld [vmem:[%s665 + $0xc] sm:$0xf]
        %v3416 = vpack.c.bf16 %v3411, %v3410
        %v3417 = vld [vmem:[%s691] sm:$0xf]
        %v3418 = vld [vmem:[%s691 + $0x4] sm:$0xf]
        %v3419 = vld [vmem:[%s691 + $0x8] sm:$0xf]
        %v3420 = vld [vmem:[%s691 + $0xc] sm:$0xf]
        %v3421 = vld [vmem:[%s691 + $0x10] sm:$0xf]
        %v3422 = vld [vmem:[%s691 + $0x14] sm:$0xf]
        %v3423 = vld [vmem:[%s691 + $0x18] sm:$0xf]
        %v3424 = vld [vmem:[%s691 + $0x1c] sm:$0xf]
        %v3425 = vld [vmem:[%s691 + $0x20] sm:$0xf]
        %v3426 = vld [vmem:[%s691 + $0x24] sm:$0xf]
        %v3427 = vld [vmem:[%s691 + $0x28] sm:$0xf]
        %v3428 = vld [vmem:[%s691 + $0x2c] sm:$0xf]
        %v3429 = vld [vmem:[%s691 + $0x30] sm:$0xf]
        %v3430 = vld [vmem:[%s691 + $0x34] sm:$0xf]
        %v3431 = vld [vmem:[%s691 + $0x38] sm:$0xf]
        %v3432 = vld [vmem:[%s691 + $0x3c] sm:$0xf]
        %v3433 = vlaneseq
        %v3434 = vshrl.u32 %v3433, 7
        %v3435 = vsub.s32 4, %v3434
        %v3436 = vrot.slane %v725, %v3435
        %v3453 = vunpack.c.l.b16 %v3417
        %v3454 = vunpack.c.l.b16 %v3418
        %v3455 = vunpack.c.l.b16 %v3419
        %v3456 = vunpack.c.l.b16 %v3420
        %v3457 = vunpack.c.l.b16 %v3421
        %v3458 = vunpack.c.l.b16 %v3422
        %v3459 = vunpack.c.l.b16 %v3423
        %v3460 = vunpack.c.l.b16 %v3424
        %v3461 = vunpack.c.l.b16 %v3425
        %v3462 = vunpack.c.l.b16 %v3426
        %v3463 = vunpack.c.l.b16 %v3427
        %v3464 = vunpack.c.l.b16 %v3428
        %v3465 = vunpack.c.l.b16 %v3429
        %v3466 = vunpack.c.l.b16 %v3430
        %v3467 = vunpack.c.l.b16 %v3431
        %v3468 = vunpack.c.l.b16 %v3432
        %v3469 = vpack.c.b16 %v3454, %v3453
        %v3470 = vpack.c.b16 %v3456, %v3455
        %v3471 = vpack.c.b16 %v3458, %v3457
        %v3472 = vpack.c.b16 %v3460, %v3459
        %v3473 = vpack.c.b16 %v3462, %v3461
        %v3474 = vpack.c.b16 %v3464, %v3463
        %v3475 = vpack.c.b16 %v3466, %v3465
        %v3476 = vpack.c.b16 %v3468, %v3467
        %3485 = vmatprep.subr.bf16.mxu0 0
        %3486 = vmatpush1.bf16.msra.mxu0 %v3469
        %3487 = vmatprep.subr.bf16.mxu0 0
        %3488 = vmatpush1.bf16.msra.mxu0 %v3470
        %3489 = vmatprep.subr.bf16.mxu0 0
        %3490 = vmatpush1.bf16.msra.mxu0 %v3471
        %3491 = vmatprep.subr.bf16.mxu0 0
        %3492 = vmatpush1.bf16.msra.mxu0 %v3472
        %3493 = vmatprep.subr.bf16.mxu0 0
        %3494 = vmatpush1.bf16.msra.mxu0 %v3473
        %3495 = vmatprep.subr.bf16.mxu0 0
        %3496 = vmatpush1.bf16.msra.mxu0 %v3474
        %3497 = vmatprep.subr.bf16.mxu0 0
        %3498 = vmatpush1.bf16.msra.mxu0 %v3475
        %3499 = vmatprep.subr.bf16.mxu0 0
        %3500 = vmatpush1.bf16.msra.mxu0 %v3476
        %3501 = vmatprep.subr.bf16.mxu0 0
        %3502 = vmatpush1.bf16.msra.mxu0 0
        %3503 = vmatprep.subr.bf16.mxu0 0
        %3504 = vmatpush1.bf16.msra.mxu0 0
        %3505 = vmatprep.subr.bf16.mxu0 0
        %3506 = vmatpush1.bf16.msra.mxu0 0
        %3507 = vmatprep.subr.bf16.mxu0 0
        %3508 = vmatpush1.bf16.msra.mxu0 0
        %3509 = vmatprep.subr.bf16.mxu0 0
        %3510 = vmatpush1.bf16.msra.mxu0 0
        %3511 = vmatprep.subr.bf16.mxu0 0
        %3512 = vmatpush1.bf16.msra.mxu0 0
        %3513 = vmatprep.subr.bf16.mxu0 0
        %3514 = vmatpush1.bf16.msra.mxu0 0
        %3515 = vmatprep.subr.bf16.mxu0 0
        %3516 = vmatpush1.bf16.msra.mxu0 0
        %3517 = vmatprep.mubr.bf16.mxu0 0
        %3518 = vmatmul.mubr.bf16.gmra.mrb[0].mxu0 %v3416
        %v3519 = vpop.f32.mrb[0].mxu0
        %v3520 = vadd.f32 %v3436, %v3519
        %v3521 = vpop.f32.mrb[0].mxu0
        %v3522 = vpop.f32.mrb[0].mxu0
        %v3523 = vadd.f32 %v3436, %v3522
        %v3524 = vpop.f32.mrb[0].mxu0
        %3525 = vdwg.mxu0
        %v3526 = vpack.c.bf16 %v3523, %v3520
        %v3527 = vld [vmem:[%s696] sm:$0xf]
        %v3528 = vld [vmem:[%s696 + $0x4] sm:$0xf]
        %v3529 = vld [vmem:[%s696 + $0x8] sm:$0xf]
        %v3530 = vld [vmem:[%s696 + $0xc] sm:$0xf]
        %v3531 = vld [vmem:[%s696 + $0x10] sm:$0xf]
        %v3532 = vld [vmem:[%s696 + $0x14] sm:$0xf]
        %v3533 = vld [vmem:[%s696 + $0x18] sm:$0xf]
        %v3534 = vld [vmem:[%s696 + $0x1c] sm:$0xf]
        %v3535 = vld [vmem:[%s696 + $0x20] sm:$0xf]
        %v3536 = vld [vmem:[%s696 + $0x24] sm:$0xf]
        %v3537 = vld [vmem:[%s696 + $0x28] sm:$0xf]
        %v3538 = vld [vmem:[%s696 + $0x2c] sm:$0xf]
        %v3539 = vld [vmem:[%s696 + $0x30] sm:$0xf]
        %v3540 = vld [vmem:[%s696 + $0x34] sm:$0xf]
        %v3541 = vld [vmem:[%s696 + $0x38] sm:$0xf]
        %v3542 = vld [vmem:[%s696 + $0x3c] sm:$0xf]
        %v3543 = vlaneseq
        %v3544 = vshrl.u32 %v3543, 7
        %v3545 = vsub.s32 5, %v3544
        %v3546 = vrot.slane %v725, %v3545
        %v3551 = vunpack.c.l.b16 %v3412
        %v3552 = vunpack.c.l.b16 %v3413
        %v3553 = vunpack.c.l.b16 %v3414
        %v3554 = vunpack.c.l.b16 %v3415
        %v3555 = vpack.c.b16 %v3552, %v3551
        %v3556 = vpack.c.b16 %v3554, %v3553
        %v3575 = vunpack.c.l.b16 %v3527
        %v3576 = vunpack.c.l.b16 %v3528
        %v3577 = vunpack.c.l.b16 %v3529
        %v3578 = vunpack.c.l.b16 %v3530
        %v3579 = vunpack.c.l.b16 %v3531
        %v3580 = vunpack.c.l.b16 %v3532
        %v3581 = vunpack.c.l.b16 %v3533
        %v3582 = vunpack.c.l.b16 %v3534
        %v3583 = vunpack.c.l.b16 %v3535
        %v3584 = vunpack.c.l.b16 %v3536
        %v3585 = vunpack.c.l.b16 %v3537
        %v3586 = vunpack.c.l.b16 %v3538
        %v3587 = vunpack.c.l.b16 %v3539
        %v3588 = vunpack.c.l.b16 %v3540
        %v3589 = vunpack.c.l.b16 %v3541
        %v3590 = vunpack.c.l.b16 %v3542
        %v3591 = vpack.c.b16 %v3576, %v3575
        %v3592 = vpack.c.b16 %v3578, %v3577
        %v3593 = vpack.c.b16 %v3580, %v3579
        %v3594 = vpack.c.b16 %v3582, %v3581
        %v3595 = vpack.c.b16 %v3584, %v3583
        %v3596 = vpack.c.b16 %v3586, %v3585
        %v3597 = vpack.c.b16 %v3588, %v3587
        %v3598 = vpack.c.b16 %v3590, %v3589
        %3607 = vmatprep.subr.bf16.mxu0 0
        %3608 = vmatpush1.bf16.msra.mxu0 %v3591
        %3609 = vmatprep.subr.bf16.mxu0 0
        %3610 = vmatpush1.bf16.msra.mxu0 %v3592
        %3611 = vmatprep.subr.bf16.mxu0 0
        %3612 = vmatpush1.bf16.msra.mxu0 %v3593
        %3613 = vmatprep.subr.bf16.mxu0 0
        %3614 = vmatpush1.bf16.msra.mxu0 %v3594
        %3615 = vmatprep.subr.bf16.mxu0 0
        %3616 = vmatpush1.bf16.msra.mxu0 %v3595
        %3617 = vmatprep.subr.bf16.mxu0 0
        %3618 = vmatpush1.bf16.msra.mxu0 %v3596
        %3619 = vmatprep.subr.bf16.mxu0 0
        %3620 = vmatpush1.bf16.msra.mxu0 %v3597
        %3621 = vmatprep.subr.bf16.mxu0 0
        %3622 = vmatpush1.bf16.msra.mxu0 %v3598
        %3623 = vmatprep.subr.bf16.mxu0 0
        %3624 = vmatpush1.bf16.msra.mxu0 0
        %3625 = vmatprep.subr.bf16.mxu0 0
        %3626 = vmatpush1.bf16.msra.mxu0 0
        %3627 = vmatprep.subr.bf16.mxu0 0
        %3628 = vmatpush1.bf16.msra.mxu0 0
        %3629 = vmatprep.subr.bf16.mxu0 0
        %3630 = vmatpush1.bf16.msra.mxu0 0
        %3631 = vmatprep.subr.bf16.mxu0 0
        %3632 = vmatpush1.bf16.msra.mxu0 0
        %3633 = vmatprep.subr.bf16.mxu0 0
        %3634 = vmatpush1.bf16.msra.mxu0 0
        %3635 = vmatprep.subr.bf16.mxu0 0
        %3636 = vmatpush1.bf16.msra.mxu0 0
        %3637 = vmatprep.subr.bf16.mxu0 0
        %3638 = vmatpush1.bf16.msra.mxu0 0
        %3639 = vmatprep.mubr.bf16.mxu0 0
        %3640 = vmatmul.mubr.bf16.gmra.mrb[0].mxu0 %v3555
        %v3641 = vpop.f32.mrb[0].mxu0
        %v3642 = vadd.f32 %v3546, %v3641
        %v3643 = vpop.f32.mrb[0].mxu0
        %v3644 = vpop.f32.mrb[0].mxu0
        %v3645 = vadd.f32 %v3546, %v3644
        %v3646 = vpop.f32.mrb[0].mxu0
        %3647 = vmatprep.mubr.bf16.mxu0 0
        %3648 = vmatmul.mubr.bf16.gmra.mrb[0].mxu0 %v3556
        %v3649 = vpop.f32.mrb[0].mxu0
        %v3650 = vadd.f32 %v3546, %v3649
        %v3651 = vpop.f32.mrb[0].mxu0
        %v3652 = vpop.f32.mrb[0].mxu0
        %v3653 = vadd.f32 %v3546, %v3652
        %v3654 = vpop.f32.mrb[0].mxu0
        %3655 = vdwg.mxu0
        %v3656 = vpack.c.bf16 %v3645, %v3642
        %v3657 = vpack.c.bf16 %v3653, %v3650
        %v3658 = vld [vmem:[%s701] sm:$0xf]
        %v3659 = vld [vmem:[%s701 + $0x4] sm:$0xf]
        %v3660 = vld [vmem:[%s701 + $0x8] sm:$0xf]
        %v3661 = vld [vmem:[%s701 + $0xc] sm:$0xf]
        %v3662 = vld [vmem:[%s701 + $0x10] sm:$0xf]
        %v3663 = vld [vmem:[%s701 + $0x14] sm:$0xf]
        %v3664 = vld [vmem:[%s701 + $0x18] sm:$0xf]
        %v3665 = vld [vmem:[%s701 + $0x1c] sm:$0xf]
        %v3666 = vld [vmem:[%s701 + $0x20] sm:$0xf]
        %v3667 = vld [vmem:[%s701 + $0x24] sm:$0xf]
        %v3668 = vld [vmem:[%s701 + $0x28] sm:$0xf]
        %v3669 = vld [vmem:[%s701 + $0x2c] sm:$0xf]
        %v3670 = vld [vmem:[%s701 + $0x30] sm:$0xf]
        %v3671 = vld [vmem:[%s701 + $0x34] sm:$0xf]
        %v3672 = vld [vmem:[%s701 + $0x38] sm:$0xf]
        %v3673 = vld [vmem:[%s701 + $0x3c] sm:$0xf]
        %v3674 = vlaneseq
        %v3675 = vshrl.u32 %v3674, 7
        %v3676 = vsub.s32 6, %v3675
        %v3677 = vrot.slane %v725, %v3676
        %v3694 = vunpack.c.l.b16 %v3658
        %v3695 = vunpack.c.l.b16 %v3659
        %v3696 = vunpack.c.l.b16 %v3660
        %v3697 = vunpack.c.l.b16 %v3661
        %v3698 = vunpack.c.l.b16 %v3662
        %v3699 = vunpack.c.l.b16 %v3663
        %v3700 = vunpack.c.l.b16 %v3664
        %v3701 = vunpack.c.l.b16 %v3665
        %v3702 = vunpack.c.l.b16 %v3666
        %v3703 = vunpack.c.l.b16 %v3667
        %v3704 = vunpack.c.l.b16 %v3668
        %v3705 = vunpack.c.l.b16 %v3669
        %v3706 = vunpack.c.l.b16 %v3670
        %v3707 = vunpack.c.l.b16 %v3671
        %v3708 = vunpack.c.l.b16 %v3672
        %v3709 = vunpack.c.l.b16 %v3673
        %v3710 = vpack.c.b16 %v3695, %v3694
        %v3711 = vpack.c.b16 %v3697, %v3696
        %v3712 = vpack.c.b16 %v3699, %v3698
        %v3713 = vpack.c.b16 %v3701, %v3700
        %v3714 = vpack.c.b16 %v3703, %v3702
        %v3715 = vpack.c.b16 %v3705, %v3704
        %v3716 = vpack.c.b16 %v3707, %v3706
        %v3717 = vpack.c.b16 %v3709, %v3708
        %3726 = vmatprep.subr.bf16.mxu0 0
        %3727 = vmatpush1.bf16.msra.mxu0 %v3710
        %3728 = vmatprep.subr.bf16.mxu0 0
        %3729 = vmatpush1.bf16.msra.mxu0 %v3711
        %3730 = vmatprep.subr.bf16.mxu0 0
        %3731 = vmatpush1.bf16.msra.mxu0 %v3712
        %3732 = vmatprep.subr.bf16.mxu0 0
        %3733 = vmatpush1.bf16.msra.mxu0 %v3713
        %3734 = vmatprep.subr.bf16.mxu0 0
        %3735 = vmatpush1.bf16.msra.mxu0 %v3714
        %3736 = vmatprep.subr.bf16.mxu0 0
        %3737 = vmatpush1.bf16.msra.mxu0 %v3715
        %3738 = vmatprep.subr.bf16.mxu0 0
        %3739 = vmatpush1.bf16.msra.mxu0 %v3716
        %3740 = vmatprep.subr.bf16.mxu0 0
        %3741 = vmatpush1.bf16.msra.mxu0 %v3717
        %3742 = vmatprep.subr.bf16.mxu0 0
        %3743 = vmatpush1.bf16.msra.mxu0 0
        %3744 = vmatprep.subr.bf16.mxu0 0
        %3745 = vmatpush1.bf16.msra.mxu0 0
        %3746 = vmatprep.subr.bf16.mxu0 0
        %3747 = vmatpush1.bf16.msra.mxu0 0
        %3748 = vmatprep.subr.bf16.mxu0 0
        %3749 = vmatpush1.bf16.msra.mxu0 0
        %3750 = vmatprep.subr.bf16.mxu0 0
        %3751 = vmatpush1.bf16.msra.mxu0 0
        %3752 = vmatprep.subr.bf16.mxu0 0
        %3753 = vmatpush1.bf16.msra.mxu0 0
        %3754 = vmatprep.subr.bf16.mxu0 0
        %3755 = vmatpush1.bf16.msra.mxu0 0
        %3756 = vmatprep.subr.bf16.mxu0 0
        %3757 = vmatpush1.bf16.msra.mxu0 0
        %3758 = vmatprep.mubr.bf16.mxu0 0
        %3759 = vmatmul.mubr.bf16.gmra.mrb[0].mxu0 %v3555
        %v3760 = vpop.f32.mrb[0].mxu0
        %v3761 = vadd.f32 %v3677, %v3760
        %v3762 = vpop.f32.mrb[0].mxu0
        %v3763 = vpop.f32.mrb[0].mxu0
        %v3764 = vadd.f32 %v3677, %v3763
        %v3765 = vpop.f32.mrb[0].mxu0
        %3766 = vmatprep.mubr.bf16.mxu0 0
        %3767 = vmatmul.mubr.bf16.gmra.mrb[0].mxu0 %v3556
        %v3768 = vpop.f32.mrb[0].mxu0
        %v3769 = vadd.f32 %v3677, %v3768
        %v3770 = vpop.f32.mrb[0].mxu0
        %v3771 = vpop.f32.mrb[0].mxu0
        %v3772 = vadd.f32 %v3677, %v3771
        %v3773 = vpop.f32.mrb[0].mxu0
        %3774 = vdwg.mxu0
        %v3775 = vpack.c.bf16 %v3764, %v3761
        %v3776 = vpack.c.bf16 %v3772, %v3769
        %s3777 = scalar_lea.vmem %s691, 64
        %v3778 = vld [vmem:[%s3777] sm:$0xf]
        %v3779 = vld [vmem:[%s3777 + $0x4] sm:$0xf]
        %v3780 = vld [vmem:[%s3777 + $0x8] sm:$0xf]
        %v3781 = vld [vmem:[%s3777 + $0xc] sm:$0xf]
        %v3782 = vld [vmem:[%s3777 + $0x10] sm:$0xf]
        %v3783 = vld [vmem:[%s3777 + $0x14] sm:$0xf]
        %v3784 = vld [vmem:[%s3777 + $0x18] sm:$0xf]
        %v3785 = vld [vmem:[%s3777 + $0x1c] sm:$0xf]
        %v3786 = vld [vmem:[%s3777 + $0x20] sm:$0xf]
        %v3787 = vld [vmem:[%s3777 + $0x24] sm:$0xf]
        %v3788 = vld [vmem:[%s3777 + $0x28] sm:$0xf]
        %v3789 = vld [vmem:[%s3777 + $0x2c] sm:$0xf]
        %v3790 = vld [vmem:[%s3777 + $0x30] sm:$0xf]
        %v3791 = vld [vmem:[%s3777 + $0x34] sm:$0xf]
        %v3792 = vld [vmem:[%s3777 + $0x38] sm:$0xf]
        %v3793 = vld [vmem:[%s3777 + $0x3c] sm:$0xf]
        %v3810 = vunpack.c.l.b16 %v3778
        %v3811 = vunpack.c.l.b16 %v3779
        %v3812 = vunpack.c.l.b16 %v3780
        %v3813 = vunpack.c.l.b16 %v3781
        %v3814 = vunpack.c.l.b16 %v3782
        %v3815 = vunpack.c.l.b16 %v3783
        %v3816 = vunpack.c.l.b16 %v3784
        %v3817 = vunpack.c.l.b16 %v3785
        %v3818 = vunpack.c.l.b16 %v3786
        %v3819 = vunpack.c.l.b16 %v3787
        %v3820 = vunpack.c.l.b16 %v3788
        %v3821 = vunpack.c.l.b16 %v3789
        %v3822 = vunpack.c.l.b16 %v3790
        %v3823 = vunpack.c.l.b16 %v3791
        %v3824 = vunpack.c.l.b16 %v3792
        %v3825 = vunpack.c.l.b16 %v3793
        %v3826 = vpack.c.b16 %v3811, %v3810
        %v3827 = vpack.c.b16 %v3813, %v3812
        %v3828 = vpack.c.b16 %v3815, %v3814
        %v3829 = vpack.c.b16 %v3817, %v3816
        %v3830 = vpack.c.b16 %v3819, %v3818
        %v3831 = vpack.c.b16 %v3821, %v3820
        %v3832 = vpack.c.b16 %v3823, %v3822
        %v3833 = vpack.c.b16 %v3825, %v3824
        %3843 = vrot.lane.b32.xlu0 %v3436, 96
        %v3844 = vpop.permute.xlu0 %3843
        %3846 = vmatprep.subr.bf16.mxu0 0
        %3847 = vmatpush1.bf16.msra.mxu0 %v3826
        %3848 = vmatprep.subr.bf16.mxu0 0
        %3849 = vmatpush1.bf16.msra.mxu0 %v3827
        %3850 = vmatprep.subr.bf16.mxu0 0
        %3851 = vmatpush1.bf16.msra.mxu0 %v3828
        %3852 = vmatprep.subr.bf16.mxu0 0
        %3853 = vmatpush1.bf16.msra.mxu0 %v3829
        %3854 = vmatprep.subr.bf16.mxu0 0
        %3855 = vmatpush1.bf16.msra.mxu0 %v3830
        %3856 = vmatprep.subr.bf16.mxu0 0
        %3857 = vmatpush1.bf16.msra.mxu0 %v3831
        %3858 = vmatprep.subr.bf16.mxu0 0
        %3859 = vmatpush1.bf16.msra.mxu0 %v3832
        %3860 = vmatprep.subr.bf16.mxu0 0
        %3861 = vmatpush1.bf16.msra.mxu0 %v3833
        %3862 = vmatprep.subr.bf16.mxu0 0
        %3863 = vmatpush1.bf16.msra.mxu0 0
        %3864 = vmatprep.subr.bf16.mxu0 0
        %3865 = vmatpush1.bf16.msra.mxu0 0
        %3866 = vmatprep.subr.bf16.mxu0 0
        %3867 = vmatpush1.bf16.msra.mxu0 0
        %3868 = vmatprep.subr.bf16.mxu0 0
        %3869 = vmatpush1.bf16.msra.mxu0 0
        %3870 = vmatprep.subr.bf16.mxu0 0
        %3871 = vmatpush1.bf16.msra.mxu0 0
        %3872 = vmatprep.subr.bf16.mxu0 0
        %3873 = vmatpush1.bf16.msra.mxu0 0
        %3874 = vmatprep.subr.bf16.mxu0 0
        %3875 = vmatpush1.bf16.msra.mxu0 0
        %3876 = vmatprep.subr.bf16.mxu0 0
        %3877 = vmatpush1.bf16.msra.mxu0 0
        %3878 = vmatprep.mubr.bf16.mxu0 0
        %3879 = vmatmul.mubr.bf16.gmra.mrb[0].mxu0 %v3416
        %v3880 = vpop.f32.mrb[0].mxu0
        %v3881 = vadd.f32 %v3844, %v3880
        %v3882 = vpop.f32.mrb[0].mxu0
        %v3883 = vpop.f32.mrb[0].mxu0
        %v3884 = vadd.f32 %v3844, %v3883
        %v3885 = vpop.f32.mrb[0].mxu0
        %3886 = vdwg.mxu0
        %v3887 = vpack.c.bf16 %v3884, %v3881
        %s3888 = scalar_lea.vmem %s696, 64
        %v3889 = vld [vmem:[%s3888] sm:$0xf]
        %v3890 = vld [vmem:[%s3888 + $0x4] sm:$0xf]
        %v3891 = vld [vmem:[%s3888 + $0x8] sm:$0xf]
        %v3892 = vld [vmem:[%s3888 + $0xc] sm:$0xf]
        %v3893 = vld [vmem:[%s3888 + $0x10] sm:$0xf]
        %v3894 = vld [vmem:[%s3888 + $0x14] sm:$0xf]
        %v3895 = vld [vmem:[%s3888 + $0x18] sm:$0xf]
        %v3896 = vld [vmem:[%s3888 + $0x1c] sm:$0xf]
        %v3897 = vld [vmem:[%s3888 + $0x20] sm:$0xf]
        %v3898 = vld [vmem:[%s3888 + $0x24] sm:$0xf]
        %v3899 = vld [vmem:[%s3888 + $0x28] sm:$0xf]
        %v3900 = vld [vmem:[%s3888 + $0x2c] sm:$0xf]
        %v3901 = vld [vmem:[%s3888 + $0x30] sm:$0xf]
        %v3902 = vld [vmem:[%s3888 + $0x34] sm:$0xf]
        %v3903 = vld [vmem:[%s3888 + $0x38] sm:$0xf]
        %v3904 = vld [vmem:[%s3888 + $0x3c] sm:$0xf]
        %v3921 = vunpack.c.l.b16 %v3889
        %v3922 = vunpack.c.l.b16 %v3890
        %v3923 = vunpack.c.l.b16 %v3891
        %v3924 = vunpack.c.l.b16 %v3892
        %v3925 = vunpack.c.l.b16 %v3893
        %v3926 = vunpack.c.l.b16 %v3894
        %v3927 = vunpack.c.l.b16 %v3895
        %v3928 = vunpack.c.l.b16 %v3896
        %v3929 = vunpack.c.l.b16 %v3897
        %v3930 = vunpack.c.l.b16 %v3898
        %v3931 = vunpack.c.l.b16 %v3899
        %v3932 = vunpack.c.l.b16 %v3900
        %v3933 = vunpack.c.l.b16 %v3901
        %v3934 = vunpack.c.l.b16 %v3902
        %v3935 = vunpack.c.l.b16 %v3903
        %v3936 = vunpack.c.l.b16 %v3904
        %v3937 = vpack.c.b16 %v3922, %v3921
        %v3938 = vpack.c.b16 %v3924, %v3923
        %v3939 = vpack.c.b16 %v3926, %v3925
        %v3940 = vpack.c.b16 %v3928, %v3927
        %v3941 = vpack.c.b16 %v3930, %v3929
        %v3942 = vpack.c.b16 %v3932, %v3931
        %v3943 = vpack.c.b16 %v3934, %v3933
        %v3944 = vpack.c.b16 %v3936, %v3935
        %3954 = vrot.lane.b32.xlu0 %v3546, 96
        %v3955 = vpop.permute.xlu0 %3954
        %3957 = vmatprep.subr.bf16.mxu0 0
        %3958 = vmatpush1.bf16.msra.mxu0 %v3937
        %3959 = vmatprep.subr.bf16.mxu0 0
        %3960 = vmatpush1.bf16.msra.mxu0 %v3938
        %3961 = vmatprep.subr.bf16.mxu0 0
        %3962 = vmatpush1.bf16.msra.mxu0 %v3939
        %3963 = vmatprep.subr.bf16.mxu0 0
        %3964 = vmatpush1.bf16.msra.mxu0 %v3940
        %3965 = vmatprep.subr.bf16.mxu0 0
        %3966 = vmatpush1.bf16.msra.mxu0 %v3941
        %3967 = vmatprep.subr.bf16.mxu0 0
        %3968 = vmatpush1.bf16.msra.mxu0 %v3942
        %3969 = vmatprep.subr.bf16.mxu0 0
        %3970 = vmatpush1.bf16.msra.mxu0 %v3943
        %3971 = vmatprep.subr.bf16.mxu0 0
        %3972 = vmatpush1.bf16.msra.mxu0 %v3944
        %3973 = vmatprep.subr.bf16.mxu0 0
        %3974 = vmatpush1.bf16.msra.mxu0 0
        %3975 = vmatprep.subr.bf16.mxu0 0
        %3976 = vmatpush1.bf16.msra.mxu0 0
        %3977 = vmatprep.subr.bf16.mxu0 0
        %3978 = vmatpush1.bf16.msra.mxu0 0
        %3979 = vmatprep.subr.bf16.mxu0 0
        %3980 = vmatpush1.bf16.msra.mxu0 0
        %3981 = vmatprep.subr.bf16.mxu0 0
        %3982 = vmatpush1.bf16.msra.mxu0 0
        %3983 = vmatprep.subr.bf16.mxu0 0
        %3984 = vmatpush1.bf16.msra.mxu0 0
        %3985 = vmatprep.subr.bf16.mxu0 0
        %3986 = vmatpush1.bf16.msra.mxu0 0
        %3987 = vmatprep.subr.bf16.mxu0 0
        %3988 = vmatpush1.bf16.msra.mxu0 0
        %3989 = vmatprep.mubr.bf16.mxu0 0
        %3990 = vmatmul.mubr.bf16.gmra.mrb[0].mxu0 %v3555
        %v3991 = vpop.f32.mrb[0].mxu0
        %v3992 = vadd.f32 %v3955, %v3991
        %v3993 = vpop.f32.mrb[0].mxu0
        %v3994 = vpop.f32.mrb[0].mxu0
        %v3995 = vadd.f32 %v3955, %v3994
        %v3996 = vpop.f32.mrb[0].mxu0
        %3997 = vmatprep.mubr.bf16.mxu0 0
        %3998 = vmatmul.mubr.bf16.gmra.mrb[0].mxu0 %v3556
        %v3999 = vpop.f32.mrb[0].mxu0
        %v4000 = vadd.f32 %v3955, %v3999
        %v4001 = vpop.f32.mrb[0].mxu0
        %v4002 = vpop.f32.mrb[0].mxu0
        %v4003 = vadd.f32 %v3955, %v4002
        %v4004 = vpop.f32.mrb[0].mxu0
        %4005 = vdwg.mxu0
        %v4006 = vpack.c.bf16 %v3995, %v3992
        %v4007 = vpack.c.bf16 %v4003, %v4000
        %s4008 = scalar_lea.vmem %s701, 64
        %v4009 = vld [vmem:[%s4008] sm:$0xf]
        %v4010 = vld [vmem:[%s4008 + $0x4] sm:$0xf]
        %v4011 = vld [vmem:[%s4008 + $0x8] sm:$0xf]
        %v4012 = vld [vmem:[%s4008 + $0xc] sm:$0xf]
        %v4013 = vld [vmem:[%s4008 + $0x10] sm:$0xf]
        %v4014 = vld [vmem:[%s4008 + $0x14] sm:$0xf]
        %v4015 = vld [vmem:[%s4008 + $0x18] sm:$0xf]
        %v4016 = vld [vmem:[%s4008 + $0x1c] sm:$0xf]
        %v4017 = vld [vmem:[%s4008 + $0x20] sm:$0xf]
        %v4018 = vld [vmem:[%s4008 + $0x24] sm:$0xf]
        %v4019 = vld [vmem:[%s4008 + $0x28] sm:$0xf]
        %v4020 = vld [vmem:[%s4008 + $0x2c] sm:$0xf]
        %v4021 = vld [vmem:[%s4008 + $0x30] sm:$0xf]
        %v4022 = vld [vmem:[%s4008 + $0x34] sm:$0xf]
        %v4023 = vld [vmem:[%s4008 + $0x38] sm:$0xf]
        %v4024 = vld [vmem:[%s4008 + $0x3c] sm:$0xf]
        %v4041 = vunpack.c.l.b16 %v4009
        %v4042 = vunpack.c.l.b16 %v4010
        %v4043 = vunpack.c.l.b16 %v4011
        %v4044 = vunpack.c.l.b16 %v4012
        %v4045 = vunpack.c.l.b16 %v4013
        %v4046 = vunpack.c.l.b16 %v4014
        %v4047 = vunpack.c.l.b16 %v4015
        %v4048 = vunpack.c.l.b16 %v4016
        %v4049 = vunpack.c.l.b16 %v4017
        %v4050 = vunpack.c.l.b16 %v4018
        %v4051 = vunpack.c.l.b16 %v4019
        %v4052 = vunpack.c.l.b16 %v4020
        %v4053 = vunpack.c.l.b16 %v4021
        %v4054 = vunpack.c.l.b16 %v4022
        %v4055 = vunpack.c.l.b16 %v4023
        %v4056 = vunpack.c.l.b16 %v4024
        %v4057 = vpack.c.b16 %v4042, %v4041
        %v4058 = vpack.c.b16 %v4044, %v4043
        %v4059 = vpack.c.b16 %v4046, %v4045
        %v4060 = vpack.c.b16 %v4048, %v4047
        %v4061 = vpack.c.b16 %v4050, %v4049
        %v4062 = vpack.c.b16 %v4052, %v4051
        %v4063 = vpack.c.b16 %v4054, %v4053
        %v4064 = vpack.c.b16 %v4056, %v4055
        %4074 = vrot.lane.b32.xlu0 %v3677, 96
        %v4075 = vpop.permute.xlu0 %4074
        %4077 = vmatprep.subr.bf16.mxu0 0
        %4078 = vmatpush1.bf16.msra.mxu0 %v4057
        %4079 = vmatprep.subr.bf16.mxu0 0
        %4080 = vmatpush1.bf16.msra.mxu0 %v4058
        %4081 = vmatprep.subr.bf16.mxu0 0
        %4082 = vmatpush1.bf16.msra.mxu0 %v4059
        %4083 = vmatprep.subr.bf16.mxu0 0
        %4084 = vmatpush1.bf16.msra.mxu0 %v4060
        %4085 = vmatprep.subr.bf16.mxu0 0
        %4086 = vmatpush1.bf16.msra.mxu0 %v4061
        %4087 = vmatprep.subr.bf16.mxu0 0
        %4088 = vmatpush1.bf16.msra.mxu0 %v4062
        %4089 = vmatprep.subr.bf16.mxu0 0
        %4090 = vmatpush1.bf16.msra.mxu0 %v4063
        %4091 = vmatprep.subr.bf16.mxu0 0
        %4092 = vmatpush1.bf16.msra.mxu0 %v4064
        %4093 = vmatprep.subr.bf16.mxu0 0
        %4094 = vmatpush1.bf16.msra.mxu0 0
        %4095 = vmatprep.subr.bf16.mxu0 0
        %4096 = vmatpush1.bf16.msra.mxu0 0
        %4097 = vmatprep.subr.bf16.mxu0 0
        %4098 = vmatpush1.bf16.msra.mxu0 0
        %4099 = vmatprep.subr.bf16.mxu0 0
        %4100 = vmatpush1.bf16.msra.mxu0 0
        %4101 = vmatprep.subr.bf16.mxu0 0
        %4102 = vmatpush1.bf16.msra.mxu0 0
        %4103 = vmatprep.subr.bf16.mxu0 0
        %4104 = vmatpush1.bf16.msra.mxu0 0
        %4105 = vmatprep.subr.bf16.mxu0 0
        %4106 = vmatpush1.bf16.msra.mxu0 0
        %4107 = vmatprep.subr.bf16.mxu0 0
        %4108 = vmatpush1.bf16.msra.mxu0 0
        %4109 = vmatprep.mubr.bf16.mxu0 0
        %4110 = vmatmul.mubr.bf16.gmra.mrb[0].mxu0 %v3555
        %v4111 = vpop.f32.mrb[0].mxu0
        %v4112 = vadd.f32 %v4075, %v4111
        %v4113 = vpop.f32.mrb[0].mxu0
        %v4114 = vpop.f32.mrb[0].mxu0
        %v4115 = vadd.f32 %v4075, %v4114
        %v4116 = vpop.f32.mrb[0].mxu0
        %4117 = vmatprep.mubr.bf16.mxu0 0
        %4118 = vmatmul.mubr.bf16.gmra.mrb[0].mxu0 %v3556
        %v4119 = vpop.f32.mrb[0].mxu0
        %v4120 = vadd.f32 %v4075, %v4119
        %v4121 = vpop.f32.mrb[0].mxu0
        %v4122 = vpop.f32.mrb[0].mxu0
        %v4123 = vadd.f32 %v4075, %v4122
        %v4124 = vpop.f32.mrb[0].mxu0
        %4125 = vdwg.mxu0
        %v4126 = vpack.c.bf16 %v4115, %v4112
        %v4127 = vpack.c.bf16 %v4123, %v4120
        %s4128 = scalar_lea.vmem %s691, 128
        %v4129 = vld [vmem:[%s4128] sm:$0xf]
        %v4130 = vld [vmem:[%s4128 + $0x4] sm:$0xf]
        %v4131 = vld [vmem:[%s4128 + $0x8] sm:$0xf]
        %v4132 = vld [vmem:[%s4128 + $0xc] sm:$0xf]
        %v4133 = vld [vmem:[%s4128 + $0x10] sm:$0xf]
        %v4134 = vld [vmem:[%s4128 + $0x14] sm:$0xf]
        %v4135 = vld [vmem:[%s4128 + $0x18] sm:$0xf]
        %v4136 = vld [vmem:[%s4128 + $0x1c] sm:$0xf]
        %v4137 = vld [vmem:[%s4128 + $0x20] sm:$0xf]
        %v4138 = vld [vmem:[%s4128 + $0x24] sm:$0xf]
        %v4139 = vld [vmem:[%s4128 + $0x28] sm:$0xf]
        %v4140 = vld [vmem:[%s4128 + $0x2c] sm:$0xf]
        %v4141 = vld [vmem:[%s4128 + $0x30] sm:$0xf]
        %v4142 = vld [vmem:[%s4128 + $0x34] sm:$0xf]
        %v4143 = vld [vmem:[%s4128 + $0x38] sm:$0xf]
        %v4144 = vld [vmem:[%s4128 + $0x3c] sm:$0xf]
        %v4161 = vunpack.c.l.b16 %v4129
        %v4162 = vunpack.c.l.b16 %v4130
        %v4163 = vunpack.c.l.b16 %v4131
        %v4164 = vunpack.c.l.b16 %v4132
        %v4165 = vunpack.c.l.b16 %v4133
        %v4166 = vunpack.c.l.b16 %v4134
        %v4167 = vunpack.c.l.b16 %v4135
        %v4168 = vunpack.c.l.b16 %v4136
        %v4169 = vunpack.c.l.b16 %v4137
        %v4170 = vunpack.c.l.b16 %v4138
        %v4171 = vunpack.c.l.b16 %v4139
        %v4172 = vunpack.c.l.b16 %v4140
        %v4173 = vunpack.c.l.b16 %v4141
        %v4174 = vunpack.c.l.b16 %v4142
        %v4175 = vunpack.c.l.b16 %v4143
        %v4176 = vunpack.c.l.b16 %v4144
        %v4177 = vpack.c.b16 %v4162, %v4161
        %v4178 = vpack.c.b16 %v4164, %v4163
        %v4179 = vpack.c.b16 %v4166, %v4165
        %v4180 = vpack.c.b16 %v4168, %v4167
        %v4181 = vpack.c.b16 %v4170, %v4169
        %v4182 = vpack.c.b16 %v4172, %v4171
        %v4183 = vpack.c.b16 %v4174, %v4173
        %v4184 = vpack.c.b16 %v4176, %v4175
        %4193 = vrot.lane.b32.xlu0 %v3436, 64
        %v4194 = vpop.permute.xlu0 %4193
        %4196 = vmatprep.subr.bf16.mxu0 0
        %4197 = vmatpush1.bf16.msra.mxu0 %v4177
        %4198 = vmatprep.subr.bf16.mxu0 0
        %4199 = vmatpush1.bf16.msra.mxu0 %v4178
        %4200 = vmatprep.subr.bf16.mxu0 0
        %4201 = vmatpush1.bf16.msra.mxu0 %v4179
        %4202 = vmatprep.subr.bf16.mxu0 0
        %4203 = vmatpush1.bf16.msra.mxu0 %v4180
        %4204 = vmatprep.subr.bf16.mxu0 0
        %4205 = vmatpush1.bf16.msra.mxu0 %v4181
        %4206 = vmatprep.subr.bf16.mxu0 0
        %4207 = vmatpush1.bf16.msra.mxu0 %v4182
        %4208 = vmatprep.subr.bf16.mxu0 0
        %4209 = vmatpush1.bf16.msra.mxu0 %v4183
        %4210 = vmatprep.subr.bf16.mxu0 0
        %4211 = vmatpush1.bf16.msra.mxu0 %v4184
        %4212 = vmatprep.subr.bf16.mxu0 0
        %4213 = vmatpush1.bf16.msra.mxu0 0
        %4214 = vmatprep.subr.bf16.mxu0 0
        %4215 = vmatpush1.bf16.msra.mxu0 0
        %4216 = vmatprep.subr.bf16.mxu0 0
        %4217 = vmatpush1.bf16.msra.mxu0 0
        %4218 = vmatprep.subr.bf16.mxu0 0
        %4219 = vmatpush1.bf16.msra.mxu0 0
        %4220 = vmatprep.subr.bf16.mxu0 0
        %4221 = vmatpush1.bf16.msra.mxu0 0
        %4222 = vmatprep.subr.bf16.mxu0 0
        %4223 = vmatpush1.bf16.msra.mxu0 0
        %4224 = vmatprep.subr.bf16.mxu0 0
        %4225 = vmatpush1.bf16.msra.mxu0 0
        %4226 = vmatprep.subr.bf16.mxu0 0
        %4227 = vmatpush1.bf16.msra.mxu0 0
        %4228 = vmatprep.mubr.bf16.mxu0 0
        %4229 = vmatmul.mubr.bf16.gmra.mrb[0].mxu0 %v3416
        %v4230 = vpop.f32.mrb[0].mxu0
        %v4231 = vadd.f32 %v4194, %v4230
        %v4232 = vpop.f32.mrb[0].mxu0
        %v4233 = vpop.f32.mrb[0].mxu0
        %v4234 = vadd.f32 %v4194, %v4233
        %v4235 = vpop.f32.mrb[0].mxu0
        %4236 = vdwg.mxu0
        %v4237 = vpack.c.bf16 %v4234, %v4231
        %s4238 = scalar_lea.vmem %s696, 128
        %v4239 = vld [vmem:[%s4238] sm:$0xf]
        %v4240 = vld [vmem:[%s4238 + $0x4] sm:$0xf]
        %v4241 = vld [vmem:[%s4238 + $0x8] sm:$0xf]
        %v4242 = vld [vmem:[%s4238 + $0xc] sm:$0xf]
        %v4243 = vld [vmem:[%s4238 + $0x10] sm:$0xf]
        %v4244 = vld [vmem:[%s4238 + $0x14] sm:$0xf]
        %v4245 = vld [vmem:[%s4238 + $0x18] sm:$0xf]
        %v4246 = vld [vmem:[%s4238 + $0x1c] sm:$0xf]
        %v4247 = vld [vmem:[%s4238 + $0x20] sm:$0xf]
        %v4248 = vld [vmem:[%s4238 + $0x24] sm:$0xf]
        %v4249 = vld [vmem:[%s4238 + $0x28] sm:$0xf]
        %v4250 = vld [vmem:[%s4238 + $0x2c] sm:$0xf]
        %v4251 = vld [vmem:[%s4238 + $0x30] sm:$0xf]
        %v4252 = vld [vmem:[%s4238 + $0x34] sm:$0xf]
        %v4253 = vld [vmem:[%s4238 + $0x38] sm:$0xf]
        %v4254 = vld [vmem:[%s4238 + $0x3c] sm:$0xf]
        %v4271 = vunpack.c.l.b16 %v4239
        %v4272 = vunpack.c.l.b16 %v4240
        %v4273 = vunpack.c.l.b16 %v4241
        %v4274 = vunpack.c.l.b16 %v4242
        %v4275 = vunpack.c.l.b16 %v4243
        %v4276 = vunpack.c.l.b16 %v4244
        %v4277 = vunpack.c.l.b16 %v4245
        %v4278 = vunpack.c.l.b16 %v4246
        %v4279 = vunpack.c.l.b16 %v4247
        %v4280 = vunpack.c.l.b16 %v4248
        %v4281 = vunpack.c.l.b16 %v4249
        %v4282 = vunpack.c.l.b16 %v4250
        %v4283 = vunpack.c.l.b16 %v4251
        %v4284 = vunpack.c.l.b16 %v4252
        %v4285 = vunpack.c.l.b16 %v4253
        %v4286 = vunpack.c.l.b16 %v4254
        %v4287 = vpack.c.b16 %v4272, %v4271
        %v4288 = vpack.c.b16 %v4274, %v4273
        %v4289 = vpack.c.b16 %v4276, %v4275
        %v4290 = vpack.c.b16 %v4278, %v4277
        %v4291 = vpack.c.b16 %v4280, %v4279
        %v4292 = vpack.c.b16 %v4282, %v4281
        %v4293 = vpack.c.b16 %v4284, %v4283
        %v4294 = vpack.c.b16 %v4286, %v4285
        %4303 = vrot.lane.b32.xlu0 %v3546, 64
        %v4304 = vpop.permute.xlu0 %4303
        %4306 = vmatprep.subr.bf16.mxu0 0
        %4307 = vmatpush1.bf16.msra.mxu0 %v4287
        %4308 = vmatprep.subr.bf16.mxu0 0
        %4309 = vmatpush1.bf16.msra.mxu0 %v4288
        %4310 = vmatprep.subr.bf16.mxu0 0
        %4311 = vmatpush1.bf16.msra.mxu0 %v4289
        %4312 = vmatprep.subr.bf16.mxu0 0
        %4313 = vmatpush1.bf16.msra.mxu0 %v4290
        %4314 = vmatprep.subr.bf16.mxu0 0
        %4315 = vmatpush1.bf16.msra.mxu0 %v4291
        %4316 = vmatprep.subr.bf16.mxu0 0
        %4317 = vmatpush1.bf16.msra.mxu0 %v4292
        %4318 = vmatprep.subr.bf16.mxu0 0
        %4319 = vmatpush1.bf16.msra.mxu0 %v4293
        %4320 = vmatprep.subr.bf16.mxu0 0
        %4321 = vmatpush1.bf16.msra.mxu0 %v4294
        %4322 = vmatprep.subr.bf16.mxu0 0
        %4323 = vmatpush1.bf16.msra.mxu0 0
        %4324 = vmatprep.subr.bf16.mxu0 0
        %4325 = vmatpush1.bf16.msra.mxu0 0
        %4326 = vmatprep.subr.bf16.mxu0 0
        %4327 = vmatpush1.bf16.msra.mxu0 0
        %4328 = vmatprep.subr.bf16.mxu0 0
        %4329 = vmatpush1.bf16.msra.mxu0 0
        %4330 = vmatprep.subr.bf16.mxu0 0
        %4331 = vmatpush1.bf16.msra.mxu0 0
        %4332 = vmatprep.subr.bf16.mxu0 0
        %4333 = vmatpush1.bf16.msra.mxu0 0
        %4334 = vmatprep.subr.bf16.mxu0 0
        %4335 = vmatpush1.bf16.msra.mxu0 0
        %4336 = vmatprep.subr.bf16.mxu0 0
        %4337 = vmatpush1.bf16.msra.mxu0 0
        %4338 = vmatprep.mubr.bf16.mxu0 0
        %4339 = vmatmul.mubr.bf16.gmra.mrb[0].mxu0 %v3555
        %v4340 = vpop.f32.mrb[0].mxu0
        %v4341 = vadd.f32 %v4304, %v4340
        %v4342 = vpop.f32.mrb[0].mxu0
        %v4343 = vpop.f32.mrb[0].mxu0
        %v4344 = vadd.f32 %v4304, %v4343
        %v4345 = vpop.f32.mrb[0].mxu0
        %4346 = vmatprep.mubr.bf16.mxu0 0
        %4347 = vmatmul.mubr.bf16.gmra.mrb[0].mxu0 %v3556
        %v4348 = vpop.f32.mrb[0].mxu0
        %v4349 = vadd.f32 %v4304, %v4348
        %v4350 = vpop.f32.mrb[0].mxu0
        %v4351 = vpop.f32.mrb[0].mxu0
        %v4352 = vadd.f32 %v4304, %v4351
        %v4353 = vpop.f32.mrb[0].mxu0
        %4354 = vdwg.mxu0
        %v4355 = vpack.c.bf16 %v4344, %v4341
        %v4356 = vpack.c.bf16 %v4352, %v4349
        %s4357 = scalar_lea.vmem %s701, 128
        %v4358 = vld [vmem:[%s4357] sm:$0xf]
        %v4359 = vld [vmem:[%s4357 + $0x4] sm:$0xf]
        %v4360 = vld [vmem:[%s4357 + $0x8] sm:$0xf]
        %v4361 = vld [vmem:[%s4357 + $0xc] sm:$0xf]
        %v4362 = vld [vmem:[%s4357 + $0x10] sm:$0xf]
        %v4363 = vld [vmem:[%s4357 + $0x14] sm:$0xf]
        %v4364 = vld [vmem:[%s4357 + $0x18] sm:$0xf]
        %v4365 = vld [vmem:[%s4357 + $0x1c] sm:$0xf]
        %v4366 = vld [vmem:[%s4357 + $0x20] sm:$0xf]
        %v4367 = vld [vmem:[%s4357 + $0x24] sm:$0xf]
        %v4368 = vld [vmem:[%s4357 + $0x28] sm:$0xf]
        %v4369 = vld [vmem:[%s4357 + $0x2c] sm:$0xf]
        %v4370 = vld [vmem:[%s4357 + $0x30] sm:$0xf]
        %v4371 = vld [vmem:[%s4357 + $0x34] sm:$0xf]
        %v4372 = vld [vmem:[%s4357 + $0x38] sm:$0xf]
        %v4373 = vld [vmem:[%s4357 + $0x3c] sm:$0xf]
        %v4390 = vunpack.c.l.b16 %v4358
        %v4391 = vunpack.c.l.b16 %v4359
        %v4392 = vunpack.c.l.b16 %v4360
        %v4393 = vunpack.c.l.b16 %v4361
        %v4394 = vunpack.c.l.b16 %v4362
        %v4395 = vunpack.c.l.b16 %v4363
        %v4396 = vunpack.c.l.b16 %v4364
        %v4397 = vunpack.c.l.b16 %v4365
        %v4398 = vunpack.c.l.b16 %v4366
        %v4399 = vunpack.c.l.b16 %v4367
        %v4400 = vunpack.c.l.b16 %v4368
        %v4401 = vunpack.c.l.b16 %v4369
        %v4402 = vunpack.c.l.b16 %v4370
        %v4403 = vunpack.c.l.b16 %v4371
        %v4404 = vunpack.c.l.b16 %v4372
        %v4405 = vunpack.c.l.b16 %v4373
        %v4406 = vpack.c.b16 %v4391, %v4390
        %v4407 = vpack.c.b16 %v4393, %v4392
        %v4408 = vpack.c.b16 %v4395, %v4394
        %v4409 = vpack.c.b16 %v4397, %v4396
        %v4410 = vpack.c.b16 %v4399, %v4398
        %v4411 = vpack.c.b16 %v4401, %v4400
        %v4412 = vpack.c.b16 %v4403, %v4402
        %v4413 = vpack.c.b16 %v4405, %v4404
        %4422 = vrot.lane.b32.xlu0 %v3677, 64
        %v4423 = vpop.permute.xlu0 %4422
        %4425 = vmatprep.subr.bf16.mxu0 0
        %4426 = vmatpush1.bf16.msra.mxu0 %v4406
        %4427 = vmatprep.subr.bf16.mxu0 0
        %4428 = vmatpush1.bf16.msra.mxu0 %v4407
        %4429 = vmatprep.subr.bf16.mxu0 0
        %4430 = vmatpush1.bf16.msra.mxu0 %v4408
        %4431 = vmatprep.subr.bf16.mxu0 0
        %4432 = vmatpush1.bf16.msra.mxu0 %v4409
        %4433 = vmatprep.subr.bf16.mxu0 0
        %4434 = vmatpush1.bf16.msra.mxu0 %v4410
        %4435 = vmatprep.subr.bf16.mxu0 0
        %4436 = vmatpush1.bf16.msra.mxu0 %v4411
        %4437 = vmatprep.subr.bf16.mxu0 0
        %4438 = vmatpush1.bf16.msra.mxu0 %v4412
        %4439 = vmatprep.subr.bf16.mxu0 0
        %4440 = vmatpush1.bf16.msra.mxu0 %v4413
        %4441 = vmatprep.subr.bf16.mxu0 0
        %4442 = vmatpush1.bf16.msra.mxu0 0
        %4443 = vmatprep.subr.bf16.mxu0 0
        %4444 = vmatpush1.bf16.msra.mxu0 0
        %4445 = vmatprep.subr.bf16.mxu0 0
        %4446 = vmatpush1.bf16.msra.mxu0 0
        %4447 = vmatprep.subr.bf16.mxu0 0
        %4448 = vmatpush1.bf16.msra.mxu0 0
        %4449 = vmatprep.subr.bf16.mxu0 0
        %4450 = vmatpush1.bf16.msra.mxu0 0
        %4451 = vmatprep.subr.bf16.mxu0 0
        %4452 = vmatpush1.bf16.msra.mxu0 0
        %4453 = vmatprep.subr.bf16.mxu0 0
        %4454 = vmatpush1.bf16.msra.mxu0 0
        %4455 = vmatprep.subr.bf16.mxu0 0
        %4456 = vmatpush1.bf16.msra.mxu0 0
        %4457 = vmatprep.mubr.bf16.mxu0 0
        %4458 = vmatmul.mubr.bf16.gmra.mrb[0].mxu0 %v3555
        %v4459 = vpop.f32.mrb[0].mxu0
        %v4460 = vadd.f32 %v4423, %v4459
        %v4461 = vpop.f32.mrb[0].mxu0
        %v4462 = vpop.f32.mrb[0].mxu0
        %v4463 = vadd.f32 %v4423, %v4462
        %v4464 = vpop.f32.mrb[0].mxu0
        %4465 = vmatprep.mubr.bf16.mxu0 0
        %4466 = vmatmul.mubr.bf16.gmra.mrb[0].mxu0 %v3556
        %v4467 = vpop.f32.mrb[0].mxu0
        %v4468 = vadd.f32 %v4423, %v4467
        %v4469 = vpop.f32.mrb[0].mxu0
        %v4470 = vpop.f32.mrb[0].mxu0
        %v4471 = vadd.f32 %v4423, %v4470
        %v4472 = vpop.f32.mrb[0].mxu0
        %4473 = vdwg.mxu0
        %v4474 = vpack.c.bf16 %v4463, %v4460
        %v4475 = vpack.c.bf16 %v4471, %v4468
        %s4476 = scalar_lea.vmem %s691, 192
        %v4477 = vld [vmem:[%s4476] sm:$0xf]
        %v4478 = vld [vmem:[%s4476 + $0x4] sm:$0xf]
        %v4479 = vld [vmem:[%s4476 + $0x8] sm:$0xf]
        %v4480 = vld [vmem:[%s4476 + $0xc] sm:$0xf]
        %v4481 = vld [vmem:[%s4476 + $0x10] sm:$0xf]
        %v4482 = vld [vmem:[%s4476 + $0x14] sm:$0xf]
        %v4483 = vld [vmem:[%s4476 + $0x18] sm:$0xf]
        %v4484 = vld [vmem:[%s4476 + $0x1c] sm:$0xf]
        %v4485 = vld [vmem:[%s4476 + $0x20] sm:$0xf]
        %v4486 = vld [vmem:[%s4476 + $0x24] sm:$0xf]
        %v4487 = vld [vmem:[%s4476 + $0x28] sm:$0xf]
        %v4488 = vld [vmem:[%s4476 + $0x2c] sm:$0xf]
        %v4489 = vld [vmem:[%s4476 + $0x30] sm:$0xf]
        %v4490 = vld [vmem:[%s4476 + $0x34] sm:$0xf]
        %v4491 = vld [vmem:[%s4476 + $0x38] sm:$0xf]
        %v4492 = vld [vmem:[%s4476 + $0x3c] sm:$0xf]
        %v4509 = vunpack.c.l.b16 %v4477
        %v4510 = vunpack.c.l.b16 %v4478
        %v4511 = vunpack.c.l.b16 %v4479
        %v4512 = vunpack.c.l.b16 %v4480
        %v4513 = vunpack.c.l.b16 %v4481
        %v4514 = vunpack.c.l.b16 %v4482
        %v4515 = vunpack.c.l.b16 %v4483
        %v4516 = vunpack.c.l.b16 %v4484
        %v4517 = vunpack.c.l.b16 %v4485
        %v4518 = vunpack.c.l.b16 %v4486
        %v4519 = vunpack.c.l.b16 %v4487
        %v4520 = vunpack.c.l.b16 %v4488
        %v4521 = vunpack.c.l.b16 %v4489
        %v4522 = vunpack.c.l.b16 %v4490
        %v4523 = vunpack.c.l.b16 %v4491
        %v4524 = vunpack.c.l.b16 %v4492
        %v4525 = vpack.c.b16 %v4510, %v4509
        %v4526 = vpack.c.b16 %v4512, %v4511
        %v4527 = vpack.c.b16 %v4514, %v4513
        %v4528 = vpack.c.b16 %v4516, %v4515
        %v4529 = vpack.c.b16 %v4518, %v4517
        %v4530 = vpack.c.b16 %v4520, %v4519
        %v4531 = vpack.c.b16 %v4522, %v4521
        %v4532 = vpack.c.b16 %v4524, %v4523
        %4541 = vrot.lane.b32.xlu0 %v3436, 32
        %v4542 = vpop.permute.xlu0 %4541
        %4544 = vmatprep.subr.bf16.mxu0 0
        %4545 = vmatpush1.bf16.msra.mxu0 %v4525
        %4546 = vmatprep.subr.bf16.mxu0 0
        %4547 = vmatpush1.bf16.msra.mxu0 %v4526
        %4548 = vmatprep.subr.bf16.mxu0 0
        %4549 = vmatpush1.bf16.msra.mxu0 %v4527
        %4550 = vmatprep.subr.bf16.mxu0 0
        %4551 = vmatpush1.bf16.msra.mxu0 %v4528
        %4552 = vmatprep.subr.bf16.mxu0 0
        %4553 = vmatpush1.bf16.msra.mxu0 %v4529
        %4554 = vmatprep.subr.bf16.mxu0 0
        %4555 = vmatpush1.bf16.msra.mxu0 %v4530
        %4556 = vmatprep.subr.bf16.mxu0 0
        %4557 = vmatpush1.bf16.msra.mxu0 %v4531
        %4558 = vmatprep.subr.bf16.mxu0 0
        %4559 = vmatpush1.bf16.msra.mxu0 %v4532
        %4560 = vmatprep.subr.bf16.mxu0 0
        %4561 = vmatpush1.bf16.msra.mxu0 0
        %4562 = vmatprep.subr.bf16.mxu0 0
        %4563 = vmatpush1.bf16.msra.mxu0 0
        %4564 = vmatprep.subr.bf16.mxu0 0
        %4565 = vmatpush1.bf16.msra.mxu0 0
        %4566 = vmatprep.subr.bf16.mxu0 0
        %4567 = vmatpush1.bf16.msra.mxu0 0
        %4568 = vmatprep.subr.bf16.mxu0 0
        %4569 = vmatpush1.bf16.msra.mxu0 0
        %4570 = vmatprep.subr.bf16.mxu0 0
        %4571 = vmatpush1.bf16.msra.mxu0 0
        %4572 = vmatprep.subr.bf16.mxu0 0
        %4573 = vmatpush1.bf16.msra.mxu0 0
        %4574 = vmatprep.subr.bf16.mxu0 0
        %4575 = vmatpush1.bf16.msra.mxu0 0
        %4576 = vmatprep.mubr.bf16.mxu0 0
        %4577 = vmatmul.mubr.bf16.gmra.mrb[0].mxu0 %v3416
        %v4578 = vpop.f32.mrb[0].mxu0
        %v4579 = vadd.f32 %v4542, %v4578
        %v4580 = vpop.f32.mrb[0].mxu0
        %v4581 = vpop.f32.mrb[0].mxu0
        %v4582 = vadd.f32 %v4542, %v4581
        %v4583 = vpop.f32.mrb[0].mxu0
        %4584 = vdwg.mxu0
        %v4585 = vpack.c.bf16 %v4582, %v4579
        %s4586 = scalar_lea.vmem %s696, 192
        %v4587 = vld [vmem:[%s4586] sm:$0xf]
        %v4588 = vld [vmem:[%s4586 + $0x4] sm:$0xf]
        %v4589 = vld [vmem:[%s4586 + $0x8] sm:$0xf]
        %v4590 = vld [vmem:[%s4586 + $0xc] sm:$0xf]
        %v4591 = vld [vmem:[%s4586 + $0x10] sm:$0xf]
        %v4592 = vld [vmem:[%s4586 + $0x14] sm:$0xf]
        %v4593 = vld [vmem:[%s4586 + $0x18] sm:$0xf]
        %v4594 = vld [vmem:[%s4586 + $0x1c] sm:$0xf]
        %v4595 = vld [vmem:[%s4586 + $0x20] sm:$0xf]
        %v4596 = vld [vmem:[%s4586 + $0x24] sm:$0xf]
        %v4597 = vld [vmem:[%s4586 + $0x28] sm:$0xf]
        %v4598 = vld [vmem:[%s4586 + $0x2c] sm:$0xf]
        %v4599 = vld [vmem:[%s4586 + $0x30] sm:$0xf]
        %v4600 = vld [vmem:[%s4586 + $0x34] sm:$0xf]
        %v4601 = vld [vmem:[%s4586 + $0x38] sm:$0xf]
        %v4602 = vld [vmem:[%s4586 + $0x3c] sm:$0xf]
        %v4619 = vunpack.c.l.b16 %v4587
        %v4620 = vunpack.c.l.b16 %v4588
        %v4621 = vunpack.c.l.b16 %v4589
        %v4622 = vunpack.c.l.b16 %v4590
        %v4623 = vunpack.c.l.b16 %v4591
        %v4624 = vunpack.c.l.b16 %v4592
        %v4625 = vunpack.c.l.b16 %v4593
        %v4626 = vunpack.c.l.b16 %v4594
        %v4627 = vunpack.c.l.b16 %v4595
        %v4628 = vunpack.c.l.b16 %v4596
        %v4629 = vunpack.c.l.b16 %v4597
        %v4630 = vunpack.c.l.b16 %v4598
        %v4631 = vunpack.c.l.b16 %v4599
        %v4632 = vunpack.c.l.b16 %v4600
        %v4633 = vunpack.c.l.b16 %v4601
        %v4634 = vunpack.c.l.b16 %v4602
        %v4635 = vpack.c.b16 %v4620, %v4619
        %v4636 = vpack.c.b16 %v4622, %v4621
        %v4637 = vpack.c.b16 %v4624, %v4623
        %v4638 = vpack.c.b16 %v4626, %v4625
        %v4639 = vpack.c.b16 %v4628, %v4627
        %v4640 = vpack.c.b16 %v4630, %v4629
        %v4641 = vpack.c.b16 %v4632, %v4631
        %v4642 = vpack.c.b16 %v4634, %v4633
        %4651 = vrot.lane.b32.xlu0 %v3546, 32
        %v4652 = vpop.permute.xlu0 %4651
        %4654 = vmatprep.subr.bf16.mxu0 0
        %4655 = vmatpush1.bf16.msra.mxu0 %v4635
        %4656 = vmatprep.subr.bf16.mxu0 0
        %4657 = vmatpush1.bf16.msra.mxu0 %v4636
        %4658 = vmatprep.subr.bf16.mxu0 0
        %4659 = vmatpush1.bf16.msra.mxu0 %v4637
        %4660 = vmatprep.subr.bf16.mxu0 0
        %4661 = vmatpush1.bf16.msra.mxu0 %v4638
        %4662 = vmatprep.subr.bf16.mxu0 0
        %4663 = vmatpush1.bf16.msra.mxu0 %v4639
        %4664 = vmatprep.subr.bf16.mxu0 0
        %4665 = vmatpush1.bf16.msra.mxu0 %v4640
        %4666 = vmatprep.subr.bf16.mxu0 0
        %4667 = vmatpush1.bf16.msra.mxu0 %v4641
        %4668 = vmatprep.subr.bf16.mxu0 0
        %4669 = vmatpush1.bf16.msra.mxu0 %v4642
        %4670 = vmatprep.subr.bf16.mxu0 0
        %4671 = vmatpush1.bf16.msra.mxu0 0
        %4672 = vmatprep.subr.bf16.mxu0 0
        %4673 = vmatpush1.bf16.msra.mxu0 0
        %4674 = vmatprep.subr.bf16.mxu0 0
        %4675 = vmatpush1.bf16.msra.mxu0 0
        %4676 = vmatprep.subr.bf16.mxu0 0
        %4677 = vmatpush1.bf16.msra.mxu0 0
        %4678 = vmatprep.subr.bf16.mxu0 0
        %4679 = vmatpush1.bf16.msra.mxu0 0
        %4680 = vmatprep.subr.bf16.mxu0 0
        %4681 = vmatpush1.bf16.msra.mxu0 0
        %4682 = vmatprep.subr.bf16.mxu0 0
        %4683 = vmatpush1.bf16.msra.mxu0 0
        %4684 = vmatprep.subr.bf16.mxu0 0
        %4685 = vmatpush1.bf16.msra.mxu0 0
        %4686 = vmatprep.mubr.bf16.mxu0 0
        %4687 = vmatmul.mubr.bf16.gmra.mrb[0].mxu0 %v3555
        %v4688 = vpop.f32.mrb[0].mxu0
        %v4689 = vadd.f32 %v4652, %v4688
        %v4690 = vpop.f32.mrb[0].mxu0
        %v4691 = vpop.f32.mrb[0].mxu0
        %v4692 = vadd.f32 %v4652, %v4691
        %v4693 = vpop.f32.mrb[0].mxu0
        %4694 = vmatprep.mubr.bf16.mxu0 0
        %4695 = vmatmul.mubr.bf16.gmra.mrb[0].mxu0 %v3556
        %v4696 = vpop.f32.mrb[0].mxu0
        %v4697 = vadd.f32 %v4652, %v4696
        %v4698 = vpop.f32.mrb[0].mxu0
        %v4699 = vpop.f32.mrb[0].mxu0
        %v4700 = vadd.f32 %v4652, %v4699
        %v4701 = vpop.f32.mrb[0].mxu0
        %4702 = vdwg.mxu0
        %v4703 = vpack.c.bf16 %v4692, %v4689
        %v4704 = vpack.c.bf16 %v4700, %v4697
        %s4705 = scalar_lea.vmem %s701, 192
        %v4706 = vld [vmem:[%s4705] sm:$0xf]
        %v4707 = vld [vmem:[%s4705 + $0x4] sm:$0xf]
        %v4708 = vld [vmem:[%s4705 + $0x8] sm:$0xf]
        %v4709 = vld [vmem:[%s4705 + $0xc] sm:$0xf]
        %v4710 = vld [vmem:[%s4705 + $0x10] sm:$0xf]
        %v4711 = vld [vmem:[%s4705 + $0x14] sm:$0xf]
        %v4712 = vld [vmem:[%s4705 + $0x18] sm:$0xf]
        %v4713 = vld [vmem:[%s4705 + $0x1c] sm:$0xf]
        %v4714 = vld [vmem:[%s4705 + $0x20] sm:$0xf]
        %v4715 = vld [vmem:[%s4705 + $0x24] sm:$0xf]
        %v4716 = vld [vmem:[%s4705 + $0x28] sm:$0xf]
        %v4717 = vld [vmem:[%s4705 + $0x2c] sm:$0xf]
        %v4718 = vld [vmem:[%s4705 + $0x30] sm:$0xf]
        %v4719 = vld [vmem:[%s4705 + $0x34] sm:$0xf]
        %v4720 = vld [vmem:[%s4705 + $0x38] sm:$0xf]
        %v4721 = vld [vmem:[%s4705 + $0x3c] sm:$0xf]
        %v4738 = vunpack.c.l.b16 %v4706
        %v4739 = vunpack.c.l.b16 %v4707
        %v4740 = vunpack.c.l.b16 %v4708
        %v4741 = vunpack.c.l.b16 %v4709
        %v4742 = vunpack.c.l.b16 %v4710
        %v4743 = vunpack.c.l.b16 %v4711
        %v4744 = vunpack.c.l.b16 %v4712
        %v4745 = vunpack.c.l.b16 %v4713
        %v4746 = vunpack.c.l.b16 %v4714
        %v4747 = vunpack.c.l.b16 %v4715
        %v4748 = vunpack.c.l.b16 %v4716
        %v4749 = vunpack.c.l.b16 %v4717
        %v4750 = vunpack.c.l.b16 %v4718
        %v4751 = vunpack.c.l.b16 %v4719
        %v4752 = vunpack.c.l.b16 %v4720
        %v4753 = vunpack.c.l.b16 %v4721
        %v4754 = vpack.c.b16 %v4739, %v4738
        %v4755 = vpack.c.b16 %v4741, %v4740
        %v4756 = vpack.c.b16 %v4743, %v4742
        %v4757 = vpack.c.b16 %v4745, %v4744
        %v4758 = vpack.c.b16 %v4747, %v4746
        %v4759 = vpack.c.b16 %v4749, %v4748
        %v4760 = vpack.c.b16 %v4751, %v4750
        %v4761 = vpack.c.b16 %v4753, %v4752
        %4770 = vrot.lane.b32.xlu0 %v3677, 32
        %v4771 = vpop.permute.xlu0 %4770
        %4773 = vmatprep.subr.bf16.mxu0 0
        %4774 = vmatpush1.bf16.msra.mxu0 %v4754
        %4775 = vmatprep.subr.bf16.mxu0 0
        %4776 = vmatpush1.bf16.msra.mxu0 %v4755
        %4777 = vmatprep.subr.bf16.mxu0 0
        %4778 = vmatpush1.bf16.msra.mxu0 %v4756
        %4779 = vmatprep.subr.bf16.mxu0 0
        %4780 = vmatpush1.bf16.msra.mxu0 %v4757
        %4781 = vmatprep.subr.bf16.mxu0 0
        %4782 = vmatpush1.bf16.msra.mxu0 %v4758
        %4783 = vmatprep.subr.bf16.mxu0 0
        %4784 = vmatpush1.bf16.msra.mxu0 %v4759
        %4785 = vmatprep.subr.bf16.mxu0 0
        %4786 = vmatpush1.bf16.msra.mxu0 %v4760
        %4787 = vmatprep.subr.bf16.mxu0 0
        %4788 = vmatpush1.bf16.msra.mxu0 %v4761
        %4789 = vmatprep.subr.bf16.mxu0 0
        %4790 = vmatpush1.bf16.msra.mxu0 0
        %4791 = vmatprep.subr.bf16.mxu0 0
        %4792 = vmatpush1.bf16.msra.mxu0 0
        %4793 = vmatprep.subr.bf16.mxu0 0
        %4794 = vmatpush1.bf16.msra.mxu0 0
        %4795 = vmatprep.subr.bf16.mxu0 0
        %4796 = vmatpush1.bf16.msra.mxu0 0
        %4797 = vmatprep.subr.bf16.mxu0 0
        %4798 = vmatpush1.bf16.msra.mxu0 0
        %4799 = vmatprep.subr.bf16.mxu0 0
        %4800 = vmatpush1.bf16.msra.mxu0 0
        %4801 = vmatprep.subr.bf16.mxu0 0
        %4802 = vmatpush1.bf16.msra.mxu0 0
        %4803 = vmatprep.subr.bf16.mxu0 0
        %4804 = vmatpush1.bf16.msra.mxu0 0
        %4805 = vmatprep.mubr.bf16.mxu0 0
        %4806 = vmatmul.mubr.bf16.gmra.mrb[0].mxu0 %v3555
        %v4807 = vpop.f32.mrb[0].mxu0
        %v4808 = vadd.f32 %v4771, %v4807
        %v4809 = vpop.f32.mrb[0].mxu0
        %v4810 = vpop.f32.mrb[0].mxu0
        %v4811 = vadd.f32 %v4771, %v4810
        %v4812 = vpop.f32.mrb[0].mxu0
        %4813 = vmatprep.mubr.bf16.mxu0 0
        %4814 = vmatmul.mubr.bf16.gmra.mrb[0].mxu0 %v3556
        %v4815 = vpop.f32.mrb[0].mxu0
        %v4816 = vadd.f32 %v4771, %v4815
        %v4817 = vpop.f32.mrb[0].mxu0
        %v4818 = vpop.f32.mrb[0].mxu0
        %v4819 = vadd.f32 %v4771, %v4818
        %v4820 = vpop.f32.mrb[0].mxu0
        %4821 = vdwg.mxu0
        %v4822 = vpack.c.bf16 %v4811, %v4808
        %v4823 = vpack.c.bf16 %v4819, %v4816
        %v4825 = vsel %vm2075, %v3526, 0
        %v4828 = vsel %vm2075, %v3656, 0
        %4830 = vmatprep.subr.bf16.mxu0 0
        %4831 = vmatpush1.bf16.xpose.msra.mxu0 %v4828
        %4832 = vmatprep.subr.bf16.mxu0 0
        %4833 = vmatpush1.bf16.xpose.msra.mxu0 0
        %4834 = vmatprep.subr.bf16.mxu0 0
        %4835 = vmatpush1.bf16.xpose.msra.mxu0 0
        %4836 = vmatprep.subr.bf16.mxu0 0
        %4837 = vmatpush1.bf16.xpose.msra.mxu0 0
        %4838 = vmatprep.subr.bf16.mxu0 0
        %4839 = vmatpush1.bf16.xpose.msra.mxu0 0
        %4840 = vmatprep.subr.bf16.mxu0 0
        %4841 = vmatpush1.bf16.xpose.msra.mxu0 0
        %4842 = vmatprep.subr.bf16.mxu0 0
        %4843 = vmatpush1.bf16.xpose.msra.mxu0 0
        %4844 = vmatprep.subr.bf16.mxu0 0
        %4845 = vmatpush1.bf16.xpose.msra.mxu0 0
        %4846 = vmatprep.subr.bf16.mxu0 0
        %4847 = vmatpush1.bf16.xpose.msra.mxu0 0
        %4848 = vmatprep.subr.bf16.mxu0 0
        %4849 = vmatpush1.bf16.xpose.msra.mxu0 0
        %4850 = vmatprep.subr.bf16.mxu0 0
        %4851 = vmatpush1.bf16.xpose.msra.mxu0 0
        %4852 = vmatprep.subr.bf16.mxu0 0
        %4853 = vmatpush1.bf16.xpose.msra.mxu0 0
        %4854 = vmatprep.subr.bf16.mxu0 0
        %4855 = vmatpush1.bf16.xpose.msra.mxu0 0
        %4856 = vmatprep.subr.bf16.mxu0 0
        %4857 = vmatpush1.bf16.xpose.msra.mxu0 0
        %4858 = vmatprep.subr.bf16.mxu0 0
        %4859 = vmatpush1.bf16.xpose.msra.mxu0 0
        %4860 = vmatprep.subr.bf16.mxu0 0
        %4861 = vmatpush1.bf16.xpose.msra.mxu0 0
        %4862 = vmatprep.mubr.bf16.mxu0 0
        %4863 = vmatmul.mubr.bf16.gmra.mrb[0].mxu0 %v4825
        %v4864 = vpop.f32.mrb[0].mxu0
        %v4865 = vadd.f32 0.0, %v4864
        %v4866 = vpop.f32.mrb[0].mxu0
        %v4867 = vpop.f32.mrb[0].mxu0
        %v4868 = vpop.f32.mrb[0].mxu0
        %4869 = vdwg.mxu0
        %vm4870 = vcmask 130048
        %v4871 = vsel %vm4870, %v4865, -inf
        %4872 = vmax.xlane.f32.xlu0 %v4871
        %v4873 = vpop.xlane.xlu0 %4872
        %v4874 = vsub.f32 %v4865, %v4873
        %v4875 = vmul.f32 %v4874, 1.442695
        %v4876 = vpow.pop %v4875
        %v4877 = vsel %vm4870, %v4876, 0.0
        %4878 = vadd.xlane.f32.xlu0 %v4877
        %v4879 = vpop.xlane.xlu0 %4878
        %v4880 = vrcp.pop %v4879
        %v4881 = vmul.f32 %v4876, %v4880
        %v4882 = vpack.c.bf16 %v4881, %v4881
        %v4884 = vsel %vm4870, %v4882, 0
        %4886 = vmatprep.subr.bf16.mxu0 0
        %4887 = vmatpush1.bf16.msra.mxu0 %v3775
        %4888 = vmatprep.subr.bf16.mxu0 0
        %4889 = vmatpush1.bf16.msra.mxu0 0
        %4890 = vmatprep.subr.bf16.mxu0 0
        %4891 = vmatpush1.bf16.msra.mxu0 0
        %4892 = vmatprep.subr.bf16.mxu0 0
        %4893 = vmatpush1.bf16.msra.mxu0 0
        %4894 = vmatprep.subr.bf16.mxu0 0
        %4895 = vmatpush1.bf16.msra.mxu0 0
        %4896 = vmatprep.subr.bf16.mxu0 0
        %4897 = vmatpush1.bf16.msra.mxu0 0
        %4898 = vmatprep.subr.bf16.mxu0 0
        %4899 = vmatpush1.bf16.msra.mxu0 0
        %4900 = vmatprep.subr.bf16.mxu0 0
        %4901 = vmatpush1.bf16.msra.mxu0 0
        %4902 = vmatprep.subr.bf16.mxu0 0
        %4903 = vmatpush1.bf16.msra.mxu0 0
        %4904 = vmatprep.subr.bf16.mxu0 0
        %4905 = vmatpush1.bf16.msra.mxu0 0
        %4906 = vmatprep.subr.bf16.mxu0 0
        %4907 = vmatpush1.bf16.msra.mxu0 0
        %4908 = vmatprep.subr.bf16.mxu0 0
        %4909 = vmatpush1.bf16.msra.mxu0 0
        %4910 = vmatprep.subr.bf16.mxu0 0
        %4911 = vmatpush1.bf16.msra.mxu0 0
        %4912 = vmatprep.subr.bf16.mxu0 0
        %4913 = vmatpush1.bf16.msra.mxu0 0
        %4914 = vmatprep.subr.bf16.mxu0 0
        %4915 = vmatpush1.bf16.msra.mxu0 0
        %4916 = vmatprep.subr.bf16.mxu0 0
        %4917 = vmatpush1.bf16.msra.mxu0 0
        %4918 = vmatprep.mubr.bf16.mxu0 0
        %4919 = vmatmul.mubr.bf16.gmra.mrb[0].mxu0 %v4884
        %v4920 = vpop.f32.mrb[0].mxu0
        %v4921 = vadd.f32 0.0, %v4920
        %v4922 = vpop.f32.mrb[0].mxu0
        %v4923 = vpop.f32.mrb[0].mxu0
        %v4924 = vpop.f32.mrb[0].mxu0
        %4925 = vdwg.mxu0
        %v4926 = vpack.c.bf16 %v4921, %v4921
        %v4927 = vld [vmem:[%s706] sm:$0xf]
        %v4928 = vld [vmem:[%s706 + $0x4] sm:$0xf]
        %v4929 = vld [vmem:[%s706 + $0x8] sm:$0xf]
        %v4930 = vld [vmem:[%s706 + $0xc] sm:$0xf]
        %v4932 = vsel %vm2075, %v3887, 0
        %v4935 = vsel %vm2075, %v4006, 0
        %4937 = vmatprep.subr.bf16.mxu0 0
        %4938 = vmatpush1.bf16.xpose.msra.mxu0 %v4935
        %4939 = vmatprep.subr.bf16.mxu0 0
        %4940 = vmatpush1.bf16.xpose.msra.mxu0 0
        %4941 = vmatprep.subr.bf16.mxu0 0
        %4942 = vmatpush1.bf16.xpose.msra.mxu0 0
        %4943 = vmatprep.subr.bf16.mxu0 0
        %4944 = vmatpush1.bf16.xpose.msra.mxu0 0
        %4945 = vmatprep.subr.bf16.mxu0 0
        %4946 = vmatpush1.bf16.xpose.msra.mxu0 0
        %4947 = vmatprep.subr.bf16.mxu0 0
        %4948 = vmatpush1.bf16.xpose.msra.mxu0 0
        %4949 = vmatprep.subr.bf16.mxu0 0
        %4950 = vmatpush1.bf16.xpose.msra.mxu0 0
        %4951 = vmatprep.subr.bf16.mxu0 0
        %4952 = vmatpush1.bf16.xpose.msra.mxu0 0
        %4953 = vmatprep.subr.bf16.mxu0 0
        %4954 = vmatpush1.bf16.xpose.msra.mxu0 0
        %4955 = vmatprep.subr.bf16.mxu0 0
        %4956 = vmatpush1.bf16.xpose.msra.mxu0 0
        %4957 = vmatprep.subr.bf16.mxu0 0
        %4958 = vmatpush1.bf16.xpose.msra.mxu0 0
        %4959 = vmatprep.subr.bf16.mxu0 0
        %4960 = vmatpush1.bf16.xpose.msra.mxu0 0
        %4961 = vmatprep.subr.bf16.mxu0 0
        %4962 = vmatpush1.bf16.xpose.msra.mxu0 0
        %4963 = vmatprep.subr.bf16.mxu0 0
        %4964 = vmatpush1.bf16.xpose.msra.mxu0 0
        %4965 = vmatprep.subr.bf16.mxu0 0
        %4966 = vmatpush1.bf16.xpose.msra.mxu0 0
        %4967 = vmatprep.subr.bf16.mxu0 0
        %4968 = vmatpush1.bf16.xpose.msra.mxu0 0
        %4969 = vmatprep.mubr.bf16.mxu0 0
        %4970 = vmatmul.mubr.bf16.gmra.mrb[0].mxu0 %v4932
        %v4971 = vpop.f32.mrb[0].mxu0
        %v4972 = vadd.f32 0.0, %v4971
        %v4973 = vpop.f32.mrb[0].mxu0
        %v4974 = vpop.f32.mrb[0].mxu0
        %v4975 = vpop.f32.mrb[0].mxu0
        %4976 = vdwg.mxu0
        %v4977 = vsel %vm4870, %v4972, -inf
        %4978 = vmax.xlane.f32.xlu0 %v4977
        %v4979 = vpop.xlane.xlu0 %4978
        %v4980 = vsub.f32 %v4972, %v4979
        %v4981 = vmul.f32 %v4980, 1.442695
        %v4982 = vpow.pop %v4981
        %v4983 = vsel %vm4870, %v4982, 0.0
        %4984 = vadd.xlane.f32.xlu0 %v4983
        %v4985 = vpop.xlane.xlu0 %4984
        %v4986 = vrcp.pop %v4985
        %v4987 = vmul.f32 %v4982, %v4986
        %v4988 = vpack.c.bf16 %v4987, %v4987
        %v4990 = vsel %vm4870, %v4988, 0
        %4992 = vmatprep.subr.bf16.mxu0 0
        %4993 = vmatpush1.bf16.msra.mxu0 %v4126
        %4994 = vmatprep.subr.bf16.mxu0 0
        %4995 = vmatpush1.bf16.msra.mxu0 0
        %4996 = vmatprep.subr.bf16.mxu0 0
        %4997 = vmatpush1.bf16.msra.mxu0 0
        %4998 = vmatprep.subr.bf16.mxu0 0
        %4999 = vmatpush1.bf16.msra.mxu0 0
        %5000 = vmatprep.subr.bf16.mxu0 0
        %5001 = vmatpush1.bf16.msra.mxu0 0
        %5002 = vmatprep.subr.bf16.mxu0 0
        %5003 = vmatpush1.bf16.msra.mxu0 0
        %5004 = vmatprep.subr.bf16.mxu0 0
        %5005 = vmatpush1.bf16.msra.mxu0 0
        %5006 = vmatprep.subr.bf16.mxu0 0
        %5007 = vmatpush1.bf16.msra.mxu0 0
        %5008 = vmatprep.subr.bf16.mxu0 0
        %5009 = vmatpush1.bf16.msra.mxu0 0
        %5010 = vmatprep.subr.bf16.mxu0 0
        %5011 = vmatpush1.bf16.msra.mxu0 0
        %5012 = vmatprep.subr.bf16.mxu0 0
        %5013 = vmatpush1.bf16.msra.mxu0 0
        %5014 = vmatprep.subr.bf16.mxu0 0
        %5015 = vmatpush1.bf16.msra.mxu0 0
        %5016 = vmatprep.subr.bf16.mxu0 0
        %5017 = vmatpush1.bf16.msra.mxu0 0
        %5018 = vmatprep.subr.bf16.mxu0 0
        %5019 = vmatpush1.bf16.msra.mxu0 0
        %5020 = vmatprep.subr.bf16.mxu0 0
        %5021 = vmatpush1.bf16.msra.mxu0 0
        %5022 = vmatprep.subr.bf16.mxu0 0
        %5023 = vmatpush1.bf16.msra.mxu0 0
        %5024 = vmatprep.mubr.bf16.mxu0 0
        %5025 = vmatmul.mubr.bf16.gmra.mrb[0].mxu0 %v4990
        %v5026 = vpop.f32.mrb[0].mxu0
        %v5027 = vadd.f32 0.0, %v5026
        %v5028 = vpop.f32.mrb[0].mxu0
        %v5029 = vpop.f32.mrb[0].mxu0
        %v5030 = vpop.f32.mrb[0].mxu0
        %5031 = vdwg.mxu0
        %v5032 = vpack.c.bf16 %v5027, %v5027
        %s5033 = scalar_lea.vmem %s706, 16
        %v5034 = vld [vmem:[%s5033] sm:$0xf]
        %v5035 = vld [vmem:[%s5033 + $0x4] sm:$0xf]
        %v5036 = vld [vmem:[%s5033 + $0x8] sm:$0xf]
        %v5037 = vld [vmem:[%s5033 + $0xc] sm:$0xf]
        %v5042 = vunpack.c.l.b16 %v5034
        %v5043 = vunpack.c.l.b16 %v5035
        %v5044 = vunpack.c.l.b16 %v5036
        %v5045 = vunpack.c.l.b16 %v5037
        %v5046 = vpack.c.b16 %v5043, %v5042
        %v5047 = vpack.c.b16 %v5045, %v5044
        %v5051 = vsel %vm2075, %v5032, 0
        %5053 = vmatprep.subr.bf16.mxu0 0
        %5054 = vmatpush1.bf16.msra.mxu0 %v5046
        %5055 = vmatprep.subr.bf16.mxu0 0
        %5056 = vmatpush1.bf16.msra.mxu0 %v5047
        %5057 = vmatprep.subr.bf16.mxu0 0
        %5058 = vmatpush1.bf16.msra.mxu0 0
        %5059 = vmatprep.subr.bf16.mxu0 0
        %5060 = vmatpush1.bf16.msra.mxu0 0
        %5061 = vmatprep.subr.bf16.mxu0 0
        %5062 = vmatpush1.bf16.msra.mxu0 0
        %5063 = vmatprep.subr.bf16.mxu0 0
        %5064 = vmatpush1.bf16.msra.mxu0 0
        %5065 = vmatprep.subr.bf16.mxu0 0
        %5066 = vmatpush1.bf16.msra.mxu0 0
        %5067 = vmatprep.subr.bf16.mxu0 0
        %5068 = vmatpush1.bf16.msra.mxu0 0
        %5069 = vmatprep.subr.bf16.mxu0 0
        %5070 = vmatpush1.bf16.msra.mxu0 0
        %5071 = vmatprep.subr.bf16.mxu0 0
        %5072 = vmatpush1.bf16.msra.mxu0 0
        %5073 = vmatprep.subr.bf16.mxu0 0
        %5074 = vmatpush1.bf16.msra.mxu0 0
        %5075 = vmatprep.subr.bf16.mxu0 0
        %5076 = vmatpush1.bf16.msra.mxu0 0
        %5077 = vmatprep.subr.bf16.mxu0 0
        %5078 = vmatpush1.bf16.msra.mxu0 0
        %5079 = vmatprep.subr.bf16.mxu0 0
        %5080 = vmatpush1.bf16.msra.mxu0 0
        %5081 = vmatprep.subr.bf16.mxu0 0
        %5082 = vmatpush1.bf16.msra.mxu0 0
        %5083 = vmatprep.subr.bf16.mxu0 0
        %5084 = vmatpush1.bf16.msra.mxu0 0
        %5085 = vmatprep.mubr.bf16.mxu0 0
        %5086 = vmatmul.mubr.bf16.gmra.mrb[0].mxu0 %v5051
        %v5087 = vpop.f32.mrb[0].mxu0
        %v5088 = vadd.f32 0.0, %v5087
        %v5089 = vpop.f32.mrb[0].mxu0
        %v5090 = vpop.f32.mrb[0].mxu0
        %v5091 = vpop.f32.mrb[0].mxu0
        %5092 = vdwg.mxu0
        %v5097 = vunpack.c.l.b16 %v4927
        %v5098 = vunpack.c.l.b16 %v4928
        %v5099 = vunpack.c.l.b16 %v4929
        %v5100 = vunpack.c.l.b16 %v4930
        %v5101 = vpack.c.b16 %v5098, %v5097
        %v5102 = vpack.c.b16 %v5100, %v5099
        %v5106 = vsel %vm2075, %v4926, 0
        %5108 = vmatprep.subr.bf16.mxu0 0
        %5109 = vmatpush1.bf16.msra.mxu0 %v5101
        %5110 = vmatprep.subr.bf16.mxu0 0
        %5111 = vmatpush1.bf16.msra.mxu0 %v5102
        %5112 = vmatprep.subr.bf16.mxu0 0
        %5113 = vmatpush1.bf16.msra.mxu0 0
        %5114 = vmatprep.subr.bf16.mxu0 0
        %5115 = vmatpush1.bf16.msra.mxu0 0
        %5116 = vmatprep.subr.bf16.mxu0 0
        %5117 = vmatpush1.bf16.msra.mxu0 0
        %5118 = vmatprep.subr.bf16.mxu0 0
        %5119 = vmatpush1.bf16.msra.mxu0 0
        %5120 = vmatprep.subr.bf16.mxu0 0
        %5121 = vmatpush1.bf16.msra.mxu0 0
        %5122 = vmatprep.subr.bf16.mxu0 0
        %5123 = vmatpush1.bf16.msra.mxu0 0
        %5124 = vmatprep.subr.bf16.mxu0 0
        %5125 = vmatpush1.bf16.msra.mxu0 0
        %5126 = vmatprep.subr.bf16.mxu0 0
        %5127 = vmatpush1.bf16.msra.mxu0 0
        %5128 = vmatprep.subr.bf16.mxu0 0
        %5129 = vmatpush1.bf16.msra.mxu0 0
        %5130 = vmatprep.subr.bf16.mxu0 0
        %5131 = vmatpush1.bf16.msra.mxu0 0
        %5132 = vmatprep.subr.bf16.mxu0 0
        %5133 = vmatpush1.bf16.msra.mxu0 0
        %5134 = vmatprep.subr.bf16.mxu0 0
        %5135 = vmatpush1.bf16.msra.mxu0 0
        %5136 = vmatprep.subr.bf16.mxu0 0
        %5137 = vmatpush1.bf16.msra.mxu0 0
        %5138 = vmatprep.subr.bf16.mxu0 0
        %5139 = vmatpush1.bf16.msra.mxu0 0
        %5140 = vmatprep.mubr.bf16.mxu0 0
        %5141 = vmatmul.mubr.bf16.gmra.mrb[0].mxu0 %v5106
        %v5142 = vpop.f32.mrb[0].mxu0
        %v5143 = vadd.f32 %v5088, %v5142
        %v5144 = vpop.f32.mrb[0].mxu0
        %v5145 = vpop.f32.mrb[0].mxu0
        %v5146 = vpop.f32.mrb[0].mxu0
        %5147 = vdwg.mxu0
        %v5149 = vsel %vm2075, %v4237, 0
        %v5152 = vsel %vm2075, %v4355, 0
        %5154 = vmatprep.subr.bf16.mxu0 0
        %5155 = vmatpush1.bf16.xpose.msra.mxu0 %v5152
        %5156 = vmatprep.subr.bf16.mxu0 0
        %5157 = vmatpush1.bf16.xpose.msra.mxu0 0
        %5158 = vmatprep.subr.bf16.mxu0 0
        %5159 = vmatpush1.bf16.xpose.msra.mxu0 0
        %5160 = vmatprep.subr.bf16.mxu0 0
        %5161 = vmatpush1.bf16.xpose.msra.mxu0 0
        %5162 = vmatprep.subr.bf16.mxu0 0
        %5163 = vmatpush1.bf16.xpose.msra.mxu0 0
        %5164 = vmatprep.subr.bf16.mxu0 0
        %5165 = vmatpush1.bf16.xpose.msra.mxu0 0
        %5166 = vmatprep.subr.bf16.mxu0 0
        %5167 = vmatpush1.bf16.xpose.msra.mxu0 0
        %5168 = vmatprep.subr.bf16.mxu0 0
        %5169 = vmatpush1.bf16.xpose.msra.mxu0 0
        %5170 = vmatprep.subr.bf16.mxu0 0
        %5171 = vmatpush1.bf16.xpose.msra.mxu0 0
        %5172 = vmatprep.subr.bf16.mxu0 0
        %5173 = vmatpush1.bf16.xpose.msra.mxu0 0
        %5174 = vmatprep.subr.bf16.mxu0 0
        %5175 = vmatpush1.bf16.xpose.msra.mxu0 0
        %5176 = vmatprep.subr.bf16.mxu0 0
        %5177 = vmatpush1.bf16.xpose.msra.mxu0 0
        %5178 = vmatprep.subr.bf16.mxu0 0
        %5179 = vmatpush1.bf16.xpose.msra.mxu0 0
        %5180 = vmatprep.subr.bf16.mxu0 0
        %5181 = vmatpush1.bf16.xpose.msra.mxu0 0
        %5182 = vmatprep.subr.bf16.mxu0 0
        %5183 = vmatpush1.bf16.xpose.msra.mxu0 0
        %5184 = vmatprep.subr.bf16.mxu0 0
        %5185 = vmatpush1.bf16.xpose.msra.mxu0 0
        %5186 = vmatprep.mubr.bf16.mxu0 0
        %5187 = vmatmul.mubr.bf16.gmra.mrb[0].mxu0 %v5149
        %v5188 = vpop.f32.mrb[0].mxu0
        %v5189 = vadd.f32 0.0, %v5188
        %v5190 = vpop.f32.mrb[0].mxu0
        %v5191 = vpop.f32.mrb[0].mxu0
        %v5192 = vpop.f32.mrb[0].mxu0
        %5193 = vdwg.mxu0
        %v5194 = vsel %vm4870, %v5189, -inf
        %5195 = vmax.xlane.f32.xlu0 %v5194
        %v5196 = vpop.xlane.xlu0 %5195
        %v5197 = vsub.f32 %v5189, %v5196
        %v5198 = vmul.f32 %v5197, 1.442695
        %v5199 = vpow.pop %v5198
        %v5200 = vsel %vm4870, %v5199, 0.0
        %5201 = vadd.xlane.f32.xlu0 %v5200
        %v5202 = vpop.xlane.xlu0 %5201
        %v5203 = vrcp.pop %v5202
        %v5204 = vmul.f32 %v5199, %v5203
        %v5205 = vpack.c.bf16 %v5204, %v5204
        %v5207 = vsel %vm4870, %v5205, 0
        %5209 = vmatprep.subr.bf16.mxu0 0
        %5210 = vmatpush1.bf16.msra.mxu0 %v4474
        %5211 = vmatprep.subr.bf16.mxu0 0
        %5212 = vmatpush1.bf16.msra.mxu0 0
        %5213 = vmatprep.subr.bf16.mxu0 0
        %5214 = vmatpush1.bf16.msra.mxu0 0
        %5215 = vmatprep.subr.bf16.mxu0 0
        %5216 = vmatpush1.bf16.msra.mxu0 0
        %5217 = vmatprep.subr.bf16.mxu0 0
        %5218 = vmatpush1.bf16.msra.mxu0 0
        %5219 = vmatprep.subr.bf16.mxu0 0
        %5220 = vmatpush1.bf16.msra.mxu0 0
        %5221 = vmatprep.subr.bf16.mxu0 0
        %5222 = vmatpush1.bf16.msra.mxu0 0
        %5223 = vmatprep.subr.bf16.mxu0 0
        %5224 = vmatpush1.bf16.msra.mxu0 0
        %5225 = vmatprep.subr.bf16.mxu0 0
        %5226 = vmatpush1.bf16.msra.mxu0 0
        %5227 = vmatprep.subr.bf16.mxu0 0
        %5228 = vmatpush1.bf16.msra.mxu0 0
        %5229 = vmatprep.subr.bf16.mxu0 0
        %5230 = vmatpush1.bf16.msra.mxu0 0
        %5231 = vmatprep.subr.bf16.mxu0 0
        %5232 = vmatpush1.bf16.msra.mxu0 0
        %5233 = vmatprep.subr.bf16.mxu0 0
        %5234 = vmatpush1.bf16.msra.mxu0 0
        %5235 = vmatprep.subr.bf16.mxu0 0
        %5236 = vmatpush1.bf16.msra.mxu0 0
        %5237 = vmatprep.subr.bf16.mxu0 0
        %5238 = vmatpush1.bf16.msra.mxu0 0
        %5239 = vmatprep.subr.bf16.mxu0 0
        %5240 = vmatpush1.bf16.msra.mxu0 0
        %5241 = vmatprep.mubr.bf16.mxu0 0
        %5242 = vmatmul.mubr.bf16.gmra.mrb[0].mxu0 %v5207
        %v5243 = vpop.f32.mrb[0].mxu0
        %v5244 = vadd.f32 0.0, %v5243
        %v5245 = vpop.f32.mrb[0].mxu0
        %v5246 = vpop.f32.mrb[0].mxu0
        %v5247 = vpop.f32.mrb[0].mxu0
        %5248 = vdwg.mxu0
        %v5249 = vpack.c.bf16 %v5244, %v5244
        %s5250 = scalar_lea.vmem %s706, 32
        %v5251 = vld [vmem:[%s5250] sm:$0xf]
        %v5252 = vld [vmem:[%s5250 + $0x4] sm:$0xf]
        %v5253 = vld [vmem:[%s5250 + $0x8] sm:$0xf]
        %v5254 = vld [vmem:[%s5250 + $0xc] sm:$0xf]
        %v5259 = vunpack.c.l.b16 %v5251
        %v5260 = vunpack.c.l.b16 %v5252
        %v5261 = vunpack.c.l.b16 %v5253
        %v5262 = vunpack.c.l.b16 %v5254
        %v5263 = vpack.c.b16 %v5260, %v5259
        %v5264 = vpack.c.b16 %v5262, %v5261
        %v5268 = vsel %vm2075, %v5249, 0
        %5270 = vmatprep.subr.bf16.mxu0 0
        %5271 = vmatpush1.bf16.msra.mxu0 %v5263
        %5272 = vmatprep.subr.bf16.mxu0 0
        %5273 = vmatpush1.bf16.msra.mxu0 %v5264
        %5274 = vmatprep.subr.bf16.mxu0 0
        %5275 = vmatpush1.bf16.msra.mxu0 0
        %5276 = vmatprep.subr.bf16.mxu0 0
        %5277 = vmatpush1.bf16.msra.mxu0 0
        %5278 = vmatprep.subr.bf16.mxu0 0
        %5279 = vmatpush1.bf16.msra.mxu0 0
        %5280 = vmatprep.subr.bf16.mxu0 0
        %5281 = vmatpush1.bf16.msra.mxu0 0
        %5282 = vmatprep.subr.bf16.mxu0 0
        %5283 = vmatpush1.bf16.msra.mxu0 0
        %5284 = vmatprep.subr.bf16.mxu0 0
        %5285 = vmatpush1.bf16.msra.mxu0 0
        %5286 = vmatprep.subr.bf16.mxu0 0
        %5287 = vmatpush1.bf16.msra.mxu0 0
        %5288 = vmatprep.subr.bf16.mxu0 0
        %5289 = vmatpush1.bf16.msra.mxu0 0
        %5290 = vmatprep.subr.bf16.mxu0 0
        %5291 = vmatpush1.bf16.msra.mxu0 0
        %5292 = vmatprep.subr.bf16.mxu0 0
        %5293 = vmatpush1.bf16.msra.mxu0 0
        %5294 = vmatprep.subr.bf16.mxu0 0
        %5295 = vmatpush1.bf16.msra.mxu0 0
        %5296 = vmatprep.subr.bf16.mxu0 0
        %5297 = vmatpush1.bf16.msra.mxu0 0
        %5298 = vmatprep.subr.bf16.mxu0 0
        %5299 = vmatpush1.bf16.msra.mxu0 0
        %5300 = vmatprep.subr.bf16.mxu0 0
        %5301 = vmatpush1.bf16.msra.mxu0 0
        %5302 = vmatprep.mubr.bf16.mxu0 0
        %5303 = vmatmul.mubr.bf16.gmra.mrb[0].mxu0 %v5268
        %v5304 = vpop.f32.mrb[0].mxu0
        %v5305 = vadd.f32 0.0, %v5304
        %v5306 = vpop.f32.mrb[0].mxu0
        %v5307 = vpop.f32.mrb[0].mxu0
        %v5308 = vpop.f32.mrb[0].mxu0
        %5309 = vdwg.mxu0
        %v5310 = vadd.f32 %v5143, %v5305
        %v5312 = vsel %vm2075, %v4585, 0
        %v5315 = vsel %vm2075, %v4703, 0
        %5317 = vmatprep.subr.bf16.mxu0 0
        %5318 = vmatpush1.bf16.xpose.msra.mxu0 %v5315
        %5319 = vmatprep.subr.bf16.mxu0 0
        %5320 = vmatpush1.bf16.xpose.msra.mxu0 0
        %5321 = vmatprep.subr.bf16.mxu0 0
        %5322 = vmatpush1.bf16.xpose.msra.mxu0 0
        %5323 = vmatprep.subr.bf16.mxu0 0
        %5324 = vmatpush1.bf16.xpose.msra.mxu0 0
        %5325 = vmatprep.subr.bf16.mxu0 0
        %5326 = vmatpush1.bf16.xpose.msra.mxu0 0
        %5327 = vmatprep.subr.bf16.mxu0 0
        %5328 = vmatpush1.bf16.xpose.msra.mxu0 0
        %5329 = vmatprep.subr.bf16.mxu0 0
        %5330 = vmatpush1.bf16.xpose.msra.mxu0 0
        %5331 = vmatprep.subr.bf16.mxu0 0
        %5332 = vmatpush1.bf16.xpose.msra.mxu0 0
        %5333 = vmatprep.subr.bf16.mxu0 0
        %5334 = vmatpush1.bf16.xpose.msra.mxu0 0
        %5335 = vmatprep.subr.bf16.mxu0 0
        %5336 = vmatpush1.bf16.xpose.msra.mxu0 0
        %5337 = vmatprep.subr.bf16.mxu0 0
        %5338 = vmatpush1.bf16.xpose.msra.mxu0 0
        %5339 = vmatprep.subr.bf16.mxu0 0
        %5340 = vmatpush1.bf16.xpose.msra.mxu0 0
        %5341 = vmatprep.subr.bf16.mxu0 0
        %5342 = vmatpush1.bf16.xpose.msra.mxu0 0
        %5343 = vmatprep.subr.bf16.mxu0 0
        %5344 = vmatpush1.bf16.xpose.msra.mxu0 0
        %5345 = vmatprep.subr.bf16.mxu0 0
        %5346 = vmatpush1.bf16.xpose.msra.mxu0 0
        %5347 = vmatprep.subr.bf16.mxu0 0
        %5348 = vmatpush1.bf16.xpose.msra.mxu0 0
        %5349 = vmatprep.mubr.bf16.mxu0 0
        %5350 = vmatmul.mubr.bf16.gmra.mrb[0].mxu0 %v5312
        %v5351 = vpop.f32.mrb[0].mxu0
        %v5352 = vadd.f32 0.0, %v5351
        %v5353 = vpop.f32.mrb[0].mxu0
        %v5354 = vpop.f32.mrb[0].mxu0
        %v5355 = vpop.f32.mrb[0].mxu0
        %5356 = vdwg.mxu0
        %v5357 = vsel %vm4870, %v5352, -inf
        %5358 = vmax.xlane.f32.xlu0 %v5357
        %v5359 = vpop.xlane.xlu0 %5358
        %v5360 = vsub.f32 %v5352, %v5359
        %v5361 = vmul.f32 %v5360, 1.442695
        %v5362 = vpow.pop %v5361
        %v5363 = vsel %vm4870, %v5362, 0.0
        %5364 = vadd.xlane.f32.xlu0 %v5363
        %v5365 = vpop.xlane.xlu0 %5364
        %v5366 = vrcp.pop %v5365
        %v5367 = vmul.f32 %v5362, %v5366
        %v5368 = vpack.c.bf16 %v5367, %v5367
        %v5370 = vsel %vm4870, %v5368, 0
        %5372 = vmatprep.subr.bf16.mxu0 0
        %5373 = vmatpush1.bf16.msra.mxu0 %v4822
        %5374 = vmatprep.subr.bf16.mxu0 0
        %5375 = vmatpush1.bf16.msra.mxu0 0
        %5376 = vmatprep.subr.bf16.mxu0 0
        %5377 = vmatpush1.bf16.msra.mxu0 0
        %5378 = vmatprep.subr.bf16.mxu0 0
        %5379 = vmatpush1.bf16.msra.mxu0 0
        %5380 = vmatprep.subr.bf16.mxu0 0
        %5381 = vmatpush1.bf16.msra.mxu0 0
        %5382 = vmatprep.subr.bf16.mxu0 0
        %5383 = vmatpush1.bf16.msra.mxu0 0
        %5384 = vmatprep.subr.bf16.mxu0 0
        %5385 = vmatpush1.bf16.msra.mxu0 0
        %5386 = vmatprep.subr.bf16.mxu0 0
        %5387 = vmatpush1.bf16.msra.mxu0 0
        %5388 = vmatprep.subr.bf16.mxu0 0
        %5389 = vmatpush1.bf16.msra.mxu0 0
        %5390 = vmatprep.subr.bf16.mxu0 0
        %5391 = vmatpush1.bf16.msra.mxu0 0
        %5392 = vmatprep.subr.bf16.mxu0 0
        %5393 = vmatpush1.bf16.msra.mxu0 0
        %5394 = vmatprep.subr.bf16.mxu0 0
        %5395 = vmatpush1.bf16.msra.mxu0 0
        %5396 = vmatprep.subr.bf16.mxu0 0
        %5397 = vmatpush1.bf16.msra.mxu0 0
        %5398 = vmatprep.subr.bf16.mxu0 0
        %5399 = vmatpush1.bf16.msra.mxu0 0
        %5400 = vmatprep.subr.bf16.mxu0 0
        %5401 = vmatpush1.bf16.msra.mxu0 0
        %5402 = vmatprep.subr.bf16.mxu0 0
        %5403 = vmatpush1.bf16.msra.mxu0 0
        %5404 = vmatprep.mubr.bf16.mxu0 0
        %5405 = vmatmul.mubr.bf16.gmra.mrb[0].mxu0 %v5370
        %v5406 = vpop.f32.mrb[0].mxu0
        %v5407 = vadd.f32 0.0, %v5406
        %v5408 = vpop.f32.mrb[0].mxu0
        %v5409 = vpop.f32.mrb[0].mxu0
        %v5410 = vpop.f32.mrb[0].mxu0
        %5411 = vdwg.mxu0
        %v5412 = vpack.c.bf16 %v5407, %v5407
        %s5413 = scalar_lea.vmem %s706, 48
        %v5414 = vld [vmem:[%s5413] sm:$0xf]
        %v5415 = vld [vmem:[%s5413 + $0x4] sm:$0xf]
        %v5416 = vld [vmem:[%s5413 + $0x8] sm:$0xf]
        %v5417 = vld [vmem:[%s5413 + $0xc] sm:$0xf]
        %v5422 = vunpack.c.l.b16 %v5414
        %v5423 = vunpack.c.l.b16 %v5415
        %v5424 = vunpack.c.l.b16 %v5416
        %v5425 = vunpack.c.l.b16 %v5417
        %v5426 = vpack.c.b16 %v5423, %v5422
        %v5427 = vpack.c.b16 %v5425, %v5424
        %v5431 = vsel %vm2075, %v5412, 0
        %5433 = vmatprep.subr.bf16.mxu0 0
        %5434 = vmatpush1.bf16.msra.mxu0 %v5426
        %5435 = vmatprep.subr.bf16.mxu0 0
        %5436 = vmatpush1.bf16.msra.mxu0 %v5427
        %5437 = vmatprep.subr.bf16.mxu0 0
        %5438 = vmatpush1.bf16.msra.mxu0 0
        %5439 = vmatprep.subr.bf16.mxu0 0
        %5440 = vmatpush1.bf16.msra.mxu0 0
        %5441 = vmatprep.subr.bf16.mxu0 0
        %5442 = vmatpush1.bf16.msra.mxu0 0
        %5443 = vmatprep.subr.bf16.mxu0 0
        %5444 = vmatpush1.bf16.msra.mxu0 0
        %5445 = vmatprep.subr.bf16.mxu0 0
        %5446 = vmatpush1.bf16.msra.mxu0 0
        %5447 = vmatprep.subr.bf16.mxu0 0
        %5448 = vmatpush1.bf16.msra.mxu0 0
        %5449 = vmatprep.subr.bf16.mxu0 0
        %5450 = vmatpush1.bf16.msra.mxu0 0
        %5451 = vmatprep.subr.bf16.mxu0 0
        %5452 = vmatpush1.bf16.msra.mxu0 0
        %5453 = vmatprep.subr.bf16.mxu0 0
        %5454 = vmatpush1.bf16.msra.mxu0 0
        %5455 = vmatprep.subr.bf16.mxu0 0
        %5456 = vmatpush1.bf16.msra.mxu0 0
        %5457 = vmatprep.subr.bf16.mxu0 0
        %5458 = vmatpush1.bf16.msra.mxu0 0
        %5459 = vmatprep.subr.bf16.mxu0 0
        %5460 = vmatpush1.bf16.msra.mxu0 0
        %5461 = vmatprep.subr.bf16.mxu0 0
        %5462 = vmatpush1.bf16.msra.mxu0 0
        %5463 = vmatprep.subr.bf16.mxu0 0
        %5464 = vmatpush1.bf16.msra.mxu0 0
        %5465 = vmatprep.mubr.bf16.mxu0 0
        %5466 = vmatmul.mubr.bf16.gmra.mrb[0].mxu0 %v5431
        %v5467 = vpop.f32.mrb[0].mxu0
        %v5468 = vadd.f32 0.0, %v5467
        %v5469 = vpop.f32.mrb[0].mxu0
        %v5470 = vpop.f32.mrb[0].mxu0
        %v5471 = vpop.f32.mrb[0].mxu0
        %5472 = vdwg.mxu0
        %v5473 = vadd.f32 %v5310, %v5468
        %v5475 = vrot.slane %v3526, 4
        %v5477 = vsel %vm2075, %v5475, 0
        %v5480 = vsel %vm2075, %v3657, 0
        %5482 = vmatprep.subr.bf16.mxu0 0
        %5483 = vmatpush1.bf16.xpose.msra.mxu0 %v5480
        %5484 = vmatprep.subr.bf16.mxu0 0
        %5485 = vmatpush1.bf16.xpose.msra.mxu0 0
        %5486 = vmatprep.subr.bf16.mxu0 0
        %5487 = vmatpush1.bf16.xpose.msra.mxu0 0
        %5488 = vmatprep.subr.bf16.mxu0 0
        %5489 = vmatpush1.bf16.xpose.msra.mxu0 0
        %5490 = vmatprep.subr.bf16.mxu0 0
        %5491 = vmatpush1.bf16.xpose.msra.mxu0 0
        %5492 = vmatprep.subr.bf16.mxu0 0
        %5493 = vmatpush1.bf16.xpose.msra.mxu0 0
        %5494 = vmatprep.subr.bf16.mxu0 0
        %5495 = vmatpush1.bf16.xpose.msra.mxu0 0
        %5496 = vmatprep.subr.bf16.mxu0 0
        %5497 = vmatpush1.bf16.xpose.msra.mxu0 0
        %5498 = vmatprep.subr.bf16.mxu0 0
        %5499 = vmatpush1.bf16.xpose.msra.mxu0 0
        %5500 = vmatprep.subr.bf16.mxu0 0
        %5501 = vmatpush1.bf16.xpose.msra.mxu0 0
        %5502 = vmatprep.subr.bf16.mxu0 0
        %5503 = vmatpush1.bf16.xpose.msra.mxu0 0
        %5504 = vmatprep.subr.bf16.mxu0 0
        %5505 = vmatpush1.bf16.xpose.msra.mxu0 0
        %5506 = vmatprep.subr.bf16.mxu0 0
        %5507 = vmatpush1.bf16.xpose.msra.mxu0 0
        %5508 = vmatprep.subr.bf16.mxu0 0
        %5509 = vmatpush1.bf16.xpose.msra.mxu0 0
        %5510 = vmatprep.subr.bf16.mxu0 0
        %5511 = vmatpush1.bf16.xpose.msra.mxu0 0
        %5512 = vmatprep.subr.bf16.mxu0 0
        %5513 = vmatpush1.bf16.xpose.msra.mxu0 0
        %5514 = vmatprep.mubr.bf16.mxu0 0
        %5515 = vmatmul.mubr.bf16.gmra.mrb[0].mxu0 %v5477
        %v5516 = vpop.f32.mrb[0].mxu0
        %v5517 = vadd.f32 0.0, %v5516
        %v5518 = vpop.f32.mrb[0].mxu0
        %v5519 = vpop.f32.mrb[0].mxu0
        %v5520 = vpop.f32.mrb[0].mxu0
        %5521 = vdwg.mxu0
        %v5522 = vsel %vm4870, %v5517, -inf
        %5523 = vmax.xlane.f32.xlu0 %v5522
        %v5524 = vpop.xlane.xlu0 %5523
        %v5525 = vsub.f32 %v5517, %v5524
        %v5526 = vmul.f32 %v5525, 1.442695
        %v5527 = vpow.pop %v5526
        %v5528 = vsel %vm4870, %v5527, 0.0
        %5529 = vadd.xlane.f32.xlu0 %v5528
        %v5530 = vpop.xlane.xlu0 %5529
        %v5531 = vrcp.pop %v5530
        %v5532 = vmul.f32 %v5527, %v5531
        %v5533 = vpack.c.bf16 %v5532, %v5532
        %v5535 = vsel %vm4870, %v5533, 0
        %5537 = vmatprep.subr.bf16.mxu0 0
        %5538 = vmatpush1.bf16.msra.mxu0 %v3776
        %5539 = vmatprep.subr.bf16.mxu0 0
        %5540 = vmatpush1.bf16.msra.mxu0 0
        %5541 = vmatprep.subr.bf16.mxu0 0
        %5542 = vmatpush1.bf16.msra.mxu0 0
        %5543 = vmatprep.subr.bf16.mxu0 0
        %5544 = vmatpush1.bf16.msra.mxu0 0
        %5545 = vmatprep.subr.bf16.mxu0 0
        %5546 = vmatpush1.bf16.msra.mxu0 0
        %5547 = vmatprep.subr.bf16.mxu0 0
        %5548 = vmatpush1.bf16.msra.mxu0 0
        %5549 = vmatprep.subr.bf16.mxu0 0
        %5550 = vmatpush1.bf16.msra.mxu0 0
        %5551 = vmatprep.subr.bf16.mxu0 0
        %5552 = vmatpush1.bf16.msra.mxu0 0
        %5553 = vmatprep.subr.bf16.mxu0 0
        %5554 = vmatpush1.bf16.msra.mxu0 0
        %5555 = vmatprep.subr.bf16.mxu0 0
        %5556 = vmatpush1.bf16.msra.mxu0 0
        %5557 = vmatprep.subr.bf16.mxu0 0
        %5558 = vmatpush1.bf16.msra.mxu0 0
        %5559 = vmatprep.subr.bf16.mxu0 0
        %5560 = vmatpush1.bf16.msra.mxu0 0
        %5561 = vmatprep.subr.bf16.mxu0 0
        %5562 = vmatpush1.bf16.msra.mxu0 0
        %5563 = vmatprep.subr.bf16.mxu0 0
        %5564 = vmatpush1.bf16.msra.mxu0 0
        %5565 = vmatprep.subr.bf16.mxu0 0
        %5566 = vmatpush1.bf16.msra.mxu0 0
        %5567 = vmatprep.subr.bf16.mxu0 0
        %5568 = vmatpush1.bf16.msra.mxu0 0
        %5569 = vmatprep.mubr.bf16.mxu0 0
        %5570 = vmatmul.mubr.bf16.gmra.mrb[0].mxu0 %v5535
        %v5571 = vpop.f32.mrb[0].mxu0
        %v5572 = vadd.f32 0.0, %v5571
        %v5573 = vpop.f32.mrb[0].mxu0
        %v5574 = vpop.f32.mrb[0].mxu0
        %v5575 = vpop.f32.mrb[0].mxu0
        %5576 = vdwg.mxu0
        %v5577 = vpack.c.bf16 %v5572, %v5572
        %v5579 = vrot.slane %v3887, 4
        %v5581 = vsel %vm2075, %v5579, 0
        %v5584 = vsel %vm2075, %v4007, 0
        %5586 = vmatprep.subr.bf16.mxu0 0
        %5587 = vmatpush1.bf16.xpose.msra.mxu0 %v5584
        %5588 = vmatprep.subr.bf16.mxu0 0
        %5589 = vmatpush1.bf16.xpose.msra.mxu0 0
        %5590 = vmatprep.subr.bf16.mxu0 0
        %5591 = vmatpush1.bf16.xpose.msra.mxu0 0
        %5592 = vmatprep.subr.bf16.mxu0 0
        %5593 = vmatpush1.bf16.xpose.msra.mxu0 0
        %5594 = vmatprep.subr.bf16.mxu0 0
        %5595 = vmatpush1.bf16.xpose.msra.mxu0 0
        %5596 = vmatprep.subr.bf16.mxu0 0
        %5597 = vmatpush1.bf16.xpose.msra.mxu0 0
        %5598 = vmatprep.subr.bf16.mxu0 0
        %5599 = vmatpush1.bf16.xpose.msra.mxu0 0
        %5600 = vmatprep.subr.bf16.mxu0 0
        %5601 = vmatpush1.bf16.xpose.msra.mxu0 0
        %5602 = vmatprep.subr.bf16.mxu0 0
        %5603 = vmatpush1.bf16.xpose.msra.mxu0 0
        %5604 = vmatprep.subr.bf16.mxu0 0
        %5605 = vmatpush1.bf16.xpose.msra.mxu0 0
        %5606 = vmatprep.subr.bf16.mxu0 0
        %5607 = vmatpush1.bf16.xpose.msra.mxu0 0
        %5608 = vmatprep.subr.bf16.mxu0 0
        %5609 = vmatpush1.bf16.xpose.msra.mxu0 0
        %5610 = vmatprep.subr.bf16.mxu0 0
        %5611 = vmatpush1.bf16.xpose.msra.mxu0 0
        %5612 = vmatprep.subr.bf16.mxu0 0
        %5613 = vmatpush1.bf16.xpose.msra.mxu0 0
        %5614 = vmatprep.subr.bf16.mxu0 0
        %5615 = vmatpush1.bf16.xpose.msra.mxu0 0
        %5616 = vmatprep.subr.bf16.mxu0 0
        %5617 = vmatpush1.bf16.xpose.msra.mxu0 0
        %5618 = vmatprep.mubr.bf16.mxu0 0
        %5619 = vmatmul.mubr.bf16.gmra.mrb[0].mxu0 %v5581
        %v5620 = vpop.f32.mrb[0].mxu0
        %v5621 = vadd.f32 0.0, %v5620
        %v5622 = vpop.f32.mrb[0].mxu0
        %v5623 = vpop.f32.mrb[0].mxu0
        %v5624 = vpop.f32.mrb[0].mxu0
        %5625 = vdwg.mxu0
        %v5626 = vsel %vm4870, %v5621, -inf
        %5627 = vmax.xlane.f32.xlu0 %v5626
        %v5628 = vpop.xlane.xlu0 %5627
        %v5629 = vsub.f32 %v5621, %v5628
        %v5630 = vmul.f32 %v5629, 1.442695
        %v5631 = vpow.pop %v5630
        %v5632 = vsel %vm4870, %v5631, 0.0
        %5633 = vadd.xlane.f32.xlu0 %v5632
        %v5634 = vpop.xlane.xlu0 %5633
        %v5635 = vrcp.pop %v5634
        %v5636 = vmul.f32 %v5631, %v5635
        %v5637 = vpack.c.bf16 %v5636, %v5636
        %v5639 = vsel %vm4870, %v5637, 0
        %5641 = vmatprep.subr.bf16.mxu0 0
        %5642 = vmatpush1.bf16.msra.mxu0 %v4127
        %5643 = vmatprep.subr.bf16.mxu0 0
        %5644 = vmatpush1.bf16.msra.mxu0 0
        %5645 = vmatprep.subr.bf16.mxu0 0
        %5646 = vmatpush1.bf16.msra.mxu0 0
        %5647 = vmatprep.subr.bf16.mxu0 0
        %5648 = vmatpush1.bf16.msra.mxu0 0
        %5649 = vmatprep.subr.bf16.mxu0 0
        %5650 = vmatpush1.bf16.msra.mxu0 0
        %5651 = vmatprep.subr.bf16.mxu0 0
        %5652 = vmatpush1.bf16.msra.mxu0 0
        %5653 = vmatprep.subr.bf16.mxu0 0
        %5654 = vmatpush1.bf16.msra.mxu0 0
        %5655 = vmatprep.subr.bf16.mxu0 0
        %5656 = vmatpush1.bf16.msra.mxu0 0
        %5657 = vmatprep.subr.bf16.mxu0 0
        %5658 = vmatpush1.bf16.msra.mxu0 0
        %5659 = vmatprep.subr.bf16.mxu0 0
        %5660 = vmatpush1.bf16.msra.mxu0 0
        %5661 = vmatprep.subr.bf16.mxu0 0
        %5662 = vmatpush1.bf16.msra.mxu0 0
        %5663 = vmatprep.subr.bf16.mxu0 0
        %5664 = vmatpush1.bf16.msra.mxu0 0
        %5665 = vmatprep.subr.bf16.mxu0 0
        %5666 = vmatpush1.bf16.msra.mxu0 0
        %5667 = vmatprep.subr.bf16.mxu0 0
        %5668 = vmatpush1.bf16.msra.mxu0 0
        %5669 = vmatprep.subr.bf16.mxu0 0
        %5670 = vmatpush1.bf16.msra.mxu0 0
        %5671 = vmatprep.subr.bf16.mxu0 0
        %5672 = vmatpush1.bf16.msra.mxu0 0
        %5673 = vmatprep.mubr.bf16.mxu0 0
        %5674 = vmatmul.mubr.bf16.gmra.mrb[0].mxu0 %v5639
        %v5675 = vpop.f32.mrb[0].mxu0
        %v5676 = vadd.f32 0.0, %v5675
        %v5677 = vpop.f32.mrb[0].mxu0
        %v5678 = vpop.f32.mrb[0].mxu0
        %v5679 = vpop.f32.mrb[0].mxu0
        %5680 = vdwg.mxu0
        %v5681 = vpack.c.bf16 %v5676, %v5676
        %v5683 = vsel %vm2075, %v5681, 0
        %5685 = vmatprep.subr.bf16.mxu0 0
        %5686 = vmatpush1.bf16.msra.mxu0 %v5046
        %5687 = vmatprep.subr.bf16.mxu0 0
        %5688 = vmatpush1.bf16.msra.mxu0 %v5047
        %5689 = vmatprep.subr.bf16.mxu0 0
        %5690 = vmatpush1.bf16.msra.mxu0 0
        %5691 = vmatprep.subr.bf16.mxu0 0
        %5692 = vmatpush1.bf16.msra.mxu0 0
        %5693 = vmatprep.subr.bf16.mxu0 0
        %5694 = vmatpush1.bf16.msra.mxu0 0
        %5695 = vmatprep.subr.bf16.mxu0 0
        %5696 = vmatpush1.bf16.msra.mxu0 0
        %5697 = vmatprep.subr.bf16.mxu0 0
        %5698 = vmatpush1.bf16.msra.mxu0 0
        %5699 = vmatprep.subr.bf16.mxu0 0
        %5700 = vmatpush1.bf16.msra.mxu0 0
        %5701 = vmatprep.subr.bf16.mxu0 0
        %5702 = vmatpush1.bf16.msra.mxu0 0
        %5703 = vmatprep.subr.bf16.mxu0 0
        %5704 = vmatpush1.bf16.msra.mxu0 0
        %5705 = vmatprep.subr.bf16.mxu0 0
        %5706 = vmatpush1.bf16.msra.mxu0 0
        %5707 = vmatprep.subr.bf16.mxu0 0
        %5708 = vmatpush1.bf16.msra.mxu0 0
        %5709 = vmatprep.subr.bf16.mxu0 0
        %5710 = vmatpush1.bf16.msra.mxu0 0
        %5711 = vmatprep.subr.bf16.mxu0 0
        %5712 = vmatpush1.bf16.msra.mxu0 0
        %5713 = vmatprep.subr.bf16.mxu0 0
        %5714 = vmatpush1.bf16.msra.mxu0 0
        %5715 = vmatprep.subr.bf16.mxu0 0
        %5716 = vmatpush1.bf16.msra.mxu0 0
        %5717 = vmatprep.mubr.bf16.mxu0 0
        %5718 = vmatmul.mubr.bf16.gmra.mrb[0].mxu0 %v5683
        %v5719 = vpop.f32.mrb[0].mxu0
        %v5720 = vadd.f32 0.0, %v5719
        %v5721 = vpop.f32.mrb[0].mxu0
        %v5722 = vpop.f32.mrb[0].mxu0
        %v5723 = vpop.f32.mrb[0].mxu0
        %5724 = vdwg.mxu0
        %v5726 = vsel %vm2075, %v5577, 0
        %5728 = vmatprep.subr.bf16.mxu0 0
        %5729 = vmatpush1.bf16.msra.mxu0 %v5101
        %5730 = vmatprep.subr.bf16.mxu0 0
        %5731 = vmatpush1.bf16.msra.mxu0 %v5102
        %5732 = vmatprep.subr.bf16.mxu0 0
        %5733 = vmatpush1.bf16.msra.mxu0 0
        %5734 = vmatprep.subr.bf16.mxu0 0
        %5735 = vmatpush1.bf16.msra.mxu0 0
        %5736 = vmatprep.subr.bf16.mxu0 0
        %5737 = vmatpush1.bf16.msra.mxu0 0
        %5738 = vmatprep.subr.bf16.mxu0 0
        %5739 = vmatpush1.bf16.msra.mxu0 0
        %5740 = vmatprep.subr.bf16.mxu0 0
        %5741 = vmatpush1.bf16.msra.mxu0 0
        %5742 = vmatprep.subr.bf16.mxu0 0
        %5743 = vmatpush1.bf16.msra.mxu0 0
        %5744 = vmatprep.subr.bf16.mxu0 0
        %5745 = vmatpush1.bf16.msra.mxu0 0
        %5746 = vmatprep.subr.bf16.mxu0 0
        %5747 = vmatpush1.bf16.msra.mxu0 0
        %5748 = vmatprep.subr.bf16.mxu0 0
        %5749 = vmatpush1.bf16.msra.mxu0 0
        %5750 = vmatprep.subr.bf16.mxu0 0
        %5751 = vmatpush1.bf16.msra.mxu0 0
        %5752 = vmatprep.subr.bf16.mxu0 0
        %5753 = vmatpush1.bf16.msra.mxu0 0
        %5754 = vmatprep.subr.bf16.mxu0 0
        %5755 = vmatpush1.bf16.msra.mxu0 0
        %5756 = vmatprep.subr.bf16.mxu0 0
        %5757 = vmatpush1.bf16.msra.mxu0 0
        %5758 = vmatprep.subr.bf16.mxu0 0
        %5759 = vmatpush1.bf16.msra.mxu0 0
        %5760 = vmatprep.mubr.bf16.mxu0 0
        %5761 = vmatmul.mubr.bf16.gmra.mrb[0].mxu0 %v5726
        %v5762 = vpop.f32.mrb[0].mxu0
        %v5763 = vadd.f32 %v5720, %v5762
        %v5764 = vpop.f32.mrb[0].mxu0
        %v5765 = vpop.f32.mrb[0].mxu0
        %v5766 = vpop.f32.mrb[0].mxu0
        %5767 = vdwg.mxu0
        %v5769 = vrot.slane %v4237, 4
        %v5771 = vsel %vm2075, %v5769, 0
        %v5774 = vsel %vm2075, %v4356, 0
        %5776 = vmatprep.subr.bf16.mxu0 0
        %5777 = vmatpush1.bf16.xpose.msra.mxu0 %v5774
        %5778 = vmatprep.subr.bf16.mxu0 0
        %5779 = vmatpush1.bf16.xpose.msra.mxu0 0
        %5780 = vmatprep.subr.bf16.mxu0 0
        %5781 = vmatpush1.bf16.xpose.msra.mxu0 0
        %5782 = vmatprep.subr.bf16.mxu0 0
        %5783 = vmatpush1.bf16.xpose.msra.mxu0 0
        %5784 = vmatprep.subr.bf16.mxu0 0
        %5785 = vmatpush1.bf16.xpose.msra.mxu0 0
        %5786 = vmatprep.subr.bf16.mxu0 0
        %5787 = vmatpush1.bf16.xpose.msra.mxu0 0
        %5788 = vmatprep.subr.bf16.mxu0 0
        %5789 = vmatpush1.bf16.xpose.msra.mxu0 0
        %5790 = vmatprep.subr.bf16.mxu0 0
        %5791 = vmatpush1.bf16.xpose.msra.mxu0 0
        %5792 = vmatprep.subr.bf16.mxu0 0
        %5793 = vmatpush1.bf16.xpose.msra.mxu0 0
        %5794 = vmatprep.subr.bf16.mxu0 0
        %5795 = vmatpush1.bf16.xpose.msra.mxu0 0
        %5796 = vmatprep.subr.bf16.mxu0 0
        %5797 = vmatpush1.bf16.xpose.msra.mxu0 0
        %5798 = vmatprep.subr.bf16.mxu0 0
        %5799 = vmatpush1.bf16.xpose.msra.mxu0 0
        %5800 = vmatprep.subr.bf16.mxu0 0
        %5801 = vmatpush1.bf16.xpose.msra.mxu0 0
        %5802 = vmatprep.subr.bf16.mxu0 0
        %5803 = vmatpush1.bf16.xpose.msra.mxu0 0
        %5804 = vmatprep.subr.bf16.mxu0 0
        %5805 = vmatpush1.bf16.xpose.msra.mxu0 0
        %5806 = vmatprep.subr.bf16.mxu0 0
        %5807 = vmatpush1.bf16.xpose.msra.mxu0 0
        %5808 = vmatprep.mubr.bf16.mxu0 0
        %5809 = vmatmul.mubr.bf16.gmra.mrb[0].mxu0 %v5771
        %v5810 = vpop.f32.mrb[0].mxu0
        %v5811 = vadd.f32 0.0, %v5810
        %v5812 = vpop.f32.mrb[0].mxu0
        %v5813 = vpop.f32.mrb[0].mxu0
        %v5814 = vpop.f32.mrb[0].mxu0
        %5815 = vdwg.mxu0
        %v5816 = vsel %vm4870, %v5811, -inf
        %5817 = vmax.xlane.f32.xlu0 %v5816
        %v5818 = vpop.xlane.xlu0 %5817
        %v5819 = vsub.f32 %v5811, %v5818
        %v5820 = vmul.f32 %v5819, 1.442695
        %v5821 = vpow.pop %v5820
        %v5822 = vsel %vm4870, %v5821, 0.0
        %5823 = vadd.xlane.f32.xlu0 %v5822
        %v5824 = vpop.xlane.xlu0 %5823
        %v5825 = vrcp.pop %v5824
        %v5826 = vmul.f32 %v5821, %v5825
        %v5827 = vpack.c.bf16 %v5826, %v5826
        %v5829 = vsel %vm4870, %v5827, 0
        %5831 = vmatprep.subr.bf16.mxu0 0
        %5832 = vmatpush1.bf16.msra.mxu0 %v4475
        %5833 = vmatprep.subr.bf16.mxu0 0
        %5834 = vmatpush1.bf16.msra.mxu0 0
        %5835 = vmatprep.subr.bf16.mxu0 0
        %5836 = vmatpush1.bf16.msra.mxu0 0
        %5837 = vmatprep.subr.bf16.mxu0 0
        %5838 = vmatpush1.bf16.msra.mxu0 0
        %5839 = vmatprep.subr.bf16.mxu0 0
        %5840 = vmatpush1.bf16.msra.mxu0 0
        %5841 = vmatprep.subr.bf16.mxu0 0
        %5842 = vmatpush1.bf16.msra.mxu0 0
        %5843 = vmatprep.subr.bf16.mxu0 0
        %5844 = vmatpush1.bf16.msra.mxu0 0
        %5845 = vmatprep.subr.bf16.mxu0 0
        %5846 = vmatpush1.bf16.msra.mxu0 0
        %5847 = vmatprep.subr.bf16.mxu0 0
        %5848 = vmatpush1.bf16.msra.mxu0 0
        %5849 = vmatprep.subr.bf16.mxu0 0
        %5850 = vmatpush1.bf16.msra.mxu0 0
        %5851 = vmatprep.subr.bf16.mxu0 0
        %5852 = vmatpush1.bf16.msra.mxu0 0
        %5853 = vmatprep.subr.bf16.mxu0 0
        %5854 = vmatpush1.bf16.msra.mxu0 0
        %5855 = vmatprep.subr.bf16.mxu0 0
        %5856 = vmatpush1.bf16.msra.mxu0 0
        %5857 = vmatprep.subr.bf16.mxu0 0
        %5858 = vmatpush1.bf16.msra.mxu0 0
        %5859 = vmatprep.subr.bf16.mxu0 0
        %5860 = vmatpush1.bf16.msra.mxu0 0
        %5861 = vmatprep.subr.bf16.mxu0 0
        %5862 = vmatpush1.bf16.msra.mxu0 0
        %5863 = vmatprep.mubr.bf16.mxu0 0
        %5864 = vmatmul.mubr.bf16.gmra.mrb[0].mxu0 %v5829
        %v5865 = vpop.f32.mrb[0].mxu0
        %v5866 = vadd.f32 0.0, %v5865
        %v5867 = vpop.f32.mrb[0].mxu0
        %v5868 = vpop.f32.mrb[0].mxu0
        %v5869 = vpop.f32.mrb[0].mxu0
        %5870 = vdwg.mxu0
        %v5871 = vpack.c.bf16 %v5866, %v5866
        %v5873 = vsel %vm2075, %v5871, 0
        %5875 = vmatprep.subr.bf16.mxu0 0
        %5876 = vmatpush1.bf16.msra.mxu0 %v5263
        %5877 = vmatprep.subr.bf16.mxu0 0
        %5878 = vmatpush1.bf16.msra.mxu0 %v5264
        %5879 = vmatprep.subr.bf16.mxu0 0
        %5880 = vmatpush1.bf16.msra.mxu0 0
        %5881 = vmatprep.subr.bf16.mxu0 0
        %5882 = vmatpush1.bf16.msra.mxu0 0
        %5883 = vmatprep.subr.bf16.mxu0 0
        %5884 = vmatpush1.bf16.msra.mxu0 0
        %5885 = vmatprep.subr.bf16.mxu0 0
        %5886 = vmatpush1.bf16.msra.mxu0 0
        %5887 = vmatprep.subr.bf16.mxu0 0
        %5888 = vmatpush1.bf16.msra.mxu0 0
        %5889 = vmatprep.subr.bf16.mxu0 0
        %5890 = vmatpush1.bf16.msra.mxu0 0
        %5891 = vmatprep.subr.bf16.mxu0 0
        %5892 = vmatpush1.bf16.msra.mxu0 0
        %5893 = vmatprep.subr.bf16.mxu0 0
        %5894 = vmatpush1.bf16.msra.mxu0 0
        %5895 = vmatprep.subr.bf16.mxu0 0
        %5896 = vmatpush1.bf16.msra.mxu0 0
        %5897 = vmatprep.subr.bf16.mxu0 0
        %5898 = vmatpush1.bf16.msra.mxu0 0
        %5899 = vmatprep.subr.bf16.mxu0 0
        %5900 = vmatpush1.bf16.msra.mxu0 0
        %5901 = vmatprep.subr.bf16.mxu0 0
        %5902 = vmatpush1.bf16.msra.mxu0 0
        %5903 = vmatprep.subr.bf16.mxu0 0
        %5904 = vmatpush1.bf16.msra.mxu0 0
        %5905 = vmatprep.subr.bf16.mxu0 0
        %5906 = vmatpush1.bf16.msra.mxu0 0
        %5907 = vmatprep.mubr.bf16.mxu0 0
        %5908 = vmatmul.mubr.bf16.gmra.mrb[0].mxu0 %v5873
        %v5909 = vpop.f32.mrb[0].mxu0
        %v5910 = vadd.f32 0.0, %v5909
        %v5911 = vpop.f32.mrb[0].mxu0
        %v5912 = vpop.f32.mrb[0].mxu0
        %v5913 = vpop.f32.mrb[0].mxu0
        %5914 = vdwg.mxu0
        %v5915 = vadd.f32 %v5763, %v5910
        %v5917 = vrot.slane %v4585, 4
        %v5919 = vsel %vm2075, %v5917, 0
        %v5922 = vsel %vm2075, %v4704, 0
        %5924 = vmatprep.subr.bf16.mxu0 0
        %5925 = vmatpush1.bf16.xpose.msra.mxu0 %v5922
        %5926 = vmatprep.subr.bf16.mxu0 0
        %5927 = vmatpush1.bf16.xpose.msra.mxu0 0
        %5928 = vmatprep.subr.bf16.mxu0 0
        %5929 = vmatpush1.bf16.xpose.msra.mxu0 0
        %5930 = vmatprep.subr.bf16.mxu0 0
        %5931 = vmatpush1.bf16.xpose.msra.mxu0 0
        %5932 = vmatprep.subr.bf16.mxu0 0
        %5933 = vmatpush1.bf16.xpose.msra.mxu0 0
        %5934 = vmatprep.subr.bf16.mxu0 0
        %5935 = vmatpush1.bf16.xpose.msra.mxu0 0
        %5936 = vmatprep.subr.bf16.mxu0 0
        %5937 = vmatpush1.bf16.xpose.msra.mxu0 0
        %5938 = vmatprep.subr.bf16.mxu0 0
        %5939 = vmatpush1.bf16.xpose.msra.mxu0 0
        %5940 = vmatprep.subr.bf16.mxu0 0
        %5941 = vmatpush1.bf16.xpose.msra.mxu0 0
        %5942 = vmatprep.subr.bf16.mxu0 0
        %5943 = vmatpush1.bf16.xpose.msra.mxu0 0
        %5944 = vmatprep.subr.bf16.mxu0 0
        %5945 = vmatpush1.bf16.xpose.msra.mxu0 0
        %5946 = vmatprep.subr.bf16.mxu0 0
        %5947 = vmatpush1.bf16.xpose.msra.mxu0 0
        %5948 = vmatprep.subr.bf16.mxu0 0
        %5949 = vmatpush1.bf16.xpose.msra.mxu0 0
        %5950 = vmatprep.subr.bf16.mxu0 0
        %5951 = vmatpush1.bf16.xpose.msra.mxu0 0
        %5952 = vmatprep.subr.bf16.mxu0 0
        %5953 = vmatpush1.bf16.xpose.msra.mxu0 0
        %5954 = vmatprep.subr.bf16.mxu0 0
        %5955 = vmatpush1.bf16.xpose.msra.mxu0 0
        %5956 = vmatprep.mubr.bf16.mxu0 0
        %5957 = vmatmul.mubr.bf16.gmra.mrb[0].mxu0 %v5919
        %v5958 = vpop.f32.mrb[0].mxu0
        %v5959 = vadd.f32 0.0, %v5958
        %v5960 = vpop.f32.mrb[0].mxu0
        %v5961 = vpop.f32.mrb[0].mxu0
        %v5962 = vpop.f32.mrb[0].mxu0
        %5963 = vdwg.mxu0
        %v5964 = vsel %vm4870, %v5959, -inf
        %5965 = vmax.xlane.f32.xlu0 %v5964
        %v5966 = vpop.xlane.xlu0 %5965
        %v5967 = vsub.f32 %v5959, %v5966
        %v5968 = vmul.f32 %v5967, 1.442695
        %v5969 = vpow.pop %v5968
        %v5970 = vsel %vm4870, %v5969, 0.0
        %5971 = vadd.xlane.f32.xlu0 %v5970
        %v5972 = vpop.xlane.xlu0 %5971
        %v5973 = vrcp.pop %v5972
        %v5974 = vmul.f32 %v5969, %v5973
        %v5975 = vpack.c.bf16 %v5974, %v5974
        %v5977 = vsel %vm4870, %v5975, 0
        %5979 = vmatprep.subr.bf16.mxu0 0
        %5980 = vmatpush1.bf16.msra.mxu0 %v4823
        %5981 = vmatprep.subr.bf16.mxu0 0
        %5982 = vmatpush1.bf16.msra.mxu0 0
        %5983 = vmatprep.subr.bf16.mxu0 0
        %5984 = vmatpush1.bf16.msra.mxu0 0
        %5985 = vmatprep.subr.bf16.mxu0 0
        %5986 = vmatpush1.bf16.msra.mxu0 0
        %5987 = vmatprep.subr.bf16.mxu0 0
        %5988 = vmatpush1.bf16.msra.mxu0 0
        %5989 = vmatprep.subr.bf16.mxu0 0
        %5990 = vmatpush1.bf16.msra.mxu0 0
        %5991 = vmatprep.subr.bf16.mxu0 0
        %5992 = vmatpush1.bf16.msra.mxu0 0
        %5993 = vmatprep.subr.bf16.mxu0 0
        %5994 = vmatpush1.bf16.msra.mxu0 0
        %5995 = vmatprep.subr.bf16.mxu0 0
        %5996 = vmatpush1.bf16.msra.mxu0 0
        %5997 = vmatprep.subr.bf16.mxu0 0
        %5998 = vmatpush1.bf16.msra.mxu0 0
        %5999 = vmatprep.subr.bf16.mxu0 0
        %6000 = vmatpush1.bf16.msra.mxu0 0
        %6001 = vmatprep.subr.bf16.mxu0 0
        %6002 = vmatpush1.bf16.msra.mxu0 0
        %6003 = vmatprep.subr.bf16.mxu0 0
        %6004 = vmatpush1.bf16.msra.mxu0 0
        %6005 = vmatprep.subr.bf16.mxu0 0
        %6006 = vmatpush1.bf16.msra.mxu0 0
        %6007 = vmatprep.subr.bf16.mxu0 0
        %6008 = vmatpush1.bf16.msra.mxu0 0
        %6009 = vmatprep.subr.bf16.mxu0 0
        %6010 = vmatpush1.bf16.msra.mxu0 0
        %6011 = vmatprep.mubr.bf16.mxu0 0
        %6012 = vmatmul.mubr.bf16.gmra.mrb[0].mxu0 %v5977
        %v6013 = vpop.f32.mrb[0].mxu0
        %v6014 = vadd.f32 0.0, %v6013
        %v6015 = vpop.f32.mrb[0].mxu0
        %v6016 = vpop.f32.mrb[0].mxu0
        %v6017 = vpop.f32.mrb[0].mxu0
        %6018 = vdwg.mxu0
        %v6019 = vpack.c.bf16 %v6014, %v6014
        %v6021 = vsel %vm2075, %v6019, 0
        %6023 = vmatprep.subr.bf16.mxu0 0
        %6024 = vmatpush1.bf16.msra.mxu0 %v5426
        %6025 = vmatprep.subr.bf16.mxu0 0
        %6026 = vmatpush1.bf16.msra.mxu0 %v5427
        %6027 = vmatprep.subr.bf16.mxu0 0
        %6028 = vmatpush1.bf16.msra.mxu0 0
        %6029 = vmatprep.subr.bf16.mxu0 0
        %6030 = vmatpush1.bf16.msra.mxu0 0
        %6031 = vmatprep.subr.bf16.mxu0 0
        %6032 = vmatpush1.bf16.msra.mxu0 0
        %6033 = vmatprep.subr.bf16.mxu0 0
        %6034 = vmatpush1.bf16.msra.mxu0 0
        %6035 = vmatprep.subr.bf16.mxu0 0
        %6036 = vmatpush1.bf16.msra.mxu0 0
        %6037 = vmatprep.subr.bf16.mxu0 0
        %6038 = vmatpush1.bf16.msra.mxu0 0
        %6039 = vmatprep.subr.bf16.mxu0 0
        %6040 = vmatpush1.bf16.msra.mxu0 0
        %6041 = vmatprep.subr.bf16.mxu0 0
        %6042 = vmatpush1.bf16.msra.mxu0 0
        %6043 = vmatprep.subr.bf16.mxu0 0
        %6044 = vmatpush1.bf16.msra.mxu0 0
        %6045 = vmatprep.subr.bf16.mxu0 0
        %6046 = vmatpush1.bf16.msra.mxu0 0
        %6047 = vmatprep.subr.bf16.mxu0 0
        %6048 = vmatpush1.bf16.msra.mxu0 0
        %6049 = vmatprep.subr.bf16.mxu0 0
        %6050 = vmatpush1.bf16.msra.mxu0 0
        %6051 = vmatprep.subr.bf16.mxu0 0
        %6052 = vmatpush1.bf16.msra.mxu0 0
        %6053 = vmatprep.subr.bf16.mxu0 0
        %6054 = vmatpush1.bf16.msra.mxu0 0
        %6055 = vmatprep.mubr.bf16.mxu0 0
        %6056 = vmatmul.mubr.bf16.gmra.mrb[0].mxu0 %v6021
        %v6057 = vpop.f32.mrb[0].mxu0
        %v6058 = vadd.f32 0.0, %v6057
        %v6059 = vpop.f32.mrb[0].mxu0
        %v6060 = vpop.f32.mrb[0].mxu0
        %v6061 = vpop.f32.mrb[0].mxu0
        %6062 = vdwg.mxu0
        %v6063 = vadd.f32 %v5915, %v6058
        %v6064 = vlaneseq
        %v6065 = vshrl.u32 %v6064, 7
        %v6066 = vsub.s32 7, %v6065
        %v6067 = vrot.slane %v725, %v6066
        %v6068 = vadd.f32 %v5473, %v6067
        %v6069 = vadd.f32 %v6063, %v6067
        %v6070 = vadd.f32 %v6068, %v3410
        %v6071 = vadd.f32 %v6069, %v3411
        %6072 = vadd.xlane.f32.xlu0 %v6070
        %v6073 = vpop.xlane.xlu0 %6072
        %6074 = vadd.xlane.f32.xlu0 %v6071
        %v6075 = vpop.xlane.xlu0 %6074
        %v6076 = vmul.f32 %v6073, %v3377
        %v6077 = vmul.f32 %v6075, %v3377
        %v6078 = vmul.f32 %v6070, %v6070
        %v6079 = vmul.f32 %v6071, %v6071
        %6080 = vadd.xlane.f32.xlu0 %v6078
        %v6081 = vpop.xlane.xlu0 %6080
        %6082 = vadd.xlane.f32.xlu0 %v6079
        %v6083 = vpop.xlane.xlu0 %6082
        %v6084 = vmul.f32 %v6081, %v3377
        %v6085 = vmul.f32 %v6083, %v3377
        %v6086 = vsub.f32 %v6070, %v6076
        %v6087 = vsub.f32 %v6071, %v6077
        %v6088 = vmul.f32 %v6076, %v6076
        %v6089 = vmul.f32 %v6077, %v6077
        %v6090 = vsub.f32 %v6084, %v6088
        %v6091 = vsub.f32 %v6085, %v6089
        %v6092 = vadd.f32 %v6090, 1e-05
        %v6093 = vadd.f32 %v6091, 1e-05
        %v6094 = vrsqrt.pop %v6092
        %v6095 = vrsqrt.pop %v6093
        %v6096 = vmul.f32 %v6086, %v6094
        %v6097 = vmul.f32 %v6087, %v6095
        %v6098 = vlaneseq
        %v6099 = vshrl.u32 %v6098, 7
        %v6100 = vsub.s32 4, %v6099
        %v6101 = vrot.slane %v726, %v6100
        %v6102 = vmul.f32 %v6096, %v6101
        %v6103 = vmul.f32 %v6097, %v6101
        %v6104 = vlaneseq
        %v6105 = vshrl.u32 %v6104, 7
        %v6106 = vsub.s32 5, %v6105
        %v6107 = vrot.slane %v726, %v6106
        %v6108 = vadd.f32 %v6102, %v6107
        %v6109 = vadd.f32 %v6103, %v6107
        %v6110 = vpack.c.bf16 %v6109, %v6108
        %v6111 = vld [vmem:[%s711] sm:$0xff]
        %v6112 = vld [vmem:[%s711 + $0x8] sm:$0xff]
        %v6113 = vld [vmem:[%s711 + $0x10] sm:$0xff]
        %v6114 = vld [vmem:[%s711 + $0x18] sm:$0xff]
        %v6115 = vld [vmem:[%s711 + $0x20] sm:$0xff]
        %v6116 = vld [vmem:[%s711 + $0x28] sm:$0xff]
        %v6117 = vld [vmem:[%s711 + $0x30] sm:$0xff]
        %v6118 = vld [vmem:[%s711 + $0x38] sm:$0xff]
        %v6119 = vld [vmem:[%s711 + $0x40] sm:$0xff]
        %v6120 = vld [vmem:[%s711 + $0x48] sm:$0xff]
        %v6121 = vld [vmem:[%s711 + $0x50] sm:$0xff]
        %v6122 = vld [vmem:[%s711 + $0x58] sm:$0xff]
        %v6123 = vld [vmem:[%s711 + $0x60] sm:$0xff]
        %v6124 = vld [vmem:[%s711 + $0x68] sm:$0xff]
        %v6125 = vld [vmem:[%s711 + $0x70] sm:$0xff]
        %v6126 = vld [vmem:[%s711 + $0x78] sm:$0xff]
        %v6127 = vlaneseq
        %v6128 = vshrl.u32 %v6127, 7
        %v6129 = vsub.s32 0, %v6128
        %v6130 = vrot.slane %v726, %v6129
        %v6131 = vlaneseq
        %v6132 = vshrl.u32 %v6131, 7
        %v6133 = vsub.s32 0, %v6132
        %v6134 = vrot.slane %v727, %v6133
        %v6151 = vunpack.c.l.b16 %v6111
        %v6152 = vunpack.c.h.b16 %v6111
        %v6153 = vunpack.c.l.b16 %v6112
        %v6154 = vunpack.c.h.b16 %v6112
        %v6155 = vunpack.c.l.b16 %v6113
        %v6156 = vunpack.c.h.b16 %v6113
        %v6157 = vunpack.c.l.b16 %v6114
        %v6158 = vunpack.c.h.b16 %v6114
        %v6159 = vunpack.c.l.b16 %v6115
        %v6160 = vunpack.c.h.b16 %v6115
        %v6161 = vunpack.c.l.b16 %v6116
        %v6162 = vunpack.c.h.b16 %v6116
        %v6163 = vunpack.c.l.b16 %v6117
        %v6164 = vunpack.c.h.b16 %v6117
        %v6165 = vunpack.c.l.b16 %v6118
        %v6166 = vunpack.c.h.b16 %v6118
        %v6167 = vunpack.c.l.b16 %v6119
        %v6168 = vunpack.c.h.b16 %v6119
        %v6169 = vunpack.c.l.b16 %v6120
        %v6170 = vunpack.c.h.b16 %v6120
        %v6171 = vunpack.c.l.b16 %v6121
        %v6172 = vunpack.c.h.b16 %v6121
        %v6173 = vunpack.c.l.b16 %v6122
        %v6174 = vunpack.c.h.b16 %v6122
        %v6175 = vunpack.c.l.b16 %v6123
        %v6176 = vunpack.c.h.b16 %v6123
        %v6177 = vunpack.c.l.b16 %v6124
        %v6178 = vunpack.c.h.b16 %v6124
        %v6179 = vunpack.c.l.b16 %v6125
        %v6180 = vunpack.c.h.b16 %v6125
        %v6181 = vunpack.c.l.b16 %v6126
        %v6182 = vunpack.c.h.b16 %v6126
        %v6183 = vpack.c.b16 %v6153, %v6151
        %v6184 = vpack.c.b16 %v6154, %v6152
        %v6185 = vpack.c.b16 %v6157, %v6155
        %v6186 = vpack.c.b16 %v6158, %v6156
        %v6187 = vpack.c.b16 %v6161, %v6159
        %v6188 = vpack.c.b16 %v6162, %v6160
        %v6189 = vpack.c.b16 %v6165, %v6163
        %v6190 = vpack.c.b16 %v6166, %v6164
        %v6191 = vpack.c.b16 %v6169, %v6167
        %v6192 = vpack.c.b16 %v6170, %v6168
        %v6193 = vpack.c.b16 %v6173, %v6171
        %v6194 = vpack.c.b16 %v6174, %v6172
        %v6195 = vpack.c.b16 %v6177, %v6175
        %v6196 = vpack.c.b16 %v6178, %v6176
        %v6197 = vpack.c.b16 %v6181, %v6179
        %v6198 = vpack.c.b16 %v6182, %v6180
        %6215 = vmatprep.subr.bf16.mxu0 %v6184
        %6216 = vmatpush1.bf16.msra.mxu0 %v6183
        %6217 = vmatprep.subr.bf16.mxu0 %v6186
        %6218 = vmatpush1.bf16.msra.mxu0 %v6185
        %6219 = vmatprep.subr.bf16.mxu0 %v6188
        %6220 = vmatpush1.bf16.msra.mxu0 %v6187
        %6221 = vmatprep.subr.bf16.mxu0 %v6190
        %6222 = vmatpush1.bf16.msra.mxu0 %v6189
        %6223 = vmatprep.subr.bf16.mxu0 %v6192
        %6224 = vmatpush1.bf16.msra.mxu0 %v6191
        %6225 = vmatprep.subr.bf16.mxu0 %v6194
        %6226 = vmatpush1.bf16.msra.mxu0 %v6193
        %6227 = vmatprep.subr.bf16.mxu0 %v6196
        %6228 = vmatpush1.bf16.msra.mxu0 %v6195
        %6229 = vmatprep.subr.bf16.mxu0 %v6198
        %6230 = vmatpush1.bf16.msra.mxu0 %v6197
        %6231 = vmatprep.subr.bf16.mxu0 0
        %6232 = vmatpush1.bf16.msra.mxu0 0
        %6233 = vmatprep.subr.bf16.mxu0 0
        %6234 = vmatpush1.bf16.msra.mxu0 0
        %6235 = vmatprep.subr.bf16.mxu0 0
        %6236 = vmatpush1.bf16.msra.mxu0 0
        %6237 = vmatprep.subr.bf16.mxu0 0
        %6238 = vmatpush1.bf16.msra.mxu0 0
        %6239 = vmatprep.subr.bf16.mxu0 0
        %6240 = vmatpush1.bf16.msra.mxu0 0
        %6241 = vmatprep.subr.bf16.mxu0 0
        %6242 = vmatpush1.bf16.msra.mxu0 0
        %6243 = vmatprep.subr.bf16.mxu0 0
        %6244 = vmatpush1.bf16.msra.mxu0 0
        %6245 = vmatprep.subr.bf16.mxu0 0
        %6246 = vmatpush1.bf16.msra.mxu0 0
        %6247 = vmatprep.mubr.bf16.mxu0 0
        %6248 = vmatmul.mubr.bf16.gmra.mrb[0].mxu0 %v6110
        %v6249 = vpop.f32.mrb[0].mxu0
        %v6250 = vadd.f32 %v6130, %v6249
        %v6251 = vpop.f32.mrb[0].mxu0
        %v6252 = vadd.f32 %v6134, %v6251
        %v6253 = vpop.f32.mrb[0].mxu0
        %v6254 = vadd.f32 %v6130, %v6253
        %v6255 = vpop.f32.mrb[0].mxu0
        %v6256 = vadd.f32 %v6134, %v6255
        %6257 = vdwg.mxu0
        %v6258 = vmax.f32 %v6250, 0.0
        %v6259 = vmax.f32 %v6252, 0.0
        %v6260 = vmax.f32 %v6254, 0.0
        %v6261 = vmax.f32 %v6256, 0.0
        %v6262 = vpack.c.bf16 %v6260, %v6258
        %v6263 = vpack.c.bf16 %v6261, %v6259
        %v6264 = vld [vmem:[%s716] sm:$0xf]
        %v6265 = vld [vmem:[%s716 + $0x4] sm:$0xf]
        %v6266 = vld [vmem:[%s716 + $0x8] sm:$0xf]
        %v6267 = vld [vmem:[%s716 + $0xc] sm:$0xf]
        %v6268 = vld [vmem:[%s716 + $0x10] sm:$0xf]
        %v6269 = vld [vmem:[%s716 + $0x14] sm:$0xf]
        %v6270 = vld [vmem:[%s716 + $0x18] sm:$0xf]
        %v6271 = vld [vmem:[%s716 + $0x1c] sm:$0xf]
        %v6272 = vld [vmem:[%s716 + $0x20] sm:$0xf]
        %v6273 = vld [vmem:[%s716 + $0x24] sm:$0xf]
        %v6274 = vld [vmem:[%s716 + $0x28] sm:$0xf]
        %v6275 = vld [vmem:[%s716 + $0x2c] sm:$0xf]
        %v6276 = vld [vmem:[%s716 + $0x30] sm:$0xf]
        %v6277 = vld [vmem:[%s716 + $0x34] sm:$0xf]
        %v6278 = vld [vmem:[%s716 + $0x38] sm:$0xf]
        %v6279 = vld [vmem:[%s716 + $0x3c] sm:$0xf]
        %v6280 = vld [vmem:[%s716 + $0x40] sm:$0xf]
        %v6281 = vld [vmem:[%s716 + $0x44] sm:$0xf]
        %v6282 = vld [vmem:[%s716 + $0x48] sm:$0xf]
        %v6283 = vld [vmem:[%s716 + $0x4c] sm:$0xf]
        %v6284 = vld [vmem:[%s716 + $0x50] sm:$0xf]
        %v6285 = vld [vmem:[%s716 + $0x54] sm:$0xf]
        %v6286 = vld [vmem:[%s716 + $0x58] sm:$0xf]
        %v6287 = vld [vmem:[%s716 + $0x5c] sm:$0xf]
        %v6288 = vld [vmem:[%s716 + $0x60] sm:$0xf]
        %v6289 = vld [vmem:[%s716 + $0x64] sm:$0xf]
        %v6290 = vld [vmem:[%s716 + $0x68] sm:$0xf]
        %v6291 = vld [vmem:[%s716 + $0x6c] sm:$0xf]
        %v6292 = vld [vmem:[%s716 + $0x70] sm:$0xf]
        %v6293 = vld [vmem:[%s716 + $0x74] sm:$0xf]
        %v6294 = vld [vmem:[%s716 + $0x78] sm:$0xf]
        %v6295 = vld [vmem:[%s716 + $0x7c] sm:$0xf]
        %v6296 = vlaneseq
        %v6297 = vshrl.u32 %v6296, 7
        %v6298 = vsub.s32 1, %v6297
        %v6299 = vrot.slane %v726, %v6298
        %v6332 = vunpack.c.l.b16 %v6264
        %v6333 = vunpack.c.l.b16 %v6265
        %v6334 = vunpack.c.l.b16 %v6266
        %v6335 = vunpack.c.l.b16 %v6267
        %v6336 = vunpack.c.l.b16 %v6268
        %v6337 = vunpack.c.l.b16 %v6269
        %v6338 = vunpack.c.l.b16 %v6270
        %v6339 = vunpack.c.l.b16 %v6271
        %v6340 = vunpack.c.l.b16 %v6272
        %v6341 = vunpack.c.l.b16 %v6273
        %v6342 = vunpack.c.l.b16 %v6274
        %v6343 = vunpack.c.l.b16 %v6275
        %v6344 = vunpack.c.l.b16 %v6276
        %v6345 = vunpack.c.l.b16 %v6277
        %v6346 = vunpack.c.l.b16 %v6278
        %v6347 = vunpack.c.l.b16 %v6279
        %v6348 = vunpack.c.l.b16 %v6280
        %v6349 = vunpack.c.l.b16 %v6281
        %v6350 = vunpack.c.l.b16 %v6282
        %v6351 = vunpack.c.l.b16 %v6283
        %v6352 = vunpack.c.l.b16 %v6284
        %v6353 = vunpack.c.l.b16 %v6285
        %v6354 = vunpack.c.l.b16 %v6286
        %v6355 = vunpack.c.l.b16 %v6287
        %v6356 = vunpack.c.l.b16 %v6288
        %v6357 = vunpack.c.l.b16 %v6289
        %v6358 = vunpack.c.l.b16 %v6290
        %v6359 = vunpack.c.l.b16 %v6291
        %v6360 = vunpack.c.l.b16 %v6292
        %v6361 = vunpack.c.l.b16 %v6293
        %v6362 = vunpack.c.l.b16 %v6294
        %v6363 = vunpack.c.l.b16 %v6295
        %v6364 = vpack.c.b16 %v6333, %v6332
        %v6365 = vpack.c.b16 %v6335, %v6334
        %v6366 = vpack.c.b16 %v6337, %v6336
        %v6367 = vpack.c.b16 %v6339, %v6338
        %v6368 = vpack.c.b16 %v6341, %v6340
        %v6369 = vpack.c.b16 %v6343, %v6342
        %v6370 = vpack.c.b16 %v6345, %v6344
        %v6371 = vpack.c.b16 %v6347, %v6346
        %v6372 = vpack.c.b16 %v6349, %v6348
        %v6373 = vpack.c.b16 %v6351, %v6350
        %v6374 = vpack.c.b16 %v6353, %v6352
        %v6375 = vpack.c.b16 %v6355, %v6354
        %v6376 = vpack.c.b16 %v6357, %v6356
        %v6377 = vpack.c.b16 %v6359, %v6358
        %v6378 = vpack.c.b16 %v6361, %v6360
        %v6379 = vpack.c.b16 %v6363, %v6362
        %6396 = vmatprep.subr.bf16.mxu0 0
        %6397 = vmatpush1.bf16.msra.mxu0 %v6364
        %6398 = vmatprep.subr.bf16.mxu0 0
        %6399 = vmatpush1.bf16.msra.mxu0 %v6365
        %6400 = vmatprep.subr.bf16.mxu0 0
        %6401 = vmatpush1.bf16.msra.mxu0 %v6366
        %6402 = vmatprep.subr.bf16.mxu0 0
        %6403 = vmatpush1.bf16.msra.mxu0 %v6367
        %6404 = vmatprep.subr.bf16.mxu0 0
        %6405 = vmatpush1.bf16.msra.mxu0 %v6368
        %6406 = vmatprep.subr.bf16.mxu0 0
        %6407 = vmatpush1.bf16.msra.mxu0 %v6369
        %6408 = vmatprep.subr.bf16.mxu0 0
        %6409 = vmatpush1.bf16.msra.mxu0 %v6370
        %6410 = vmatprep.subr.bf16.mxu0 0
        %6411 = vmatpush1.bf16.msra.mxu0 %v6371
        %6412 = vmatprep.subr.bf16.mxu0 0
        %6413 = vmatpush1.bf16.msra.mxu0 %v6372
        %6414 = vmatprep.subr.bf16.mxu0 0
        %6415 = vmatpush1.bf16.msra.mxu0 %v6373
        %6416 = vmatprep.subr.bf16.mxu0 0
        %6417 = vmatpush1.bf16.msra.mxu0 %v6374
        %6418 = vmatprep.subr.bf16.mxu0 0
        %6419 = vmatpush1.bf16.msra.mxu0 %v6375
        %6420 = vmatprep.subr.bf16.mxu0 0
        %6421 = vmatpush1.bf16.msra.mxu0 %v6376
        %6422 = vmatprep.subr.bf16.mxu0 0
        %6423 = vmatpush1.bf16.msra.mxu0 %v6377
        %6424 = vmatprep.subr.bf16.mxu0 0
        %6425 = vmatpush1.bf16.msra.mxu0 %v6378
        %6426 = vmatprep.subr.bf16.mxu0 0
        %6427 = vmatpush1.bf16.msra.mxu0 %v6379
        %6428 = vmatprep.mubr.bf16.mxu0 %v6263
        %6429 = vmatmul.mubr.bf16.gmra.mrb[0].mxu0 %v6262
        %v6430 = vpop.f32.mrb[0].mxu0
        %v6431 = vadd.f32 %v6299, %v6430
        %v6432 = vpop.f32.mrb[0].mxu0
        %v6433 = vpop.f32.mrb[0].mxu0
        %v6434 = vadd.f32 %v6299, %v6433
        %v6435 = vpop.f32.mrb[0].mxu0
        %6436 = vdwg.mxu0
        %v6437 = vadd.f32 %v6431, %v6108
        %v6438 = vadd.f32 %v6434, %v6109
        %6439 = vadd.xlane.f32.xlu0 %v6437
        %v6440 = vpop.xlane.xlu0 %6439
        %6441 = vadd.xlane.f32.xlu0 %v6438
        %v6442 = vpop.xlane.xlu0 %6441
        %v6443 = vmul.f32 %v6440, %v3377
        %v6444 = vmul.f32 %v6442, %v3377
        %v6445 = vmul.f32 %v6437, %v6437
        %v6446 = vmul.f32 %v6438, %v6438
        %6447 = vadd.xlane.f32.xlu0 %v6445
        %v6448 = vpop.xlane.xlu0 %6447
        %6449 = vadd.xlane.f32.xlu0 %v6446
        %v6450 = vpop.xlane.xlu0 %6449
        %v6451 = vmul.f32 %v6448, %v3377
        %v6452 = vmul.f32 %v6450, %v3377
        %v6453 = vsub.f32 %v6437, %v6443
        %v6454 = vsub.f32 %v6438, %v6444
        %v6455 = vmul.f32 %v6443, %v6443
        %v6456 = vmul.f32 %v6444, %v6444
        %v6457 = vsub.f32 %v6451, %v6455
        %v6458 = vsub.f32 %v6452, %v6456
        %v6459 = vadd.f32 %v6457, 1e-05
        %v6460 = vadd.f32 %v6458, 1e-05
        %v6461 = vrsqrt.pop %v6459
        %v6462 = vrsqrt.pop %v6460
        %v6463 = vmul.f32 %v6453, %v6461
        %v6464 = vmul.f32 %v6454, %v6462
        %v6465 = vlaneseq
        %v6466 = vshrl.u32 %v6465, 7
        %v6467 = vsub.s32 6, %v6466
        %v6468 = vrot.slane %v726, %v6467
        %v6469 = vmul.f32 %v6463, %v6468
        %v6470 = vmul.f32 %v6464, %v6468
        %v6471 = vlaneseq
        %v6472 = vshrl.u32 %v6471, 7
        %v6473 = vsub.s32 7, %v6472
        %v6474 = vrot.slane %v726, %v6473
        %v6475 = vadd.f32 %v6469, %v6474
        %v6476 = vadd.f32 %v6470, %v6474
        %6477 = vst [vmem:[%s654] sm:$0xff] %v6475
        %6478 = vst [vmem:[%s654 + $0x8] sm:$0xff] %v6476
        %s6479 = sand.u32 %s407, 1
        %s6480 = scalar_lea.sflag [#allocation3], %s6479
        %s6481 = sand.u32 %s407, 1
        %s6482 = smul.addr %s6481, 16
        %s6483 = scalar_lea.vmem [#allocation2], %s6482
        // Predicated region
        $region81: #{tpu_custom_call.1} parent=75 // pred_check
          %p6484 = pneg %p417
        $region82: #{tpu_custom_call.1} parent=75 // pred_check_branch
          %6486 = sbr.rel (%p6484) target = $region84
        $region83: #{tpu_custom_call.1} parent=75 // pred_region
          %s6487 = smul.u32 2, %s32
          %s6489 = ssub.s32 256, 256
          %6490 = vsyncadd %s6480, %s6489
          %s6491 = smul.addr %s6487, 128
          %s6492 = scalar_lea.hbm %s14, %s6491
          %s6493 = sshll.u32 %s6483, 4
          %s6494 = int_to_ptr.vmem [resolvable:$true] %s6493
          %6499 = dma.vmem_to_hbm [thread:$0]  %s6494, 256, %s6492, %s6480, 128, 128, 8
        $region84: #{tpu_custom_call.1} parent=75 // pred_fallthru
          _
      $region76: #{tpu_custom_call.1} parent=5 // pred_fallthru
        _
      %p6500 = scmp.le.s32.totalorder 2, %s23
      // Predicated region
      $region85: #{tpu_custom_call.1} parent=5 // pred_check
        %p6501 = pneg %p6500
      $region86: #{tpu_custom_call.1} parent=5 // pred_check_branch
        %6503 = sbr.rel (%p6501) target = $region88
      $region87: #{tpu_custom_call.1} parent=5 // pred_region
        %s6504 = ssub.s32 %s23, 2
        // Predicated region
        $region89: #{tpu_custom_call.1} parent=87 // pred_check
          %p6505 = pneg %p423
        $region90: #{tpu_custom_call.1} parent=87 // pred_check_branch
          %6507 = sbr.rel (%p6505) target = $region92
        $region91: #{tpu_custom_call.1} parent=87 // pred_region
          %s6508 = sand.u32 %s408, 1
          %s6509 = scalar_lea.sflag [#allocation3], %s6508
          %s6510 = sand.u32 %s408, 1
          %s6511 = smul.addr %s6510, 16
          %s6512 = scalar_lea.vmem [#allocation2], %s6511
          %6513 = dma.done %s6509, 256
        $region92: #{tpu_custom_call.1} parent=87 // pred_fallthru
          _
      $region88: #{tpu_custom_call.1} parent=5 // pred_fallthru
        _
    $region6: #{tpu_custom_call.1} parent=1 // loop_footer
      %s27 = sadd.s32 1, %s23
    $region7: #{tpu_custom_call.1} parent=1 // loop_footer_branch
      %22 = sbr.rel target = $region3
    $region8: #{tpu_custom_call.1} parent=1 // loop_exit
      _
    %6514 = vsyncpa [#allocation3], 1
    %s6515 = scalar_lea.sflag [#allocation3], 1
    %6516 = vsyncpa %s6515, 1

</llo_original>
